<compile_context>
chip_gen: v7x
topology: tpu7x:2x2x1
jax: 0.10.0
libtpu: 0.0.40
codegen_flags: <defaults>
</compile_context>

<pallas_src>
import functools

import jax
import jax.numpy as jnp
import numpy as np
from jax import lax
from jax.experimental import pallas as pl
from jax.experimental.pallas import tpu as pltpu


@functools.lru_cache(maxsize=None)
def _vmem_limit_bytes():
    """Generation-aware scoped-VMEM budget (3/4 of physical, capped)."""
    try:
        cap = int(pltpu.get_tpu_info().vmem_capacity_bytes)
        return min((cap * 3) // 4, 96 * 1024 * 1024)
    except Exception:
        return 48 * 1024 * 1024


# ----------------------------------------------------------------------------
# Shared wrapper glue
# ----------------------------------------------------------------------------
def _stack_columns(x):
    """x: (N, h, w, Cin) -> zero-padded, column-shift-stacked (N, (h+2)*w, 3*Cin)
    bf16.  Only the 3 column (dw) shifts are stacked; the 3 row (dh) shifts are
    contiguous leading-dim slices inside the kernels."""
    N, h, w, cin = x.shape
    xp = jnp.pad(x.astype(jnp.bfloat16), ((0, 0), (1, 1), (1, 1), (0, 0)))
    pw = jnp.concatenate([xp[:, :, dw:dw + w, :] for dw in range(3)], axis=-1)
    return pw.reshape(N, (h + 2) * w, 3 * cin)


def _fold_bn_scale(wk, scale):
    """Fold the BN scale into the HWIO conv weights in f32, then cast to bf16."""
    wf = wk.astype(jnp.float32) * scale.astype(jnp.float32)[None, None, None, :]
    return wf.astype(jnp.bfloat16)


# ----------------------------------------------------------------------------
# Fused stage kernel: conv3x3 + BN(eval) + multi-step LIF + 3x3/s2/p1 max pool
# ----------------------------------------------------------------------------
def _stage_kernel(pw_ref, w_ref, b_ref, o_ref, v_ref, s_ref, r_ref,
                  *, h, w, tau, v_th):
    """pw_ref: (1, (h+2)*w, 3*Cin) bf16  column-stacked padded image (one (b,t))
       w_ref : (3, 3*Cin, Cout)    bf16  BN-scale-folded weights, one slab / dh
       b_ref : (1, Cout)           f32   BN shift
       o_ref : (1, h//2, w, Cout)  bf16  H-pooled, W-window-maxed spikes
                                         (caller strides the W axis by 2)
       v_ref : (h, w, Cout)        f32   membrane potential carried across T
       s_ref : (h+2, w+2, Cout)    f32   zero-padded spike map (pool input)
       r_ref : (h//2, w+2, Cout)   f32   H-pooled intermediate"""
    t = pl.program_id(1)

    @pl.when(t == 0)
    def _():
        v_ref[...] = jnp.zeros_like(v_ref)
        s_ref[...] = jnp.zeros_like(s_ref)   # zero halo; interior rewritten below

    # --- conv3x3 (stride 1, pad 1): 3 MXU dots of K = 3*Cin, f32 accumulation.
    acc = None
    for dh in range(3):
        lhs = pw_ref[0, pl.ds(dh * w, h * w), :]              # (h*w, 3*Cin) bf16
        part = jnp.dot(lhs, w_ref[dh], preferred_element_type=jnp.float32)
        acc = part if acc is None else acc + part
    y2 = acc + b_ref[...]                                     # BN shift epilogue
    cout = y2.shape[-1]
    y = y2.reshape(h, w, cout)                                # free: w % 8 == 0

    # --- multi-step LIF (spikingjelly LIFNode: decay_input=True, v_reset=0,
    #     hard reset); membrane carried across the T grid axis.
    v = v_ref[...] + (y - v_ref[...]) * (1.0 / tau)
    spike = (v >= v_th).astype(jnp.float32)
    v_ref[...] = v * (1.0 - spike)

    # --- 3x3 / stride-2 / pad-1 max pool.  Spikes are >= 0, so the zero halo
    #     is equivalent to PyTorch's -inf padding.
    ho = h // 2
    s_ref[1:1 + h, 1:1 + w, :] = spike
    # H pass: window max + stride-2 decimation on the untiled leading axis.
    r_ref[...] = jnp.maximum(
        jnp.maximum(s_ref[pl.ds(0, ho, stride=2), :, :],
                    s_ref[pl.ds(1, ho, stride=2), :, :]),
        s_ref[pl.ds(2, ho, stride=2), :, :])
    # W pass: adjacent-column max at full width (contiguous offset reads); the
    # stride-2 column decimation is done by the caller / next-stage glue.
    o_ref[0] = jnp.maximum(
        jnp.maximum(r_ref[:, 0:w, :], r_ref[:, 1:1 + w, :]),
        r_ref[:, 2:2 + w, :]).astype(o_ref.dtype)


def conv_bn_lif_pool(x, wk, scale, shift, *, T, B, tau=1.5, v_th=1.0):
    """x: (T*B, h, w, Cin); wk: (3,3,Cin,Cout) HWIO; scale/shift: (Cout,).
    Returns H-pooled / W-window-maxed spikes (T*B, h//2, w, Cout) bf16; the
    caller applies the stride-2 W decimation (folded into the next glue)."""
    N, h, w, cin = x.shape
    assert N == T * B and h % 2 == 0 and w % 2 == 0
    assert w % 8 == 0, "fused stage requires the stage width to be a multiple of 8"
    cout = wk.shape[-1]
    ho = h // 2

    pw = _stack_columns(x)
    wf = _fold_bn_scale(wk, scale).reshape(3, 3 * cin, cout)
    kern = functools.partial(_stage_kernel, h=h, w=w, tau=tau, v_th=v_th)

    return pl.pallas_call(
        kern,
        out_shape=jax.ShapeDtypeStruct((N, ho, w, cout), jnp.bfloat16),
        grid=(B, T),
        in_specs=[
            pl.BlockSpec((1, (h + 2) * w, 3 * cin), lambda b, t: (t * B + b, 0, 0)),
            pl.BlockSpec((3, 3 * cin, cout), lambda b, t: (0, 0, 0)),
            pl.BlockSpec((1, cout), lambda b, t: (0, 0)),
        ],
        out_specs=pl.BlockSpec((1, ho, w, cout), lambda b, t: (t * B + b, 0, 0, 0)),
        scratch_shapes=[
            pltpu.VMEM((h, w, cout), jnp.float32),          # membrane potential
            pltpu.VMEM((h + 2, w + 2, cout), jnp.float32),  # padded spike map
            pltpu.VMEM((ho, w + 2, cout), jnp.float32),     # H-pooled intermediate
        ],
        compiler_params=pltpu.CompilerParams(
            dimension_semantics=("parallel", "arbitrary"),
            vmem_limit_bytes=_vmem_limit_bytes()),
    )(pw, wf, shift.reshape(1, cout).astype(jnp.float32))


# ----------------------------------------------------------------------------
# Final stage kernel: conv3x3 + BN(eval) only (proj3_conv / proj3_bn)
# ----------------------------------------------------------------------------
def _conv_bn_kernel(pw_ref, w_ref, b_ref, o_ref, *, h, w):
    acc = None
    for dh in range(3):
        lhs = pw_ref[0, pl.ds(dh * w, h * w), :]              # (h*w, 3*Cin) bf16
        part = jnp.dot(lhs, w_ref[dh], preferred_element_type=jnp.float32)
        acc = part if acc is None else acc + part
    o_ref[0] = acc + b_ref[...]                               # BN shift only


def conv_bn(x, wk, scale, shift):
    """x: (N, h, w, Cin) -> BN(conv3x3(x)) as (N, h, w, Cout) float32."""
    N, h, w, cin = x.shape
    cout = wk.shape[-1]
    pw = _stack_columns(x)
    wf = _fold_bn_scale(wk, scale).reshape(3, 3 * cin, cout)
    kern = functools.partial(_conv_bn_kernel, h=h, w=w)
    out = pl.pallas_call(
        kern,
        out_shape=jax.ShapeDtypeStruct((N, h * w, cout), jnp.float32),
        grid=(N,),
        in_specs=[
            pl.BlockSpec((1, (h + 2) * w, 3 * cin), lambda n: (n, 0, 0)),
            pl.BlockSpec((3, 3 * cin, cout), lambda n: (0, 0, 0)),
            pl.BlockSpec((1, cout), lambda n: (0, 0)),
        ],
        out_specs=pl.BlockSpec((1, h * w, cout), lambda n: (n, 0, 0)),
        compiler_params=pltpu.CompilerParams(
            dimension_semantics=("parallel",),
            vmem_limit_bytes=_vmem_limit_bytes()),
    )(pw, wf, shift.reshape(1, cout).astype(jnp.float32))
    return out.reshape(N, h, w, cout)


# ----------------------------------------------------------------------------
# SpikingTokenizer forward
# ----------------------------------------------------------------------------
def init_params(key, in_channels, embed_dims):
    """Deterministic synthetic parameters (conv weight + folded BN scale/shift)."""
    dims_in = [in_channels, embed_dims // 8, embed_dims // 4, embed_dims // 2]
    dims_out = [embed_dims // 8, embed_dims // 4, embed_dims // 2, embed_dims]
    params = []
    for k in range(4):
        key, kw, kg, kb, km, kv = jax.random.split(key, 6)
        cin, cout = dims_in[k], dims_out[k]
        wk = 0.2 * jax.random.normal(kw, (3, 3, cin, cout), jnp.float32)
        gamma = 1.0 + 0.1 * jax.random.normal(kg, (cout,), jnp.float32)
        beta = 0.1 * jax.random.normal(kb, (cout,), jnp.float32)
        mean = 0.1 * jax.random.normal(km, (cout,), jnp.float32)
        var = jax.random.uniform(kv, (cout,), jnp.float32, 0.5, 1.5)
        scale = gamma / jnp.sqrt(var + 1e-5)
        shift = beta - mean * scale
        params.append((wk, scale, shift))
    return params


def spiking_tokenizer(x, params, embed_dims):
    """x: (T, B, C, H, W) -> ((T, B, embed_dims, H//8, W//8), (H//8, W//8)).
    Requires W % 32 == 0 and H % 8 == 0 for the fused pooled stages."""
    T, B, C, H, W = x.shape
    y = jnp.transpose(x, (0, 1, 3, 4, 2)).reshape(T * B, H, W, C)  # NHWC, n = t*B+b
    h, w = H, W
    for k in range(3):
        wk, sk, bk = params[k]
        y = conv_bn_lif_pool(y, wk, sk, bk, T=T, B=B)  # conv+BN+LIF+pool (H dec.)
        y = y[:, :, ::2, :]                            # stride-2 W decimation
        h, w = h // 2, w // 2                          # (fused into next glue)
    wk, sk, bk = params[3]
    y = conv_bn(y, wk, sk, bk)                         # final conv + BN, f32
    y = y.reshape(T, B, h, w, embed_dims)
    y = jnp.transpose(y, (0, 1, 4, 2, 3))              # back to (T, B, E, H//8, W//8)
    return y, (h, w)


# ----------------------------------------------------------------------------
# Pure-JAX references for sanity checks
# ----------------------------------------------------------------------------
def _ref_conv_bn(x, wk, scale, shift):
    xb = x.astype(jnp.bfloat16).astype(jnp.float32)    # match kernel's bf16 inputs
    wf = _fold_bn_scale(wk, scale).astype(jnp.float32)
    out = lax.conv_general_dilated(
        xb, wf, window_strides=(1, 1), padding=((1, 1), (1, 1)),
        dimension_numbers=("NHWC", "HWIO", "NHWC"),
        precision=lax.Precision.HIGHEST)
    return out + shift


def _ref_stage(x, wk, scale, shift, T, B, tau=1.5, v_th=1.0):
    """Reference conv+BN+LIF+3x3/s2 pool -> pooled spikes (T*B, h//2, w//2, C)."""
    N, h, w, _ = x.shape
    y = _ref_conv_bn(x, wk, scale, shift)
    yT = y.reshape(T, B, h, w, -1)
    v = jnp.zeros_like(yT[0])
    outs = []
    for t in range(T):
        v = v + (yT[t] - v) * (1.0 / tau)
        s = (v >= v_th).astype(jnp.float32)
        v = v * (1.0 - s)
        outs.append(lax.reduce_window(
            s, -jnp.inf, lax.max, (1, 3, 3, 1), (1, 2, 2, 1),
            [(0, 0), (1, 1), (1, 1), (0, 0)]))
    return jnp.stack(outs).reshape(T * B, h // 2, w // 2, -1)


if __name__ == "__main__":
    key = jax.random.PRNGKey(0)
    T, B, C, H, W = 2, 2, 2, 32, 32
    E = 32  # embed_dims

    kx, kp = jax.random.split(key)
    x = jax.random.normal(kx, (T, B, C, H, W), jnp.float32)
    params = init_params(kp, C, E)

    fwd = jax.jit(spiking_tokenizer, static_argnums=2)
    out, (gh, gw) = fwd(x, params, E)
    out = jax.block_until_ready(out)
    assert out.shape == (T, B, E, H // 8, W // 8), out.shape
    assert (gh, gw) == (H // 8, W // 8)
    assert bool(jnp.all(jnp.isfinite(out)))

    # --- fused stage (conv+BN+LIF+pool) vs pure-JAX reference ---------------
    Ts, Bs = 4, 2
    xs = jax.random.normal(jax.random.PRNGKey(1), (Ts * Bs, 16, 16, 4), jnp.float32)
    ws = 0.2 * jax.random.normal(jax.random.PRNGKey(2), (3, 3, 4, 8), jnp.float32)
    sc = 1.0 + 0.1 * jax.random.normal(jax.random.PRNGKey(3), (8,), jnp.float32)
    sh = 0.1 * jax.random.normal(jax.random.PRNGKey(4), (8,), jnp.float32)
    got = conv_bn_lif_pool(xs, ws, sc, sh, T=Ts, B=Bs)[:, :, ::2, :]
    got = jax.block_until_ready(got).astype(jnp.float32)
    ref = _ref_stage(xs, ws, sc, sh, Ts, Bs)
    # Spikes may flip only for pre-activations within accumulation-order noise
    # of the threshold; allow a tiny mismatch fraction instead of exactness.
    mismatch = float(jnp.mean((got != ref).astype(jnp.float32)))
    assert mismatch < 0.02, f"spike mismatch fraction too high: {mismatch}"

    # --- final conv+BN kernel vs pure-JAX reference --------------------------
    xc = jax.random.normal(jax.random.PRNGKey(5), (3, 8, 8, 8), jnp.float32)
    wc = 0.1 * jax.random.normal(jax.random.PRNGKey(6), (3, 3, 8, 16), jnp.float32)
    scc = 1.0 + 0.1 * jax.random.normal(jax.random.PRNGKey(7), (16,), jnp.float32)
    shc = 0.1 * jax.random.normal(jax.random.PRNGKey(8), (16,), jnp.float32)
    np.testing.assert_allclose(np.asarray(conv_bn(xc, wc, scc, shc)),
                               np.asarray(_ref_conv_bn(xc, wc, scc, shc)),
                               atol=2e-2, rtol=2e-2)

    print("KERNEL_OK")
</pallas_src>

<mosaic_0001>
module attributes {stable_mosaic.version = 11 : i64} {
  func.func @_stage_kernel(%arg0: i32, %arg1: i32, %arg2: memref<1x1088x6xbf16, #tpu.memory_space<vmem>>, %arg3: memref<3x6x4xbf16, #tpu.memory_space<vmem>>, %arg4: memref<1x4xf32, #tpu.memory_space<vmem>>, %arg5: memref<1x16x32x4xbf16, #tpu.memory_space<vmem>>, %arg6: memref<32x32x4xf32, #tpu.memory_space<vmem>>, %arg7: memref<34x34x4xf32, #tpu.memory_space<vmem>>, %arg8: memref<16x34x4xf32, #tpu.memory_space<vmem>>) attributes {dimension_semantics = [#tpu.dimension_semantics<parallel>, #tpu.dimension_semantics<arbitrary>], iteration_bounds = array<i64: 2, 2>, scalar_prefetch = 0 : i64, scratch_operands = 3 : i64, tpu.core_type = #tpu.core_type<tc>, window_params = [{transform_indices = @transform_0, window_bounds = array<i64: 1, 1088, 6>}, {pipeline_mode = #tpu.pipeline_mode<synchronous>, transform_indices = @transform_1, window_bounds = array<i64: 3, 6, 4>}, {pipeline_mode = #tpu.pipeline_mode<synchronous>, transform_indices = @transform_2, window_bounds = array<i64: 1, 4>}, {transform_indices = @transform_3, window_bounds = array<i64: 1, 16, 32, 4>}]} {
    %c0_i32 = arith.constant 0 : i32
    %0 = arith.cmpi eq, %arg1, %c0_i32 : i32
    %1 = arith.extui %0 : i1 to i32
    %c0_i32_0 = arith.constant 0 : i32
    %2 = arith.cmpi ne, %1, %c0_i32_0 : i32
    scf.if %2 {
      %cst_58 = arith.constant 0.000000e+00 : f32
      %54 = vector.broadcast %cst_58 : f32 to vector<32x32x4xf32>
      %c0_59 = arith.constant 0 : index
      %c0_60 = arith.constant 0 : index
      %c0_61 = arith.constant 0 : index
      %55 = vector.load %arg6[%c0_59, %c0_60, %c0_61] : memref<32x32x4xf32, #tpu.memory_space<vmem>>, vector<32x32x4xf32>
      tpu.vector_store %arg6[%c0_59, %c0_60, %c0_61], %54 {strides = array<i32>} : memref<32x32x4xf32, #tpu.memory_space<vmem>>, vector<32x32x4xf32>,
      %cst_62 = arith.constant 0.000000e+00 : f32
      %56 = vector.broadcast %cst_62 : f32 to vector<34x34x4xf32>
      %c0_63 = arith.constant 0 : index
      %c0_64 = arith.constant 0 : index
      %c0_65 = arith.constant 0 : index
      %57 = vector.load %arg7[%c0_63, %c0_64, %c0_65] : memref<34x34x4xf32, #tpu.memory_space<vmem>>, vector<34x34x4xf32>
      tpu.vector_store %arg7[%c0_63, %c0_64, %c0_65], %56 {strides = array<i32>} : memref<34x34x4xf32, #tpu.memory_space<vmem>>, vector<34x34x4xf32>,
    } else {
    }
    %c0 = arith.constant 0 : index
    %c0_1 = arith.constant 0 : index
    %c0_2 = arith.constant 0 : index
    %3 = vector.load %arg2[%c0, %c0_1, %c0_2] : memref<1x1088x6xbf16, #tpu.memory_space<vmem>>, vector<1x1024x6xbf16>
    %4 = vector.shape_cast %3 : vector<1x1024x6xbf16> to vector<1024x6xbf16>
    %c0_3 = arith.constant 0 : index
    %c0_4 = arith.constant 0 : index
    %c0_5 = arith.constant 0 : index
    %5 = vector.load %arg3[%c0_3, %c0_4, %c0_5] : memref<3x6x4xbf16, #tpu.memory_space<vmem>>, vector<1x6x4xbf16>
    %6 = vector.shape_cast %5 : vector<1x6x4xbf16> to vector<6x4xbf16>
    %cst = arith.constant dense<0.000000e+00> : vector<1024x4xf32>
    %7 = tpu.matmul %4, %6, %cst {dimension_numbers = #tpu.dot_dimension_numbers<[1], [0], [0], [1], [0, 0, 1, 1], [], []>} : vector<1024x6xbf16>, vector<6x4xbf16>, vector<1024x4xf32> -> vector<1024x4xf32>
    %c0_6 = arith.constant 0 : index
    %c32 = arith.constant 32 : index
    %c0_7 = arith.constant 0 : index
    %8 = vector.load %arg2[%c0_6, %c32, %c0_7] : memref<1x1088x6xbf16, #tpu.memory_space<vmem>>, vector<1x1024x6xbf16>
    %9 = vector.shape_cast %8 : vector<1x1024x6xbf16> to vector<1024x6xbf16>
    %c1 = arith.constant 1 : index
    %c0_8 = arith.constant 0 : index
    %c0_9 = arith.constant 0 : index
    %10 = vector.load %arg3[%c1, %c0_8, %c0_9] : memref<3x6x4xbf16, #tpu.memory_space<vmem>>, vector<1x6x4xbf16>
    %11 = vector.shape_cast %10 : vector<1x6x4xbf16> to vector<6x4xbf16>
    %cst_10 = arith.constant dense<0.000000e+00> : vector<1024x4xf32>
    %12 = tpu.matmul %9, %11, %cst_10 {dimension_numbers = #tpu.dot_dimension_numbers<[1], [0], [0], [1], [0, 0, 1, 1], [], []>} : vector<1024x6xbf16>, vector<6x4xbf16>, vector<1024x4xf32> -> vector<1024x4xf32>
    %13 = arith.addf %7, %12 : vector<1024x4xf32>
    %c0_11 = arith.constant 0 : index
    %c64 = arith.constant 64 : index
    %c0_12 = arith.constant 0 : index
    %14 = vector.load %arg2[%c0_11, %c64, %c0_12] : memref<1x1088x6xbf16, #tpu.memory_space<vmem>>, vector<1x1024x6xbf16>
    %15 = vector.shape_cast %14 : vector<1x1024x6xbf16> to vector<1024x6xbf16>
    %c2 = arith.constant 2 : index
    %c0_13 = arith.constant 0 : index
    %c0_14 = arith.constant 0 : index
    %16 = vector.load %arg3[%c2, %c0_13, %c0_14] : memref<3x6x4xbf16, #tpu.memory_space<vmem>>, vector<1x6x4xbf16>
    %17 = vector.shape_cast %16 : vector<1x6x4xbf16> to vector<6x4xbf16>
    %cst_15 = arith.constant dense<0.000000e+00> : vector<1024x4xf32>
    %18 = tpu.matmul %15, %17, %cst_15 {dimension_numbers = #tpu.dot_dimension_numbers<[1], [0], [0], [1], [0, 0, 1, 1], [], []>} : vector<1024x6xbf16>, vector<6x4xbf16>, vector<1024x4xf32> -> vector<1024x4xf32>
    %19 = arith.addf %13, %18 : vector<1024x4xf32>
    %c0_16 = arith.constant 0 : index
    %c0_17 = arith.constant 0 : index
    %20 = vector.load %arg4[%c0_16, %c0_17] : memref<1x4xf32, #tpu.memory_space<vmem>>, vector<1x4xf32>
    %21 = vector.broadcast %20 : vector<1x4xf32> to vector<1024x4xf32>
    %22 = arith.addf %19, %21 : vector<1024x4xf32>
    %23 = vector.shape_cast %22 : vector<1024x4xf32> to vector<32x32x4xf32>
    %c0_18 = arith.constant 0 : index
    %c0_19 = arith.constant 0 : index
    %c0_20 = arith.constant 0 : index
    %24 = vector.load %arg6[%c0_18, %c0_19, %c0_20] : memref<32x32x4xf32, #tpu.memory_space<vmem>>, vector<32x32x4xf32>
    %c0_21 = arith.constant 0 : index
    %c0_22 = arith.constant 0 : index
    %c0_23 = arith.constant 0 : index
    %25 = vector.load %arg6[%c0_21, %c0_22, %c0_23] : memref<32x32x4xf32, #tpu.memory_space<vmem>>, vector<32x32x4xf32>
    %26 = arith.subf %23, %25 : vector<32x32x4xf32>
    %cst_24 = arith.constant 0.666666686 : f32
    %27 = vector.broadcast %cst_24 : f32 to vector<32x32x4xf32>
    %28 = arith.mulf %26, %27 : vector<32x32x4xf32>
    %29 = arith.addf %24, %28 : vector<32x32x4xf32>
    %cst_25 = arith.constant 1.000000e+00 : f32
    %30 = vector.broadcast %cst_25 : f32 to vector<32x32x4xf32>
    %31 = arith.cmpf oge, %29, %30 : vector<32x32x4xf32>
    %32 = arith.extui %31 : vector<32x32x4xi1> to vector<32x32x4xi32>
    %33 = arith.sitofp %32 : vector<32x32x4xi32> to vector<32x32x4xf32>
    %cst_26 = arith.constant 1.000000e+00 : f32
    %34 = vector.broadcast %cst_26 : f32 to vector<32x32x4xf32>
    %35 = arith.subf %34, %33 : vector<32x32x4xf32>
    %36 = arith.mulf %29, %35 : vector<32x32x4xf32>
    %c0_27 = arith.constant 0 : index
    %c0_28 = arith.constant 0 : index
    %c0_29 = arith.constant 0 : index
    %37 = vector.load %arg6[%c0_27, %c0_28, %c0_29] : memref<32x32x4xf32, #tpu.memory_space<vmem>>, vector<32x32x4xf32>
    tpu.vector_store %arg6[%c0_27, %c0_28, %c0_29], %36 {strides = array<i32>} : memref<32x32x4xf32, #tpu.memory_space<vmem>>, vector<32x32x4xf32>,
    %c1_30 = arith.constant 1 : index
    %c1_31 = arith.constant 1 : index
    %c0_32 = arith.constant 0 : index
    %38 = vector.load %arg7[%c1_30, %c1_31, %c0_32] : memref<34x34x4xf32, #tpu.memory_space<vmem>>, vector<32x32x4xf32>
    tpu.vector_store %arg7[%c1_30, %c1_31, %c0_32], %33 {strides = array<i32>} : memref<34x34x4xf32, #tpu.memory_space<vmem>>, vector<32x32x4xf32>,
    %c0_33 = arith.constant 0 : index
    %c0_34 = arith.constant 0 : index
    %c0_35 = arith.constant 0 : index
    %39 = tpu.strided_load %arg7[%c0_33, %c0_34, %c0_35] {strides = array<i32: 2, 1, 1>} : memref<34x34x4xf32, #tpu.memory_space<vmem>>, vector<16x34x4xf32>
    %c1_36 = arith.constant 1 : index
    %c0_37 = arith.constant 0 : index
    %c0_38 = arith.constant 0 : index
    %40 = tpu.strided_load %arg7[%c1_36, %c0_37, %c0_38] {strides = array<i32: 2, 1, 1>} : memref<34x34x4xf32, #tpu.memory_space<vmem>>, vector<16x34x4xf32>
    %41 = arith.maximumf %39, %40 : vector<16x34x4xf32>
    %c2_39 = arith.constant 2 : index
    %c0_40 = arith.constant 0 : index
    %c0_41 = arith.constant 0 : index
    %42 = tpu.strided_load %arg7[%c2_39, %c0_40, %c0_41] {strides = array<i32: 2, 1, 1>} : memref<34x34x4xf32, #tpu.memory_space<vmem>>, vector<16x34x4xf32>
    %43 = arith.maximumf %41, %42 : vector<16x34x4xf32>
    %c0_42 = arith.constant 0 : index
    %c0_43 = arith.constant 0 : index
    %c0_44 = arith.constant 0 : index
    %44 = vector.load %arg8[%c0_42, %c0_43, %c0_44] : memref<16x34x4xf32, #tpu.memory_space<vmem>>, vector<16x34x4xf32>
    tpu.vector_store %arg8[%c0_42, %c0_43, %c0_44], %43 {strides = array<i32>} : memref<16x34x4xf32, #tpu.memory_space<vmem>>, vector<16x34x4xf32>,
    %c0_45 = arith.constant 0 : index
    %c0_46 = arith.constant 0 : index
    %c0_47 = arith.constant 0 : index
    %45 = vector.load %arg8[%c0_45, %c0_46, %c0_47] : memref<16x34x4xf32, #tpu.memory_space<vmem>>, vector<16x32x4xf32>
    %c0_48 = arith.constant 0 : index
    %c1_49 = arith.constant 1 : index
    %c0_50 = arith.constant 0 : index
    %46 = vector.load %arg8[%c0_48, %c1_49, %c0_50] : memref<16x34x4xf32, #tpu.memory_space<vmem>>, vector<16x32x4xf32>
    %47 = arith.maximumf %45, %46 : vector<16x32x4xf32>
    %c0_51 = arith.constant 0 : index
    %c2_52 = arith.constant 2 : index
    %c0_53 = arith.constant 0 : index
    %48 = vector.load %arg8[%c0_51, %c2_52, %c0_53] : memref<16x34x4xf32, #tpu.memory_space<vmem>>, vector<16x32x4xf32>
    %49 = arith.maximumf %47, %48 : vector<16x32x4xf32>
    %50 = arith.truncf %49 : vector<16x32x4xf32> to vector<16x32x4xbf16>
    %c0_54 = arith.constant 0 : index
    %c0_55 = arith.constant 0 : index
    %c0_56 = arith.constant 0 : index
    %c0_57 = arith.constant 0 : index
    %51 = vector.load %arg5[%c0_54, %c0_55, %c0_56, %c0_57] : memref<1x16x32x4xbf16, #tpu.memory_space<vmem>>, vector<1x16x32x4xbf16>
    %52 = vector.shape_cast %51 : vector<1x16x32x4xbf16> to vector<16x32x4xbf16>
    %53 = vector.shape_cast %50 : vector<16x32x4xbf16> to vector<1x16x32x4xbf16>
    tpu.vector_store %arg5[%c0_54, %c0_55, %c0_56, %c0_57], %53 {strides = array<i32>} : memref<1x16x32x4xbf16, #tpu.memory_space<vmem>>, vector<1x16x32x4xbf16>,
    return
  }
  func.func @transform_0(%arg0: i32, %arg1: i32) -> (i32, i32, i32) {
    %c2_i32 = arith.constant 2 : i32
    %0 = arith.muli %arg1, %c2_i32 : i32
    %1 = arith.addi %0, %arg0 : i32
    %c0_i32 = arith.constant 0 : i32
    %c0_i32_0 = arith.constant 0 : i32
    %c0_i32_1 = arith.constant 0 : i32
    return %1, %c0_i32, %c0_i32_0 : i32, i32, i32
  }
  func.func @transform_1(%arg0: i32, %arg1: i32) -> (i32, i32, i32) {
    %c0_i32 = arith.constant 0 : i32
    %c0_i32_0 = arith.constant 0 : i32
    %c0_i32_1 = arith.constant 0 : i32
    %c0_i32_2 = arith.constant 0 : i32
    return %c0_i32, %c0_i32_0, %c0_i32_1 : i32, i32, i32
  }
  func.func @transform_2(%arg0: i32, %arg1: i32) -> (i32, i32) {
    %c0_i32 = arith.constant 0 : i32
    %c0_i32_0 = arith.constant 0 : i32
    %c0_i32_1 = arith.constant 0 : i32
    return %c0_i32, %c0_i32_0 : i32, i32
  }
  func.func @transform_3(%arg0: i32, %arg1: i32) -> (i32, i32, i32, i32) {
    %c2_i32 = arith.constant 2 : i32
    %0 = arith.muli %arg1, %c2_i32 : i32
    %1 = arith.addi %0, %arg0 : i32
    %c0_i32 = arith.constant 0 : i32
    %c0_i32_0 = arith.constant 0 : i32
    %c0_i32_1 = arith.constant 0 : i32
    %c0_i32_2 = arith.constant 0 : i32
    return %1, %c0_i32, %c0_i32_0, %c0_i32_1 : i32, i32, i32, i32
  }
}

module attributes {stable_mosaic.version = 11 : i64} {
  func.func @_stage_kernel(%arg0: i32, %arg1: i32, %arg2: memref<1x288x12xbf16, #tpu.memory_space<vmem>>, %arg3: memref<3x12x8xbf16, #tpu.memory_space<vmem>>, %arg4: memref<1x8xf32, #tpu.memory_space<vmem>>, %arg5: memref<1x8x16x8xbf16, #tpu.memory_space<vmem>>, %arg6: memref<16x16x8xf32, #tpu.memory_space<vmem>>, %arg7: memref<18x18x8xf32, #tpu.memory_space<vmem>>, %arg8: memref<8x18x8xf32, #tpu.memory_space<vmem>>) attributes {dimension_semantics = [#tpu.dimension_semantics<parallel>, #tpu.dimension_semantics<arbitrary>], iteration_bounds = array<i64: 2, 2>, scalar_prefetch = 0 : i64, scratch_operands = 3 : i64, tpu.core_type = #tpu.core_type<tc>, window_params = [{transform_indices = @transform_0, window_bounds = array<i64: 1, 288, 12>}, {pipeline_mode = #tpu.pipeline_mode<synchronous>, transform_indices = @transform_1, window_bounds = array<i64: 3, 12, 8>}, {pipeline_mode = #tpu.pipeline_mode<synchronous>, transform_indices = @transform_2, window_bounds = array<i64: 1, 8>}, {transform_indices = @transform_3, window_bounds = array<i64: 1, 8, 16, 8>}]} {
    %c0_i32 = arith.constant 0 : i32
    %0 = arith.cmpi eq, %arg1, %c0_i32 : i32
    %1 = arith.extui %0 : i1 to i32
    %c0_i32_0 = arith.constant 0 : i32
    %2 = arith.cmpi ne, %1, %c0_i32_0 : i32
    scf.if %2 {
      %cst_58 = arith.constant 0.000000e+00 : f32
      %54 = vector.broadcast %cst_58 : f32 to vector<16x16x8xf32>
      %c0_59 = arith.constant 0 : index
      %c0_60 = arith.constant 0 : index
      %c0_61 = arith.constant 0 : index
      %55 = vector.load %arg6[%c0_59, %c0_60, %c0_61] : memref<16x16x8xf32, #tpu.memory_space<vmem>>, vector<16x16x8xf32>
      tpu.vector_store %arg6[%c0_59, %c0_60, %c0_61], %54 {strides = array<i32>} : memref<16x16x8xf32, #tpu.memory_space<vmem>>, vector<16x16x8xf32>,
      %cst_62 = arith.constant 0.000000e+00 : f32
      %56 = vector.broadcast %cst_62 : f32 to vector<18x18x8xf32>
      %c0_63 = arith.constant 0 : index
      %c0_64 = arith.constant 0 : index
      %c0_65 = arith.constant 0 : index
      %57 = vector.load %arg7[%c0_63, %c0_64, %c0_65] : memref<18x18x8xf32, #tpu.memory_space<vmem>>, vector<18x18x8xf32>
      tpu.vector_store %arg7[%c0_63, %c0_64, %c0_65], %56 {strides = array<i32>} : memref<18x18x8xf32, #tpu.memory_space<vmem>>, vector<18x18x8xf32>,
    } else {
    }
    %c0 = arith.constant 0 : index
    %c0_1 = arith.constant 0 : index
    %c0_2 = arith.constant 0 : index
    %3 = vector.load %arg2[%c0, %c0_1, %c0_2] : memref<1x288x12xbf16, #tpu.memory_space<vmem>>, vector<1x256x12xbf16>
    %4 = vector.shape_cast %3 : vector<1x256x12xbf16> to vector<256x12xbf16>
    %c0_3 = arith.constant 0 : index
    %c0_4 = arith.constant 0 : index
    %c0_5 = arith.constant 0 : index
    %5 = vector.load %arg3[%c0_3, %c0_4, %c0_5] : memref<3x12x8xbf16, #tpu.memory_space<vmem>>, vector<1x12x8xbf16>
    %6 = vector.shape_cast %5 : vector<1x12x8xbf16> to vector<12x8xbf16>
    %cst = arith.constant dense<0.000000e+00> : vector<256x8xf32>
    %7 = tpu.matmul %4, %6, %cst {dimension_numbers = #tpu.dot_dimension_numbers<[1], [0], [0], [1], [0, 0, 1, 1], [], []>} : vector<256x12xbf16>, vector<12x8xbf16>, vector<256x8xf32> -> vector<256x8xf32>
    %c0_6 = arith.constant 0 : index
    %c16 = arith.constant 16 : index
    %c0_7 = arith.constant 0 : index
    %8 = vector.load %arg2[%c0_6, %c16, %c0_7] : memref<1x288x12xbf16, #tpu.memory_space<vmem>>, vector<1x256x12xbf16>
    %9 = vector.shape_cast %8 : vector<1x256x12xbf16> to vector<256x12xbf16>
    %c1 = arith.constant 1 : index
    %c0_8 = arith.constant 0 : index
    %c0_9 = arith.constant 0 : index
    %10 = vector.load %arg3[%c1, %c0_8, %c0_9] : memref<3x12x8xbf16, #tpu.memory_space<vmem>>, vector<1x12x8xbf16>
    %11 = vector.shape_cast %10 : vector<1x12x8xbf16> to vector<12x8xbf16>
    %cst_10 = arith.constant dense<0.000000e+00> : vector<256x8xf32>
    %12 = tpu.matmul %9, %11, %cst_10 {dimension_numbers = #tpu.dot_dimension_numbers<[1], [0], [0], [1], [0, 0, 1, 1], [], []>} : vector<256x12xbf16>, vector<12x8xbf16>, vector<256x8xf32> -> vector<256x8xf32>
    %13 = arith.addf %7, %12 : vector<256x8xf32>
    %c0_11 = arith.constant 0 : index
    %c32 = arith.constant 32 : index
    %c0_12 = arith.constant 0 : index
    %14 = vector.load %arg2[%c0_11, %c32, %c0_12] : memref<1x288x12xbf16, #tpu.memory_space<vmem>>, vector<1x256x12xbf16>
    %15 = vector.shape_cast %14 : vector<1x256x12xbf16> to vector<256x12xbf16>
    %c2 = arith.constant 2 : index
    %c0_13 = arith.constant 0 : index
    %c0_14 = arith.constant 0 : index
    %16 = vector.load %arg3[%c2, %c0_13, %c0_14] : memref<3x12x8xbf16, #tpu.memory_space<vmem>>, vector<1x12x8xbf16>
    %17 = vector.shape_cast %16 : vector<1x12x8xbf16> to vector<12x8xbf16>
    %cst_15 = arith.constant dense<0.000000e+00> : vector<256x8xf32>
    %18 = tpu.matmul %15, %17, %cst_15 {dimension_numbers = #tpu.dot_dimension_numbers<[1], [0], [0], [1], [0, 0, 1, 1], [], []>} : vector<256x12xbf16>, vector<12x8xbf16>, vector<256x8xf32> -> vector<256x8xf32>
    %19 = arith.addf %13, %18 : vector<256x8xf32>
    %c0_16 = arith.constant 0 : index
    %c0_17 = arith.constant 0 : index
    %20 = vector.load %arg4[%c0_16, %c0_17] : memref<1x8xf32, #tpu.memory_space<vmem>>, vector<1x8xf32>
    %21 = vector.broadcast %20 : vector<1x8xf32> to vector<256x8xf32>
    %22 = arith.addf %19, %21 : vector<256x8xf32>
    %23 = vector.shape_cast %22 : vector<256x8xf32> to vector<16x16x8xf32>
    %c0_18 = arith.constant 0 : index
    %c0_19 = arith.constant 0 : index
    %c0_20 = arith.constant 0 : index
    %24 = vector.load %arg6[%c0_18, %c0_19, %c0_20] : memref<16x16x8xf32, #tpu.memory_space<vmem>>, vector<16x16x8xf32>
    %c0_21 = arith.constant 0 : index
    %c0_22 = arith.constant 0 : index
    %c0_23 = arith.constant 0 : index
    %25 = vector.load %arg6[%c0_21, %c0_22, %c0_23] : memref<16x16x8xf32, #tpu.memory_space<vmem>>, vector<16x16x8xf32>
    %26 = arith.subf %23, %25 : vector<16x16x8xf32>
    %cst_24 = arith.constant 0.666666686 : f32
    %27 = vector.broadcast %cst_24 : f32 to vector<16x16x8xf32>
    %28 = arith.mulf %26, %27 : vector<16x16x8xf32>
    %29 = arith.addf %24, %28 : vector<16x16x8xf32>
    %cst_25 = arith.constant 1.000000e+00 : f32
    %30 = vector.broadcast %cst_25 : f32 to vector<16x16x8xf32>
    %31 = arith.cmpf oge, %29, %30 : vector<16x16x8xf32>
    %32 = arith.extui %31 : vector<16x16x8xi1> to vector<16x16x8xi32>
    %33 = arith.sitofp %32 : vector<16x16x8xi32> to vector<16x16x8xf32>
    %cst_26 = arith.constant 1.000000e+00 : f32
    %34 = vector.broadcast %cst_26 : f32 to vector<16x16x8xf32>
    %35 = arith.subf %34, %33 : vector<16x16x8xf32>
    %36 = arith.mulf %29, %35 : vector<16x16x8xf32>
    %c0_27 = arith.constant 0 : index
    %c0_28 = arith.constant 0 : index
    %c0_29 = arith.constant 0 : index
    %37 = vector.load %arg6[%c0_27, %c0_28, %c0_29] : memref<16x16x8xf32, #tpu.memory_space<vmem>>, vector<16x16x8xf32>
    tpu.vector_store %arg6[%c0_27, %c0_28, %c0_29], %36 {strides = array<i32>} : memref<16x16x8xf32, #tpu.memory_space<vmem>>, vector<16x16x8xf32>,
    %c1_30 = arith.constant 1 : index
    %c1_31 = arith.constant 1 : index
    %c0_32 = arith.constant 0 : index
    %38 = vector.load %arg7[%c1_30, %c1_31, %c0_32] : memref<18x18x8xf32, #tpu.memory_space<vmem>>, vector<16x16x8xf32>
    tpu.vector_store %arg7[%c1_30, %c1_31, %c0_32], %33 {strides = array<i32>} : memref<18x18x8xf32, #tpu.memory_space<vmem>>, vector<16x16x8xf32>,
    %c0_33 = arith.constant 0 : index
    %c0_34 = arith.constant 0 : index
    %c0_35 = arith.constant 0 : index
    %39 = tpu.strided_load %arg7[%c0_33, %c0_34, %c0_35] {strides = array<i32: 2, 1, 1>} : memref<18x18x8xf32, #tpu.memory_space<vmem>>, vector<8x18x8xf32>
    %c1_36 = arith.constant 1 : index
    %c0_37 = arith.constant 0 : index
    %c0_38 = arith.constant 0 : index
    %40 = tpu.strided_load %arg7[%c1_36, %c0_37, %c0_38] {strides = array<i32: 2, 1, 1>} : memref<18x18x8xf32, #tpu.memory_space<vmem>>, vector<8x18x8xf32>
    %41 = arith.maximumf %39, %40 : vector<8x18x8xf32>
    %c2_39 = arith.constant 2 : index
    %c0_40 = arith.constant 0 : index
    %c0_41 = arith.constant 0 : index
    %42 = tpu.strided_load %arg7[%c2_39, %c0_40, %c0_41] {strides = array<i32: 2, 1, 1>} : memref<18x18x8xf32, #tpu.memory_space<vmem>>, vector<8x18x8xf32>
    %43 = arith.maximumf %41, %42 : vector<8x18x8xf32>
    %c0_42 = arith.constant 0 : index
    %c0_43 = arith.constant 0 : index
    %c0_44 = arith.constant 0 : index
    %44 = vector.load %arg8[%c0_42, %c0_43, %c0_44] : memref<8x18x8xf32, #tpu.memory_space<vmem>>, vector<8x18x8xf32>
    tpu.vector_store %arg8[%c0_42, %c0_43, %c0_44], %43 {strides = array<i32>} : memref<8x18x8xf32, #tpu.memory_space<vmem>>, vector<8x18x8xf32>,
    %c0_45 = arith.constant 0 : index
    %c0_46 = arith.constant 0 : index
    %c0_47 = arith.constant 0 : index
    %45 = vector.load %arg8[%c0_45, %c0_46, %c0_47] : memref<8x18x8xf32, #tpu.memory_space<vmem>>, vector<8x16x8xf32>
    %c0_48 = arith.constant 0 : index
    %c1_49 = arith.constant 1 : index
    %c0_50 = arith.constant 0 : index
    %46 = vector.load %arg8[%c0_48, %c1_49, %c0_50] : memref<8x18x8xf32, #tpu.memory_space<vmem>>, vector<8x16x8xf32>
    %47 = arith.maximumf %45, %46 : vector<8x16x8xf32>
    %c0_51 = arith.constant 0 : index
    %c2_52 = arith.constant 2 : index
    %c0_53 = arith.constant 0 : index
    %48 = vector.load %arg8[%c0_51, %c2_52, %c0_53] : memref<8x18x8xf32, #tpu.memory_space<vmem>>, vector<8x16x8xf32>
    %49 = arith.maximumf %47, %48 : vector<8x16x8xf32>
    %50 = arith.truncf %49 : vector<8x16x8xf32> to vector<8x16x8xbf16>
    %c0_54 = arith.constant 0 : index
    %c0_55 = arith.constant 0 : index
    %c0_56 = arith.constant 0 : index
    %c0_57 = arith.constant 0 : index
    %51 = vector.load %arg5[%c0_54, %c0_55, %c0_56, %c0_57] : memref<1x8x16x8xbf16, #tpu.memory_space<vmem>>, vector<1x8x16x8xbf16>
    %52 = vector.shape_cast %51 : vector<1x8x16x8xbf16> to vector<8x16x8xbf16>
    %53 = vector.shape_cast %50 : vector<8x16x8xbf16> to vector<1x8x16x8xbf16>
    tpu.vector_store %arg5[%c0_54, %c0_55, %c0_56, %c0_57], %53 {strides = array<i32>} : memref<1x8x16x8xbf16, #tpu.memory_space<vmem>>, vector<1x8x16x8xbf16>,
    return
  }
  func.func @transform_0(%arg0: i32, %arg1: i32) -> (i32, i32, i32) {
    %c2_i32 = arith.constant 2 : i32
    %0 = arith.muli %arg1, %c2_i32 : i32
    %1 = arith.addi %0, %arg0 : i32
    %c0_i32 = arith.constant 0 : i32
    %c0_i32_0 = arith.constant 0 : i32
    %c0_i32_1 = arith.constant 0 : i32
    return %1, %c0_i32, %c0_i32_0 : i32, i32, i32
  }
  func.func @transform_1(%arg0: i32, %arg1: i32) -> (i32, i32, i32) {
    %c0_i32 = arith.constant 0 : i32
    %c0_i32_0 = arith.constant 0 : i32
    %c0_i32_1 = arith.constant 0 : i32
    %c0_i32_2 = arith.constant 0 : i32
    return %c0_i32, %c0_i32_0, %c0_i32_1 : i32, i32, i32
  }
  func.func @transform_2(%arg0: i32, %arg1: i32) -> (i32, i32) {
    %c0_i32 = arith.constant 0 : i32
    %c0_i32_0 = arith.constant 0 : i32
    %c0_i32_1 = arith.constant 0 : i32
    return %c0_i32, %c0_i32_0 : i32, i32
  }
  func.func @transform_3(%arg0: i32, %arg1: i32) -> (i32, i32, i32, i32) {
    %c2_i32 = arith.constant 2 : i32
    %0 = arith.muli %arg1, %c2_i32 : i32
    %1 = arith.addi %0, %arg0 : i32
    %c0_i32 = arith.constant 0 : i32
    %c0_i32_0 = arith.constant 0 : i32
    %c0_i32_1 = arith.constant 0 : i32
    %c0_i32_2 = arith.constant 0 : i32
    return %1, %c0_i32, %c0_i32_0, %c0_i32_1 : i32, i32, i32, i32
  }
}

module attributes {stable_mosaic.version = 11 : i64} {
  func.func @_stage_kernel(%arg0: i32, %arg1: i32, %arg2: memref<1x80x24xbf16, #tpu.memory_space<vmem>>, %arg3: memref<3x24x16xbf16, #tpu.memory_space<vmem>>, %arg4: memref<1x16xf32, #tpu.memory_space<vmem>>, %arg5: memref<1x4x8x16xbf16, #tpu.memory_space<vmem>>, %arg6: memref<8x8x16xf32, #tpu.memory_space<vmem>>, %arg7: memref<10x10x16xf32, #tpu.memory_space<vmem>>, %arg8: memref<4x10x16xf32, #tpu.memory_space<vmem>>) attributes {dimension_semantics = [#tpu.dimension_semantics<parallel>, #tpu.dimension_semantics<arbitrary>], iteration_bounds = array<i64: 2, 2>, scalar_prefetch = 0 : i64, scratch_operands = 3 : i64, tpu.core_type = #tpu.core_type<tc>, window_params = [{transform_indices = @transform_0, window_bounds = array<i64: 1, 80, 24>}, {pipeline_mode = #tpu.pipeline_mode<synchronous>, transform_indices = @transform_1, window_bounds = array<i64: 3, 24, 16>}, {pipeline_mode = #tpu.pipeline_mode<synchronous>, transform_indices = @transform_2, window_bounds = array<i64: 1, 16>}, {transform_indices = @transform_3, window_bounds = array<i64: 1, 4, 8, 16>}]} {
    %c0_i32 = arith.constant 0 : i32
    %0 = arith.cmpi eq, %arg1, %c0_i32 : i32
    %1 = arith.extui %0 : i1 to i32
    %c0_i32_0 = arith.constant 0 : i32
    %2 = arith.cmpi ne, %1, %c0_i32_0 : i32
    scf.if %2 {
      %cst_58 = arith.constant 0.000000e+00 : f32
      %54 = vector.broadcast %cst_58 : f32 to vector<8x8x16xf32>
      %c0_59 = arith.constant 0 : index
      %c0_60 = arith.constant 0 : index
      %c0_61 = arith.constant 0 : index
      %55 = vector.load %arg6[%c0_59, %c0_60, %c0_61] : memref<8x8x16xf32, #tpu.memory_space<vmem>>, vector<8x8x16xf32>
      tpu.vector_store %arg6[%c0_59, %c0_60, %c0_61], %54 {strides = array<i32>} : memref<8x8x16xf32, #tpu.memory_space<vmem>>, vector<8x8x16xf32>,
      %cst_62 = arith.constant 0.000000e+00 : f32
      %56 = vector.broadcast %cst_62 : f32 to vector<10x10x16xf32>
      %c0_63 = arith.constant 0 : index
      %c0_64 = arith.constant 0 : index
      %c0_65 = arith.constant 0 : index
      %57 = vector.load %arg7[%c0_63, %c0_64, %c0_65] : memref<10x10x16xf32, #tpu.memory_space<vmem>>, vector<10x10x16xf32>
      tpu.vector_store %arg7[%c0_63, %c0_64, %c0_65], %56 {strides = array<i32>} : memref<10x10x16xf32, #tpu.memory_space<vmem>>, vector<10x10x16xf32>,
    } else {
    }
    %c0 = arith.constant 0 : index
    %c0_1 = arith.constant 0 : index
    %c0_2 = arith.constant 0 : index
    %3 = vector.load %arg2[%c0, %c0_1, %c0_2] : memref<1x80x24xbf16, #tpu.memory_space<vmem>>, vector<1x64x24xbf16>
    %4 = vector.shape_cast %3 : vector<1x64x24xbf16> to vector<64x24xbf16>
    %c0_3 = arith.constant 0 : index
    %c0_4 = arith.constant 0 : index
    %c0_5 = arith.constant 0 : index
    %5 = vector.load %arg3[%c0_3, %c0_4, %c0_5] : memref<3x24x16xbf16, #tpu.memory_space<vmem>>, vector<1x24x16xbf16>
    %6 = vector.shape_cast %5 : vector<1x24x16xbf16> to vector<24x16xbf16>
    %cst = arith.constant dense<0.000000e+00> : vector<64x16xf32>
    %7 = tpu.matmul %4, %6, %cst {dimension_numbers = #tpu.dot_dimension_numbers<[1], [0], [0], [1], [0, 0, 1, 1], [], []>} : vector<64x24xbf16>, vector<24x16xbf16>, vector<64x16xf32> -> vector<64x16xf32>
    %c0_6 = arith.constant 0 : index
    %c8 = arith.constant 8 : index
    %c0_7 = arith.constant 0 : index
    %8 = vector.load %arg2[%c0_6, %c8, %c0_7] : memref<1x80x24xbf16, #tpu.memory_space<vmem>>, vector<1x64x24xbf16>
    %9 = vector.shape_cast %8 : vector<1x64x24xbf16> to vector<64x24xbf16>
    %c1 = arith.constant 1 : index
    %c0_8 = arith.constant 0 : index
    %c0_9 = arith.constant 0 : index
    %10 = vector.load %arg3[%c1, %c0_8, %c0_9] : memref<3x24x16xbf16, #tpu.memory_space<vmem>>, vector<1x24x16xbf16>
    %11 = vector.shape_cast %10 : vector<1x24x16xbf16> to vector<24x16xbf16>
    %cst_10 = arith.constant dense<0.000000e+00> : vector<64x16xf32>
    %12 = tpu.matmul %9, %11, %cst_10 {dimension_numbers = #tpu.dot_dimension_numbers<[1], [0], [0], [1], [0, 0, 1, 1], [], []>} : vector<64x24xbf16>, vector<24x16xbf16>, vector<64x16xf32> -> vector<64x16xf32>
    %13 = arith.addf %7, %12 : vector<64x16xf32>
    %c0_11 = arith.constant 0 : index
    %c16 = arith.constant 16 : index
    %c0_12 = arith.constant 0 : index
    %14 = vector.load %arg2[%c0_11, %c16, %c0_12] : memref<1x80x24xbf16, #tpu.memory_space<vmem>>, vector<1x64x24xbf16>
    %15 = vector.shape_cast %14 : vector<1x64x24xbf16> to vector<64x24xbf16>
    %c2 = arith.constant 2 : index
    %c0_13 = arith.constant 0 : index
    %c0_14 = arith.constant 0 : index
    %16 = vector.load %arg3[%c2, %c0_13, %c0_14] : memref<3x24x16xbf16, #tpu.memory_space<vmem>>, vector<1x24x16xbf16>
    %17 = vector.shape_cast %16 : vector<1x24x16xbf16> to vector<24x16xbf16>
    %cst_15 = arith.constant dense<0.000000e+00> : vector<64x16xf32>
    %18 = tpu.matmul %15, %17, %cst_15 {dimension_numbers = #tpu.dot_dimension_numbers<[1], [0], [0], [1], [0, 0, 1, 1], [], []>} : vector<64x24xbf16>, vector<24x16xbf16>, vector<64x16xf32> -> vector<64x16xf32>
    %19 = arith.addf %13, %18 : vector<64x16xf32>
    %c0_16 = arith.constant 0 : index
    %c0_17 = arith.constant 0 : index
    %20 = vector.load %arg4[%c0_16, %c0_17] : memref<1x16xf32, #tpu.memory_space<vmem>>, vector<1x16xf32>
    %21 = vector.broadcast %20 : vector<1x16xf32> to vector<64x16xf32>
    %22 = arith.addf %19, %21 : vector<64x16xf32>
    %23 = vector.shape_cast %22 : vector<64x16xf32> to vector<8x8x16xf32>
    %c0_18 = arith.constant 0 : index
    %c0_19 = arith.constant 0 : index
    %c0_20 = arith.constant 0 : index
    %24 = vector.load %arg6[%c0_18, %c0_19, %c0_20] : memref<8x8x16xf32, #tpu.memory_space<vmem>>, vector<8x8x16xf32>
    %c0_21 = arith.constant 0 : index
    %c0_22 = arith.constant 0 : index
    %c0_23 = arith.constant 0 : index
    %25 = vector.load %arg6[%c0_21, %c0_22, %c0_23] : memref<8x8x16xf32, #tpu.memory_space<vmem>>, vector<8x8x16xf32>
    %26 = arith.subf %23, %25 : vector<8x8x16xf32>
    %cst_24 = arith.constant 0.666666686 : f32
    %27 = vector.broadcast %cst_24 : f32 to vector<8x8x16xf32>
    %28 = arith.mulf %26, %27 : vector<8x8x16xf32>
    %29 = arith.addf %24, %28 : vector<8x8x16xf32>
    %cst_25 = arith.constant 1.000000e+00 : f32
    %30 = vector.broadcast %cst_25 : f32 to vector<8x8x16xf32>
    %31 = arith.cmpf oge, %29, %30 : vector<8x8x16xf32>
    %32 = arith.extui %31 : vector<8x8x16xi1> to vector<8x8x16xi32>
    %33 = arith.sitofp %32 : vector<8x8x16xi32> to vector<8x8x16xf32>
    %cst_26 = arith.constant 1.000000e+00 : f32
    %34 = vector.broadcast %cst_26 : f32 to vector<8x8x16xf32>
    %35 = arith.subf %34, %33 : vector<8x8x16xf32>
    %36 = arith.mulf %29, %35 : vector<8x8x16xf32>
    %c0_27 = arith.constant 0 : index
    %c0_28 = arith.constant 0 : index
    %c0_29 = arith.constant 0 : index
    %37 = vector.load %arg6[%c0_27, %c0_28, %c0_29] : memref<8x8x16xf32, #tpu.memory_space<vmem>>, vector<8x8x16xf32>
    tpu.vector_store %arg6[%c0_27, %c0_28, %c0_29], %36 {strides = array<i32>} : memref<8x8x16xf32, #tpu.memory_space<vmem>>, vector<8x8x16xf32>,
    %c1_30 = arith.constant 1 : index
    %c1_31 = arith.constant 1 : index
    %c0_32 = arith.constant 0 : index
    %38 = vector.load %arg7[%c1_30, %c1_31, %c0_32] : memref<10x10x16xf32, #tpu.memory_space<vmem>>, vector<8x8x16xf32>
    tpu.vector_store %arg7[%c1_30, %c1_31, %c0_32], %33 {strides = array<i32>} : memref<10x10x16xf32, #tpu.memory_space<vmem>>, vector<8x8x16xf32>,
    %c0_33 = arith.constant 0 : index
    %c0_34 = arith.constant 0 : index
    %c0_35 = arith.constant 0 : index
    %39 = tpu.strided_load %arg7[%c0_33, %c0_34, %c0_35] {strides = array<i32: 2, 1, 1>} : memref<10x10x16xf32, #tpu.memory_space<vmem>>, vector<4x10x16xf32>
    %c1_36 = arith.constant 1 : index
    %c0_37 = arith.constant 0 : index
    %c0_38 = arith.constant 0 : index
    %40 = tpu.strided_load %arg7[%c1_36, %c0_37, %c0_38] {strides = array<i32: 2, 1, 1>} : memref<10x10x16xf32, #tpu.memory_space<vmem>>, vector<4x10x16xf32>
    %41 = arith.maximumf %39, %40 : vector<4x10x16xf32>
    %c2_39 = arith.constant 2 : index
    %c0_40 = arith.constant 0 : index
    %c0_41 = arith.constant 0 : index
    %42 = tpu.strided_load %arg7[%c2_39, %c0_40, %c0_41] {strides = array<i32: 2, 1, 1>} : memref<10x10x16xf32, #tpu.memory_space<vmem>>, vector<4x10x16xf32>
    %43 = arith.maximumf %41, %42 : vector<4x10x16xf32>
    %c0_42 = arith.constant 0 : index
    %c0_43 = arith.constant 0 : index
    %c0_44 = arith.constant 0 : index
    %44 = vector.load %arg8[%c0_42, %c0_43, %c0_44] : memref<4x10x16xf32, #tpu.memory_space<vmem>>, vector<4x10x16xf32>
    tpu.vector_store %arg8[%c0_42, %c0_43, %c0_44], %43 {strides = array<i32>} : memref<4x10x16xf32, #tpu.memory_space<vmem>>, vector<4x10x16xf32>,
    %c0_45 = arith.constant 0 : index
    %c0_46 = arith.constant 0 : index
    %c0_47 = arith.constant 0 : index
    %45 = vector.load %arg8[%c0_45, %c0_46, %c0_47] : memref<4x10x16xf32, #tpu.memory_space<vmem>>, vector<4x8x16xf32>
    %c0_48 = arith.constant 0 : index
    %c1_49 = arith.constant 1 : index
    %c0_50 = arith.constant 0 : index
    %46 = vector.load %arg8[%c0_48, %c1_49, %c0_50] : memref<4x10x16xf32, #tpu.memory_space<vmem>>, vector<4x8x16xf32>
    %47 = arith.maximumf %45, %46 : vector<4x8x16xf32>
    %c0_51 = arith.constant 0 : index
    %c2_52 = arith.constant 2 : index
    %c0_53 = arith.constant 0 : index
    %48 = vector.load %arg8[%c0_51, %c2_52, %c0_53] : memref<4x10x16xf32, #tpu.memory_space<vmem>>, vector<4x8x16xf32>
    %49 = arith.maximumf %47, %48 : vector<4x8x16xf32>
    %50 = arith.truncf %49 : vector<4x8x16xf32> to vector<4x8x16xbf16>
    %c0_54 = arith.constant 0 : index
    %c0_55 = arith.constant 0 : index
    %c0_56 = arith.constant 0 : index
    %c0_57 = arith.constant 0 : index
    %51 = vector.load %arg5[%c0_54, %c0_55, %c0_56, %c0_57] : memref<1x4x8x16xbf16, #tpu.memory_space<vmem>>, vector<1x4x8x16xbf16>
    %52 = vector.shape_cast %51 : vector<1x4x8x16xbf16> to vector<4x8x16xbf16>
    %53 = vector.shape_cast %50 : vector<4x8x16xbf16> to vector<1x4x8x16xbf16>
    tpu.vector_store %arg5[%c0_54, %c0_55, %c0_56, %c0_57], %53 {strides = array<i32>} : memref<1x4x8x16xbf16, #tpu.memory_space<vmem>>, vector<1x4x8x16xbf16>,
    return
  }
  func.func @transform_0(%arg0: i32, %arg1: i32) -> (i32, i32, i32) {
    %c2_i32 = arith.constant 2 : i32
    %0 = arith.muli %arg1, %c2_i32 : i32
    %1 = arith.addi %0, %arg0 : i32
    %c0_i32 = arith.constant 0 : i32
    %c0_i32_0 = arith.constant 0 : i32
    %c0_i32_1 = arith.constant 0 : i32
    return %1, %c0_i32, %c0_i32_0 : i32, i32, i32
  }
  func.func @transform_1(%arg0: i32, %arg1: i32) -> (i32, i32, i32) {
    %c0_i32 = arith.constant 0 : i32
    %c0_i32_0 = arith.constant 0 : i32
    %c0_i32_1 = arith.constant 0 : i32
    %c0_i32_2 = arith.constant 0 : i32
    return %c0_i32, %c0_i32_0, %c0_i32_1 : i32, i32, i32
  }
  func.func @transform_2(%arg0: i32, %arg1: i32) -> (i32, i32) {
    %c0_i32 = arith.constant 0 : i32
    %c0_i32_0 = arith.constant 0 : i32
    %c0_i32_1 = arith.constant 0 : i32
    return %c0_i32, %c0_i32_0 : i32, i32
  }
  func.func @transform_3(%arg0: i32, %arg1: i32) -> (i32, i32, i32, i32) {
    %c2_i32 = arith.constant 2 : i32
    %0 = arith.muli %arg1, %c2_i32 : i32
    %1 = arith.addi %0, %arg0 : i32
    %c0_i32 = arith.constant 0 : i32
    %c0_i32_0 = arith.constant 0 : i32
    %c0_i32_1 = arith.constant 0 : i32
    %c0_i32_2 = arith.constant 0 : i32
    return %1, %c0_i32, %c0_i32_0, %c0_i32_1 : i32, i32, i32, i32
  }
}

module attributes {stable_mosaic.version = 11 : i64} {
  func.func @_conv_bn_kernel(%arg0: i32, %arg1: memref<1x24x48xbf16, #tpu.memory_space<vmem>>, %arg2: memref<3x48x32xbf16, #tpu.memory_space<vmem>>, %arg3: memref<1x32xf32, #tpu.memory_space<vmem>>, %arg4: memref<1x16x32xf32, #tpu.memory_space<vmem>>) attributes {dimension_semantics = [#tpu.dimension_semantics<parallel>], iteration_bounds = array<i64: 4>, scalar_prefetch = 0 : i64, scratch_operands = 0 : i64, tpu.core_type = #tpu.core_type<tc>, window_params = [{transform_indices = @transform_0, window_bounds = array<i64: 1, 24, 48>}, {pipeline_mode = #tpu.pipeline_mode<synchronous>, transform_indices = @transform_1, window_bounds = array<i64: 3, 48, 32>}, {pipeline_mode = #tpu.pipeline_mode<synchronous>, transform_indices = @transform_2, window_bounds = array<i64: 1, 32>}, {transform_indices = @transform_3, window_bounds = array<i64: 1, 16, 32>}]} {
    %c0 = arith.constant 0 : index
    %c0_0 = arith.constant 0 : index
    %c0_1 = arith.constant 0 : index
    %0 = vector.load %arg1[%c0, %c0_0, %c0_1] : memref<1x24x48xbf16, #tpu.memory_space<vmem>>, vector<1x16x48xbf16>
    %1 = vector.shape_cast %0 : vector<1x16x48xbf16> to vector<16x48xbf16>
    %c0_2 = arith.constant 0 : index
    %c0_3 = arith.constant 0 : index
    %c0_4 = arith.constant 0 : index
    %2 = vector.load %arg2[%c0_2, %c0_3, %c0_4] : memref<3x48x32xbf16, #tpu.memory_space<vmem>>, vector<1x48x32xbf16>
    %3 = vector.shape_cast %2 : vector<1x48x32xbf16> to vector<48x32xbf16>
    %cst = arith.constant dense<0.000000e+00> : vector<16x32xf32>
    %4 = tpu.matmul %1, %3, %cst {dimension_numbers = #tpu.dot_dimension_numbers<[1], [0], [0], [1], [0, 0, 1, 1], [], []>} : vector<16x48xbf16>, vector<48x32xbf16>, vector<16x32xf32> -> vector<16x32xf32>
    %c0_5 = arith.constant 0 : index
    %c4 = arith.constant 4 : index
    %c0_6 = arith.constant 0 : index
    %5 = vector.load %arg1[%c0_5, %c4, %c0_6] : memref<1x24x48xbf16, #tpu.memory_space<vmem>>, vector<1x16x48xbf16>
    %6 = vector.shape_cast %5 : vector<1x16x48xbf16> to vector<16x48xbf16>
    %c1 = arith.constant 1 : index
    %c0_7 = arith.constant 0 : index
    %c0_8 = arith.constant 0 : index
    %7 = vector.load %arg2[%c1, %c0_7, %c0_8] : memref<3x48x32xbf16, #tpu.memory_space<vmem>>, vector<1x48x32xbf16>
    %8 = vector.shape_cast %7 : vector<1x48x32xbf16> to vector<48x32xbf16>
    %cst_9 = arith.constant dense<0.000000e+00> : vector<16x32xf32>
    %9 = tpu.matmul %6, %8, %cst_9 {dimension_numbers = #tpu.dot_dimension_numbers<[1], [0], [0], [1], [0, 0, 1, 1], [], []>} : vector<16x48xbf16>, vector<48x32xbf16>, vector<16x32xf32> -> vector<16x32xf32>
    %10 = arith.addf %4, %9 : vector<16x32xf32>
    %c0_10 = arith.constant 0 : index
    %c8 = arith.constant 8 : index
    %c0_11 = arith.constant 0 : index
    %11 = vector.load %arg1[%c0_10, %c8, %c0_11] : memref<1x24x48xbf16, #tpu.memory_space<vmem>>, vector<1x16x48xbf16>
    %12 = vector.shape_cast %11 : vector<1x16x48xbf16> to vector<16x48xbf16>
    %c2 = arith.constant 2 : index
    %c0_12 = arith.constant 0 : index
    %c0_13 = arith.constant 0 : index
    %13 = vector.load %arg2[%c2, %c0_12, %c0_13] : memref<3x48x32xbf16, #tpu.memory_space<vmem>>, vector<1x48x32xbf16>
    %14 = vector.shape_cast %13 : vector<1x48x32xbf16> to vector<48x32xbf16>
    %cst_14 = arith.constant dense<0.000000e+00> : vector<16x32xf32>
    %15 = tpu.matmul %12, %14, %cst_14 {dimension_numbers = #tpu.dot_dimension_numbers<[1], [0], [0], [1], [0, 0, 1, 1], [], []>} : vector<16x48xbf16>, vector<48x32xbf16>, vector<16x32xf32> -> vector<16x32xf32>
    %16 = arith.addf %10, %15 : vector<16x32xf32>
    %c0_15 = arith.constant 0 : index
    %c0_16 = arith.constant 0 : index
    %17 = vector.load %arg3[%c0_15, %c0_16] : memref<1x32xf32, #tpu.memory_space<vmem>>, vector<1x32xf32>
    %18 = vector.broadcast %17 : vector<1x32xf32> to vector<16x32xf32>
    %19 = arith.addf %16, %18 : vector<16x32xf32>
    %c0_17 = arith.constant 0 : index
    %c0_18 = arith.constant 0 : index
    %c0_19 = arith.constant 0 : index
    %20 = vector.load %arg4[%c0_17, %c0_18, %c0_19] : memref<1x16x32xf32, #tpu.memory_space<vmem>>, vector<1x16x32xf32>
    %21 = vector.shape_cast %20 : vector<1x16x32xf32> to vector<16x32xf32>
    %22 = vector.shape_cast %19 : vector<16x32xf32> to vector<1x16x32xf32>
    tpu.vector_store %arg4[%c0_17, %c0_18, %c0_19], %22 {strides = array<i32>} : memref<1x16x32xf32, #tpu.memory_space<vmem>>, vector<1x16x32xf32>,
    return
  }
  func.func @transform_0(%arg0: i32) -> (i32, i32, i32) {
    %c0_i32 = arith.constant 0 : i32
    %c0_i32_0 = arith.constant 0 : i32
    %c0_i32_1 = arith.constant 0 : i32
    return %arg0, %c0_i32, %c0_i32_0 : i32, i32, i32
  }
  func.func @transform_1(%arg0: i32) -> (i32, i32, i32) {
    %c0_i32 = arith.constant 0 : i32
    %c0_i32_0 = arith.constant 0 : i32
    %c0_i32_1 = arith.constant 0 : i32
    %c0_i32_2 = arith.constant 0 : i32
    return %c0_i32, %c0_i32_0, %c0_i32_1 : i32, i32, i32
  }
  func.func @transform_2(%arg0: i32) -> (i32, i32) {
    %c0_i32 = arith.constant 0 : i32
    %c0_i32_0 = arith.constant 0 : i32
    %c0_i32_1 = arith.constant 0 : i32
    return %c0_i32, %c0_i32_0 : i32, i32
  }
  func.func @transform_3(%arg0: i32) -> (i32, i32, i32) {
    %c0_i32 = arith.constant 0 : i32
    %c0_i32_0 = arith.constant 0 : i32
    %c0_i32_1 = arith.constant 0 : i32
    return %arg0, %c0_i32, %c0_i32_0 : i32, i32, i32
  }
}

</mosaic_0001>

<llo_original>
// kernel: spiking_tokenizer.5
$region0: #{spiking_tokenizer.5}
  #allocation0 [shape = 'u32[]', space=smem, size = 0x4, offset = 0x4, fixed_abs, tag = 'smem constant byte address 0x4 - core index']
  #allocation1 [shape = 'u32[144,128]{1,0:T(1,128)}', space=vmem, size = 0x12000, scoped, tag = 'internal scratch']
  #allocation2 [shape = 'f32[16,16,8]{2,1,0:T(8,128)}', space=vmem, size = 0x20000, scoped, tag = 'scratch operand']
  #allocation3 [shape = 'f32[18,18,8]{2,1,0:T(8,128)}', space=vmem, size = 0x36000, scoped, tag = 'scratch operand']
  #allocation4 [shape = 'f32[8,18,8]{2,1,0:T(8,128)}', space=vmem, size = 0x18000, scoped, tag = 'scratch operand']
  %s0 = inlined_call_operand.vmem [shape: bf16[4,288,12], index: 0, kind: input, shape index: {}]
  %s1 = inlined_call_operand.vmem [shape: bf16[3,12,8], index: 1, kind: input, shape index: {}]
  %s2 = inlined_call_operand.vmem [shape: f32[1,8], index: 2, kind: input, shape index: {}]
  %s3 = inlined_call_operand.vmem [shape: bf16[4,8,16,8], index: 3, kind: output, shape index: {}]
  %s4 = sld [smem:[#allocation0]]
  $region49: #{spiking_tokenizer.5} parent=0
    _
  %s6 = ssub.s32 1, %s4
  %s7 = scalar_select 0, %s6, %s4
  loop: start=0, step=1, limit=6
  $region2: #{spiking_tokenizer.5} parent=0 // loop_pre_header
    _
  $region3: #{spiking_tokenizer.5} parent=0 // loop_header
    %s9 = sphi 0, %s13
    %p10 = scmp.ge.s32.totalorder %s9, 6
    %s16 = sphi 0, %s28
    %s17 = sphi 0, %s24
    %s18 = sphi 0, %s16
    %s19 = sphi 0, %s17
    %s20 = sphi 0, %s18
    %s21 = sphi 0, %s19
    %s35 = sphi 0, %s37
    %s38 = sphi 0, %s35
    %s39 = sphi 0, %s38
    %s55 = sphi 0, %s39
    %s59 = sphi 0, %s59
    %s61 = sphi 0, %s59
    %s62 = sphi 0, %s61
    %s76 = sphi 0, %s62
    %s80 = sphi 0, %s80
    %s82 = sphi 0, %s80
    %s83 = sphi 0, %s82
    %s97 = sphi 0, %s83
    %s107 = sphi 0, %s109
    %s110 = sphi 0, %s107
    %s111 = sphi 0, %s110
    %s127 = sphi 0, %s111
  $region4: #{spiking_tokenizer.5} parent=0 // loop_header_branch
    %12 = sbr.rel (%p10) target = $region8
  $region5: #{spiking_tokenizer.5} parent=0 // loop_body
    %s14 = ssub.s32 %s9, 1
    %s15 = ssub.s32 %s9, 2
    %s22 = sadd.s32 1, %s17
    %p23 = scmp.ge.s32.totalorder %s22, 2
    %s24 = scalar_select %p23, 0, %s22
    %s25 = sadd.s32 1, %s16
    %s26 = scalar_select %p23, %s25, %s16
    %p27 = scmp.ge.s32.totalorder %s26, 2
    %s28 = scalar_select %p27, 0, %s26
    %s29 = smul.u32 %s17, 2
    %s30 = sadd.s32 %s29, %s16
    %s31 = smul.u32 %s24, 2
    %s32 = sadd.s32 %s31, %s28
    %s33 = ssub.s32 %s30, %s32
    %p34 = scmp.eq.s32.totalorder %s33, 0
    %s36 = sadd.s32 %s35, 1
    %s37 = scalar_select %p34, %s35, %s36
    %p40 = pneg %p34
    %p41 = scmp.eq.s32.totalorder %s9, 3
    %p42 = por %p40, %p41
    %p43 = scmp.ne.s32.totalorder %s35, %s38
    %p44 = scmp.eq.s32.totalorder %s9, 0
    %p45 = por %p43, %p44
    %p46 = scmp.ne.s32.totalorder %s35, %s38
    %p47 = scmp.eq.s32.totalorder %s14, 3
    %p48 = por %p46, %p47
    %p49 = scmp.ne.s32.totalorder %s38, %s39
    %p50 = scmp.eq.s32.totalorder %s14, 0
    %p51 = por %p49, %p50
    %p52 = scmp.ne.s32.totalorder %s38, %s39
    %p53 = scmp.eq.s32.totalorder %s15, 3
    %p54 = por %p52, %p53
    %p56 = scmp.ne.s32.totalorder %s39, %s55
    %p57 = scmp.eq.s32.totalorder %s15, 0
    %p58 = por %p56, %p57
    %s60 = sadd.s32 %s59, 1
    %p63 = scmp.eq.s32.totalorder %s9, 3
    %p64 = scmp.ne.s32.totalorder %s59, %s61
    %p65 = scmp.eq.s32.totalorder %s9, 0
    %p66 = por %p64, %p65
    %p67 = scmp.ne.s32.totalorder %s59, %s61
    %p68 = scmp.eq.s32.totalorder %s14, 3
    %p69 = por %p67, %p68
    %p70 = scmp.ne.s32.totalorder %s61, %s62
    %p71 = scmp.eq.s32.totalorder %s14, 0
    %p72 = por %p70, %p71
    %p73 = scmp.ne.s32.totalorder %s61, %s62
    %p74 = scmp.eq.s32.totalorder %s15, 3
    %p75 = por %p73, %p74
    %p77 = scmp.ne.s32.totalorder %s62, %s76
    %p78 = scmp.eq.s32.totalorder %s15, 0
    %p79 = por %p77, %p78
    %s81 = sadd.s32 %s80, 1
    %p84 = scmp.eq.s32.totalorder %s9, 3
    %p85 = scmp.ne.s32.totalorder %s80, %s82
    %p86 = scmp.eq.s32.totalorder %s9, 0
    %p87 = por %p85, %p86
    %p88 = scmp.ne.s32.totalorder %s80, %s82
    %p89 = scmp.eq.s32.totalorder %s14, 3
    %p90 = por %p88, %p89
    %p91 = scmp.ne.s32.totalorder %s82, %s83
    %p92 = scmp.eq.s32.totalorder %s14, 0
    %p93 = por %p91, %p92
    %p94 = scmp.ne.s32.totalorder %s82, %s83
    %p95 = scmp.eq.s32.totalorder %s15, 3
    %p96 = por %p94, %p95
    %p98 = scmp.ne.s32.totalorder %s83, %s97
    %p99 = scmp.eq.s32.totalorder %s15, 0
    %p100 = por %p98, %p99
    %s101 = smul.u32 %s17, 2
    %s102 = sadd.s32 %s101, %s16
    %s103 = smul.u32 %s24, 2
    %s104 = sadd.s32 %s103, %s28
    %s105 = ssub.s32 %s102, %s104
    %p106 = scmp.eq.s32.totalorder %s105, 0
    %s108 = sadd.s32 %s107, 1
    %s109 = scalar_select %p106, %s107, %s108
    %p112 = pneg %p106
    %p113 = scmp.eq.s32.totalorder %s9, 3
    %p114 = por %p112, %p113
    %p115 = scmp.ne.s32.totalorder %s107, %s110
    %p116 = scmp.eq.s32.totalorder %s9, 0
    %p117 = por %p115, %p116
    %p118 = scmp.ne.s32.totalorder %s107, %s110
    %p119 = scmp.eq.s32.totalorder %s14, 3
    %p120 = por %p118, %p119
    %p121 = scmp.ne.s32.totalorder %s110, %s111
    %p122 = scmp.eq.s32.totalorder %s14, 0
    %p123 = por %p121, %p122
    %p124 = scmp.ne.s32.totalorder %s110, %s111
    %p125 = scmp.eq.s32.totalorder %s15, 3
    %p126 = por %p124, %p125
    %p128 = scmp.ne.s32.totalorder %s111, %s127
    %p129 = scmp.eq.s32.totalorder %s15, 0
    %p130 = por %p128, %p129
    %p131 = scmp.le.s32.totalorder 1, %s9
    %p132 = scmp.lt.s32.totalorder %s9, 5
    %p133 = pnand %p131, %p132
    %p134 = pneg %p133
    // Predicated region
    $region9: #{spiking_tokenizer.5} parent=5 // pred_check
      _
    $region10: #{spiking_tokenizer.5} parent=5 // pred_check_branch
      %136 = sbr.rel (%p133) target = $region12
    $region11: #{spiking_tokenizer.5} parent=5 // pred_region
      %s137 = ssub.s32 %s9, 1
      // Predicated region
      $region13: #{spiking_tokenizer.5} parent=11 // pred_check
        %p138 = pneg %p72
      $region14: #{spiking_tokenizer.5} parent=11 // pred_check_branch
        %140 = sbr.rel (%p138) target = $region16
      $region15: #{spiking_tokenizer.5} parent=11 // pred_region
        _
      $region16: #{spiking_tokenizer.5} parent=11 // pred_fallthru
        _
      // Predicated region
      $region17: #{spiking_tokenizer.5} parent=11 // pred_check
        %p141 = pneg %p93
      $region18: #{spiking_tokenizer.5} parent=11 // pred_check_branch
        %143 = sbr.rel (%p141) target = $region20
      $region19: #{spiking_tokenizer.5} parent=11 // pred_region
        _
      $region20: #{spiking_tokenizer.5} parent=11 // pred_fallthru
        _
    $region12: #{spiking_tokenizer.5} parent=5 // pred_fallthru
      _
    %p144 = scmp.lt.s32.totalorder %s9, 4
    // Predicated region
    $region21: #{spiking_tokenizer.5} parent=5 // pred_check
      %p145 = pneg %p144
    $region22: #{spiking_tokenizer.5} parent=5 // pred_check_branch
      %147 = sbr.rel (%p145) target = $region24
    $region23: #{spiking_tokenizer.5} parent=5 // pred_region
      // Predicated region
      $region25: #{spiking_tokenizer.5} parent=23 // pred_check
        %p148 = pneg %p45
      $region26: #{spiking_tokenizer.5} parent=23 // pred_check_branch
        %150 = sbr.rel (%p148) target = $region28
      $region27: #{spiking_tokenizer.5} parent=23 // pred_region
        %s151 = smul.u32 %s17, 2
        %s152 = sadd.s32 %s151, %s16
        %p153 = scmp.lt.s32.totalorder %s152, 3
        %s154 = scalar_select %p153, %s152, 3
        %s155 = smul.addr %s154, 36
        %s156 = smul.addr %s155, 4
        %s157 = scalar_lea.vmem %s0, %s156
        %s158 = smul.u32 %s17, 2
        %s159 = sadd.s32 %s158, %s16
      $region28: #{spiking_tokenizer.5} parent=23 // pred_fallthru
        _
    $region24: #{spiking_tokenizer.5} parent=5 // pred_fallthru
      _
    %p160 = scmp.le.s32.totalorder 1, %s9
    %p161 = scmp.lt.s32.totalorder %s9, 5
    %p162 = pnand %p160, %p161
    %p163 = pneg %p162
    // Predicated region
    $region29: #{spiking_tokenizer.5} parent=5 // pred_check
      _
    $region30: #{spiking_tokenizer.5} parent=5 // pred_check_branch
      %165 = sbr.rel (%p162) target = $region32
    $region31: #{spiking_tokenizer.5} parent=5 // pred_region
      %s166 = ssub.s32 %s9, 1
      %s167 = smul.u32 %s19, 2
      %s168 = sadd.s32 %s167, %s18
      %p169 = scmp.lt.s32.totalorder %s168, 3
      %s170 = scalar_select %p169, %s168, 3
      %s171 = smul.addr %s170, 36
      %s172 = smul.addr %s171, 4
      %s173 = scalar_lea.vmem %s0, %s172
      %p174 = pneg %p51
      %p175 = pneg %p48
      %p176 = pneg %p72
      %p177 = pneg %p69
      %p178 = pneg %p93
      %p179 = pneg %p90
      %p180 = pneg %p123
      %p181 = pneg %p120
      %s182 = smul.u32 %s19, 2
      %s183 = sadd.s32 %s182, %s18
      %p184 = scmp.lt.s32.totalorder %s183, 3
      %s185 = scalar_select %p184, %s183, 3
      %s186 = smul.addr %s185, 16
      %s187 = smul.addr %s186, 4
      %s188 = scalar_lea.vmem %s3, %s187
      %s189 = smul.u32 %s19, 2
      %s190 = sadd.s32 %s189, %s18
      %p191 = scmp.lt.s32.totalorder %s190, 3
      %s192 = scalar_select %p191, %s190, 3
      %s193 = smul.addr %s192, 36
      %s194 = smul.addr %s193, 4
      %s195 = scalar_lea.vmem %s0, %s194
      %s196 = smul.u32 %s19, 2
      %s197 = sadd.s32 %s196, %s18
      %s198 = smul.u32 %s19, 2
      %s199 = sadd.s32 %s198, %s18
      %p200 = scmp.lt.s32.totalorder %s199, 3
      %s201 = scalar_select %p200, %s199, 3
      %s202 = smul.addr %s201, 16
      %s203 = smul.addr %s202, 4
      %s204 = scalar_lea.vmem %s3, %s203
      %s205 = smul.u32 %s19, 2
      %s206 = sadd.s32 %s205, %s18
      %p208 = scmp.eq.s32.totalorder %s19, 0
      // Predicated region
      $region33: #{spiking_tokenizer.5} parent=31 // pred_check
        %p209 = pneg %p208
      $region34: #{spiking_tokenizer.5} parent=31 // pred_check_branch
        %211 = sbr.rel (%p209) target = $region36
      $region35: #{spiking_tokenizer.5} parent=31 // pred_region
        %vm212 = vcmask 64512
        %213 = vst.msk [vmem:[#allocation2] sm:$0xff] %vm212, 0.0
        %214 = vst.msk [vmem:[#allocation2 + $0x8] sm:$0xff] %vm212, 0.0
        %215 = vst.msk [vmem:[#allocation2 + $0x10] sm:$0xff] %vm212, 0.0
        %216 = vst.msk [vmem:[#allocation2 + $0x18] sm:$0xff] %vm212, 0.0
        %217 = vst.msk [vmem:[#allocation2 + $0x20] sm:$0xff] %vm212, 0.0
        %218 = vst.msk [vmem:[#allocation2 + $0x28] sm:$0xff] %vm212, 0.0
        %219 = vst.msk [vmem:[#allocation2 + $0x30] sm:$0xff] %vm212, 0.0
        %220 = vst.msk [vmem:[#allocation2 + $0x38] sm:$0xff] %vm212, 0.0
        %221 = vst.msk [vmem:[#allocation2 + $0x40] sm:$0xff] %vm212, 0.0
        %222 = vst.msk [vmem:[#allocation2 + $0x48] sm:$0xff] %vm212, 0.0
        %223 = vst.msk [vmem:[#allocation2 + $0x50] sm:$0xff] %vm212, 0.0
        %224 = vst.msk [vmem:[#allocation2 + $0x58] sm:$0xff] %vm212, 0.0
        %225 = vst.msk [vmem:[#allocation2 + $0x60] sm:$0xff] %vm212, 0.0
        %226 = vst.msk [vmem:[#allocation2 + $0x68] sm:$0xff] %vm212, 0.0
        %227 = vst.msk [vmem:[#allocation2 + $0x70] sm:$0xff] %vm212, 0.0
        %228 = vst.msk [vmem:[#allocation2 + $0x78] sm:$0xff] %vm212, 0.0
        %229 = vst.msk [vmem:[#allocation2 + $0x80] sm:$0xff] %vm212, 0.0
        %230 = vst.msk [vmem:[#allocation2 + $0x88] sm:$0xff] %vm212, 0.0
        %231 = vst.msk [vmem:[#allocation2 + $0x90] sm:$0xff] %vm212, 0.0
        %232 = vst.msk [vmem:[#allocation2 + $0x98] sm:$0xff] %vm212, 0.0
        %233 = vst.msk [vmem:[#allocation2 + $0xa0] sm:$0xff] %vm212, 0.0
        %234 = vst.msk [vmem:[#allocation2 + $0xa8] sm:$0xff] %vm212, 0.0
        %235 = vst.msk [vmem:[#allocation2 + $0xb0] sm:$0xff] %vm212, 0.0
        %236 = vst.msk [vmem:[#allocation2 + $0xb8] sm:$0xff] %vm212, 0.0
        %237 = vst.msk [vmem:[#allocation2 + $0xc0] sm:$0xff] %vm212, 0.0
        %238 = vst.msk [vmem:[#allocation2 + $0xc8] sm:$0xff] %vm212, 0.0
        %239 = vst.msk [vmem:[#allocation2 + $0xd0] sm:$0xff] %vm212, 0.0
        %240 = vst.msk [vmem:[#allocation2 + $0xd8] sm:$0xff] %vm212, 0.0
        %241 = vst.msk [vmem:[#allocation2 + $0xe0] sm:$0xff] %vm212, 0.0
        %242 = vst.msk [vmem:[#allocation2 + $0xe8] sm:$0xff] %vm212, 0.0
        %243 = vst.msk [vmem:[#allocation2 + $0xf0] sm:$0xff] %vm212, 0.0
        %244 = vst.msk [vmem:[#allocation2 + $0xf8] sm:$0xff] %vm212, 0.0
        %245 = vst.msk [vmem:[#allocation3] sm:$0xff] %vm212, 0.0
        %246 = vst.msk [vmem:[#allocation3 + $0x8] sm:$0xff] %vm212, 0.0
        %vm247 = vcmask 58368
        %248 = vst.msk [vmem:[#allocation3 + $0x10] sm:$0x3] %vm247, 0.0
        %249 = vst.msk [vmem:[#allocation3 + $0x18] sm:$0xff] %vm212, 0.0
        %250 = vst.msk [vmem:[#allocation3 + $0x20] sm:$0xff] %vm212, 0.0
        %251 = vst.msk [vmem:[#allocation3 + $0x28] sm:$0x3] %vm247, 0.0
        %252 = vst.msk [vmem:[#allocation3 + $0x30] sm:$0xff] %vm212, 0.0
        %253 = vst.msk [vmem:[#allocation3 + $0x38] sm:$0xff] %vm212, 0.0
        %254 = vst.msk [vmem:[#allocation3 + $0x40] sm:$0x3] %vm247, 0.0
        %255 = vst.msk [vmem:[#allocation3 + $0x48] sm:$0xff] %vm212, 0.0
        %256 = vst.msk [vmem:[#allocation3 + $0x50] sm:$0xff] %vm212, 0.0
        %257 = vst.msk [vmem:[#allocation3 + $0x58] sm:$0x3] %vm247, 0.0
        %258 = vst.msk [vmem:[#allocation3 + $0x60] sm:$0xff] %vm212, 0.0
        %259 = vst.msk [vmem:[#allocation3 + $0x68] sm:$0xff] %vm212, 0.0
        %260 = vst.msk [vmem:[#allocation3 + $0x70] sm:$0x3] %vm247, 0.0
        %261 = vst.msk [vmem:[#allocation3 + $0x78] sm:$0xff] %vm212, 0.0
        %262 = vst.msk [vmem:[#allocation3 + $0x80] sm:$0xff] %vm212, 0.0
        %263 = vst.msk [vmem:[#allocation3 + $0x88] sm:$0x3] %vm247, 0.0
        %264 = vst.msk [vmem:[#allocation3 + $0x90] sm:$0xff] %vm212, 0.0
        %265 = vst.msk [vmem:[#allocation3 + $0x98] sm:$0xff] %vm212, 0.0
        %266 = vst.msk [vmem:[#allocation3 + $0xa0] sm:$0x3] %vm247, 0.0
        %267 = vst.msk [vmem:[#allocation3 + $0xa8] sm:$0xff] %vm212, 0.0
        %268 = vst.msk [vmem:[#allocation3 + $0xb0] sm:$0xff] %vm212, 0.0
        %269 = vst.msk [vmem:[#allocation3 + $0xb8] sm:$0x3] %vm247, 0.0
        %270 = vst.msk [vmem:[#allocation3 + $0xc0] sm:$0xff] %vm212, 0.0
        %271 = vst.msk [vmem:[#allocation3 + $0xc8] sm:$0xff] %vm212, 0.0
        %272 = vst.msk [vmem:[#allocation3 + $0xd0] sm:$0x3] %vm247, 0.0
        %273 = vst.msk [vmem:[#allocation3 + $0xd8] sm:$0xff] %vm212, 0.0
        %274 = vst.msk [vmem:[#allocation3 + $0xe0] sm:$0xff] %vm212, 0.0
        %275 = vst.msk [vmem:[#allocation3 + $0xe8] sm:$0x3] %vm247, 0.0
        %276 = vst.msk [vmem:[#allocation3 + $0xf0] sm:$0xff] %vm212, 0.0
        %277 = vst.msk [vmem:[#allocation3 + $0xf8] sm:$0xff] %vm212, 0.0
        %278 = vst.msk [vmem:[#allocation3 + $0x100] sm:$0x3] %vm247, 0.0
        %279 = vst.msk [vmem:[#allocation3 + $0x108] sm:$0xff] %vm212, 0.0
        %280 = vst.msk [vmem:[#allocation3 + $0x110] sm:$0xff] %vm212, 0.0
        %281 = vst.msk [vmem:[#allocation3 + $0x118] sm:$0x3] %vm247, 0.0
        %282 = vst.msk [vmem:[#allocation3 + $0x120] sm:$0xff] %vm212, 0.0
        %283 = vst.msk [vmem:[#allocation3 + $0x128] sm:$0xff] %vm212, 0.0
        %284 = vst.msk [vmem:[#allocation3 + $0x130] sm:$0x3] %vm247, 0.0
        %285 = vst.msk [vmem:[#allocation3 + $0x138] sm:$0xff] %vm212, 0.0
        %286 = vst.msk [vmem:[#allocation3 + $0x140] sm:$0xff] %vm212, 0.0
        %287 = vst.msk [vmem:[#allocation3 + $0x148] sm:$0x3] %vm247, 0.0
        %288 = vst.msk [vmem:[#allocation3 + $0x150] sm:$0xff] %vm212, 0.0
        %289 = vst.msk [vmem:[#allocation3 + $0x158] sm:$0xff] %vm212, 0.0
        %290 = vst.msk [vmem:[#allocation3 + $0x160] sm:$0x3] %vm247, 0.0
        %291 = vst.msk [vmem:[#allocation3 + $0x168] sm:$0xff] %vm212, 0.0
        %292 = vst.msk [vmem:[#allocation3 + $0x170] sm:$0xff] %vm212, 0.0
        %293 = vst.msk [vmem:[#allocation3 + $0x178] sm:$0x3] %vm247, 0.0
        %294 = vst.msk [vmem:[#allocation3 + $0x180] sm:$0xff] %vm212, 0.0
        %295 = vst.msk [vmem:[#allocation3 + $0x188] sm:$0xff] %vm212, 0.0
        %296 = vst.msk [vmem:[#allocation3 + $0x190] sm:$0x3] %vm247, 0.0
        %297 = vst.msk [vmem:[#allocation3 + $0x198] sm:$0xff] %vm212, 0.0
        %298 = vst.msk [vmem:[#allocation3 + $0x1a0] sm:$0xff] %vm212, 0.0
        %299 = vst.msk [vmem:[#allocation3 + $0x1a8] sm:$0x3] %vm247, 0.0
      $region36: #{spiking_tokenizer.5} parent=31 // pred_fallthru
        _
      %v300 = vld [vmem:[%s195] sm:$0xf]
      %v301 = vld [vmem:[%s195 + $0x4] sm:$0xf]
      %v302 = vld [vmem:[%s195 + $0x8] sm:$0xf]
      %v303 = vld [vmem:[%s195 + $0xc] sm:$0xf]
      %v304 = vld [vmem:[%s195 + $0x10] sm:$0xf]
      %v305 = vld [vmem:[%s195 + $0x14] sm:$0xf]
      %v306 = vld [vmem:[%s195 + $0x18] sm:$0xf]
      %v307 = vld [vmem:[%s195 + $0x1c] sm:$0xf]
      %v308 = vld [vmem:[%s195 + $0x20] sm:$0xf]
      %v309 = vld [vmem:[%s195 + $0x24] sm:$0xf]
      %v310 = vld [vmem:[%s195 + $0x28] sm:$0xf]
      %v311 = vld [vmem:[%s195 + $0x2c] sm:$0xf]
      %v312 = vld [vmem:[%s195 + $0x30] sm:$0xf]
      %v313 = vld [vmem:[%s195 + $0x34] sm:$0xf]
      %v314 = vld [vmem:[%s195 + $0x38] sm:$0xf]
      %v315 = vld [vmem:[%s195 + $0x3c] sm:$0xf]
      %v316 = vld [vmem:[%s195 + $0x40] sm:$0xf]
      %v317 = vld [vmem:[%s195 + $0x44] sm:$0xf]
      %v318 = vld [vmem:[%s195 + $0x48] sm:$0xf]
      %v319 = vld [vmem:[%s195 + $0x4c] sm:$0xf]
      %v320 = vld [vmem:[%s195 + $0x50] sm:$0xf]
      %v321 = vld [vmem:[%s195 + $0x54] sm:$0xf]
      %v322 = vld [vmem:[%s195 + $0x58] sm:$0xf]
      %v323 = vld [vmem:[%s195 + $0x5c] sm:$0xf]
      %v324 = vld [vmem:[%s195 + $0x60] sm:$0xf]
      %v325 = vld [vmem:[%s195 + $0x64] sm:$0xf]
      %v326 = vld [vmem:[%s195 + $0x68] sm:$0xf]
      %v327 = vld [vmem:[%s195 + $0x6c] sm:$0xf]
      %v328 = vld [vmem:[%s195 + $0x70] sm:$0xf]
      %v329 = vld [vmem:[%s195 + $0x74] sm:$0xf]
      %v330 = vld [vmem:[%s195 + $0x78] sm:$0xf]
      %v331 = vld [vmem:[%s195 + $0x7c] sm:$0xf]
      %v332 = vld [vmem:[%s1] sm:$0xf]
      %v333 = vld [vmem:[%s1 + $0x4] sm:$0x3]
      %v334 = vld [vmem:[%s195 + $0x80] sm:$0xf]
      %v335 = vld [vmem:[%s195 + $0x84] sm:$0xf]
      %s336 = scalar_lea.vmem %s1, 8
      %v337 = vld [vmem:[%s336] sm:$0xf]
      %v338 = vld [vmem:[%s336 + $0x4] sm:$0x3]
      %v371 = vunpack.c.l.b16 %v302
      %v372 = vunpack.c.l.b16 %v303
      %v373 = vunpack.c.l.b16 %v304
      %v374 = vunpack.c.l.b16 %v305
      %v375 = vunpack.c.l.b16 %v306
      %v376 = vunpack.c.l.b16 %v307
      %v377 = vunpack.c.l.b16 %v308
      %v378 = vunpack.c.l.b16 %v309
      %v379 = vunpack.c.l.b16 %v310
      %v380 = vunpack.c.l.b16 %v311
      %v381 = vunpack.c.l.b16 %v312
      %v382 = vunpack.c.l.b16 %v313
      %v383 = vunpack.c.l.b16 %v314
      %v384 = vunpack.c.l.b16 %v315
      %v385 = vunpack.c.l.b16 %v316
      %v386 = vunpack.c.l.b16 %v317
      %v387 = vunpack.c.l.b16 %v318
      %v388 = vunpack.c.l.b16 %v319
      %v389 = vunpack.c.l.b16 %v320
      %v390 = vunpack.c.l.b16 %v321
      %v391 = vunpack.c.l.b16 %v322
      %v392 = vunpack.c.l.b16 %v323
      %v393 = vunpack.c.l.b16 %v324
      %v394 = vunpack.c.l.b16 %v325
      %v395 = vunpack.c.l.b16 %v326
      %v396 = vunpack.c.l.b16 %v327
      %v397 = vunpack.c.l.b16 %v328
      %v398 = vunpack.c.l.b16 %v329
      %v399 = vunpack.c.l.b16 %v330
      %v400 = vunpack.c.l.b16 %v331
      %v401 = vunpack.c.l.b16 %v334
      %v402 = vunpack.c.l.b16 %v335
      %v403 = vpack.c.b16 %v372, %v371
      %v404 = vpack.c.b16 %v374, %v373
      %v405 = vpack.c.b16 %v376, %v375
      %v406 = vpack.c.b16 %v378, %v377
      %v407 = vpack.c.b16 %v380, %v379
      %v408 = vpack.c.b16 %v382, %v381
      %v409 = vpack.c.b16 %v384, %v383
      %v410 = vpack.c.b16 %v386, %v385
      %v411 = vpack.c.b16 %v388, %v387
      %v412 = vpack.c.b16 %v390, %v389
      %v413 = vpack.c.b16 %v392, %v391
      %v414 = vpack.c.b16 %v394, %v393
      %v415 = vpack.c.b16 %v396, %v395
      %v416 = vpack.c.b16 %v398, %v397
      %v417 = vpack.c.b16 %v400, %v399
      %v418 = vpack.c.b16 %v402, %v401
      %v421 = vunpack.c.l.b16 %v337
      %v422 = vunpack.c.l.b16 %v338
      %v423 = vpack.c.b16 %v422, %v421
      %vm424 = vcmask 97280
      %v426 = vsel %vm424, %v403, 0
      %v429 = vsel %vm424, %v404, 0
      %v432 = vsel %vm424, %v405, 0
      %v435 = vsel %vm424, %v406, 0
      %v438 = vsel %vm424, %v407, 0
      %v441 = vsel %vm424, %v408, 0
      %v444 = vsel %vm424, %v409, 0
      %v447 = vsel %vm424, %v410, 0
      %v450 = vsel %vm424, %v411, 0
      %v453 = vsel %vm424, %v412, 0
      %v456 = vsel %vm424, %v413, 0
      %v459 = vsel %vm424, %v414, 0
      %v462 = vsel %vm424, %v415, 0
      %v465 = vsel %vm424, %v416, 0
      %v468 = vsel %vm424, %v417, 0
      %v471 = vsel %vm424, %v418, 0
      %vm473 = vcmask 1045504
      %v475 = vsel %vm473, %v423, 0
      %477 = vmatprep.subr.bf16.mxu0 0
      %478 = vmatpush1.bf16.msra.mxu0 %v475
      %479 = vmatprep.subr.bf16.mxu0 0
      %480 = vmatpush1.bf16.msra.mxu0 0
      %481 = vmatprep.subr.bf16.mxu0 0
      %482 = vmatpush1.bf16.msra.mxu0 0
      %483 = vmatprep.subr.bf16.mxu0 0
      %484 = vmatpush1.bf16.msra.mxu0 0
      %485 = vmatprep.subr.bf16.mxu0 0
      %486 = vmatpush1.bf16.msra.mxu0 0
      %487 = vmatprep.subr.bf16.mxu0 0
      %488 = vmatpush1.bf16.msra.mxu0 0
      %489 = vmatprep.subr.bf16.mxu0 0
      %490 = vmatpush1.bf16.msra.mxu0 0
      %491 = vmatprep.subr.bf16.mxu0 0
      %492 = vmatpush1.bf16.msra.mxu0 0
      %493 = vmatprep.subr.bf16.mxu0 0
      %494 = vmatpush1.bf16.msra.mxu0 0
      %495 = vmatprep.subr.bf16.mxu0 0
      %496 = vmatpush1.bf16.msra.mxu0 0
      %497 = vmatprep.subr.bf16.mxu0 0
      %498 = vmatpush1.bf16.msra.mxu0 0
      %499 = vmatprep.subr.bf16.mxu0 0
      %500 = vmatpush1.bf16.msra.mxu0 0
      %501 = vmatprep.subr.bf16.mxu0 0
      %502 = vmatpush1.bf16.msra.mxu0 0
      %503 = vmatprep.subr.bf16.mxu0 0
      %504 = vmatpush1.bf16.msra.mxu0 0
      %505 = vmatprep.subr.bf16.mxu0 0
      %506 = vmatpush1.bf16.msra.mxu0 0
      %507 = vmatprep.subr.bf16.mxu0 0
      %508 = vmatpush1.bf16.msra.mxu0 0
      %509 = vmatprep.mubr.bf16.mxu0 0
      %510 = vmatmul.mubr.bf16.gmra.mrb[0].mxu0 %v426
      %v511 = vpop.f32.mrb[0].mxu0
      %v512 = vadd.f32 0.0, %v511
      %v513 = vpop.f32.mrb[0].mxu0
      %v514 = vpop.f32.mrb[0].mxu0
      %v515 = vadd.f32 0.0, %v514
      %v516 = vpop.f32.mrb[0].mxu0
      %517 = vmatprep.mubr.bf16.mxu0 0
      %518 = vmatmul.mubr.bf16.gmra.mrb[0].mxu0 %v429
      %v519 = vpop.f32.mrb[0].mxu0
      %v520 = vadd.f32 0.0, %v519
      %v521 = vpop.f32.mrb[0].mxu0
      %v522 = vpop.f32.mrb[0].mxu0
      %v523 = vadd.f32 0.0, %v522
      %v524 = vpop.f32.mrb[0].mxu0
      %525 = vmatprep.mubr.bf16.mxu0 0
      %526 = vmatmul.mubr.bf16.gmra.mrb[0].mxu0 %v432
      %v527 = vpop.f32.mrb[0].mxu0
      %v528 = vadd.f32 0.0, %v527
      %v529 = vpop.f32.mrb[0].mxu0
      %v530 = vpop.f32.mrb[0].mxu0
      %v531 = vadd.f32 0.0, %v530
      %v532 = vpop.f32.mrb[0].mxu0
      %533 = vmatprep.mubr.bf16.mxu0 0
      %534 = vmatmul.mubr.bf16.gmra.mrb[0].mxu0 %v435
      %v535 = vpop.f32.mrb[0].mxu0
      %v536 = vadd.f32 0.0, %v535
      %v537 = vpop.f32.mrb[0].mxu0
      %v538 = vpop.f32.mrb[0].mxu0
      %v539 = vadd.f32 0.0, %v538
      %v540 = vpop.f32.mrb[0].mxu0
      %541 = vmatprep.mubr.bf16.mxu0 0
      %542 = vmatmul.mubr.bf16.gmra.mrb[0].mxu0 %v438
      %v543 = vpop.f32.mrb[0].mxu0
      %v544 = vadd.f32 0.0, %v543
      %v545 = vpop.f32.mrb[0].mxu0
      %v546 = vpop.f32.mrb[0].mxu0
      %v547 = vadd.f32 0.0, %v546
      %v548 = vpop.f32.mrb[0].mxu0
      %549 = vmatprep.mubr.bf16.mxu0 0
      %550 = vmatmul.mubr.bf16.gmra.mrb[0].mxu0 %v441
      %v551 = vpop.f32.mrb[0].mxu0
      %v552 = vadd.f32 0.0, %v551
      %v553 = vpop.f32.mrb[0].mxu0
      %v554 = vpop.f32.mrb[0].mxu0
      %v555 = vadd.f32 0.0, %v554
      %v556 = vpop.f32.mrb[0].mxu0
      %557 = vmatprep.mubr.bf16.mxu0 0
      %558 = vmatmul.mubr.bf16.gmra.mrb[0].mxu0 %v444
      %v559 = vpop.f32.mrb[0].mxu0
      %v560 = vadd.f32 0.0, %v559
      %v561 = vpop.f32.mrb[0].mxu0
      %v562 = vpop.f32.mrb[0].mxu0
      %v563 = vadd.f32 0.0, %v562
      %v564 = vpop.f32.mrb[0].mxu0
      %565 = vmatprep.mubr.bf16.mxu0 0
      %566 = vmatmul.mubr.bf16.gmra.mrb[0].mxu0 %v447
      %v567 = vpop.f32.mrb[0].mxu0
      %v568 = vadd.f32 0.0, %v567
      %v569 = vpop.f32.mrb[0].mxu0
      %v570 = vpop.f32.mrb[0].mxu0
      %v571 = vadd.f32 0.0, %v570
      %v572 = vpop.f32.mrb[0].mxu0
      %573 = vmatprep.mubr.bf16.mxu0 0
      %574 = vmatmul.mubr.bf16.gmra.mrb[0].mxu0 %v450
      %v575 = vpop.f32.mrb[0].mxu0
      %v576 = vadd.f32 0.0, %v575
      %v577 = vpop.f32.mrb[0].mxu0
      %v578 = vpop.f32.mrb[0].mxu0
      %v579 = vadd.f32 0.0, %v578
      %v580 = vpop.f32.mrb[0].mxu0
      %581 = vmatprep.mubr.bf16.mxu0 0
      %582 = vmatmul.mubr.bf16.gmra.mrb[0].mxu0 %v453
      %v583 = vpop.f32.mrb[0].mxu0
      %v584 = vadd.f32 0.0, %v583
      %v585 = vpop.f32.mrb[0].mxu0
      %v586 = vpop.f32.mrb[0].mxu0
      %v587 = vadd.f32 0.0, %v586
      %v588 = vpop.f32.mrb[0].mxu0
      %589 = vmatprep.mubr.bf16.mxu0 0
      %590 = vmatmul.mubr.bf16.gmra.mrb[0].mxu0 %v456
      %v591 = vpop.f32.mrb[0].mxu0
      %v592 = vadd.f32 0.0, %v591
      %v593 = vpop.f32.mrb[0].mxu0
      %v594 = vpop.f32.mrb[0].mxu0
      %v595 = vadd.f32 0.0, %v594
      %v596 = vpop.f32.mrb[0].mxu0
      %597 = vmatprep.mubr.bf16.mxu0 0
      %598 = vmatmul.mubr.bf16.gmra.mrb[0].mxu0 %v459
      %v599 = vpop.f32.mrb[0].mxu0
      %v600 = vadd.f32 0.0, %v599
      %v601 = vpop.f32.mrb[0].mxu0
      %v602 = vpop.f32.mrb[0].mxu0
      %v603 = vadd.f32 0.0, %v602
      %v604 = vpop.f32.mrb[0].mxu0
      %605 = vmatprep.mubr.bf16.mxu0 0
      %606 = vmatmul.mubr.bf16.gmra.mrb[0].mxu0 %v462
      %v607 = vpop.f32.mrb[0].mxu0
      %v608 = vadd.f32 0.0, %v607
      %v609 = vpop.f32.mrb[0].mxu0
      %v610 = vpop.f32.mrb[0].mxu0
      %v611 = vadd.f32 0.0, %v610
      %v612 = vpop.f32.mrb[0].mxu0
      %613 = vmatprep.mubr.bf16.mxu0 0
      %614 = vmatmul.mubr.bf16.gmra.mrb[0].mxu0 %v465
      %v615 = vpop.f32.mrb[0].mxu0
      %v616 = vadd.f32 0.0, %v615
      %v617 = vpop.f32.mrb[0].mxu0
      %v618 = vpop.f32.mrb[0].mxu0
      %v619 = vadd.f32 0.0, %v618
      %v620 = vpop.f32.mrb[0].mxu0
      %621 = vmatprep.mubr.bf16.mxu0 0
      %622 = vmatmul.mubr.bf16.gmra.mrb[0].mxu0 %v468
      %v623 = vpop.f32.mrb[0].mxu0
      %v624 = vadd.f32 0.0, %v623
      %v625 = vpop.f32.mrb[0].mxu0
      %v626 = vpop.f32.mrb[0].mxu0
      %v627 = vadd.f32 0.0, %v626
      %v628 = vpop.f32.mrb[0].mxu0
      %629 = vmatprep.mubr.bf16.mxu0 0
      %630 = vmatmul.mubr.bf16.gmra.mrb[0].mxu0 %v471
      %v631 = vpop.f32.mrb[0].mxu0
      %v632 = vadd.f32 0.0, %v631
      %v633 = vpop.f32.mrb[0].mxu0
      %v634 = vpop.f32.mrb[0].mxu0
      %v635 = vadd.f32 0.0, %v634
      %v636 = vpop.f32.mrb[0].mxu0
      %637 = vdwg.mxu0
      %v640 = vunpack.c.l.b16 %v300
      %v641 = vunpack.c.l.b16 %v301
      %v642 = vpack.c.b16 %v641, %v640
      %v645 = vunpack.c.l.b16 %v332
      %v646 = vunpack.c.l.b16 %v333
      %v647 = vpack.c.b16 %v646, %v645
      %v649 = vsel %vm424, %v642, 0
      %v652 = vsel %vm473, %v647, 0
      %654 = vmatprep.subr.bf16.mxu0 0
      %655 = vmatpush1.bf16.msra.mxu0 %v652
      %656 = vmatprep.subr.bf16.mxu0 0
      %657 = vmatpush1.bf16.msra.mxu0 0
      %658 = vmatprep.subr.bf16.mxu0 0
      %659 = vmatpush1.bf16.msra.mxu0 0
      %660 = vmatprep.subr.bf16.mxu0 0
      %661 = vmatpush1.bf16.msra.mxu0 0
      %662 = vmatprep.subr.bf16.mxu0 0
      %663 = vmatpush1.bf16.msra.mxu0 0
      %664 = vmatprep.subr.bf16.mxu0 0
      %665 = vmatpush1.bf16.msra.mxu0 0
      %666 = vmatprep.subr.bf16.mxu0 0
      %667 = vmatpush1.bf16.msra.mxu0 0
      %668 = vmatprep.subr.bf16.mxu0 0
      %669 = vmatpush1.bf16.msra.mxu0 0
      %670 = vmatprep.subr.bf16.mxu0 0
      %671 = vmatpush1.bf16.msra.mxu0 0
      %672 = vmatprep.subr.bf16.mxu0 0
      %673 = vmatpush1.bf16.msra.mxu0 0
      %674 = vmatprep.subr.bf16.mxu0 0
      %675 = vmatpush1.bf16.msra.mxu0 0
      %676 = vmatprep.subr.bf16.mxu0 0
      %677 = vmatpush1.bf16.msra.mxu0 0
      %678 = vmatprep.subr.bf16.mxu0 0
      %679 = vmatpush1.bf16.msra.mxu0 0
      %680 = vmatprep.subr.bf16.mxu0 0
      %681 = vmatpush1.bf16.msra.mxu0 0
      %682 = vmatprep.subr.bf16.mxu0 0
      %683 = vmatpush1.bf16.msra.mxu0 0
      %684 = vmatprep.subr.bf16.mxu0 0
      %685 = vmatpush1.bf16.msra.mxu0 0
      %686 = vmatprep.mubr.bf16.mxu0 0
      %687 = vmatmul.mubr.bf16.gmra.mrb[0].mxu0 %v649
      %v688 = vpop.f32.mrb[0].mxu0
      %v689 = vadd.f32 %v512, %v688
      %v690 = vpop.f32.mrb[0].mxu0
      %v691 = vpop.f32.mrb[0].mxu0
      %v692 = vadd.f32 %v515, %v691
      %v693 = vpop.f32.mrb[0].mxu0
      %694 = vmatprep.mubr.bf16.mxu0 0
      %695 = vmatmul.mubr.bf16.gmra.mrb[0].mxu0 %v426
      %v696 = vpop.f32.mrb[0].mxu0
      %v697 = vadd.f32 %v520, %v696
      %v698 = vpop.f32.mrb[0].mxu0
      %v699 = vpop.f32.mrb[0].mxu0
      %v700 = vadd.f32 %v523, %v699
      %v701 = vpop.f32.mrb[0].mxu0
      %702 = vmatprep.mubr.bf16.mxu0 0
      %703 = vmatmul.mubr.bf16.gmra.mrb[0].mxu0 %v429
      %v704 = vpop.f32.mrb[0].mxu0
      %v705 = vadd.f32 %v528, %v704
      %v706 = vpop.f32.mrb[0].mxu0
      %v707 = vpop.f32.mrb[0].mxu0
      %v708 = vadd.f32 %v531, %v707
      %v709 = vpop.f32.mrb[0].mxu0
      %710 = vmatprep.mubr.bf16.mxu0 0
      %711 = vmatmul.mubr.bf16.gmra.mrb[0].mxu0 %v432
      %v712 = vpop.f32.mrb[0].mxu0
      %v713 = vadd.f32 %v536, %v712
      %v714 = vpop.f32.mrb[0].mxu0
      %v715 = vpop.f32.mrb[0].mxu0
      %v716 = vadd.f32 %v539, %v715
      %v717 = vpop.f32.mrb[0].mxu0
      %718 = vmatprep.mubr.bf16.mxu0 0
      %719 = vmatmul.mubr.bf16.gmra.mrb[0].mxu0 %v435
      %v720 = vpop.f32.mrb[0].mxu0
      %v721 = vadd.f32 %v544, %v720
      %v722 = vpop.f32.mrb[0].mxu0
      %v723 = vpop.f32.mrb[0].mxu0
      %v724 = vadd.f32 %v547, %v723
      %v725 = vpop.f32.mrb[0].mxu0
      %726 = vmatprep.mubr.bf16.mxu0 0
      %727 = vmatmul.mubr.bf16.gmra.mrb[0].mxu0 %v438
      %v728 = vpop.f32.mrb[0].mxu0
      %v729 = vadd.f32 %v552, %v728
      %v730 = vpop.f32.mrb[0].mxu0
      %v731 = vpop.f32.mrb[0].mxu0
      %v732 = vadd.f32 %v555, %v731
      %v733 = vpop.f32.mrb[0].mxu0
      %734 = vmatprep.mubr.bf16.mxu0 0
      %735 = vmatmul.mubr.bf16.gmra.mrb[0].mxu0 %v441
      %v736 = vpop.f32.mrb[0].mxu0
      %v737 = vadd.f32 %v560, %v736
      %v738 = vpop.f32.mrb[0].mxu0
      %v739 = vpop.f32.mrb[0].mxu0
      %v740 = vadd.f32 %v563, %v739
      %v741 = vpop.f32.mrb[0].mxu0
      %742 = vmatprep.mubr.bf16.mxu0 0
      %743 = vmatmul.mubr.bf16.gmra.mrb[0].mxu0 %v444
      %v744 = vpop.f32.mrb[0].mxu0
      %v745 = vadd.f32 %v568, %v744
      %v746 = vpop.f32.mrb[0].mxu0
      %v747 = vpop.f32.mrb[0].mxu0
      %v748 = vadd.f32 %v571, %v747
      %v749 = vpop.f32.mrb[0].mxu0
      %750 = vmatprep.mubr.bf16.mxu0 0
      %751 = vmatmul.mubr.bf16.gmra.mrb[0].mxu0 %v447
      %v752 = vpop.f32.mrb[0].mxu0
      %v753 = vadd.f32 %v576, %v752
      %v754 = vpop.f32.mrb[0].mxu0
      %v755 = vpop.f32.mrb[0].mxu0
      %v756 = vadd.f32 %v579, %v755
      %v757 = vpop.f32.mrb[0].mxu0
      %758 = vmatprep.mubr.bf16.mxu0 0
      %759 = vmatmul.mubr.bf16.gmra.mrb[0].mxu0 %v450
      %v760 = vpop.f32.mrb[0].mxu0
      %v761 = vadd.f32 %v584, %v760
      %v762 = vpop.f32.mrb[0].mxu0
      %v763 = vpop.f32.mrb[0].mxu0
      %v764 = vadd.f32 %v587, %v763
      %v765 = vpop.f32.mrb[0].mxu0
      %766 = vmatprep.mubr.bf16.mxu0 0
      %767 = vmatmul.mubr.bf16.gmra.mrb[0].mxu0 %v453
      %v768 = vpop.f32.mrb[0].mxu0
      %v769 = vadd.f32 %v592, %v768
      %v770 = vpop.f32.mrb[0].mxu0
      %v771 = vpop.f32.mrb[0].mxu0
      %v772 = vadd.f32 %v595, %v771
      %v773 = vpop.f32.mrb[0].mxu0
      %774 = vmatprep.mubr.bf16.mxu0 0
      %775 = vmatmul.mubr.bf16.gmra.mrb[0].mxu0 %v456
      %v776 = vpop.f32.mrb[0].mxu0
      %v777 = vadd.f32 %v600, %v776
      %v778 = vpop.f32.mrb[0].mxu0
      %v779 = vpop.f32.mrb[0].mxu0
      %v780 = vadd.f32 %v603, %v779
      %v781 = vpop.f32.mrb[0].mxu0
      %782 = vmatprep.mubr.bf16.mxu0 0
      %783 = vmatmul.mubr.bf16.gmra.mrb[0].mxu0 %v459
      %v784 = vpop.f32.mrb[0].mxu0
      %v785 = vadd.f32 %v608, %v784
      %v786 = vpop.f32.mrb[0].mxu0
      %v787 = vpop.f32.mrb[0].mxu0
      %v788 = vadd.f32 %v611, %v787
      %v789 = vpop.f32.mrb[0].mxu0
      %790 = vmatprep.mubr.bf16.mxu0 0
      %791 = vmatmul.mubr.bf16.gmra.mrb[0].mxu0 %v462
      %v792 = vpop.f32.mrb[0].mxu0
      %v793 = vadd.f32 %v616, %v792
      %v794 = vpop.f32.mrb[0].mxu0
      %v795 = vpop.f32.mrb[0].mxu0
      %v796 = vadd.f32 %v619, %v795
      %v797 = vpop.f32.mrb[0].mxu0
      %798 = vmatprep.mubr.bf16.mxu0 0
      %799 = vmatmul.mubr.bf16.gmra.mrb[0].mxu0 %v465
      %v800 = vpop.f32.mrb[0].mxu0
      %v801 = vadd.f32 %v624, %v800
      %v802 = vpop.f32.mrb[0].mxu0
      %v803 = vpop.f32.mrb[0].mxu0
      %v804 = vadd.f32 %v627, %v803
      %v805 = vpop.f32.mrb[0].mxu0
      %806 = vmatprep.mubr.bf16.mxu0 0
      %807 = vmatmul.mubr.bf16.gmra.mrb[0].mxu0 %v468
      %v808 = vpop.f32.mrb[0].mxu0
      %v809 = vadd.f32 %v632, %v808
      %v810 = vpop.f32.mrb[0].mxu0
      %v811 = vpop.f32.mrb[0].mxu0
      %v812 = vadd.f32 %v635, %v811
      %v813 = vpop.f32.mrb[0].mxu0
      %814 = vdwg.mxu0
      %v815 = vld [vmem:[%s195 + $0x10] sm:$0xf]
      %v816 = vld [vmem:[%s195 + $0x14] sm:$0xf]
      %v817 = vld [vmem:[%s195 + $0x18] sm:$0xf]
      %v818 = vld [vmem:[%s195 + $0x1c] sm:$0xf]
      %v819 = vld [vmem:[%s195 + $0x20] sm:$0xf]
      %v820 = vld [vmem:[%s195 + $0x24] sm:$0xf]
      %v821 = vld [vmem:[%s195 + $0x28] sm:$0xf]
      %v822 = vld [vmem:[%s195 + $0x2c] sm:$0xf]
      %v823 = vld [vmem:[%s195 + $0x30] sm:$0xf]
      %v824 = vld [vmem:[%s195 + $0x34] sm:$0xf]
      %v825 = vld [vmem:[%s195 + $0x38] sm:$0xf]
      %v826 = vld [vmem:[%s195 + $0x3c] sm:$0xf]
      %v827 = vld [vmem:[%s195 + $0x40] sm:$0xf]
      %v828 = vld [vmem:[%s195 + $0x44] sm:$0xf]
      %v829 = vld [vmem:[%s195 + $0x48] sm:$0xf]
      %v830 = vld [vmem:[%s195 + $0x4c] sm:$0xf]
      %v831 = vld [vmem:[%s195 + $0x50] sm:$0xf]
      %v832 = vld [vmem:[%s195 + $0x54] sm:$0xf]
      %v833 = vld [vmem:[%s195 + $0x58] sm:$0xf]
      %v834 = vld [vmem:[%s195 + $0x5c] sm:$0xf]
      %v835 = vld [vmem:[%s195 + $0x60] sm:$0xf]
      %v836 = vld [vmem:[%s195 + $0x64] sm:$0xf]
      %v837 = vld [vmem:[%s195 + $0x68] sm:$0xf]
      %v838 = vld [vmem:[%s195 + $0x6c] sm:$0xf]
      %v839 = vld [vmem:[%s195 + $0x70] sm:$0xf]
      %v840 = vld [vmem:[%s195 + $0x74] sm:$0xf]
      %v841 = vld [vmem:[%s195 + $0x78] sm:$0xf]
      %v842 = vld [vmem:[%s195 + $0x7c] sm:$0xf]
      %v843 = vld [vmem:[%s195 + $0x80] sm:$0xf]
      %v844 = vld [vmem:[%s195 + $0x84] sm:$0xf]
      %v845 = vld [vmem:[%s195 + $0x88] sm:$0xf]
      %v846 = vld [vmem:[%s195 + $0x8c] sm:$0xf]
      %s847 = scalar_lea.vmem %s1, 16
      %v848 = vld [vmem:[%s847] sm:$0xf]
      %v849 = vld [vmem:[%s847 + $0x4] sm:$0x3]
      %v882 = vunpack.c.l.b16 %v815
      %v883 = vunpack.c.l.b16 %v816
      %v884 = vunpack.c.l.b16 %v817
      %v885 = vunpack.c.l.b16 %v818
      %v886 = vunpack.c.l.b16 %v819
      %v887 = vunpack.c.l.b16 %v820
      %v888 = vunpack.c.l.b16 %v821
      %v889 = vunpack.c.l.b16 %v822
      %v890 = vunpack.c.l.b16 %v823
      %v891 = vunpack.c.l.b16 %v824
      %v892 = vunpack.c.l.b16 %v825
      %v893 = vunpack.c.l.b16 %v826
      %v894 = vunpack.c.l.b16 %v827
      %v895 = vunpack.c.l.b16 %v828
      %v896 = vunpack.c.l.b16 %v829
      %v897 = vunpack.c.l.b16 %v830
      %v898 = vunpack.c.l.b16 %v831
      %v899 = vunpack.c.l.b16 %v832
      %v900 = vunpack.c.l.b16 %v833
      %v901 = vunpack.c.l.b16 %v834
      %v902 = vunpack.c.l.b16 %v835
      %v903 = vunpack.c.l.b16 %v836
      %v904 = vunpack.c.l.b16 %v837
      %v905 = vunpack.c.l.b16 %v838
      %v906 = vunpack.c.l.b16 %v839
      %v907 = vunpack.c.l.b16 %v840
      %v908 = vunpack.c.l.b16 %v841
      %v909 = vunpack.c.l.b16 %v842
      %v910 = vunpack.c.l.b16 %v843
      %v911 = vunpack.c.l.b16 %v844
      %v912 = vunpack.c.l.b16 %v845
      %v913 = vunpack.c.l.b16 %v846
      %v914 = vpack.c.b16 %v883, %v882
      %v915 = vpack.c.b16 %v885, %v884
      %v916 = vpack.c.b16 %v887, %v886
      %v917 = vpack.c.b16 %v889, %v888
      %v918 = vpack.c.b16 %v891, %v890
      %v919 = vpack.c.b16 %v893, %v892
      %v920 = vpack.c.b16 %v895, %v894
      %v921 = vpack.c.b16 %v897, %v896
      %v922 = vpack.c.b16 %v899, %v898
      %v923 = vpack.c.b16 %v901, %v900
      %v924 = vpack.c.b16 %v903, %v902
      %v925 = vpack.c.b16 %v905, %v904
      %v926 = vpack.c.b16 %v907, %v906
      %v927 = vpack.c.b16 %v909, %v908
      %v928 = vpack.c.b16 %v911, %v910
      %v929 = vpack.c.b16 %v913, %v912
      %v932 = vunpack.c.l.b16 %v848
      %v933 = vunpack.c.l.b16 %v849
      %v934 = vpack.c.b16 %v933, %v932
      %v936 = vsel %vm424, %v914, 0
      %v939 = vsel %vm424, %v915, 0
      %v942 = vsel %vm424, %v916, 0
      %v945 = vsel %vm424, %v917, 0
      %v948 = vsel %vm424, %v918, 0
      %v951 = vsel %vm424, %v919, 0
      %v954 = vsel %vm424, %v920, 0
      %v957 = vsel %vm424, %v921, 0
      %v960 = vsel %vm424, %v922, 0
      %v963 = vsel %vm424, %v923, 0
      %v966 = vsel %vm424, %v924, 0
      %v969 = vsel %vm424, %v925, 0
      %v972 = vsel %vm424, %v926, 0
      %v975 = vsel %vm424, %v927, 0
      %v978 = vsel %vm424, %v928, 0
      %v981 = vsel %vm424, %v929, 0
      %v984 = vsel %vm473, %v934, 0
      %986 = vmatprep.subr.bf16.mxu0 0
      %987 = vmatpush1.bf16.msra.mxu0 %v984
      %988 = vmatprep.subr.bf16.mxu0 0
      %989 = vmatpush1.bf16.msra.mxu0 0
      %990 = vmatprep.subr.bf16.mxu0 0
      %991 = vmatpush1.bf16.msra.mxu0 0
      %992 = vmatprep.subr.bf16.mxu0 0
      %993 = vmatpush1.bf16.msra.mxu0 0
      %994 = vmatprep.subr.bf16.mxu0 0
      %995 = vmatpush1.bf16.msra.mxu0 0
      %996 = vmatprep.subr.bf16.mxu0 0
      %997 = vmatpush1.bf16.msra.mxu0 0
      %998 = vmatprep.subr.bf16.mxu0 0
      %999 = vmatpush1.bf16.msra.mxu0 0
      %1000 = vmatprep.subr.bf16.mxu0 0
      %1001 = vmatpush1.bf16.msra.mxu0 0
      %1002 = vmatprep.subr.bf16.mxu0 0
      %1003 = vmatpush1.bf16.msra.mxu0 0
      %1004 = vmatprep.subr.bf16.mxu0 0
      %1005 = vmatpush1.bf16.msra.mxu0 0
      %1006 = vmatprep.subr.bf16.mxu0 0
      %1007 = vmatpush1.bf16.msra.mxu0 0
      %1008 = vmatprep.subr.bf16.mxu0 0
      %1009 = vmatpush1.bf16.msra.mxu0 0
      %1010 = vmatprep.subr.bf16.mxu0 0
      %1011 = vmatpush1.bf16.msra.mxu0 0
      %1012 = vmatprep.subr.bf16.mxu0 0
      %1013 = vmatpush1.bf16.msra.mxu0 0
      %1014 = vmatprep.subr.bf16.mxu0 0
      %1015 = vmatpush1.bf16.msra.mxu0 0
      %1016 = vmatprep.subr.bf16.mxu0 0
      %1017 = vmatpush1.bf16.msra.mxu0 0
      %1018 = vmatprep.mubr.bf16.mxu0 0
      %1019 = vmatmul.mubr.bf16.gmra.mrb[0].mxu0 %v936
      %v1020 = vpop.f32.mrb[0].mxu0
      %v1021 = vadd.f32 0.0, %v1020
      %v1022 = vpop.f32.mrb[0].mxu0
      %v1023 = vpop.f32.mrb[0].mxu0
      %v1024 = vadd.f32 0.0, %v1023
      %v1025 = vpop.f32.mrb[0].mxu0
      %1026 = vmatprep.mubr.bf16.mxu0 0
      %1027 = vmatmul.mubr.bf16.gmra.mrb[0].mxu0 %v939
      %v1028 = vpop.f32.mrb[0].mxu0
      %v1029 = vadd.f32 0.0, %v1028
      %v1030 = vpop.f32.mrb[0].mxu0
      %v1031 = vpop.f32.mrb[0].mxu0
      %v1032 = vadd.f32 0.0, %v1031
      %v1033 = vpop.f32.mrb[0].mxu0
      %1034 = vmatprep.mubr.bf16.mxu0 0
      %1035 = vmatmul.mubr.bf16.gmra.mrb[0].mxu0 %v942
      %v1036 = vpop.f32.mrb[0].mxu0
      %v1037 = vadd.f32 0.0, %v1036
      %v1038 = vpop.f32.mrb[0].mxu0
      %v1039 = vpop.f32.mrb[0].mxu0
      %v1040 = vadd.f32 0.0, %v1039
      %v1041 = vpop.f32.mrb[0].mxu0
      %1042 = vmatprep.mubr.bf16.mxu0 0
      %1043 = vmatmul.mubr.bf16.gmra.mrb[0].mxu0 %v945
      %v1044 = vpop.f32.mrb[0].mxu0
      %v1045 = vadd.f32 0.0, %v1044
      %v1046 = vpop.f32.mrb[0].mxu0
      %v1047 = vpop.f32.mrb[0].mxu0
      %v1048 = vadd.f32 0.0, %v1047
      %v1049 = vpop.f32.mrb[0].mxu0
      %1050 = vmatprep.mubr.bf16.mxu0 0
      %1051 = vmatmul.mubr.bf16.gmra.mrb[0].mxu0 %v948
      %v1052 = vpop.f32.mrb[0].mxu0
      %v1053 = vadd.f32 0.0, %v1052
      %v1054 = vpop.f32.mrb[0].mxu0
      %v1055 = vpop.f32.mrb[0].mxu0
      %v1056 = vadd.f32 0.0, %v1055
      %v1057 = vpop.f32.mrb[0].mxu0
      %1058 = vmatprep.mubr.bf16.mxu0 0
      %1059 = vmatmul.mubr.bf16.gmra.mrb[0].mxu0 %v951
      %v1060 = vpop.f32.mrb[0].mxu0
      %v1061 = vadd.f32 0.0, %v1060
      %v1062 = vpop.f32.mrb[0].mxu0
      %v1063 = vpop.f32.mrb[0].mxu0
      %v1064 = vadd.f32 0.0, %v1063
      %v1065 = vpop.f32.mrb[0].mxu0
      %1066 = vmatprep.mubr.bf16.mxu0 0
      %1067 = vmatmul.mubr.bf16.gmra.mrb[0].mxu0 %v954
      %v1068 = vpop.f32.mrb[0].mxu0
      %v1069 = vadd.f32 0.0, %v1068
      %v1070 = vpop.f32.mrb[0].mxu0
      %v1071 = vpop.f32.mrb[0].mxu0
      %v1072 = vadd.f32 0.0, %v1071
      %v1073 = vpop.f32.mrb[0].mxu0
      %1074 = vmatprep.mubr.bf16.mxu0 0
      %1075 = vmatmul.mubr.bf16.gmra.mrb[0].mxu0 %v957
      %v1076 = vpop.f32.mrb[0].mxu0
      %v1077 = vadd.f32 0.0, %v1076
      %v1078 = vpop.f32.mrb[0].mxu0
      %v1079 = vpop.f32.mrb[0].mxu0
      %v1080 = vadd.f32 0.0, %v1079
      %v1081 = vpop.f32.mrb[0].mxu0
      %1082 = vmatprep.mubr.bf16.mxu0 0
      %1083 = vmatmul.mubr.bf16.gmra.mrb[0].mxu0 %v960
      %v1084 = vpop.f32.mrb[0].mxu0
      %v1085 = vadd.f32 0.0, %v1084
      %v1086 = vpop.f32.mrb[0].mxu0
      %v1087 = vpop.f32.mrb[0].mxu0
      %v1088 = vadd.f32 0.0, %v1087
      %v1089 = vpop.f32.mrb[0].mxu0
      %1090 = vmatprep.mubr.bf16.mxu0 0
      %1091 = vmatmul.mubr.bf16.gmra.mrb[0].mxu0 %v963
      %v1092 = vpop.f32.mrb[0].mxu0
      %v1093 = vadd.f32 0.0, %v1092
      %v1094 = vpop.f32.mrb[0].mxu0
      %v1095 = vpop.f32.mrb[0].mxu0
      %v1096 = vadd.f32 0.0, %v1095
      %v1097 = vpop.f32.mrb[0].mxu0
      %1098 = vmatprep.mubr.bf16.mxu0 0
      %1099 = vmatmul.mubr.bf16.gmra.mrb[0].mxu0 %v966
      %v1100 = vpop.f32.mrb[0].mxu0
      %v1101 = vadd.f32 0.0, %v1100
      %v1102 = vpop.f32.mrb[0].mxu0
      %v1103 = vpop.f32.mrb[0].mxu0
      %v1104 = vadd.f32 0.0, %v1103
      %v1105 = vpop.f32.mrb[0].mxu0
      %1106 = vmatprep.mubr.bf16.mxu0 0
      %1107 = vmatmul.mubr.bf16.gmra.mrb[0].mxu0 %v969
      %v1108 = vpop.f32.mrb[0].mxu0
      %v1109 = vadd.f32 0.0, %v1108
      %v1110 = vpop.f32.mrb[0].mxu0
      %v1111 = vpop.f32.mrb[0].mxu0
      %v1112 = vadd.f32 0.0, %v1111
      %v1113 = vpop.f32.mrb[0].mxu0
      %1114 = vmatprep.mubr.bf16.mxu0 0
      %1115 = vmatmul.mubr.bf16.gmra.mrb[0].mxu0 %v972
      %v1116 = vpop.f32.mrb[0].mxu0
      %v1117 = vadd.f32 0.0, %v1116
      %v1118 = vpop.f32.mrb[0].mxu0
      %v1119 = vpop.f32.mrb[0].mxu0
      %v1120 = vadd.f32 0.0, %v1119
      %v1121 = vpop.f32.mrb[0].mxu0
      %1122 = vmatprep.mubr.bf16.mxu0 0
      %1123 = vmatmul.mubr.bf16.gmra.mrb[0].mxu0 %v975
      %v1124 = vpop.f32.mrb[0].mxu0
      %v1125 = vadd.f32 0.0, %v1124
      %v1126 = vpop.f32.mrb[0].mxu0
      %v1127 = vpop.f32.mrb[0].mxu0
      %v1128 = vadd.f32 0.0, %v1127
      %v1129 = vpop.f32.mrb[0].mxu0
      %1130 = vmatprep.mubr.bf16.mxu0 0
      %1131 = vmatmul.mubr.bf16.gmra.mrb[0].mxu0 %v978
      %v1132 = vpop.f32.mrb[0].mxu0
      %v1133 = vadd.f32 0.0, %v1132
      %v1134 = vpop.f32.mrb[0].mxu0
      %v1135 = vpop.f32.mrb[0].mxu0
      %v1136 = vadd.f32 0.0, %v1135
      %v1137 = vpop.f32.mrb[0].mxu0
      %1138 = vmatprep.mubr.bf16.mxu0 0
      %1139 = vmatmul.mubr.bf16.gmra.mrb[0].mxu0 %v981
      %v1140 = vpop.f32.mrb[0].mxu0
      %v1141 = vadd.f32 0.0, %v1140
      %v1142 = vpop.f32.mrb[0].mxu0
      %v1143 = vpop.f32.mrb[0].mxu0
      %v1144 = vadd.f32 0.0, %v1143
      %v1145 = vpop.f32.mrb[0].mxu0
      %1146 = vdwg.mxu0
      %v1147 = vadd.f32 %v689, %v1021
      %v1148 = vadd.f32 %v692, %v1024
      %v1149 = vadd.f32 %v697, %v1029
      %v1150 = vadd.f32 %v700, %v1032
      %v1151 = vadd.f32 %v705, %v1037
      %v1152 = vadd.f32 %v708, %v1040
      %v1153 = vadd.f32 %v713, %v1045
      %v1154 = vadd.f32 %v716, %v1048
      %v1155 = vadd.f32 %v721, %v1053
      %v1156 = vadd.f32 %v724, %v1056
      %v1157 = vadd.f32 %v729, %v1061
      %v1158 = vadd.f32 %v732, %v1064
      %v1159 = vadd.f32 %v737, %v1069
      %v1160 = vadd.f32 %v740, %v1072
      %v1161 = vadd.f32 %v745, %v1077
      %v1162 = vadd.f32 %v748, %v1080
      %v1163 = vadd.f32 %v753, %v1085
      %v1164 = vadd.f32 %v756, %v1088
      %v1165 = vadd.f32 %v761, %v1093
      %v1166 = vadd.f32 %v764, %v1096
      %v1167 = vadd.f32 %v769, %v1101
      %v1168 = vadd.f32 %v772, %v1104
      %v1169 = vadd.f32 %v777, %v1109
      %v1170 = vadd.f32 %v780, %v1112
      %v1171 = vadd.f32 %v785, %v1117
      %v1172 = vadd.f32 %v788, %v1120
      %v1173 = vadd.f32 %v793, %v1125
      %v1174 = vadd.f32 %v796, %v1128
      %v1175 = vadd.f32 %v801, %v1133
      %v1176 = vadd.f32 %v804, %v1136
      %v1177 = vadd.f32 %v809, %v1141
      %v1178 = vadd.f32 %v812, %v1144
      %v1179 = vld [vmem:[%s2] sm:$0x1]
      %v1181 = vlaneseq
      %v1182 = vshrl.u32 %v1181, 7
      %v1183 = vsub.s32 0, %v1182
      %v1184 = vrot.slane %v1179, %v1183
      %v1186 = vadd.f32 %v1147, %v1184
      %v1187 = vadd.f32 %v1148, %v1184
      %v1188 = vadd.f32 %v1149, %v1184
      %v1189 = vadd.f32 %v1150, %v1184
      %v1190 = vadd.f32 %v1151, %v1184
      %v1191 = vadd.f32 %v1152, %v1184
      %v1192 = vadd.f32 %v1153, %v1184
      %v1193 = vadd.f32 %v1154, %v1184
      %v1194 = vadd.f32 %v1155, %v1184
      %v1195 = vadd.f32 %v1156, %v1184
      %v1196 = vadd.f32 %v1157, %v1184
      %v1197 = vadd.f32 %v1158, %v1184
      %v1198 = vadd.f32 %v1159, %v1184
      %v1199 = vadd.f32 %v1160, %v1184
      %v1200 = vadd.f32 %v1161, %v1184
      %v1201 = vadd.f32 %v1162, %v1184
      %v1202 = vadd.f32 %v1163, %v1184
      %v1203 = vadd.f32 %v1164, %v1184
      %v1204 = vadd.f32 %v1165, %v1184
      %v1205 = vadd.f32 %v1166, %v1184
      %v1206 = vadd.f32 %v1167, %v1184
      %v1207 = vadd.f32 %v1168, %v1184
      %v1208 = vadd.f32 %v1169, %v1184
      %v1209 = vadd.f32 %v1170, %v1184
      %v1210 = vadd.f32 %v1171, %v1184
      %v1211 = vadd.f32 %v1172, %v1184
      %v1212 = vadd.f32 %v1173, %v1184
      %v1213 = vadd.f32 %v1174, %v1184
      %v1214 = vadd.f32 %v1175, %v1184
      %v1215 = vadd.f32 %v1176, %v1184
      %v1216 = vadd.f32 %v1177, %v1184
      %v1217 = vadd.f32 %v1178, %v1184
      %v1218 = vld [vmem:[#allocation2] sm:$0xff]
      %v1219 = vld [vmem:[#allocation2 + $0x8] sm:$0xff]
      %v1220 = vld [vmem:[#allocation2 + $0x10] sm:$0xff]
      %v1221 = vld [vmem:[#allocation2 + $0x18] sm:$0xff]
      %v1222 = vld [vmem:[#allocation2 + $0x20] sm:$0xff]
      %v1223 = vld [vmem:[#allocation2 + $0x28] sm:$0xff]
      %v1224 = vld [vmem:[#allocation2 + $0x30] sm:$0xff]
      %v1225 = vld [vmem:[#allocation2 + $0x38] sm:$0xff]
      %v1226 = vld [vmem:[#allocation2 + $0x40] sm:$0xff]
      %v1227 = vld [vmem:[#allocation2 + $0x48] sm:$0xff]
      %v1228 = vld [vmem:[#allocation2 + $0x50] sm:$0xff]
      %v1229 = vld [vmem:[#allocation2 + $0x58] sm:$0xff]
      %v1230 = vld [vmem:[#allocation2 + $0x60] sm:$0xff]
      %v1231 = vld [vmem:[#allocation2 + $0x68] sm:$0xff]
      %v1232 = vld [vmem:[#allocation2 + $0x70] sm:$0xff]
      %v1233 = vld [vmem:[#allocation2 + $0x78] sm:$0xff]
      %v1234 = vld [vmem:[#allocation2 + $0x80] sm:$0xff]
      %v1235 = vld [vmem:[#allocation2 + $0x88] sm:$0xff]
      %v1236 = vld [vmem:[#allocation2 + $0x90] sm:$0xff]
      %v1237 = vld [vmem:[#allocation2 + $0x98] sm:$0xff]
      %v1238 = vld [vmem:[#allocation2 + $0xa0] sm:$0xff]
      %v1239 = vld [vmem:[#allocation2 + $0xa8] sm:$0xff]
      %v1240 = vld [vmem:[#allocation2 + $0xb0] sm:$0xff]
      %v1241 = vld [vmem:[#allocation2 + $0xb8] sm:$0xff]
      %v1242 = vld [vmem:[#allocation2 + $0xc0] sm:$0xff]
      %v1243 = vld [vmem:[#allocation2 + $0xc8] sm:$0xff]
      %v1244 = vld [vmem:[#allocation2 + $0xd0] sm:$0xff]
      %v1245 = vld [vmem:[#allocation2 + $0xd8] sm:$0xff]
      %v1246 = vld [vmem:[#allocation2 + $0xe0] sm:$0xff]
      %v1247 = vld [vmem:[#allocation2 + $0xe8] sm:$0xff]
      %v1248 = vld [vmem:[#allocation2 + $0xf0] sm:$0xff]
      %v1249 = vld [vmem:[#allocation2 + $0xf8] sm:$0xff]
      %v1250 = vsub.f32 %v1186, %v1218
      %v1251 = vsub.f32 %v1187, %v1219
      %v1252 = vsub.f32 %v1188, %v1220
      %v1253 = vsub.f32 %v1189, %v1221
      %v1254 = vsub.f32 %v1190, %v1222
      %v1255 = vsub.f32 %v1191, %v1223
      %v1256 = vsub.f32 %v1192, %v1224
      %v1257 = vsub.f32 %v1193, %v1225
      %v1258 = vsub.f32 %v1194, %v1226
      %v1259 = vsub.f32 %v1195, %v1227
      %v1260 = vsub.f32 %v1196, %v1228
      %v1261 = vsub.f32 %v1197, %v1229
      %v1262 = vsub.f32 %v1198, %v1230
      %v1263 = vsub.f32 %v1199, %v1231
      %v1264 = vsub.f32 %v1200, %v1232
      %v1265 = vsub.f32 %v1201, %v1233
      %v1266 = vsub.f32 %v1202, %v1234
      %v1267 = vsub.f32 %v1203, %v1235
      %v1268 = vsub.f32 %v1204, %v1236
      %v1269 = vsub.f32 %v1205, %v1237
      %v1270 = vsub.f32 %v1206, %v1238
      %v1271 = vsub.f32 %v1207, %v1239
      %v1272 = vsub.f32 %v1208, %v1240
      %v1273 = vsub.f32 %v1209, %v1241
      %v1274 = vsub.f32 %v1210, %v1242
      %v1275 = vsub.f32 %v1211, %v1243
      %v1276 = vsub.f32 %v1212, %v1244
      %v1277 = vsub.f32 %v1213, %v1245
      %v1278 = vsub.f32 %v1214, %v1246
      %v1279 = vsub.f32 %v1215, %v1247
      %v1280 = vsub.f32 %v1216, %v1248
      %v1281 = vsub.f32 %v1217, %v1249
      %v1282 = vmul.f32 %v1250, 0.6666667
      %v1283 = vmul.f32 %v1251, 0.6666667
      %v1284 = vmul.f32 %v1252, 0.6666667
      %v1285 = vmul.f32 %v1253, 0.6666667
      %v1286 = vmul.f32 %v1254, 0.6666667
      %v1287 = vmul.f32 %v1255, 0.6666667
      %v1288 = vmul.f32 %v1256, 0.6666667
      %v1289 = vmul.f32 %v1257, 0.6666667
      %v1290 = vmul.f32 %v1258, 0.6666667
      %v1291 = vmul.f32 %v1259, 0.6666667
      %v1292 = vmul.f32 %v1260, 0.6666667
      %v1293 = vmul.f32 %v1261, 0.6666667
      %v1294 = vmul.f32 %v1262, 0.6666667
      %v1295 = vmul.f32 %v1263, 0.6666667
      %v1296 = vmul.f32 %v1264, 0.6666667
      %v1297 = vmul.f32 %v1265, 0.6666667
      %v1298 = vmul.f32 %v1266, 0.6666667
      %v1299 = vmul.f32 %v1267, 0.6666667
      %v1300 = vmul.f32 %v1268, 0.6666667
      %v1301 = vmul.f32 %v1269, 0.6666667
      %v1302 = vmul.f32 %v1270, 0.6666667
      %v1303 = vmul.f32 %v1271, 0.6666667
      %v1304 = vmul.f32 %v1272, 0.6666667
      %v1305 = vmul.f32 %v1273, 0.6666667
      %v1306 = vmul.f32 %v1274, 0.6666667
      %v1307 = vmul.f32 %v1275, 0.6666667
      %v1308 = vmul.f32 %v1276, 0.6666667
      %v1309 = vmul.f32 %v1277, 0.6666667
      %v1310 = vmul.f32 %v1278, 0.6666667
      %v1311 = vmul.f32 %v1279, 0.6666667
      %v1312 = vmul.f32 %v1280, 0.6666667
      %v1313 = vmul.f32 %v1281, 0.6666667
      %v1314 = vadd.f32 %v1218, %v1282
      %v1315 = vadd.f32 %v1219, %v1283
      %v1316 = vadd.f32 %v1220, %v1284
      %v1317 = vadd.f32 %v1221, %v1285
      %v1318 = vadd.f32 %v1222, %v1286
      %v1319 = vadd.f32 %v1223, %v1287
      %v1320 = vadd.f32 %v1224, %v1288
      %v1321 = vadd.f32 %v1225, %v1289
      %v1322 = vadd.f32 %v1226, %v1290
      %v1323 = vadd.f32 %v1227, %v1291
      %v1324 = vadd.f32 %v1228, %v1292
      %v1325 = vadd.f32 %v1229, %v1293
      %v1326 = vadd.f32 %v1230, %v1294
      %v1327 = vadd.f32 %v1231, %v1295
      %v1328 = vadd.f32 %v1232, %v1296
      %v1329 = vadd.f32 %v1233, %v1297
      %v1330 = vadd.f32 %v1234, %v1298
      %v1331 = vadd.f32 %v1235, %v1299
      %v1332 = vadd.f32 %v1236, %v1300
      %v1333 = vadd.f32 %v1237, %v1301
      %v1334 = vadd.f32 %v1238, %v1302
      %v1335 = vadd.f32 %v1239, %v1303
      %v1336 = vadd.f32 %v1240, %v1304
      %v1337 = vadd.f32 %v1241, %v1305
      %v1338 = vadd.f32 %v1242, %v1306
      %v1339 = vadd.f32 %v1243, %v1307
      %v1340 = vadd.f32 %v1244, %v1308
      %v1341 = vadd.f32 %v1245, %v1309
      %v1342 = vadd.f32 %v1246, %v1310
      %v1343 = vadd.f32 %v1247, %v1311
      %v1344 = vadd.f32 %v1248, %v1312
      %v1345 = vadd.f32 %v1249, %v1313
      %vm1346 = vcmp.ge.f32.partialorder %v1314, 1.0
      %vm1347 = vcmp.ge.f32.partialorder %v1315, 1.0
      %vm1348 = vcmp.ge.f32.partialorder %v1316, 1.0
      %vm1349 = vcmp.ge.f32.partialorder %v1317, 1.0
      %vm1350 = vcmp.ge.f32.partialorder %v1318, 1.0
      %vm1351 = vcmp.ge.f32.partialorder %v1319, 1.0
      %vm1352 = vcmp.ge.f32.partialorder %v1320, 1.0
      %vm1353 = vcmp.ge.f32.partialorder %v1321, 1.0
      %vm1354 = vcmp.ge.f32.partialorder %v1322, 1.0
      %vm1355 = vcmp.ge.f32.partialorder %v1323, 1.0
      %vm1356 = vcmp.ge.f32.partialorder %v1324, 1.0
      %vm1357 = vcmp.ge.f32.partialorder %v1325, 1.0
      %vm1358 = vcmp.ge.f32.partialorder %v1326, 1.0
      %vm1359 = vcmp.ge.f32.partialorder %v1327, 1.0
      %vm1360 = vcmp.ge.f32.partialorder %v1328, 1.0
      %vm1361 = vcmp.ge.f32.partialorder %v1329, 1.0
      %vm1362 = vcmp.ge.f32.partialorder %v1330, 1.0
      %vm1363 = vcmp.ge.f32.partialorder %v1331, 1.0
      %vm1364 = vcmp.ge.f32.partialorder %v1332, 1.0
      %vm1365 = vcmp.ge.f32.partialorder %v1333, 1.0
      %vm1366 = vcmp.ge.f32.partialorder %v1334, 1.0
      %vm1367 = vcmp.ge.f32.partialorder %v1335, 1.0
      %vm1368 = vcmp.ge.f32.partialorder %v1336, 1.0
      %vm1369 = vcmp.ge.f32.partialorder %v1337, 1.0
      %vm1370 = vcmp.ge.f32.partialorder %v1338, 1.0
      %vm1371 = vcmp.ge.f32.partialorder %v1339, 1.0
      %vm1372 = vcmp.ge.f32.partialorder %v1340, 1.0
      %vm1373 = vcmp.ge.f32.partialorder %v1341, 1.0
      %vm1374 = vcmp.ge.f32.partialorder %v1342, 1.0
      %vm1375 = vcmp.ge.f32.partialorder %v1343, 1.0
      %vm1376 = vcmp.ge.f32.partialorder %v1344, 1.0
      %vm1377 = vcmp.ge.f32.partialorder %v1345, 1.0
      %v1378 = vsel %vm1346, 1, 0
      %v1379 = vsel %vm1347, 1, 0
      %v1380 = vsel %vm1348, 1, 0
      %v1381 = vsel %vm1349, 1, 0
      %v1382 = vsel %vm1350, 1, 0
      %v1383 = vsel %vm1351, 1, 0
      %v1384 = vsel %vm1352, 1, 0
      %v1385 = vsel %vm1353, 1, 0
      %v1386 = vsel %vm1354, 1, 0
      %v1387 = vsel %vm1355, 1, 0
      %v1388 = vsel %vm1356, 1, 0
      %v1389 = vsel %vm1357, 1, 0
      %v1390 = vsel %vm1358, 1, 0
      %v1391 = vsel %vm1359, 1, 0
      %v1392 = vsel %vm1360, 1, 0
      %v1393 = vsel %vm1361, 1, 0
      %v1394 = vsel %vm1362, 1, 0
      %v1395 = vsel %vm1363, 1, 0
      %v1396 = vsel %vm1364, 1, 0
      %v1397 = vsel %vm1365, 1, 0
      %v1398 = vsel %vm1366, 1, 0
      %v1399 = vsel %vm1367, 1, 0
      %v1400 = vsel %vm1368, 1, 0
      %v1401 = vsel %vm1369, 1, 0
      %v1402 = vsel %vm1370, 1, 0
      %v1403 = vsel %vm1371, 1, 0
      %v1404 = vsel %vm1372, 1, 0
      %v1405 = vsel %vm1373, 1, 0
      %v1406 = vsel %vm1374, 1, 0
      %v1407 = vsel %vm1375, 1, 0
      %v1408 = vsel %vm1376, 1, 0
      %v1409 = vsel %vm1377, 1, 0
      %v1410 = vcvt.s32.f32 %v1378
      %v1411 = vcvt.s32.f32 %v1379
      %v1412 = vcvt.s32.f32 %v1380
      %v1413 = vcvt.s32.f32 %v1381
      %v1414 = vcvt.s32.f32 %v1382
      %v1415 = vcvt.s32.f32 %v1383
      %v1416 = vcvt.s32.f32 %v1384
      %v1417 = vcvt.s32.f32 %v1385
      %v1418 = vcvt.s32.f32 %v1386
      %v1419 = vcvt.s32.f32 %v1387
      %v1420 = vcvt.s32.f32 %v1388
      %v1421 = vcvt.s32.f32 %v1389
      %v1422 = vcvt.s32.f32 %v1390
      %v1423 = vcvt.s32.f32 %v1391
      %v1424 = vcvt.s32.f32 %v1392
      %v1425 = vcvt.s32.f32 %v1393
      %v1426 = vcvt.s32.f32 %v1394
      %v1427 = vcvt.s32.f32 %v1395
      %v1428 = vcvt.s32.f32 %v1396
      %v1429 = vcvt.s32.f32 %v1397
      %v1430 = vcvt.s32.f32 %v1398
      %v1431 = vcvt.s32.f32 %v1399
      %v1432 = vcvt.s32.f32 %v1400
      %v1433 = vcvt.s32.f32 %v1401
      %v1434 = vcvt.s32.f32 %v1402
      %v1435 = vcvt.s32.f32 %v1403
      %v1436 = vcvt.s32.f32 %v1404
      %v1437 = vcvt.s32.f32 %v1405
      %v1438 = vcvt.s32.f32 %v1406
      %v1439 = vcvt.s32.f32 %v1407
      %v1440 = vcvt.s32.f32 %v1408
      %v1441 = vcvt.s32.f32 %v1409
      %v1442 = vsub.f32 1.0, %v1410
      %v1443 = vsub.f32 1.0, %v1411
      %v1444 = vsub.f32 1.0, %v1412
      %v1445 = vsub.f32 1.0, %v1413
      %v1446 = vsub.f32 1.0, %v1414
      %v1447 = vsub.f32 1.0, %v1415
      %v1448 = vsub.f32 1.0, %v1416
      %v1449 = vsub.f32 1.0, %v1417
      %v1450 = vsub.f32 1.0, %v1418
      %v1451 = vsub.f32 1.0, %v1419
      %v1452 = vsub.f32 1.0, %v1420
      %v1453 = vsub.f32 1.0, %v1421
      %v1454 = vsub.f32 1.0, %v1422
      %v1455 = vsub.f32 1.0, %v1423
      %v1456 = vsub.f32 1.0, %v1424
      %v1457 = vsub.f32 1.0, %v1425
      %v1458 = vsub.f32 1.0, %v1426
      %v1459 = vsub.f32 1.0, %v1427
      %v1460 = vsub.f32 1.0, %v1428
      %v1461 = vsub.f32 1.0, %v1429
      %v1462 = vsub.f32 1.0, %v1430
      %v1463 = vsub.f32 1.0, %v1431
      %v1464 = vsub.f32 1.0, %v1432
      %v1465 = vsub.f32 1.0, %v1433
      %v1466 = vsub.f32 1.0, %v1434
      %v1467 = vsub.f32 1.0, %v1435
      %v1468 = vsub.f32 1.0, %v1436
      %v1469 = vsub.f32 1.0, %v1437
      %v1470 = vsub.f32 1.0, %v1438
      %v1471 = vsub.f32 1.0, %v1439
      %v1472 = vsub.f32 1.0, %v1440
      %v1473 = vsub.f32 1.0, %v1441
      %v1474 = vmul.f32 %v1314, %v1442
      %v1475 = vmul.f32 %v1315, %v1443
      %v1476 = vmul.f32 %v1316, %v1444
      %v1477 = vmul.f32 %v1317, %v1445
      %v1478 = vmul.f32 %v1318, %v1446
      %v1479 = vmul.f32 %v1319, %v1447
      %v1480 = vmul.f32 %v1320, %v1448
      %v1481 = vmul.f32 %v1321, %v1449
      %v1482 = vmul.f32 %v1322, %v1450
      %v1483 = vmul.f32 %v1323, %v1451
      %v1484 = vmul.f32 %v1324, %v1452
      %v1485 = vmul.f32 %v1325, %v1453
      %v1486 = vmul.f32 %v1326, %v1454
      %v1487 = vmul.f32 %v1327, %v1455
      %v1488 = vmul.f32 %v1328, %v1456
      %v1489 = vmul.f32 %v1329, %v1457
      %v1490 = vmul.f32 %v1330, %v1458
      %v1491 = vmul.f32 %v1331, %v1459
      %v1492 = vmul.f32 %v1332, %v1460
      %v1493 = vmul.f32 %v1333, %v1461
      %v1494 = vmul.f32 %v1334, %v1462
      %v1495 = vmul.f32 %v1335, %v1463
      %v1496 = vmul.f32 %v1336, %v1464
      %v1497 = vmul.f32 %v1337, %v1465
      %v1498 = vmul.f32 %v1338, %v1466
      %v1499 = vmul.f32 %v1339, %v1467
      %v1500 = vmul.f32 %v1340, %v1468
      %v1501 = vmul.f32 %v1341, %v1469
      %v1502 = vmul.f32 %v1342, %v1470
      %v1503 = vmul.f32 %v1343, %v1471
      %v1504 = vmul.f32 %v1344, %v1472
      %v1505 = vmul.f32 %v1345, %v1473
      %vm1506 = vcmask 64512
      %1507 = vst.msk [vmem:[#allocation2] sm:$0xff] %vm1506, %v1474
      %1508 = vst.msk [vmem:[#allocation2 + $0x8] sm:$0xff] %vm1506, %v1475
      %1509 = vst.msk [vmem:[#allocation2 + $0x10] sm:$0xff] %vm1506, %v1476
      %1510 = vst.msk [vmem:[#allocation2 + $0x18] sm:$0xff] %vm1506, %v1477
      %1511 = vst.msk [vmem:[#allocation2 + $0x20] sm:$0xff] %vm1506, %v1478
      %1512 = vst.msk [vmem:[#allocation2 + $0x28] sm:$0xff] %vm1506, %v1479
      %1513 = vst.msk [vmem:[#allocation2 + $0x30] sm:$0xff] %vm1506, %v1480
      %1514 = vst.msk [vmem:[#allocation2 + $0x38] sm:$0xff] %vm1506, %v1481
      %1515 = vst.msk [vmem:[#allocation2 + $0x40] sm:$0xff] %vm1506, %v1482
      %1516 = vst.msk [vmem:[#allocation2 + $0x48] sm:$0xff] %vm1506, %v1483
      %1517 = vst.msk [vmem:[#allocation2 + $0x50] sm:$0xff] %vm1506, %v1484
      %1518 = vst.msk [vmem:[#allocation2 + $0x58] sm:$0xff] %vm1506, %v1485
      %1519 = vst.msk [vmem:[#allocation2 + $0x60] sm:$0xff] %vm1506, %v1486
      %1520 = vst.msk [vmem:[#allocation2 + $0x68] sm:$0xff] %vm1506, %v1487
      %1521 = vst.msk [vmem:[#allocation2 + $0x70] sm:$0xff] %vm1506, %v1488
      %1522 = vst.msk [vmem:[#allocation2 + $0x78] sm:$0xff] %vm1506, %v1489
      %1523 = vst.msk [vmem:[#allocation2 + $0x80] sm:$0xff] %vm1506, %v1490
      %1524 = vst.msk [vmem:[#allocation2 + $0x88] sm:$0xff] %vm1506, %v1491
      %1525 = vst.msk [vmem:[#allocation2 + $0x90] sm:$0xff] %vm1506, %v1492
      %1526 = vst.msk [vmem:[#allocation2 + $0x98] sm:$0xff] %vm1506, %v1493
      %1527 = vst.msk [vmem:[#allocation2 + $0xa0] sm:$0xff] %vm1506, %v1494
      %1528 = vst.msk [vmem:[#allocation2 + $0xa8] sm:$0xff] %vm1506, %v1495
      %1529 = vst.msk [vmem:[#allocation2 + $0xb0] sm:$0xff] %vm1506, %v1496
      %1530 = vst.msk [vmem:[#allocation2 + $0xb8] sm:$0xff] %vm1506, %v1497
      %1531 = vst.msk [vmem:[#allocation2 + $0xc0] sm:$0xff] %vm1506, %v1498
      %1532 = vst.msk [vmem:[#allocation2 + $0xc8] sm:$0xff] %vm1506, %v1499
      %1533 = vst.msk [vmem:[#allocation2 + $0xd0] sm:$0xff] %vm1506, %v1500
      %1534 = vst.msk [vmem:[#allocation2 + $0xd8] sm:$0xff] %vm1506, %v1501
      %1535 = vst.msk [vmem:[#allocation2 + $0xe0] sm:$0xff] %vm1506, %v1502
      %1536 = vst.msk [vmem:[#allocation2 + $0xe8] sm:$0xff] %vm1506, %v1503
      %1537 = vst.msk [vmem:[#allocation2 + $0xf0] sm:$0xff] %vm1506, %v1504
      %1538 = vst.msk [vmem:[#allocation2 + $0xf8] sm:$0xff] %vm1506, %v1505
      %s1539 = scalar_lea.vmem [#allocation3], 24
      %1540 = vst.msk [vmem:[%s1539 + $0x1] sm:$0xff] %vm1506, %v1410
      %1541 = vst.msk [vmem:[%s1539 + $0x9] sm:$0xff] %vm1506, %v1411
      %1542 = vst.msk [vmem:[%s1539 + $0x19] sm:$0xff] %vm1506, %v1412
      %1543 = vst.msk [vmem:[%s1539 + $0x21] sm:$0xff] %vm1506, %v1413
      %1544 = vst.msk [vmem:[%s1539 + $0x31] sm:$0xff] %vm1506, %v1414
      %1545 = vst.msk [vmem:[%s1539 + $0x39] sm:$0xff] %vm1506, %v1415
      %1546 = vst.msk [vmem:[%s1539 + $0x49] sm:$0xff] %vm1506, %v1416
      %1547 = vst.msk [vmem:[%s1539 + $0x51] sm:$0xff] %vm1506, %v1417
      %1548 = vst.msk [vmem:[%s1539 + $0x61] sm:$0xff] %vm1506, %v1418
      %1549 = vst.msk [vmem:[%s1539 + $0x69] sm:$0xff] %vm1506, %v1419
      %1550 = vst.msk [vmem:[%s1539 + $0x79] sm:$0xff] %vm1506, %v1420
      %1551 = vst.msk [vmem:[%s1539 + $0x81] sm:$0xff] %vm1506, %v1421
      %1552 = vst.msk [vmem:[%s1539 + $0x91] sm:$0xff] %vm1506, %v1422
      %1553 = vst.msk [vmem:[%s1539 + $0x99] sm:$0xff] %vm1506, %v1423
      %1554 = vst.msk [vmem:[%s1539 + $0xa9] sm:$0xff] %vm1506, %v1424
      %1555 = vst.msk [vmem:[%s1539 + $0xb1] sm:$0xff] %vm1506, %v1425
      %1556 = vst.msk [vmem:[%s1539 + $0xc1] sm:$0xff] %vm1506, %v1426
      %1557 = vst.msk [vmem:[%s1539 + $0xc9] sm:$0xff] %vm1506, %v1427
      %1558 = vst.msk [vmem:[%s1539 + $0xd9] sm:$0xff] %vm1506, %v1428
      %1559 = vst.msk [vmem:[%s1539 + $0xe1] sm:$0xff] %vm1506, %v1429
      %1560 = vst.msk [vmem:[%s1539 + $0xf1] sm:$0xff] %vm1506, %v1430
      %1561 = vst.msk [vmem:[%s1539 + $0xf9] sm:$0xff] %vm1506, %v1431
      %1562 = vst.msk [vmem:[%s1539 + $0x109] sm:$0xff] %vm1506, %v1432
      %1563 = vst.msk [vmem:[%s1539 + $0x111] sm:$0xff] %vm1506, %v1433
      %1564 = vst.msk [vmem:[%s1539 + $0x121] sm:$0xff] %vm1506, %v1434
      %1565 = vst.msk [vmem:[%s1539 + $0x129] sm:$0xff] %vm1506, %v1435
      %1566 = vst.msk [vmem:[%s1539 + $0x139] sm:$0xff] %vm1506, %v1436
      %1567 = vst.msk [vmem:[%s1539 + $0x141] sm:$0xff] %vm1506, %v1437
      %1568 = vst.msk [vmem:[%s1539 + $0x151] sm:$0xff] %vm1506, %v1438
      %1569 = vst.msk [vmem:[%s1539 + $0x159] sm:$0xff] %vm1506, %v1439
      %1570 = vst.msk [vmem:[%s1539 + $0x169] sm:$0xff] %vm1506, %v1440
      %1571 = vst.msk [vmem:[%s1539 + $0x171] sm:$0xff] %vm1506, %v1441
      %v1572 = vld [vmem:[#allocation3] sm:$0xff]
      %v1573 = vld [vmem:[#allocation3 + $0x8] sm:$0xff]
      %v1574 = vld [vmem:[#allocation3 + $0x10] sm:$0x3]
      %v1575 = vld [vmem:[#allocation3 + $0x30] sm:$0xff]
      %v1576 = vld [vmem:[#allocation3 + $0x38] sm:$0xff]
      %v1577 = vld [vmem:[#allocation3 + $0x40] sm:$0x3]
      %v1578 = vld [vmem:[#allocation3 + $0x60] sm:$0xff]
      %v1579 = vld [vmem:[#allocation3 + $0x68] sm:$0xff]
      %v1580 = vld [vmem:[#allocation3 + $0x70] sm:$0x3]
      %v1581 = vld [vmem:[#allocation3 + $0x90] sm:$0xff]
      %v1582 = vld [vmem:[#allocation3 + $0x98] sm:$0xff]
      %v1583 = vld [vmem:[#allocation3 + $0xa0] sm:$0x3]
      %v1584 = vld [vmem:[#allocation3 + $0xc0] sm:$0xff]
      %v1585 = vld [vmem:[#allocation3 + $0xc8] sm:$0xff]
      %v1586 = vld [vmem:[#allocation3 + $0xd0] sm:$0x3]
      %v1587 = vld [vmem:[#allocation3 + $0xf0] sm:$0xff]
      %v1588 = vld [vmem:[#allocation3 + $0xf8] sm:$0xff]
      %v1589 = vld [vmem:[#allocation3 + $0x100] sm:$0x3]
      %v1590 = vld [vmem:[#allocation3 + $0x120] sm:$0xff]
      %v1591 = vld [vmem:[#allocation3 + $0x128] sm:$0xff]
      %v1592 = vld [vmem:[#allocation3 + $0x130] sm:$0x3]
      %v1593 = vld [vmem:[#allocation3 + $0x150] sm:$0xff]
      %v1594 = vld [vmem:[#allocation3 + $0x158] sm:$0xff]
      %v1595 = vld [vmem:[#allocation3 + $0x160] sm:$0x3]
      %v1596 = vld [vmem:[%s1539] sm:$0xff]
      %v1597 = vld [vmem:[%s1539 + $0x8] sm:$0xff]
      %v1598 = vld [vmem:[%s1539 + $0x10] sm:$0x3]
      %v1599 = vld [vmem:[%s1539 + $0x30] sm:$0xff]
      %v1600 = vld [vmem:[%s1539 + $0x38] sm:$0xff]
      %v1601 = vld [vmem:[%s1539 + $0x40] sm:$0x3]
      %v1602 = vld [vmem:[%s1539 + $0x60] sm:$0xff]
      %v1603 = vld [vmem:[%s1539 + $0x68] sm:$0xff]
      %v1604 = vld [vmem:[%s1539 + $0x70] sm:$0x3]
      %v1605 = vld [vmem:[%s1539 + $0x90] sm:$0xff]
      %v1606 = vld [vmem:[%s1539 + $0x98] sm:$0xff]
      %v1607 = vld [vmem:[%s1539 + $0xa0] sm:$0x3]
      %v1608 = vld [vmem:[%s1539 + $0xc0] sm:$0xff]
      %v1609 = vld [vmem:[%s1539 + $0xc8] sm:$0xff]
      %v1610 = vld [vmem:[%s1539 + $0xd0] sm:$0x3]
      %v1611 = vld [vmem:[%s1539 + $0xf0] sm:$0xff]
      %v1612 = vld [vmem:[%s1539 + $0xf8] sm:$0xff]
      %v1613 = vld [vmem:[%s1539 + $0x100] sm:$0x3]
      %v1614 = vld [vmem:[%s1539 + $0x120] sm:$0xff]
      %v1615 = vld [vmem:[%s1539 + $0x128] sm:$0xff]
      %v1616 = vld [vmem:[%s1539 + $0x130] sm:$0x3]
      %v1617 = vld [vmem:[%s1539 + $0x150] sm:$0xff]
      %v1618 = vld [vmem:[%s1539 + $0x158] sm:$0xff]
      %v1619 = vld [vmem:[%s1539 + $0x160] sm:$0x3]
      %v1620 = vmax.f32 %v1572, %v1596
      %v1621 = vmax.f32 %v1573, %v1597
      %v1622 = vmax.f32 %v1574, %v1598
      %v1623 = vmax.f32 %v1575, %v1599
      %v1624 = vmax.f32 %v1576, %v1600
      %v1625 = vmax.f32 %v1577, %v1601
      %v1626 = vmax.f32 %v1578, %v1602
      %v1627 = vmax.f32 %v1579, %v1603
      %v1628 = vmax.f32 %v1580, %v1604
      %v1629 = vmax.f32 %v1581, %v1605
      %v1630 = vmax.f32 %v1582, %v1606
      %v1631 = vmax.f32 %v1583, %v1607
      %v1632 = vmax.f32 %v1584, %v1608
      %v1633 = vmax.f32 %v1585, %v1609
      %v1634 = vmax.f32 %v1586, %v1610
      %v1635 = vmax.f32 %v1587, %v1611
      %v1636 = vmax.f32 %v1588, %v1612
      %v1637 = vmax.f32 %v1589, %v1613
      %v1638 = vmax.f32 %v1590, %v1614
      %v1639 = vmax.f32 %v1591, %v1615
      %v1640 = vmax.f32 %v1592, %v1616
      %v1641 = vmax.f32 %v1593, %v1617
      %v1642 = vmax.f32 %v1594, %v1618
      %v1643 = vmax.f32 %v1595, %v1619
      %s1644 = scalar_lea.vmem [#allocation3], 48
      %v1645 = vld [vmem:[%s1644] sm:$0xff]
      %v1646 = vld [vmem:[%s1644 + $0x8] sm:$0xff]
      %v1647 = vld [vmem:[%s1644 + $0x10] sm:$0x3]
      %v1648 = vld [vmem:[%s1644 + $0x30] sm:$0xff]
      %v1649 = vld [vmem:[%s1644 + $0x38] sm:$0xff]
      %v1650 = vld [vmem:[%s1644 + $0x40] sm:$0x3]
      %v1651 = vld [vmem:[%s1644 + $0x60] sm:$0xff]
      %v1652 = vld [vmem:[%s1644 + $0x68] sm:$0xff]
      %v1653 = vld [vmem:[%s1644 + $0x70] sm:$0x3]
      %v1654 = vld [vmem:[%s1644 + $0x90] sm:$0xff]
      %v1655 = vld [vmem:[%s1644 + $0x98] sm:$0xff]
      %v1656 = vld [vmem:[%s1644 + $0xa0] sm:$0x3]
      %v1657 = vld [vmem:[%s1644 + $0xc0] sm:$0xff]
      %v1658 = vld [vmem:[%s1644 + $0xc8] sm:$0xff]
      %v1659 = vld [vmem:[%s1644 + $0xd0] sm:$0x3]
      %v1660 = vld [vmem:[%s1644 + $0xf0] sm:$0xff]
      %v1661 = vld [vmem:[%s1644 + $0xf8] sm:$0xff]
      %v1662 = vld [vmem:[%s1644 + $0x100] sm:$0x3]
      %v1663 = vld [vmem:[%s1644 + $0x120] sm:$0xff]
      %v1664 = vld [vmem:[%s1644 + $0x128] sm:$0xff]
      %v1665 = vld [vmem:[%s1644 + $0x130] sm:$0x3]
      %v1666 = vld [vmem:[%s1644 + $0x150] sm:$0xff]
      %v1667 = vld [vmem:[%s1644 + $0x158] sm:$0xff]
      %v1668 = vld [vmem:[%s1644 + $0x160] sm:$0x3]
      %v1669 = vmax.f32 %v1620, %v1645
      %v1670 = vmax.f32 %v1621, %v1646
      %v1671 = vmax.f32 %v1622, %v1647
      %v1672 = vmax.f32 %v1623, %v1648
      %v1673 = vmax.f32 %v1624, %v1649
      %v1674 = vmax.f32 %v1625, %v1650
      %v1675 = vmax.f32 %v1626, %v1651
      %v1676 = vmax.f32 %v1627, %v1652
      %v1677 = vmax.f32 %v1628, %v1653
      %v1678 = vmax.f32 %v1629, %v1654
      %v1679 = vmax.f32 %v1630, %v1655
      %v1680 = vmax.f32 %v1631, %v1656
      %v1681 = vmax.f32 %v1632, %v1657
      %v1682 = vmax.f32 %v1633, %v1658
      %v1683 = vmax.f32 %v1634, %v1659
      %v1684 = vmax.f32 %v1635, %v1660
      %v1685 = vmax.f32 %v1636, %v1661
      %v1686 = vmax.f32 %v1637, %v1662
      %v1687 = vmax.f32 %v1638, %v1663
      %v1688 = vmax.f32 %v1639, %v1664
      %v1689 = vmax.f32 %v1640, %v1665
      %v1690 = vmax.f32 %v1641, %v1666
      %v1691 = vmax.f32 %v1642, %v1667
      %v1692 = vmax.f32 %v1643, %v1668
      %1693 = vst.msk [vmem:[#allocation4] sm:$0xff] %vm1506, %v1669
      %1694 = vst.msk [vmem:[#allocation4 + $0x8] sm:$0xff] %vm1506, %v1670
      %vm1695 = vcmask 58368
      %1696 = vst.msk [vmem:[#allocation4 + $0x10] sm:$0x3] %vm1695, %v1671
      %1697 = vst.msk [vmem:[#allocation4 + $0x18] sm:$0xff] %vm1506, %v1672
      %1698 = vst.msk [vmem:[#allocation4 + $0x20] sm:$0xff] %vm1506, %v1673
      %1699 = vst.msk [vmem:[#allocation4 + $0x28] sm:$0x3] %vm1695, %v1674
      %1700 = vst.msk [vmem:[#allocation4 + $0x30] sm:$0xff] %vm1506, %v1675
      %1701 = vst.msk [vmem:[#allocation4 + $0x38] sm:$0xff] %vm1506, %v1676
      %1702 = vst.msk [vmem:[#allocation4 + $0x40] sm:$0x3] %vm1695, %v1677
      %1703 = vst.msk [vmem:[#allocation4 + $0x48] sm:$0xff] %vm1506, %v1678
      %1704 = vst.msk [vmem:[#allocation4 + $0x50] sm:$0xff] %vm1506, %v1679
      %1705 = vst.msk [vmem:[#allocation4 + $0x58] sm:$0x3] %vm1695, %v1680
      %1706 = vst.msk [vmem:[#allocation4 + $0x60] sm:$0xff] %vm1506, %v1681
      %1707 = vst.msk [vmem:[#allocation4 + $0x68] sm:$0xff] %vm1506, %v1682
      %1708 = vst.msk [vmem:[#allocation4 + $0x70] sm:$0x3] %vm1695, %v1683
      %1709 = vst.msk [vmem:[#allocation4 + $0x78] sm:$0xff] %vm1506, %v1684
      %1710 = vst.msk [vmem:[#allocation4 + $0x80] sm:$0xff] %vm1506, %v1685
      %1711 = vst.msk [vmem:[#allocation4 + $0x88] sm:$0x3] %vm1695, %v1686
      %1712 = vst.msk [vmem:[#allocation4 + $0x90] sm:$0xff] %vm1506, %v1687
      %1713 = vst.msk [vmem:[#allocation4 + $0x98] sm:$0xff] %vm1506, %v1688
      %1714 = vst.msk [vmem:[#allocation4 + $0xa0] sm:$0x3] %vm1695, %v1689
      %1715 = vst.msk [vmem:[#allocation4 + $0xa8] sm:$0xff] %vm1506, %v1690
      %1716 = vst.msk [vmem:[#allocation4 + $0xb0] sm:$0xff] %vm1506, %v1691
      %1717 = vst.msk [vmem:[#allocation4 + $0xb8] sm:$0x3] %vm1695, %v1692
      %v1718 = vld [vmem:[#allocation4] sm:$0xff]
      %v1719 = vld [vmem:[#allocation4 + $0x8] sm:$0xff]
      %v1720 = vld [vmem:[#allocation4 + $0x18] sm:$0xff]
      %v1721 = vld [vmem:[#allocation4 + $0x20] sm:$0xff]
      %v1722 = vld [vmem:[#allocation4 + $0x30] sm:$0xff]
      %v1723 = vld [vmem:[#allocation4 + $0x38] sm:$0xff]
      %v1724 = vld [vmem:[#allocation4 + $0x48] sm:$0xff]
      %v1725 = vld [vmem:[#allocation4 + $0x50] sm:$0xff]
      %v1726 = vld [vmem:[#allocation4 + $0x60] sm:$0xff]
      %v1727 = vld [vmem:[#allocation4 + $0x68] sm:$0xff]
      %v1728 = vld [vmem:[#allocation4 + $0x78] sm:$0xff]
      %v1729 = vld [vmem:[#allocation4 + $0x80] sm:$0xff]
      %v1730 = vld [vmem:[#allocation4 + $0x90] sm:$0xff]
      %v1731 = vld [vmem:[#allocation4 + $0x98] sm:$0xff]
      %v1732 = vld [vmem:[#allocation4 + $0xa8] sm:$0xff]
      %v1733 = vld [vmem:[#allocation4 + $0xb0] sm:$0xff]
      %v1734 = vld [vmem:[#allocation4 + $0x1] sm:$0xff]
      %v1735 = vld [vmem:[#allocation4 + $0x9] sm:$0xff]
      %v1736 = vld [vmem:[#allocation4 + $0x19] sm:$0xff]
      %v1737 = vld [vmem:[#allocation4 + $0x21] sm:$0xff]
      %v1738 = vld [vmem:[#allocation4 + $0x31] sm:$0xff]
      %v1739 = vld [vmem:[#allocation4 + $0x39] sm:$0xff]
      %v1740 = vld [vmem:[#allocation4 + $0x49] sm:$0xff]
      %v1741 = vld [vmem:[#allocation4 + $0x51] sm:$0xff]
      %v1742 = vld [vmem:[#allocation4 + $0x61] sm:$0xff]
      %v1743 = vld [vmem:[#allocation4 + $0x69] sm:$0xff]
      %v1744 = vld [vmem:[#allocation4 + $0x79] sm:$0xff]
      %v1745 = vld [vmem:[#allocation4 + $0x81] sm:$0xff]
      %v1746 = vld [vmem:[#allocation4 + $0x91] sm:$0xff]
      %v1747 = vld [vmem:[#allocation4 + $0x99] sm:$0xff]
      %v1748 = vld [vmem:[#allocation4 + $0xa9] sm:$0xff]
      %v1749 = vld [vmem:[#allocation4 + $0xb1] sm:$0xff]
      %v1750 = vmax.f32 %v1718, %v1734
      %v1751 = vmax.f32 %v1719, %v1735
      %v1752 = vmax.f32 %v1720, %v1736
      %v1753 = vmax.f32 %v1721, %v1737
      %v1754 = vmax.f32 %v1722, %v1738
      %v1755 = vmax.f32 %v1723, %v1739
      %v1756 = vmax.f32 %v1724, %v1740
      %v1757 = vmax.f32 %v1725, %v1741
      %v1758 = vmax.f32 %v1726, %v1742
      %v1759 = vmax.f32 %v1727, %v1743
      %v1760 = vmax.f32 %v1728, %v1744
      %v1761 = vmax.f32 %v1729, %v1745
      %v1762 = vmax.f32 %v1730, %v1746
      %v1763 = vmax.f32 %v1731, %v1747
      %v1764 = vmax.f32 %v1732, %v1748
      %v1765 = vmax.f32 %v1733, %v1749
      %v1766 = vld [vmem:[#allocation4 + $0x2] sm:$0xff]
      %v1767 = vld [vmem:[#allocation4 + $0xa] sm:$0xff]
      %v1768 = vld [vmem:[#allocation4 + $0x1a] sm:$0xff]
      %v1769 = vld [vmem:[#allocation4 + $0x22] sm:$0xff]
      %v1770 = vld [vmem:[#allocation4 + $0x32] sm:$0xff]
      %v1771 = vld [vmem:[#allocation4 + $0x3a] sm:$0xff]
      %v1772 = vld [vmem:[#allocation4 + $0x4a] sm:$0xff]
      %v1773 = vld [vmem:[#allocation4 + $0x52] sm:$0xff]
      %v1774 = vld [vmem:[#allocation4 + $0x62] sm:$0xff]
      %v1775 = vld [vmem:[#allocation4 + $0x6a] sm:$0xff]
      %v1776 = vld [vmem:[#allocation4 + $0x7a] sm:$0xff]
      %v1777 = vld [vmem:[#allocation4 + $0x82] sm:$0xff]
      %v1778 = vld [vmem:[#allocation4 + $0x92] sm:$0xff]
      %v1779 = vld [vmem:[#allocation4 + $0x9a] sm:$0xff]
      %v1780 = vld [vmem:[#allocation4 + $0xaa] sm:$0xff]
      %v1781 = vld [vmem:[#allocation4 + $0xb2] sm:$0xff]
      %v1782 = vmax.f32 %v1750, %v1766
      %v1783 = vmax.f32 %v1751, %v1767
      %v1784 = vmax.f32 %v1752, %v1768
      %v1785 = vmax.f32 %v1753, %v1769
      %v1786 = vmax.f32 %v1754, %v1770
      %v1787 = vmax.f32 %v1755, %v1771
      %v1788 = vmax.f32 %v1756, %v1772
      %v1789 = vmax.f32 %v1757, %v1773
      %v1790 = vmax.f32 %v1758, %v1774
      %v1791 = vmax.f32 %v1759, %v1775
      %v1792 = vmax.f32 %v1760, %v1776
      %v1793 = vmax.f32 %v1761, %v1777
      %v1794 = vmax.f32 %v1762, %v1778
      %v1795 = vmax.f32 %v1763, %v1779
      %v1796 = vmax.f32 %v1764, %v1780
      %v1797 = vmax.f32 %v1765, %v1781
      %v1798 = vpack.c.bf16 %v1783, %v1782
      %v1799 = vpack.c.bf16 %v1785, %v1784
      %v1800 = vpack.c.bf16 %v1787, %v1786
      %v1801 = vpack.c.bf16 %v1789, %v1788
      %v1802 = vpack.c.bf16 %v1791, %v1790
      %v1803 = vpack.c.bf16 %v1793, %v1792
      %v1804 = vpack.c.bf16 %v1795, %v1794
      %v1805 = vpack.c.bf16 %v1797, %v1796
      %v1814 = vunpack.c.l.b16 %v1798
      %v1815 = vunpack.c.h.b16 %v1798
      %v1816 = vunpack.c.l.b16 %v1799
      %v1817 = vunpack.c.h.b16 %v1799
      %v1818 = vunpack.c.l.b16 %v1800
      %v1819 = vunpack.c.h.b16 %v1800
      %v1820 = vunpack.c.l.b16 %v1801
      %v1821 = vunpack.c.h.b16 %v1801
      %v1822 = vunpack.c.l.b16 %v1802
      %v1823 = vunpack.c.h.b16 %v1802
      %v1824 = vunpack.c.l.b16 %v1803
      %v1825 = vunpack.c.h.b16 %v1803
      %v1826 = vunpack.c.l.b16 %v1804
      %v1827 = vunpack.c.h.b16 %v1804
      %v1828 = vunpack.c.l.b16 %v1805
      %v1829 = vunpack.c.h.b16 %v1805
      %v1830 = vpack.c.b16 %v1814, %v1814
      %v1831 = vpack.c.b16 %v1815, %v1815
      %v1832 = vpack.c.b16 %v1816, %v1816
      %v1833 = vpack.c.b16 %v1817, %v1817
      %v1834 = vpack.c.b16 %v1818, %v1818
      %v1835 = vpack.c.b16 %v1819, %v1819
      %v1836 = vpack.c.b16 %v1820, %v1820
      %v1837 = vpack.c.b16 %v1821, %v1821
      %v1838 = vpack.c.b16 %v1822, %v1822
      %v1839 = vpack.c.b16 %v1823, %v1823
      %v1840 = vpack.c.b16 %v1824, %v1824
      %v1841 = vpack.c.b16 %v1825, %v1825
      %v1842 = vpack.c.b16 %v1826, %v1826
      %v1843 = vpack.c.b16 %v1827, %v1827
      %v1844 = vpack.c.b16 %v1828, %v1828
      %v1845 = vpack.c.b16 %v1829, %v1829
      %vm1862 = vcmask 60416
      %1863 = vst.msk [vmem:[%s204] sm:$0xf] %vm1862, %v1830
      %1864 = vst.msk [vmem:[%s204 + $0x4] sm:$0xf] %vm1862, %v1831
      %1865 = vst.msk [vmem:[%s204 + $0x8] sm:$0xf] %vm1862, %v1832
      %1866 = vst.msk [vmem:[%s204 + $0xc] sm:$0xf] %vm1862, %v1833
      %1867 = vst.msk [vmem:[%s204 + $0x10] sm:$0xf] %vm1862, %v1834
      %1868 = vst.msk [vmem:[%s204 + $0x14] sm:$0xf] %vm1862, %v1835
      %1869 = vst.msk [vmem:[%s204 + $0x18] sm:$0xf] %vm1862, %v1836
      %1870 = vst.msk [vmem:[%s204 + $0x1c] sm:$0xf] %vm1862, %v1837
      %1871 = vst.msk [vmem:[%s204 + $0x20] sm:$0xf] %vm1862, %v1838
      %1872 = vst.msk [vmem:[%s204 + $0x24] sm:$0xf] %vm1862, %v1839
      %1873 = vst.msk [vmem:[%s204 + $0x28] sm:$0xf] %vm1862, %v1840
      %1874 = vst.msk [vmem:[%s204 + $0x2c] sm:$0xf] %vm1862, %v1841
      %1875 = vst.msk [vmem:[%s204 + $0x30] sm:$0xf] %vm1862, %v1842
      %1876 = vst.msk [vmem:[%s204 + $0x34] sm:$0xf] %vm1862, %v1843
      %1877 = vst.msk [vmem:[%s204 + $0x38] sm:$0xf] %vm1862, %v1844
      %1878 = vst.msk [vmem:[%s204 + $0x3c] sm:$0xf] %vm1862, %v1845
      %s1879 = smul.u32 %s19, 2
      %s1880 = sadd.s32 %s1879, %s18
      %p1881 = scmp.lt.s32.totalorder %s1880, 3
      %s1882 = scalar_select %p1881, %s1880, 3
      %s1883 = smul.addr %s1882, 16
      %s1884 = smul.addr %s1883, 4
      %s1885 = scalar_lea.vmem %s3, %s1884
      // Predicated region
      $region37: #{spiking_tokenizer.5} parent=31 // pred_check
        %p1886 = pneg %p120
      $region38: #{spiking_tokenizer.5} parent=31 // pred_check_branch
        %1888 = sbr.rel (%p1886) target = $region40
      $region39: #{spiking_tokenizer.5} parent=31 // pred_region
        %s1889 = smul.u32 %s19, 2
        %s1890 = sadd.s32 %s1889, %s18
      $region40: #{spiking_tokenizer.5} parent=31 // pred_fallthru
        _
    $region32: #{spiking_tokenizer.5} parent=5 // pred_fallthru
      _
    %p1891 = scmp.le.s32.totalorder 2, %s9
    // Predicated region
    $region41: #{spiking_tokenizer.5} parent=5 // pred_check
      %p1892 = pneg %p1891
    $region42: #{spiking_tokenizer.5} parent=5 // pred_check_branch
      %1894 = sbr.rel (%p1892) target = $region44
    $region43: #{spiking_tokenizer.5} parent=5 // pred_region
      %s1895 = ssub.s32 %s9, 2
      // Predicated region
      $region45: #{spiking_tokenizer.5} parent=43 // pred_check
        %p1896 = pneg %p126
      $region46: #{spiking_tokenizer.5} parent=43 // pred_check_branch
        %1898 = sbr.rel (%p1896) target = $region48
      $region47: #{spiking_tokenizer.5} parent=43 // pred_region
        %s1899 = smul.u32 %s21, 2
        %s1900 = sadd.s32 %s1899, %s20
        %p1901 = scmp.lt.s32.totalorder %s1900, 3
        %s1902 = scalar_select %p1901, %s1900, 3
        %s1903 = smul.addr %s1902, 16
        %s1904 = smul.addr %s1903, 4
        %s1905 = scalar_lea.vmem %s3, %s1904
      $region48: #{spiking_tokenizer.5} parent=43 // pred_fallthru
        _
    $region44: #{spiking_tokenizer.5} parent=5 // pred_fallthru
      _
  $region6: #{spiking_tokenizer.5} parent=0 // loop_footer
    %s13 = sadd.s32 1, %s9
  $region7: #{spiking_tokenizer.5} parent=0 // loop_footer_branch
    %8 = sbr.rel target = $region3
  $region8: #{spiking_tokenizer.5} parent=0 // loop_exit
    _

// kernel: spiking_tokenizer.6
$region0: #{spiking_tokenizer.6}
  #allocation0 [shape = 'u32[]', space=smem, size = 0x4, offset = 0x4, fixed_abs, tag = 'smem constant byte address 0x4 - core index']
  #allocation1 [shape = 'u32[144,128]{1,0:T(1,128)}', space=vmem, size = 0x12000, scoped, tag = 'internal scratch']
  #allocation2 [shape = 'f32[8,8,16]{2,1,0:T(8,128)}', space=vmem, size = 0x8000, scoped, tag = 'scratch operand']
  #allocation3 [shape = 'f32[10,10,16]{2,1,0:T(8,128)}', space=vmem, size = 0x14000, scoped, tag = 'scratch operand']
  #allocation4 [shape = 'f32[4,10,16]{2,1,0:T(8,128)}', space=vmem, size = 0x8000, scoped, tag = 'scratch operand']
  %s0 = inlined_call_operand.vmem [shape: bf16[4,80,24], index: 0, kind: input, shape index: {}]
  %s1 = inlined_call_operand.vmem [shape: bf16[3,24,16], index: 1, kind: input, shape index: {}]
  %s2 = inlined_call_operand.vmem [shape: f32[1,16], index: 2, kind: input, shape index: {}]
  %s3 = inlined_call_operand.vmem [shape: bf16[4,4,8,16], index: 3, kind: output, shape index: {}]
  %s4 = sld [smem:[#allocation0]]
  $region49: #{spiking_tokenizer.6} parent=0
    _
  %s6 = ssub.s32 1, %s4
  %s7 = scalar_select 0, %s6, %s4
  loop: start=0, step=1, limit=6
  $region2: #{spiking_tokenizer.6} parent=0 // loop_pre_header
    _
  $region3: #{spiking_tokenizer.6} parent=0 // loop_header
    %s9 = sphi 0, %s13
    %p10 = scmp.ge.s32.totalorder %s9, 6
    %s16 = sphi 0, %s28
    %s17 = sphi 0, %s24
    %s18 = sphi 0, %s16
    %s19 = sphi 0, %s17
    %s20 = sphi 0, %s18
    %s21 = sphi 0, %s19
    %s35 = sphi 0, %s37
    %s38 = sphi 0, %s35
    %s39 = sphi 0, %s38
    %s55 = sphi 0, %s39
    %s59 = sphi 0, %s59
    %s61 = sphi 0, %s59
    %s62 = sphi 0, %s61
    %s76 = sphi 0, %s62
    %s80 = sphi 0, %s80
    %s82 = sphi 0, %s80
    %s83 = sphi 0, %s82
    %s97 = sphi 0, %s83
    %s107 = sphi 0, %s109
    %s110 = sphi 0, %s107
    %s111 = sphi 0, %s110
    %s127 = sphi 0, %s111
  $region4: #{spiking_tokenizer.6} parent=0 // loop_header_branch
    %12 = sbr.rel (%p10) target = $region8
  $region5: #{spiking_tokenizer.6} parent=0 // loop_body
    %s14 = ssub.s32 %s9, 1
    %s15 = ssub.s32 %s9, 2
    %s22 = sadd.s32 1, %s17
    %p23 = scmp.ge.s32.totalorder %s22, 2
    %s24 = scalar_select %p23, 0, %s22
    %s25 = sadd.s32 1, %s16
    %s26 = scalar_select %p23, %s25, %s16
    %p27 = scmp.ge.s32.totalorder %s26, 2
    %s28 = scalar_select %p27, 0, %s26
    %s29 = smul.u32 %s17, 2
    %s30 = sadd.s32 %s29, %s16
    %s31 = smul.u32 %s24, 2
    %s32 = sadd.s32 %s31, %s28
    %s33 = ssub.s32 %s30, %s32
    %p34 = scmp.eq.s32.totalorder %s33, 0
    %s36 = sadd.s32 %s35, 1
    %s37 = scalar_select %p34, %s35, %s36
    %p40 = pneg %p34
    %p41 = scmp.eq.s32.totalorder %s9, 3
    %p42 = por %p40, %p41
    %p43 = scmp.ne.s32.totalorder %s35, %s38
    %p44 = scmp.eq.s32.totalorder %s9, 0
    %p45 = por %p43, %p44
    %p46 = scmp.ne.s32.totalorder %s35, %s38
    %p47 = scmp.eq.s32.totalorder %s14, 3
    %p48 = por %p46, %p47
    %p49 = scmp.ne.s32.totalorder %s38, %s39
    %p50 = scmp.eq.s32.totalorder %s14, 0
    %p51 = por %p49, %p50
    %p52 = scmp.ne.s32.totalorder %s38, %s39
    %p53 = scmp.eq.s32.totalorder %s15, 3
    %p54 = por %p52, %p53
    %p56 = scmp.ne.s32.totalorder %s39, %s55
    %p57 = scmp.eq.s32.totalorder %s15, 0
    %p58 = por %p56, %p57
    %s60 = sadd.s32 %s59, 1
    %p63 = scmp.eq.s32.totalorder %s9, 3
    %p64 = scmp.ne.s32.totalorder %s59, %s61
    %p65 = scmp.eq.s32.totalorder %s9, 0
    %p66 = por %p64, %p65
    %p67 = scmp.ne.s32.totalorder %s59, %s61
    %p68 = scmp.eq.s32.totalorder %s14, 3
    %p69 = por %p67, %p68
    %p70 = scmp.ne.s32.totalorder %s61, %s62
    %p71 = scmp.eq.s32.totalorder %s14, 0
    %p72 = por %p70, %p71
    %p73 = scmp.ne.s32.totalorder %s61, %s62
    %p74 = scmp.eq.s32.totalorder %s15, 3
    %p75 = por %p73, %p74
    %p77 = scmp.ne.s32.totalorder %s62, %s76
    %p78 = scmp.eq.s32.totalorder %s15, 0
    %p79 = por %p77, %p78
    %s81 = sadd.s32 %s80, 1
    %p84 = scmp.eq.s32.totalorder %s9, 3
    %p85 = scmp.ne.s32.totalorder %s80, %s82
    %p86 = scmp.eq.s32.totalorder %s9, 0
    %p87 = por %p85, %p86
    %p88 = scmp.ne.s32.totalorder %s80, %s82
    %p89 = scmp.eq.s32.totalorder %s14, 3
    %p90 = por %p88, %p89
    %p91 = scmp.ne.s32.totalorder %s82, %s83
    %p92 = scmp.eq.s32.totalorder %s14, 0
    %p93 = por %p91, %p92
    %p94 = scmp.ne.s32.totalorder %s82, %s83
    %p95 = scmp.eq.s32.totalorder %s15, 3
    %p96 = por %p94, %p95
    %p98 = scmp.ne.s32.totalorder %s83, %s97
    %p99 = scmp.eq.s32.totalorder %s15, 0
    %p100 = por %p98, %p99
    %s101 = smul.u32 %s17, 2
    %s102 = sadd.s32 %s101, %s16
    %s103 = smul.u32 %s24, 2
    %s104 = sadd.s32 %s103, %s28
    %s105 = ssub.s32 %s102, %s104
    %p106 = scmp.eq.s32.totalorder %s105, 0
    %s108 = sadd.s32 %s107, 1
    %s109 = scalar_select %p106, %s107, %s108
    %p112 = pneg %p106
    %p113 = scmp.eq.s32.totalorder %s9, 3
    %p114 = por %p112, %p113
    %p115 = scmp.ne.s32.totalorder %s107, %s110
    %p116 = scmp.eq.s32.totalorder %s9, 0
    %p117 = por %p115, %p116
    %p118 = scmp.ne.s32.totalorder %s107, %s110
    %p119 = scmp.eq.s32.totalorder %s14, 3
    %p120 = por %p118, %p119
    %p121 = scmp.ne.s32.totalorder %s110, %s111
    %p122 = scmp.eq.s32.totalorder %s14, 0
    %p123 = por %p121, %p122
    %p124 = scmp.ne.s32.totalorder %s110, %s111
    %p125 = scmp.eq.s32.totalorder %s15, 3
    %p126 = por %p124, %p125
    %p128 = scmp.ne.s32.totalorder %s111, %s127
    %p129 = scmp.eq.s32.totalorder %s15, 0
    %p130 = por %p128, %p129
    %p131 = scmp.le.s32.totalorder 1, %s9
    %p132 = scmp.lt.s32.totalorder %s9, 5
    %p133 = pnand %p131, %p132
    %p134 = pneg %p133
    // Predicated region
    $region9: #{spiking_tokenizer.6} parent=5 // pred_check
      _
    $region10: #{spiking_tokenizer.6} parent=5 // pred_check_branch
      %136 = sbr.rel (%p133) target = $region12
    $region11: #{spiking_tokenizer.6} parent=5 // pred_region
      %s137 = ssub.s32 %s9, 1
      // Predicated region
      $region13: #{spiking_tokenizer.6} parent=11 // pred_check
        %p138 = pneg %p72
      $region14: #{spiking_tokenizer.6} parent=11 // pred_check_branch
        %140 = sbr.rel (%p138) target = $region16
      $region15: #{spiking_tokenizer.6} parent=11 // pred_region
        _
      $region16: #{spiking_tokenizer.6} parent=11 // pred_fallthru
        _
      // Predicated region
      $region17: #{spiking_tokenizer.6} parent=11 // pred_check
        %p141 = pneg %p93
      $region18: #{spiking_tokenizer.6} parent=11 // pred_check_branch
        %143 = sbr.rel (%p141) target = $region20
      $region19: #{spiking_tokenizer.6} parent=11 // pred_region
        _
      $region20: #{spiking_tokenizer.6} parent=11 // pred_fallthru
        _
    $region12: #{spiking_tokenizer.6} parent=5 // pred_fallthru
      _
    %p144 = scmp.lt.s32.totalorder %s9, 4
    // Predicated region
    $region21: #{spiking_tokenizer.6} parent=5 // pred_check
      %p145 = pneg %p144
    $region22: #{spiking_tokenizer.6} parent=5 // pred_check_branch
      %147 = sbr.rel (%p145) target = $region24
    $region23: #{spiking_tokenizer.6} parent=5 // pred_region
      // Predicated region
      $region25: #{spiking_tokenizer.6} parent=23 // pred_check
        %p148 = pneg %p45
      $region26: #{spiking_tokenizer.6} parent=23 // pred_check_branch
        %150 = sbr.rel (%p148) target = $region28
      $region27: #{spiking_tokenizer.6} parent=23 // pred_region
        %s151 = smul.u32 %s17, 2
        %s152 = sadd.s32 %s151, %s16
        %p153 = scmp.lt.s32.totalorder %s152, 3
        %s154 = scalar_select %p153, %s152, 3
        %s155 = smul.addr %s154, 10
        %s156 = smul.addr %s155, 4
        %s157 = scalar_lea.vmem %s0, %s156
        %s158 = smul.u32 %s17, 2
        %s159 = sadd.s32 %s158, %s16
      $region28: #{spiking_tokenizer.6} parent=23 // pred_fallthru
        _
    $region24: #{spiking_tokenizer.6} parent=5 // pred_fallthru
      _
    %p160 = scmp.le.s32.totalorder 1, %s9
    %p161 = scmp.lt.s32.totalorder %s9, 5
    %p162 = pnand %p160, %p161
    %p163 = pneg %p162
    // Predicated region
    $region29: #{spiking_tokenizer.6} parent=5 // pred_check
      _
    $region30: #{spiking_tokenizer.6} parent=5 // pred_check_branch
      %165 = sbr.rel (%p162) target = $region32
    $region31: #{spiking_tokenizer.6} parent=5 // pred_region
      %s166 = ssub.s32 %s9, 1
      %s167 = smul.u32 %s19, 2
      %s168 = sadd.s32 %s167, %s18
      %p169 = scmp.lt.s32.totalorder %s168, 3
      %s170 = scalar_select %p169, %s168, 3
      %s171 = smul.addr %s170, 10
      %s172 = smul.addr %s171, 4
      %s173 = scalar_lea.vmem %s0, %s172
      %p174 = pneg %p51
      %p175 = pneg %p48
      %p176 = pneg %p72
      %p177 = pneg %p69
      %p178 = pneg %p93
      %p179 = pneg %p90
      %p180 = pneg %p123
      %p181 = pneg %p120
      %s182 = smul.u32 %s19, 2
      %s183 = sadd.s32 %s182, %s18
      %p184 = scmp.lt.s32.totalorder %s183, 3
      %s185 = scalar_select %p184, %s183, 3
      %s186 = smul.addr %s185, 4
      %s187 = smul.addr %s186, 4
      %s188 = scalar_lea.vmem %s3, %s187
      %s189 = smul.u32 %s19, 2
      %s190 = sadd.s32 %s189, %s18
      %p191 = scmp.lt.s32.totalorder %s190, 3
      %s192 = scalar_select %p191, %s190, 3
      %s193 = smul.addr %s192, 10
      %s194 = smul.addr %s193, 4
      %s195 = scalar_lea.vmem %s0, %s194
      %s196 = smul.u32 %s19, 2
      %s197 = sadd.s32 %s196, %s18
      %s198 = smul.u32 %s19, 2
      %s199 = sadd.s32 %s198, %s18
      %p200 = scmp.lt.s32.totalorder %s199, 3
      %s201 = scalar_select %p200, %s199, 3
      %s202 = smul.addr %s201, 4
      %s203 = smul.addr %s202, 4
      %s204 = scalar_lea.vmem %s3, %s203
      %s205 = smul.u32 %s19, 2
      %s206 = sadd.s32 %s205, %s18
      %p208 = scmp.eq.s32.totalorder %s19, 0
      // Predicated region
      $region33: #{spiking_tokenizer.6} parent=31 // pred_check
        %p209 = pneg %p208
      $region34: #{spiking_tokenizer.6} parent=31 // pred_check_branch
        %211 = sbr.rel (%p209) target = $region36
      $region35: #{spiking_tokenizer.6} parent=31 // pred_region
        %vm212 = vcmask 130048
        %213 = vst.msk [vmem:[#allocation2] sm:$0xff] %vm212, 0.0
        %214 = vst.msk [vmem:[#allocation2 + $0x8] sm:$0xff] %vm212, 0.0
        %215 = vst.msk [vmem:[#allocation2 + $0x10] sm:$0xff] %vm212, 0.0
        %216 = vst.msk [vmem:[#allocation2 + $0x18] sm:$0xff] %vm212, 0.0
        %217 = vst.msk [vmem:[#allocation2 + $0x20] sm:$0xff] %vm212, 0.0
        %218 = vst.msk [vmem:[#allocation2 + $0x28] sm:$0xff] %vm212, 0.0
        %219 = vst.msk [vmem:[#allocation2 + $0x30] sm:$0xff] %vm212, 0.0
        %220 = vst.msk [vmem:[#allocation2 + $0x38] sm:$0xff] %vm212, 0.0
        %221 = vst.msk [vmem:[#allocation3] sm:$0xff] %vm212, 0.0
        %vm222 = vcmask 123904
        %223 = vst.msk [vmem:[#allocation3 + $0x8] sm:$0x3] %vm222, 0.0
        %224 = vst.msk [vmem:[#allocation3 + $0x10] sm:$0xff] %vm212, 0.0
        %225 = vst.msk [vmem:[#allocation3 + $0x18] sm:$0x3] %vm222, 0.0
        %226 = vst.msk [vmem:[#allocation3 + $0x20] sm:$0xff] %vm212, 0.0
        %227 = vst.msk [vmem:[#allocation3 + $0x28] sm:$0x3] %vm222, 0.0
        %228 = vst.msk [vmem:[#allocation3 + $0x30] sm:$0xff] %vm212, 0.0
        %229 = vst.msk [vmem:[#allocation3 + $0x38] sm:$0x3] %vm222, 0.0
        %230 = vst.msk [vmem:[#allocation3 + $0x40] sm:$0xff] %vm212, 0.0
        %231 = vst.msk [vmem:[#allocation3 + $0x48] sm:$0x3] %vm222, 0.0
        %232 = vst.msk [vmem:[#allocation3 + $0x50] sm:$0xff] %vm212, 0.0
        %233 = vst.msk [vmem:[#allocation3 + $0x58] sm:$0x3] %vm222, 0.0
        %234 = vst.msk [vmem:[#allocation3 + $0x60] sm:$0xff] %vm212, 0.0
        %235 = vst.msk [vmem:[#allocation3 + $0x68] sm:$0x3] %vm222, 0.0
        %236 = vst.msk [vmem:[#allocation3 + $0x70] sm:$0xff] %vm212, 0.0
        %237 = vst.msk [vmem:[#allocation3 + $0x78] sm:$0x3] %vm222, 0.0
        %238 = vst.msk [vmem:[#allocation3 + $0x80] sm:$0xff] %vm212, 0.0
        %239 = vst.msk [vmem:[#allocation3 + $0x88] sm:$0x3] %vm222, 0.0
        %240 = vst.msk [vmem:[#allocation3 + $0x90] sm:$0xff] %vm212, 0.0
        %241 = vst.msk [vmem:[#allocation3 + $0x98] sm:$0x3] %vm222, 0.0
      $region36: #{spiking_tokenizer.6} parent=31 // pred_fallthru
        _
      %v242 = vld [vmem:[%s195] sm:$0xf]
      %v243 = vld [vmem:[%s195 + $0x4] sm:$0xf]
      %v244 = vld [vmem:[%s195 + $0x8] sm:$0xf]
      %v245 = vld [vmem:[%s195 + $0xc] sm:$0xf]
      %v246 = vld [vmem:[%s195 + $0x10] sm:$0xf]
      %v247 = vld [vmem:[%s195 + $0x14] sm:$0xf]
      %v248 = vld [vmem:[%s195 + $0x18] sm:$0xf]
      %v249 = vld [vmem:[%s195 + $0x1c] sm:$0xf]
      %v250 = vld [vmem:[%s1] sm:$0xf]
      %v251 = vld [vmem:[%s1 + $0x4] sm:$0xf]
      %v252 = vld [vmem:[%s1 + $0x8] sm:$0xf]
      %v253 = vld [vmem:[%s195 + $0x20] sm:$0xf]
      %s254 = scalar_lea.vmem %s1, 12
      %v255 = vld [vmem:[%s254] sm:$0xf]
      %v256 = vld [vmem:[%s254 + $0x4] sm:$0xf]
      %v257 = vld [vmem:[%s254 + $0x8] sm:$0xf]
      %v266 = vunpack.c.l.b16 %v243
      %v267 = vunpack.c.l.b16 %v244
      %v268 = vunpack.c.l.b16 %v245
      %v269 = vunpack.c.l.b16 %v246
      %v270 = vunpack.c.l.b16 %v247
      %v271 = vunpack.c.l.b16 %v248
      %v272 = vunpack.c.l.b16 %v249
      %v273 = vunpack.c.l.b16 %v253
      %v274 = vpack.c.b16 %v267, %v266
      %v275 = vpack.c.b16 %v269, %v268
      %v276 = vpack.c.b16 %v271, %v270
      %v277 = vpack.c.b16 %v273, %v272
      %v281 = vunpack.c.l.b16 %v255
      %v282 = vunpack.c.l.b16 %v256
      %v283 = vunpack.c.l.b16 %v257
      %v284 = vpack.c.b16 %v282, %v281
      %v285 = vpack.c.b16 %v283, %v283
      %vm287 = vcmask 195584
      %v289 = vsel %vm287, %v274, 0
      %v292 = vsel %vm287, %v275, 0
      %v295 = vsel %vm287, %v276, 0
      %v298 = vsel %vm287, %v277, 0
      %vm300 = vcmask 1043456
      %v302 = vsel %vm300, %v285, 0
      %304 = vmatprep.subr.bf16.mxu0 0
      %305 = vmatpush1.bf16.msra.mxu0 %v284
      %306 = vmatprep.subr.bf16.mxu0 0
      %307 = vmatpush1.bf16.msra.mxu0 %v302
      %308 = vmatprep.subr.bf16.mxu0 0
      %309 = vmatpush1.bf16.msra.mxu0 0
      %310 = vmatprep.subr.bf16.mxu0 0
      %311 = vmatpush1.bf16.msra.mxu0 0
      %312 = vmatprep.subr.bf16.mxu0 0
      %313 = vmatpush1.bf16.msra.mxu0 0
      %314 = vmatprep.subr.bf16.mxu0 0
      %315 = vmatpush1.bf16.msra.mxu0 0
      %316 = vmatprep.subr.bf16.mxu0 0
      %317 = vmatpush1.bf16.msra.mxu0 0
      %318 = vmatprep.subr.bf16.mxu0 0
      %319 = vmatpush1.bf16.msra.mxu0 0
      %320 = vmatprep.subr.bf16.mxu0 0
      %321 = vmatpush1.bf16.msra.mxu0 0
      %322 = vmatprep.subr.bf16.mxu0 0
      %323 = vmatpush1.bf16.msra.mxu0 0
      %324 = vmatprep.subr.bf16.mxu0 0
      %325 = vmatpush1.bf16.msra.mxu0 0
      %326 = vmatprep.subr.bf16.mxu0 0
      %327 = vmatpush1.bf16.msra.mxu0 0
      %328 = vmatprep.subr.bf16.mxu0 0
      %329 = vmatpush1.bf16.msra.mxu0 0
      %330 = vmatprep.subr.bf16.mxu0 0
      %331 = vmatpush1.bf16.msra.mxu0 0
      %332 = vmatprep.subr.bf16.mxu0 0
      %333 = vmatpush1.bf16.msra.mxu0 0
      %334 = vmatprep.subr.bf16.mxu0 0
      %335 = vmatpush1.bf16.msra.mxu0 0
      %336 = vmatprep.mubr.bf16.mxu0 0
      %337 = vmatmul.mubr.bf16.gmra.mrb[0].mxu0 %v289
      %v338 = vpop.f32.mrb[0].mxu0
      %v339 = vadd.f32 0.0, %v338
      %v340 = vpop.f32.mrb[0].mxu0
      %v341 = vpop.f32.mrb[0].mxu0
      %v342 = vadd.f32 0.0, %v341
      %v343 = vpop.f32.mrb[0].mxu0
      %344 = vmatprep.mubr.bf16.mxu0 0
      %345 = vmatmul.mubr.bf16.gmra.mrb[0].mxu0 %v292
      %v346 = vpop.f32.mrb[0].mxu0
      %v347 = vadd.f32 0.0, %v346
      %v348 = vpop.f32.mrb[0].mxu0
      %v349 = vpop.f32.mrb[0].mxu0
      %v350 = vadd.f32 0.0, %v349
      %v351 = vpop.f32.mrb[0].mxu0
      %352 = vmatprep.mubr.bf16.mxu0 0
      %353 = vmatmul.mubr.bf16.gmra.mrb[0].mxu0 %v295
      %v354 = vpop.f32.mrb[0].mxu0
      %v355 = vadd.f32 0.0, %v354
      %v356 = vpop.f32.mrb[0].mxu0
      %v357 = vpop.f32.mrb[0].mxu0
      %v358 = vadd.f32 0.0, %v357
      %v359 = vpop.f32.mrb[0].mxu0
      %360 = vmatprep.mubr.bf16.mxu0 0
      %361 = vmatmul.mubr.bf16.gmra.mrb[0].mxu0 %v298
      %v362 = vpop.f32.mrb[0].mxu0
      %v363 = vadd.f32 0.0, %v362
      %v364 = vpop.f32.mrb[0].mxu0
      %v365 = vpop.f32.mrb[0].mxu0
      %v366 = vadd.f32 0.0, %v365
      %v367 = vpop.f32.mrb[0].mxu0
      %368 = vdwg.mxu0
      %v370 = vunpack.c.l.b16 %v242
      %v371 = vpack.c.b16 %v266, %v370
      %v372 = vpack.c.b16 %v268, %v267
      %v373 = vpack.c.b16 %v270, %v269
      %v374 = vpack.c.b16 %v272, %v271
      %v378 = vunpack.c.l.b16 %v250
      %v379 = vunpack.c.l.b16 %v251
      %v380 = vunpack.c.l.b16 %v252
      %v381 = vpack.c.b16 %v379, %v378
      %v382 = vpack.c.b16 %v380, %v380
      %v385 = vsel %vm287, %v371, 0
      %v388 = vsel %vm287, %v372, 0
      %v391 = vsel %vm287, %v373, 0
      %v394 = vsel %vm287, %v374, 0
      %v397 = vsel %vm300, %v382, 0
      %399 = vmatprep.subr.bf16.mxu0 0
      %400 = vmatpush1.bf16.msra.mxu0 %v381
      %401 = vmatprep.subr.bf16.mxu0 0
      %402 = vmatpush1.bf16.msra.mxu0 %v397
      %403 = vmatprep.subr.bf16.mxu0 0
      %404 = vmatpush1.bf16.msra.mxu0 0
      %405 = vmatprep.subr.bf16.mxu0 0
      %406 = vmatpush1.bf16.msra.mxu0 0
      %407 = vmatprep.subr.bf16.mxu0 0
      %408 = vmatpush1.bf16.msra.mxu0 0
      %409 = vmatprep.subr.bf16.mxu0 0
      %410 = vmatpush1.bf16.msra.mxu0 0
      %411 = vmatprep.subr.bf16.mxu0 0
      %412 = vmatpush1.bf16.msra.mxu0 0
      %413 = vmatprep.subr.bf16.mxu0 0
      %414 = vmatpush1.bf16.msra.mxu0 0
      %415 = vmatprep.subr.bf16.mxu0 0
      %416 = vmatpush1.bf16.msra.mxu0 0
      %417 = vmatprep.subr.bf16.mxu0 0
      %418 = vmatpush1.bf16.msra.mxu0 0
      %419 = vmatprep.subr.bf16.mxu0 0
      %420 = vmatpush1.bf16.msra.mxu0 0
      %421 = vmatprep.subr.bf16.mxu0 0
      %422 = vmatpush1.bf16.msra.mxu0 0
      %423 = vmatprep.subr.bf16.mxu0 0
      %424 = vmatpush1.bf16.msra.mxu0 0
      %425 = vmatprep.subr.bf16.mxu0 0
      %426 = vmatpush1.bf16.msra.mxu0 0
      %427 = vmatprep.subr.bf16.mxu0 0
      %428 = vmatpush1.bf16.msra.mxu0 0
      %429 = vmatprep.subr.bf16.mxu0 0
      %430 = vmatpush1.bf16.msra.mxu0 0
      %431 = vmatprep.mubr.bf16.mxu0 0
      %432 = vmatmul.mubr.bf16.gmra.mrb[0].mxu0 %v385
      %v433 = vpop.f32.mrb[0].mxu0
      %v434 = vadd.f32 %v339, %v433
      %v435 = vpop.f32.mrb[0].mxu0
      %v436 = vpop.f32.mrb[0].mxu0
      %v437 = vadd.f32 %v342, %v436
      %v438 = vpop.f32.mrb[0].mxu0
      %439 = vmatprep.mubr.bf16.mxu0 0
      %440 = vmatmul.mubr.bf16.gmra.mrb[0].mxu0 %v388
      %v441 = vpop.f32.mrb[0].mxu0
      %v442 = vadd.f32 %v347, %v441
      %v443 = vpop.f32.mrb[0].mxu0
      %v444 = vpop.f32.mrb[0].mxu0
      %v445 = vadd.f32 %v350, %v444
      %v446 = vpop.f32.mrb[0].mxu0
      %447 = vmatprep.mubr.bf16.mxu0 0
      %448 = vmatmul.mubr.bf16.gmra.mrb[0].mxu0 %v391
      %v449 = vpop.f32.mrb[0].mxu0
      %v450 = vadd.f32 %v355, %v449
      %v451 = vpop.f32.mrb[0].mxu0
      %v452 = vpop.f32.mrb[0].mxu0
      %v453 = vadd.f32 %v358, %v452
      %v454 = vpop.f32.mrb[0].mxu0
      %455 = vmatprep.mubr.bf16.mxu0 0
      %456 = vmatmul.mubr.bf16.gmra.mrb[0].mxu0 %v394
      %v457 = vpop.f32.mrb[0].mxu0
      %v458 = vadd.f32 %v363, %v457
      %v459 = vpop.f32.mrb[0].mxu0
      %v460 = vpop.f32.mrb[0].mxu0
      %v461 = vadd.f32 %v366, %v460
      %v462 = vpop.f32.mrb[0].mxu0
      %463 = vdwg.mxu0
      %v464 = vld [vmem:[%s195 + $0x8] sm:$0xf]
      %v465 = vld [vmem:[%s195 + $0xc] sm:$0xf]
      %v466 = vld [vmem:[%s195 + $0x10] sm:$0xf]
      %v467 = vld [vmem:[%s195 + $0x14] sm:$0xf]
      %v468 = vld [vmem:[%s195 + $0x18] sm:$0xf]
      %v469 = vld [vmem:[%s195 + $0x1c] sm:$0xf]
      %v470 = vld [vmem:[%s195 + $0x20] sm:$0xf]
      %v471 = vld [vmem:[%s195 + $0x24] sm:$0xf]
      %s472 = scalar_lea.vmem %s1, 24
      %v473 = vld [vmem:[%s472] sm:$0xf]
      %v474 = vld [vmem:[%s472 + $0x4] sm:$0xf]
      %v475 = vld [vmem:[%s472 + $0x8] sm:$0xf]
      %v484 = vunpack.c.l.b16 %v464
      %v485 = vunpack.c.l.b16 %v465
      %v486 = vunpack.c.l.b16 %v466
      %v487 = vunpack.c.l.b16 %v467
      %v488 = vunpack.c.l.b16 %v468
      %v489 = vunpack.c.l.b16 %v469
      %v490 = vunpack.c.l.b16 %v470
      %v491 = vunpack.c.l.b16 %v471
      %v492 = vpack.c.b16 %v485, %v484
      %v493 = vpack.c.b16 %v487, %v486
      %v494 = vpack.c.b16 %v489, %v488
      %v495 = vpack.c.b16 %v491, %v490
      %v499 = vunpack.c.l.b16 %v473
      %v500 = vunpack.c.l.b16 %v474
      %v501 = vunpack.c.l.b16 %v475
      %v502 = vpack.c.b16 %v500, %v499
      %v503 = vpack.c.b16 %v501, %v501
      %v506 = vsel %vm287, %v492, 0
      %v509 = vsel %vm287, %v493, 0
      %v512 = vsel %vm287, %v494, 0
      %v515 = vsel %vm287, %v495, 0
      %v518 = vsel %vm300, %v503, 0
      %520 = vmatprep.subr.bf16.mxu0 0
      %521 = vmatpush1.bf16.msra.mxu0 %v502
      %522 = vmatprep.subr.bf16.mxu0 0
      %523 = vmatpush1.bf16.msra.mxu0 %v518
      %524 = vmatprep.subr.bf16.mxu0 0
      %525 = vmatpush1.bf16.msra.mxu0 0
      %526 = vmatprep.subr.bf16.mxu0 0
      %527 = vmatpush1.bf16.msra.mxu0 0
      %528 = vmatprep.subr.bf16.mxu0 0
      %529 = vmatpush1.bf16.msra.mxu0 0
      %530 = vmatprep.subr.bf16.mxu0 0
      %531 = vmatpush1.bf16.msra.mxu0 0
      %532 = vmatprep.subr.bf16.mxu0 0
      %533 = vmatpush1.bf16.msra.mxu0 0
      %534 = vmatprep.subr.bf16.mxu0 0
      %535 = vmatpush1.bf16.msra.mxu0 0
      %536 = vmatprep.subr.bf16.mxu0 0
      %537 = vmatpush1.bf16.msra.mxu0 0
      %538 = vmatprep.subr.bf16.mxu0 0
      %539 = vmatpush1.bf16.msra.mxu0 0
      %540 = vmatprep.subr.bf16.mxu0 0
      %541 = vmatpush1.bf16.msra.mxu0 0
      %542 = vmatprep.subr.bf16.mxu0 0
      %543 = vmatpush1.bf16.msra.mxu0 0
      %544 = vmatprep.subr.bf16.mxu0 0
      %545 = vmatpush1.bf16.msra.mxu0 0
      %546 = vmatprep.subr.bf16.mxu0 0
      %547 = vmatpush1.bf16.msra.mxu0 0
      %548 = vmatprep.subr.bf16.mxu0 0
      %549 = vmatpush1.bf16.msra.mxu0 0
      %550 = vmatprep.subr.bf16.mxu0 0
      %551 = vmatpush1.bf16.msra.mxu0 0
      %552 = vmatprep.mubr.bf16.mxu0 0
      %553 = vmatmul.mubr.bf16.gmra.mrb[0].mxu0 %v506
      %v554 = vpop.f32.mrb[0].mxu0
      %v555 = vadd.f32 0.0, %v554
      %v556 = vpop.f32.mrb[0].mxu0
      %v557 = vpop.f32.mrb[0].mxu0
      %v558 = vadd.f32 0.0, %v557
      %v559 = vpop.f32.mrb[0].mxu0
      %560 = vmatprep.mubr.bf16.mxu0 0
      %561 = vmatmul.mubr.bf16.gmra.mrb[0].mxu0 %v509
      %v562 = vpop.f32.mrb[0].mxu0
      %v563 = vadd.f32 0.0, %v562
      %v564 = vpop.f32.mrb[0].mxu0
      %v565 = vpop.f32.mrb[0].mxu0
      %v566 = vadd.f32 0.0, %v565
      %v567 = vpop.f32.mrb[0].mxu0
      %568 = vmatprep.mubr.bf16.mxu0 0
      %569 = vmatmul.mubr.bf16.gmra.mrb[0].mxu0 %v512
      %v570 = vpop.f32.mrb[0].mxu0
      %v571 = vadd.f32 0.0, %v570
      %v572 = vpop.f32.mrb[0].mxu0
      %v573 = vpop.f32.mrb[0].mxu0
      %v574 = vadd.f32 0.0, %v573
      %v575 = vpop.f32.mrb[0].mxu0
      %576 = vmatprep.mubr.bf16.mxu0 0
      %577 = vmatmul.mubr.bf16.gmra.mrb[0].mxu0 %v515
      %v578 = vpop.f32.mrb[0].mxu0
      %v579 = vadd.f32 0.0, %v578
      %v580 = vpop.f32.mrb[0].mxu0
      %v581 = vpop.f32.mrb[0].mxu0
      %v582 = vadd.f32 0.0, %v581
      %v583 = vpop.f32.mrb[0].mxu0
      %584 = vdwg.mxu0
      %v585 = vadd.f32 %v434, %v555
      %v586 = vadd.f32 %v437, %v558
      %v587 = vadd.f32 %v442, %v563
      %v588 = vadd.f32 %v445, %v566
      %v589 = vadd.f32 %v450, %v571
      %v590 = vadd.f32 %v453, %v574
      %v591 = vadd.f32 %v458, %v579
      %v592 = vadd.f32 %v461, %v582
      %v593 = vld [vmem:[%s2] sm:$0x1]
      %v595 = vlaneseq
      %v596 = vshrl.u32 %v595, 7
      %v597 = vsub.s32 0, %v596
      %v598 = vrot.slane %v593, %v597
      %v600 = vadd.f32 %v585, %v598
      %v601 = vadd.f32 %v586, %v598
      %v602 = vadd.f32 %v587, %v598
      %v603 = vadd.f32 %v588, %v598
      %v604 = vadd.f32 %v589, %v598
      %v605 = vadd.f32 %v590, %v598
      %v606 = vadd.f32 %v591, %v598
      %v607 = vadd.f32 %v592, %v598
      %v608 = vld [vmem:[#allocation2] sm:$0xff]
      %v609 = vld [vmem:[#allocation2 + $0x8] sm:$0xff]
      %v610 = vld [vmem:[#allocation2 + $0x10] sm:$0xff]
      %v611 = vld [vmem:[#allocation2 + $0x18] sm:$0xff]
      %v612 = vld [vmem:[#allocation2 + $0x20] sm:$0xff]
      %v613 = vld [vmem:[#allocation2 + $0x28] sm:$0xff]
      %v614 = vld [vmem:[#allocation2 + $0x30] sm:$0xff]
      %v615 = vld [vmem:[#allocation2 + $0x38] sm:$0xff]
      %v616 = vsub.f32 %v600, %v608
      %v617 = vsub.f32 %v601, %v609
      %v618 = vsub.f32 %v602, %v610
      %v619 = vsub.f32 %v603, %v611
      %v620 = vsub.f32 %v604, %v612
      %v621 = vsub.f32 %v605, %v613
      %v622 = vsub.f32 %v606, %v614
      %v623 = vsub.f32 %v607, %v615
      %v624 = vmul.f32 %v616, 0.6666667
      %v625 = vmul.f32 %v617, 0.6666667
      %v626 = vmul.f32 %v618, 0.6666667
      %v627 = vmul.f32 %v619, 0.6666667
      %v628 = vmul.f32 %v620, 0.6666667
      %v629 = vmul.f32 %v621, 0.6666667
      %v630 = vmul.f32 %v622, 0.6666667
      %v631 = vmul.f32 %v623, 0.6666667
      %v632 = vadd.f32 %v608, %v624
      %v633 = vadd.f32 %v609, %v625
      %v634 = vadd.f32 %v610, %v626
      %v635 = vadd.f32 %v611, %v627
      %v636 = vadd.f32 %v612, %v628
      %v637 = vadd.f32 %v613, %v629
      %v638 = vadd.f32 %v614, %v630
      %v639 = vadd.f32 %v615, %v631
      %vm640 = vcmp.ge.f32.partialorder %v632, 1.0
      %vm641 = vcmp.ge.f32.partialorder %v633, 1.0
      %vm642 = vcmp.ge.f32.partialorder %v634, 1.0
      %vm643 = vcmp.ge.f32.partialorder %v635, 1.0
      %vm644 = vcmp.ge.f32.partialorder %v636, 1.0
      %vm645 = vcmp.ge.f32.partialorder %v637, 1.0
      %vm646 = vcmp.ge.f32.partialorder %v638, 1.0
      %vm647 = vcmp.ge.f32.partialorder %v639, 1.0
      %v648 = vsel %vm640, 1, 0
      %v649 = vsel %vm641, 1, 0
      %v650 = vsel %vm642, 1, 0
      %v651 = vsel %vm643, 1, 0
      %v652 = vsel %vm644, 1, 0
      %v653 = vsel %vm645, 1, 0
      %v654 = vsel %vm646, 1, 0
      %v655 = vsel %vm647, 1, 0
      %v656 = vcvt.s32.f32 %v648
      %v657 = vcvt.s32.f32 %v649
      %v658 = vcvt.s32.f32 %v650
      %v659 = vcvt.s32.f32 %v651
      %v660 = vcvt.s32.f32 %v652
      %v661 = vcvt.s32.f32 %v653
      %v662 = vcvt.s32.f32 %v654
      %v663 = vcvt.s32.f32 %v655
      %v664 = vsub.f32 1.0, %v656
      %v665 = vsub.f32 1.0, %v657
      %v666 = vsub.f32 1.0, %v658
      %v667 = vsub.f32 1.0, %v659
      %v668 = vsub.f32 1.0, %v660
      %v669 = vsub.f32 1.0, %v661
      %v670 = vsub.f32 1.0, %v662
      %v671 = vsub.f32 1.0, %v663
      %v672 = vmul.f32 %v632, %v664
      %v673 = vmul.f32 %v633, %v665
      %v674 = vmul.f32 %v634, %v666
      %v675 = vmul.f32 %v635, %v667
      %v676 = vmul.f32 %v636, %v668
      %v677 = vmul.f32 %v637, %v669
      %v678 = vmul.f32 %v638, %v670
      %v679 = vmul.f32 %v639, %v671
      %vm680 = vcmask 130048
      %681 = vst.msk [vmem:[#allocation2] sm:$0xff] %vm680, %v672
      %682 = vst.msk [vmem:[#allocation2 + $0x8] sm:$0xff] %vm680, %v673
      %683 = vst.msk [vmem:[#allocation2 + $0x10] sm:$0xff] %vm680, %v674
      %684 = vst.msk [vmem:[#allocation2 + $0x18] sm:$0xff] %vm680, %v675
      %685 = vst.msk [vmem:[#allocation2 + $0x20] sm:$0xff] %vm680, %v676
      %686 = vst.msk [vmem:[#allocation2 + $0x28] sm:$0xff] %vm680, %v677
      %687 = vst.msk [vmem:[#allocation2 + $0x30] sm:$0xff] %vm680, %v678
      %688 = vst.msk [vmem:[#allocation2 + $0x38] sm:$0xff] %vm680, %v679
      %s689 = scalar_lea.vmem [#allocation3], 16
      %690 = vst.msk [vmem:[%s689 + $0x1] sm:$0xff] %vm680, %v656
      %691 = vst.msk [vmem:[%s689 + $0x11] sm:$0xff] %vm680, %v657
      %692 = vst.msk [vmem:[%s689 + $0x21] sm:$0xff] %vm680, %v658
      %693 = vst.msk [vmem:[%s689 + $0x31] sm:$0xff] %vm680, %v659
      %694 = vst.msk [vmem:[%s689 + $0x41] sm:$0xff] %vm680, %v660
      %695 = vst.msk [vmem:[%s689 + $0x51] sm:$0xff] %vm680, %v661
      %696 = vst.msk [vmem:[%s689 + $0x61] sm:$0xff] %vm680, %v662
      %697 = vst.msk [vmem:[%s689 + $0x71] sm:$0xff] %vm680, %v663
      %v698 = vld [vmem:[#allocation3] sm:$0xff]
      %v699 = vld [vmem:[#allocation3 + $0x8] sm:$0x3]
      %v700 = vld [vmem:[#allocation3 + $0x20] sm:$0xff]
      %v701 = vld [vmem:[#allocation3 + $0x28] sm:$0x3]
      %v702 = vld [vmem:[#allocation3 + $0x40] sm:$0xff]
      %v703 = vld [vmem:[#allocation3 + $0x48] sm:$0x3]
      %v704 = vld [vmem:[#allocation3 + $0x60] sm:$0xff]
      %v705 = vld [vmem:[#allocation3 + $0x68] sm:$0x3]
      %v706 = vld [vmem:[%s689] sm:$0xff]
      %v707 = vld [vmem:[%s689 + $0x8] sm:$0x3]
      %v708 = vld [vmem:[%s689 + $0x20] sm:$0xff]
      %v709 = vld [vmem:[%s689 + $0x28] sm:$0x3]
      %v710 = vld [vmem:[%s689 + $0x40] sm:$0xff]
      %v711 = vld [vmem:[%s689 + $0x48] sm:$0x3]
      %v712 = vld [vmem:[%s689 + $0x60] sm:$0xff]
      %v713 = vld [vmem:[%s689 + $0x68] sm:$0x3]
      %v714 = vmax.f32 %v698, %v706
      %v715 = vmax.f32 %v699, %v707
      %v716 = vmax.f32 %v700, %v708
      %v717 = vmax.f32 %v701, %v709
      %v718 = vmax.f32 %v702, %v710
      %v719 = vmax.f32 %v703, %v711
      %v720 = vmax.f32 %v704, %v712
      %v721 = vmax.f32 %v705, %v713
      %s722 = scalar_lea.vmem [#allocation3], 32
      %v723 = vld [vmem:[%s722] sm:$0xff]
      %v724 = vld [vmem:[%s722 + $0x8] sm:$0x3]
      %v725 = vld [vmem:[%s722 + $0x20] sm:$0xff]
      %v726 = vld [vmem:[%s722 + $0x28] sm:$0x3]
      %v727 = vld [vmem:[%s722 + $0x40] sm:$0xff]
      %v728 = vld [vmem:[%s722 + $0x48] sm:$0x3]
      %v729 = vld [vmem:[%s722 + $0x60] sm:$0xff]
      %v730 = vld [vmem:[%s722 + $0x68] sm:$0x3]
      %v731 = vmax.f32 %v714, %v723
      %v732 = vmax.f32 %v715, %v724
      %v733 = vmax.f32 %v716, %v725
      %v734 = vmax.f32 %v717, %v726
      %v735 = vmax.f32 %v718, %v727
      %v736 = vmax.f32 %v719, %v728
      %v737 = vmax.f32 %v720, %v729
      %v738 = vmax.f32 %v721, %v730
      %739 = vst.msk [vmem:[#allocation4] sm:$0xff] %vm680, %v731
      %vm740 = vcmask 123904
      %741 = vst.msk [vmem:[#allocation4 + $0x8] sm:$0x3] %vm740, %v732
      %742 = vst.msk [vmem:[#allocation4 + $0x10] sm:$0xff] %vm680, %v733
      %743 = vst.msk [vmem:[#allocation4 + $0x18] sm:$0x3] %vm740, %v734
      %744 = vst.msk [vmem:[#allocation4 + $0x20] sm:$0xff] %vm680, %v735
      %745 = vst.msk [vmem:[#allocation4 + $0x28] sm:$0x3] %vm740, %v736
      %746 = vst.msk [vmem:[#allocation4 + $0x30] sm:$0xff] %vm680, %v737
      %747 = vst.msk [vmem:[#allocation4 + $0x38] sm:$0x3] %vm740, %v738
      %v748 = vld [vmem:[#allocation4] sm:$0xff]
      %v749 = vld [vmem:[#allocation4 + $0x10] sm:$0xff]
      %v750 = vld [vmem:[#allocation4 + $0x20] sm:$0xff]
      %v751 = vld [vmem:[#allocation4 + $0x30] sm:$0xff]
      %v752 = vld [vmem:[#allocation4 + $0x1] sm:$0xff]
      %v753 = vld [vmem:[#allocation4 + $0x11] sm:$0xff]
      %v754 = vld [vmem:[#allocation4 + $0x21] sm:$0xff]
      %v755 = vld [vmem:[#allocation4 + $0x31] sm:$0xff]
      %v756 = vmax.f32 %v748, %v752
      %v757 = vmax.f32 %v749, %v753
      %v758 = vmax.f32 %v750, %v754
      %v759 = vmax.f32 %v751, %v755
      %v760 = vld [vmem:[#allocation4 + $0x2] sm:$0xff]
      %v761 = vld [vmem:[#allocation4 + $0x12] sm:$0xff]
      %v762 = vld [vmem:[#allocation4 + $0x22] sm:$0xff]
      %v763 = vld [vmem:[#allocation4 + $0x32] sm:$0xff]
      %v764 = vmax.f32 %v756, %v760
      %v765 = vmax.f32 %v757, %v761
      %v766 = vmax.f32 %v758, %v762
      %v767 = vmax.f32 %v759, %v763
      %v768 = vpack.c.bf16 %v764, %v764
      %v769 = vpack.c.bf16 %v765, %v765
      %v770 = vpack.c.bf16 %v766, %v766
      %v771 = vpack.c.bf16 %v767, %v767
      %vm772 = vcmask 125952
      %773 = vst.msk [vmem:[%s204] sm:$0xf] %vm772, %v768
      %774 = vst.msk [vmem:[%s204 + $0x4] sm:$0xf] %vm772, %v769
      %775 = vst.msk [vmem:[%s204 + $0x8] sm:$0xf] %vm772, %v770
      %776 = vst.msk [vmem:[%s204 + $0xc] sm:$0xf] %vm772, %v771
      %s777 = smul.u32 %s19, 2
      %s778 = sadd.s32 %s777, %s18
      %p779 = scmp.lt.s32.totalorder %s778, 3
      %s780 = scalar_select %p779, %s778, 3
      %s781 = smul.addr %s780, 4
      %s782 = smul.addr %s781, 4
      %s783 = scalar_lea.vmem %s3, %s782
      // Predicated region
      $region37: #{spiking_tokenizer.6} parent=31 // pred_check
        %p784 = pneg %p120
      $region38: #{spiking_tokenizer.6} parent=31 // pred_check_branch
        %786 = sbr.rel (%p784) target = $region40
      $region39: #{spiking_tokenizer.6} parent=31 // pred_region
        %s787 = smul.u32 %s19, 2
        %s788 = sadd.s32 %s787, %s18
      $region40: #{spiking_tokenizer.6} parent=31 // pred_fallthru
        _
    $region32: #{spiking_tokenizer.6} parent=5 // pred_fallthru
      _
    %p789 = scmp.le.s32.totalorder 2, %s9
    // Predicated region
    $region41: #{spiking_tokenizer.6} parent=5 // pred_check
      %p790 = pneg %p789
    $region42: #{spiking_tokenizer.6} parent=5 // pred_check_branch
      %792 = sbr.rel (%p790) target = $region44
    $region43: #{spiking_tokenizer.6} parent=5 // pred_region
      %s793 = ssub.s32 %s9, 2
      // Predicated region
      $region45: #{spiking_tokenizer.6} parent=43 // pred_check
        %p794 = pneg %p126
      $region46: #{spiking_tokenizer.6} parent=43 // pred_check_branch
        %796 = sbr.rel (%p794) target = $region48
      $region47: #{spiking_tokenizer.6} parent=43 // pred_region
        %s797 = smul.u32 %s21, 2
        %s798 = sadd.s32 %s797, %s20
        %p799 = scmp.lt.s32.totalorder %s798, 3
        %s800 = scalar_select %p799, %s798, 3
        %s801 = smul.addr %s800, 4
        %s802 = smul.addr %s801, 4
        %s803 = scalar_lea.vmem %s3, %s802
      $region48: #{spiking_tokenizer.6} parent=43 // pred_fallthru
        _
    $region44: #{spiking_tokenizer.6} parent=5 // pred_fallthru
      _
  $region6: #{spiking_tokenizer.6} parent=0 // loop_footer
    %s13 = sadd.s32 1, %s9
  $region7: #{spiking_tokenizer.6} parent=0 // loop_footer_branch
    %8 = sbr.rel target = $region3
  $region8: #{spiking_tokenizer.6} parent=0 // loop_exit
    _

// kernel: spiking_tokenizer.4
$region0: #{spiking_tokenizer.4}
  #allocation0 [shape = 'u32[]', space=smem, size = 0x4, offset = 0x4, fixed_abs, tag = 'smem constant byte address 0x4 - core index']
  #allocation1 [shape = 'u32[144,128]{1,0:T(1,128)}', space=vmem, size = 0x12000, scoped, tag = 'internal scratch']
  #allocation2 [shape = 'f32[32,32,4]{2,1,0:T(8,128)}', space=vmem, size = 0x80000, scoped, tag = 'scratch operand']
  #allocation3 [shape = 'f32[34,34,4]{2,1,0:T(8,128)}', space=vmem, size = 0xaa000, scoped, tag = 'scratch operand']
  #allocation4 [shape = 'f32[16,34,4]{2,1,0:T(8,128)}', space=vmem, size = 0x50000, scoped, tag = 'scratch operand']
  %s0 = inlined_call_operand.vmem [shape: bf16[4,1088,6], index: 0, kind: input, shape index: {}]
  %s1 = inlined_call_operand.vmem [shape: bf16[3,6,4], index: 1, kind: input, shape index: {}]
  %s2 = inlined_call_operand.vmem [shape: f32[1,4], index: 2, kind: input, shape index: {}]
  %s3 = inlined_call_operand.vmem [shape: bf16[4,16,32,4], index: 3, kind: output, shape index: {}]
  %s4 = sld [smem:[#allocation0]]
  $region49: #{spiking_tokenizer.4} parent=0
    _
  %s6 = ssub.s32 1, %s4
  %s7 = scalar_select 0, %s6, %s4
  loop: start=0, step=1, limit=6
  $region2: #{spiking_tokenizer.4} parent=0 // loop_pre_header
    _
  $region3: #{spiking_tokenizer.4} parent=0 // loop_header
    %s9 = sphi 0, %s13
    %p10 = scmp.ge.s32.totalorder %s9, 6
    %s16 = sphi 0, %s28
    %s17 = sphi 0, %s24
    %s18 = sphi 0, %s16
    %s19 = sphi 0, %s17
    %s20 = sphi 0, %s18
    %s21 = sphi 0, %s19
    %s35 = sphi 0, %s37
    %s38 = sphi 0, %s35
    %s39 = sphi 0, %s38
    %s55 = sphi 0, %s39
    %s59 = sphi 0, %s59
    %s61 = sphi 0, %s59
    %s62 = sphi 0, %s61
    %s76 = sphi 0, %s62
    %s80 = sphi 0, %s80
    %s82 = sphi 0, %s80
    %s83 = sphi 0, %s82
    %s97 = sphi 0, %s83
    %s107 = sphi 0, %s109
    %s110 = sphi 0, %s107
    %s111 = sphi 0, %s110
    %s127 = sphi 0, %s111
  $region4: #{spiking_tokenizer.4} parent=0 // loop_header_branch
    %12 = sbr.rel (%p10) target = $region8
  $region5: #{spiking_tokenizer.4} parent=0 // loop_body
    %s14 = ssub.s32 %s9, 1
    %s15 = ssub.s32 %s9, 2
    %s22 = sadd.s32 1, %s17
    %p23 = scmp.ge.s32.totalorder %s22, 2
    %s24 = scalar_select %p23, 0, %s22
    %s25 = sadd.s32 1, %s16
    %s26 = scalar_select %p23, %s25, %s16
    %p27 = scmp.ge.s32.totalorder %s26, 2
    %s28 = scalar_select %p27, 0, %s26
    %s29 = smul.u32 %s17, 2
    %s30 = sadd.s32 %s29, %s16
    %s31 = smul.u32 %s24, 2
    %s32 = sadd.s32 %s31, %s28
    %s33 = ssub.s32 %s30, %s32
    %p34 = scmp.eq.s32.totalorder %s33, 0
    %s36 = sadd.s32 %s35, 1
    %s37 = scalar_select %p34, %s35, %s36
    %p40 = pneg %p34
    %p41 = scmp.eq.s32.totalorder %s9, 3
    %p42 = por %p40, %p41
    %p43 = scmp.ne.s32.totalorder %s35, %s38
    %p44 = scmp.eq.s32.totalorder %s9, 0
    %p45 = por %p43, %p44
    %p46 = scmp.ne.s32.totalorder %s35, %s38
    %p47 = scmp.eq.s32.totalorder %s14, 3
    %p48 = por %p46, %p47
    %p49 = scmp.ne.s32.totalorder %s38, %s39
    %p50 = scmp.eq.s32.totalorder %s14, 0
    %p51 = por %p49, %p50
    %p52 = scmp.ne.s32.totalorder %s38, %s39
    %p53 = scmp.eq.s32.totalorder %s15, 3
    %p54 = por %p52, %p53
    %p56 = scmp.ne.s32.totalorder %s39, %s55
    %p57 = scmp.eq.s32.totalorder %s15, 0
    %p58 = por %p56, %p57
    %s60 = sadd.s32 %s59, 1
    %p63 = scmp.eq.s32.totalorder %s9, 3
    %p64 = scmp.ne.s32.totalorder %s59, %s61
    %p65 = scmp.eq.s32.totalorder %s9, 0
    %p66 = por %p64, %p65
    %p67 = scmp.ne.s32.totalorder %s59, %s61
    %p68 = scmp.eq.s32.totalorder %s14, 3
    %p69 = por %p67, %p68
    %p70 = scmp.ne.s32.totalorder %s61, %s62
    %p71 = scmp.eq.s32.totalorder %s14, 0
    %p72 = por %p70, %p71
    %p73 = scmp.ne.s32.totalorder %s61, %s62
    %p74 = scmp.eq.s32.totalorder %s15, 3
    %p75 = por %p73, %p74
    %p77 = scmp.ne.s32.totalorder %s62, %s76
    %p78 = scmp.eq.s32.totalorder %s15, 0
    %p79 = por %p77, %p78
    %s81 = sadd.s32 %s80, 1
    %p84 = scmp.eq.s32.totalorder %s9, 3
    %p85 = scmp.ne.s32.totalorder %s80, %s82
    %p86 = scmp.eq.s32.totalorder %s9, 0
    %p87 = por %p85, %p86
    %p88 = scmp.ne.s32.totalorder %s80, %s82
    %p89 = scmp.eq.s32.totalorder %s14, 3
    %p90 = por %p88, %p89
    %p91 = scmp.ne.s32.totalorder %s82, %s83
    %p92 = scmp.eq.s32.totalorder %s14, 0
    %p93 = por %p91, %p92
    %p94 = scmp.ne.s32.totalorder %s82, %s83
    %p95 = scmp.eq.s32.totalorder %s15, 3
    %p96 = por %p94, %p95
    %p98 = scmp.ne.s32.totalorder %s83, %s97
    %p99 = scmp.eq.s32.totalorder %s15, 0
    %p100 = por %p98, %p99
    %s101 = smul.u32 %s17, 2
    %s102 = sadd.s32 %s101, %s16
    %s103 = smul.u32 %s24, 2
    %s104 = sadd.s32 %s103, %s28
    %s105 = ssub.s32 %s102, %s104
    %p106 = scmp.eq.s32.totalorder %s105, 0
    %s108 = sadd.s32 %s107, 1
    %s109 = scalar_select %p106, %s107, %s108
    %p112 = pneg %p106
    %p113 = scmp.eq.s32.totalorder %s9, 3
    %p114 = por %p112, %p113
    %p115 = scmp.ne.s32.totalorder %s107, %s110
    %p116 = scmp.eq.s32.totalorder %s9, 0
    %p117 = por %p115, %p116
    %p118 = scmp.ne.s32.totalorder %s107, %s110
    %p119 = scmp.eq.s32.totalorder %s14, 3
    %p120 = por %p118, %p119
    %p121 = scmp.ne.s32.totalorder %s110, %s111
    %p122 = scmp.eq.s32.totalorder %s14, 0
    %p123 = por %p121, %p122
    %p124 = scmp.ne.s32.totalorder %s110, %s111
    %p125 = scmp.eq.s32.totalorder %s15, 3
    %p126 = por %p124, %p125
    %p128 = scmp.ne.s32.totalorder %s111, %s127
    %p129 = scmp.eq.s32.totalorder %s15, 0
    %p130 = por %p128, %p129
    %p131 = scmp.le.s32.totalorder 1, %s9
    %p132 = scmp.lt.s32.totalorder %s9, 5
    %p133 = pnand %p131, %p132
    %p134 = pneg %p133
    // Predicated region
    $region9: #{spiking_tokenizer.4} parent=5 // pred_check
      _
    $region10: #{spiking_tokenizer.4} parent=5 // pred_check_branch
      %136 = sbr.rel (%p133) target = $region12
    $region11: #{spiking_tokenizer.4} parent=5 // pred_region
      %s137 = ssub.s32 %s9, 1
      // Predicated region
      $region13: #{spiking_tokenizer.4} parent=11 // pred_check
        %p138 = pneg %p72
      $region14: #{spiking_tokenizer.4} parent=11 // pred_check_branch
        %140 = sbr.rel (%p138) target = $region16
      $region15: #{spiking_tokenizer.4} parent=11 // pred_region
        _
      $region16: #{spiking_tokenizer.4} parent=11 // pred_fallthru
        _
      // Predicated region
      $region17: #{spiking_tokenizer.4} parent=11 // pred_check
        %p141 = pneg %p93
      $region18: #{spiking_tokenizer.4} parent=11 // pred_check_branch
        %143 = sbr.rel (%p141) target = $region20
      $region19: #{spiking_tokenizer.4} parent=11 // pred_region
        _
      $region20: #{spiking_tokenizer.4} parent=11 // pred_fallthru
        _
    $region12: #{spiking_tokenizer.4} parent=5 // pred_fallthru
      _
    %p144 = scmp.lt.s32.totalorder %s9, 4
    // Predicated region
    $region21: #{spiking_tokenizer.4} parent=5 // pred_check
      %p145 = pneg %p144
    $region22: #{spiking_tokenizer.4} parent=5 // pred_check_branch
      %147 = sbr.rel (%p145) target = $region24
    $region23: #{spiking_tokenizer.4} parent=5 // pred_region
      // Predicated region
      $region25: #{spiking_tokenizer.4} parent=23 // pred_check
        %p148 = pneg %p45
      $region26: #{spiking_tokenizer.4} parent=23 // pred_check_branch
        %150 = sbr.rel (%p148) target = $region28
      $region27: #{spiking_tokenizer.4} parent=23 // pred_region
        %s151 = smul.u32 %s17, 2
        %s152 = sadd.s32 %s151, %s16
        %p153 = scmp.lt.s32.totalorder %s152, 3
        %s154 = scalar_select %p153, %s152, 3
        %s155 = smul.addr %s154, 136
        %s156 = smul.addr %s155, 4
        %s157 = scalar_lea.vmem %s0, %s156
        %s158 = smul.u32 %s17, 2
        %s159 = sadd.s32 %s158, %s16
      $region28: #{spiking_tokenizer.4} parent=23 // pred_fallthru
        _
    $region24: #{spiking_tokenizer.4} parent=5 // pred_fallthru
      _
    %p160 = scmp.le.s32.totalorder 1, %s9
    %p161 = scmp.lt.s32.totalorder %s9, 5
    %p162 = pnand %p160, %p161
    %p163 = pneg %p162
    // Predicated region
    $region29: #{spiking_tokenizer.4} parent=5 // pred_check
      _
    $region30: #{spiking_tokenizer.4} parent=5 // pred_check_branch
      %165 = sbr.rel (%p162) target = $region32
    $region31: #{spiking_tokenizer.4} parent=5 // pred_region
      %s166 = ssub.s32 %s9, 1
      %s167 = smul.u32 %s19, 2
      %s168 = sadd.s32 %s167, %s18
      %p169 = scmp.lt.s32.totalorder %s168, 3
      %s170 = scalar_select %p169, %s168, 3
      %s171 = smul.addr %s170, 136
      %s172 = smul.addr %s171, 4
      %s173 = scalar_lea.vmem %s0, %s172
      %p174 = pneg %p51
      %p175 = pneg %p48
      %p176 = pneg %p72
      %p177 = pneg %p69
      %p178 = pneg %p93
      %p179 = pneg %p90
      %p180 = pneg %p123
      %p181 = pneg %p120
      %s182 = smul.u32 %s19, 2
      %s183 = sadd.s32 %s182, %s18
      %p184 = scmp.lt.s32.totalorder %s183, 3
      %s185 = scalar_select %p184, %s183, 3
      %s186 = smul.addr %s185, 64
      %s187 = smul.addr %s186, 4
      %s188 = scalar_lea.vmem %s3, %s187
      %s189 = smul.u32 %s19, 2
      %s190 = sadd.s32 %s189, %s18
      %p191 = scmp.lt.s32.totalorder %s190, 3
      %s192 = scalar_select %p191, %s190, 3
      %s193 = smul.addr %s192, 136
      %s194 = smul.addr %s193, 4
      %s195 = scalar_lea.vmem %s0, %s194
      %s196 = smul.u32 %s19, 2
      %s197 = sadd.s32 %s196, %s18
      %s198 = smul.u32 %s19, 2
      %s199 = sadd.s32 %s198, %s18
      %p200 = scmp.lt.s32.totalorder %s199, 3
      %s201 = scalar_select %p200, %s199, 3
      %s202 = smul.addr %s201, 64
      %s203 = smul.addr %s202, 4
      %s204 = scalar_lea.vmem %s3, %s203
      %s205 = smul.u32 %s19, 2
      %s206 = sadd.s32 %s205, %s18
      %p208 = scmp.eq.s32.totalorder %s19, 0
      // Predicated region
      $region33: #{spiking_tokenizer.4} parent=31 // pred_check
        %p209 = pneg %p208
      $region34: #{spiking_tokenizer.4} parent=31 // pred_check_branch
        %211 = sbr.rel (%p209) target = $region36
      $region35: #{spiking_tokenizer.4} parent=31 // pred_region
        %vm212 = vcmask 31744
        %213 = vst.msk [vmem:[#allocation2] sm:$0xff] %vm212, 0.0
        %214 = vst.msk [vmem:[#allocation2 + $0x8] sm:$0xff] %vm212, 0.0
        %215 = vst.msk [vmem:[#allocation2 + $0x10] sm:$0xff] %vm212, 0.0
        %216 = vst.msk [vmem:[#allocation2 + $0x18] sm:$0xff] %vm212, 0.0
        %217 = vst.msk [vmem:[#allocation2 + $0x20] sm:$0xff] %vm212, 0.0
        %218 = vst.msk [vmem:[#allocation2 + $0x28] sm:$0xff] %vm212, 0.0
        %219 = vst.msk [vmem:[#allocation2 + $0x30] sm:$0xff] %vm212, 0.0
        %220 = vst.msk [vmem:[#allocation2 + $0x38] sm:$0xff] %vm212, 0.0
        %221 = vst.msk [vmem:[#allocation2 + $0x40] sm:$0xff] %vm212, 0.0
        %222 = vst.msk [vmem:[#allocation2 + $0x48] sm:$0xff] %vm212, 0.0
        %223 = vst.msk [vmem:[#allocation2 + $0x50] sm:$0xff] %vm212, 0.0
        %224 = vst.msk [vmem:[#allocation2 + $0x58] sm:$0xff] %vm212, 0.0
        %225 = vst.msk [vmem:[#allocation2 + $0x60] sm:$0xff] %vm212, 0.0
        %226 = vst.msk [vmem:[#allocation2 + $0x68] sm:$0xff] %vm212, 0.0
        %227 = vst.msk [vmem:[#allocation2 + $0x70] sm:$0xff] %vm212, 0.0
        %228 = vst.msk [vmem:[#allocation2 + $0x78] sm:$0xff] %vm212, 0.0
        %229 = vst.msk [vmem:[#allocation2 + $0x80] sm:$0xff] %vm212, 0.0
        %230 = vst.msk [vmem:[#allocation2 + $0x88] sm:$0xff] %vm212, 0.0
        %231 = vst.msk [vmem:[#allocation2 + $0x90] sm:$0xff] %vm212, 0.0
        %232 = vst.msk [vmem:[#allocation2 + $0x98] sm:$0xff] %vm212, 0.0
        %233 = vst.msk [vmem:[#allocation2 + $0xa0] sm:$0xff] %vm212, 0.0
        %234 = vst.msk [vmem:[#allocation2 + $0xa8] sm:$0xff] %vm212, 0.0
        %235 = vst.msk [vmem:[#allocation2 + $0xb0] sm:$0xff] %vm212, 0.0
        %236 = vst.msk [vmem:[#allocation2 + $0xb8] sm:$0xff] %vm212, 0.0
        %237 = vst.msk [vmem:[#allocation2 + $0xc0] sm:$0xff] %vm212, 0.0
        %238 = vst.msk [vmem:[#allocation2 + $0xc8] sm:$0xff] %vm212, 0.0
        %239 = vst.msk [vmem:[#allocation2 + $0xd0] sm:$0xff] %vm212, 0.0
        %240 = vst.msk [vmem:[#allocation2 + $0xd8] sm:$0xff] %vm212, 0.0
        %241 = vst.msk [vmem:[#allocation2 + $0xe0] sm:$0xff] %vm212, 0.0
        %242 = vst.msk [vmem:[#allocation2 + $0xe8] sm:$0xff] %vm212, 0.0
        %243 = vst.msk [vmem:[#allocation2 + $0xf0] sm:$0xff] %vm212, 0.0
        %244 = vst.msk [vmem:[#allocation2 + $0xf8] sm:$0xff] %vm212, 0.0
        %245 = vst.msk [vmem:[#allocation2 + $0x100] sm:$0xff] %vm212, 0.0
        %246 = vst.msk [vmem:[#allocation2 + $0x108] sm:$0xff] %vm212, 0.0
        %247 = vst.msk [vmem:[#allocation2 + $0x110] sm:$0xff] %vm212, 0.0
        %248 = vst.msk [vmem:[#allocation2 + $0x118] sm:$0xff] %vm212, 0.0
        %249 = vst.msk [vmem:[#allocation2 + $0x120] sm:$0xff] %vm212, 0.0
        %250 = vst.msk [vmem:[#allocation2 + $0x128] sm:$0xff] %vm212, 0.0
        %251 = vst.msk [vmem:[#allocation2 + $0x130] sm:$0xff] %vm212, 0.0
        %252 = vst.msk [vmem:[#allocation2 + $0x138] sm:$0xff] %vm212, 0.0
        %253 = vst.msk [vmem:[#allocation2 + $0x140] sm:$0xff] %vm212, 0.0
        %254 = vst.msk [vmem:[#allocation2 + $0x148] sm:$0xff] %vm212, 0.0
        %255 = vst.msk [vmem:[#allocation2 + $0x150] sm:$0xff] %vm212, 0.0
        %256 = vst.msk [vmem:[#allocation2 + $0x158] sm:$0xff] %vm212, 0.0
        %257 = vst.msk [vmem:[#allocation2 + $0x160] sm:$0xff] %vm212, 0.0
        %258 = vst.msk [vmem:[#allocation2 + $0x168] sm:$0xff] %vm212, 0.0
        %259 = vst.msk [vmem:[#allocation2 + $0x170] sm:$0xff] %vm212, 0.0
        %260 = vst.msk [vmem:[#allocation2 + $0x178] sm:$0xff] %vm212, 0.0
        %261 = vst.msk [vmem:[#allocation2 + $0x180] sm:$0xff] %vm212, 0.0
        %262 = vst.msk [vmem:[#allocation2 + $0x188] sm:$0xff] %vm212, 0.0
        %263 = vst.msk [vmem:[#allocation2 + $0x190] sm:$0xff] %vm212, 0.0
        %264 = vst.msk [vmem:[#allocation2 + $0x198] sm:$0xff] %vm212, 0.0
        %265 = vst.msk [vmem:[#allocation2 + $0x1a0] sm:$0xff] %vm212, 0.0
        %266 = vst.msk [vmem:[#allocation2 + $0x1a8] sm:$0xff] %vm212, 0.0
        %267 = vst.msk [vmem:[#allocation2 + $0x1b0] sm:$0xff] %vm212, 0.0
        %268 = vst.msk [vmem:[#allocation2 + $0x1b8] sm:$0xff] %vm212, 0.0
        %269 = vst.msk [vmem:[#allocation2 + $0x1c0] sm:$0xff] %vm212, 0.0
        %270 = vst.msk [vmem:[#allocation2 + $0x1c8] sm:$0xff] %vm212, 0.0
        %271 = vst.msk [vmem:[#allocation2 + $0x1d0] sm:$0xff] %vm212, 0.0
        %272 = vst.msk [vmem:[#allocation2 + $0x1d8] sm:$0xff] %vm212, 0.0
        %273 = vst.msk [vmem:[#allocation2 + $0x1e0] sm:$0xff] %vm212, 0.0
        %274 = vst.msk [vmem:[#allocation2 + $0x1e8] sm:$0xff] %vm212, 0.0
        %275 = vst.msk [vmem:[#allocation2 + $0x1f0] sm:$0xff] %vm212, 0.0
        %276 = vst.msk [vmem:[#allocation2 + $0x1f8] sm:$0xff] %vm212, 0.0
        %277 = vst.msk [vmem:[#allocation2 + $0x200] sm:$0xff] %vm212, 0.0
        %278 = vst.msk [vmem:[#allocation2 + $0x208] sm:$0xff] %vm212, 0.0
        %279 = vst.msk [vmem:[#allocation2 + $0x210] sm:$0xff] %vm212, 0.0
        %280 = vst.msk [vmem:[#allocation2 + $0x218] sm:$0xff] %vm212, 0.0
        %281 = vst.msk [vmem:[#allocation2 + $0x220] sm:$0xff] %vm212, 0.0
        %282 = vst.msk [vmem:[#allocation2 + $0x228] sm:$0xff] %vm212, 0.0
        %283 = vst.msk [vmem:[#allocation2 + $0x230] sm:$0xff] %vm212, 0.0
        %284 = vst.msk [vmem:[#allocation2 + $0x238] sm:$0xff] %vm212, 0.0
        %285 = vst.msk [vmem:[#allocation2 + $0x240] sm:$0xff] %vm212, 0.0
        %286 = vst.msk [vmem:[#allocation2 + $0x248] sm:$0xff] %vm212, 0.0
        %287 = vst.msk [vmem:[#allocation2 + $0x250] sm:$0xff] %vm212, 0.0
        %288 = vst.msk [vmem:[#allocation2 + $0x258] sm:$0xff] %vm212, 0.0
        %289 = vst.msk [vmem:[#allocation2 + $0x260] sm:$0xff] %vm212, 0.0
        %290 = vst.msk [vmem:[#allocation2 + $0x268] sm:$0xff] %vm212, 0.0
        %291 = vst.msk [vmem:[#allocation2 + $0x270] sm:$0xff] %vm212, 0.0
        %292 = vst.msk [vmem:[#allocation2 + $0x278] sm:$0xff] %vm212, 0.0
        %293 = vst.msk [vmem:[#allocation2 + $0x280] sm:$0xff] %vm212, 0.0
        %294 = vst.msk [vmem:[#allocation2 + $0x288] sm:$0xff] %vm212, 0.0
        %295 = vst.msk [vmem:[#allocation2 + $0x290] sm:$0xff] %vm212, 0.0
        %296 = vst.msk [vmem:[#allocation2 + $0x298] sm:$0xff] %vm212, 0.0
        %297 = vst.msk [vmem:[#allocation2 + $0x2a0] sm:$0xff] %vm212, 0.0
        %298 = vst.msk [vmem:[#allocation2 + $0x2a8] sm:$0xff] %vm212, 0.0
        %299 = vst.msk [vmem:[#allocation2 + $0x2b0] sm:$0xff] %vm212, 0.0
        %300 = vst.msk [vmem:[#allocation2 + $0x2b8] sm:$0xff] %vm212, 0.0
        %301 = vst.msk [vmem:[#allocation2 + $0x2c0] sm:$0xff] %vm212, 0.0
        %302 = vst.msk [vmem:[#allocation2 + $0x2c8] sm:$0xff] %vm212, 0.0
        %303 = vst.msk [vmem:[#allocation2 + $0x2d0] sm:$0xff] %vm212, 0.0
        %304 = vst.msk [vmem:[#allocation2 + $0x2d8] sm:$0xff] %vm212, 0.0
        %305 = vst.msk [vmem:[#allocation2 + $0x2e0] sm:$0xff] %vm212, 0.0
        %306 = vst.msk [vmem:[#allocation2 + $0x2e8] sm:$0xff] %vm212, 0.0
        %307 = vst.msk [vmem:[#allocation2 + $0x2f0] sm:$0xff] %vm212, 0.0
        %308 = vst.msk [vmem:[#allocation2 + $0x2f8] sm:$0xff] %vm212, 0.0
        %309 = vst.msk [vmem:[#allocation2 + $0x300] sm:$0xff] %vm212, 0.0
        %310 = vst.msk [vmem:[#allocation2 + $0x308] sm:$0xff] %vm212, 0.0
        %311 = vst.msk [vmem:[#allocation2 + $0x310] sm:$0xff] %vm212, 0.0
        %312 = vst.msk [vmem:[#allocation2 + $0x318] sm:$0xff] %vm212, 0.0
        %313 = vst.msk [vmem:[#allocation2 + $0x320] sm:$0xff] %vm212, 0.0
        %314 = vst.msk [vmem:[#allocation2 + $0x328] sm:$0xff] %vm212, 0.0
        %315 = vst.msk [vmem:[#allocation2 + $0x330] sm:$0xff] %vm212, 0.0
        %316 = vst.msk [vmem:[#allocation2 + $0x338] sm:$0xff] %vm212, 0.0
        %317 = vst.msk [vmem:[#allocation2 + $0x340] sm:$0xff] %vm212, 0.0
        %318 = vst.msk [vmem:[#allocation2 + $0x348] sm:$0xff] %vm212, 0.0
        %319 = vst.msk [vmem:[#allocation2 + $0x350] sm:$0xff] %vm212, 0.0
        %320 = vst.msk [vmem:[#allocation2 + $0x358] sm:$0xff] %vm212, 0.0
        %321 = vst.msk [vmem:[#allocation2 + $0x360] sm:$0xff] %vm212, 0.0
        %322 = vst.msk [vmem:[#allocation2 + $0x368] sm:$0xff] %vm212, 0.0
        %323 = vst.msk [vmem:[#allocation2 + $0x370] sm:$0xff] %vm212, 0.0
        %324 = vst.msk [vmem:[#allocation2 + $0x378] sm:$0xff] %vm212, 0.0
        %325 = vst.msk [vmem:[#allocation2 + $0x380] sm:$0xff] %vm212, 0.0
        %326 = vst.msk [vmem:[#allocation2 + $0x388] sm:$0xff] %vm212, 0.0
        %327 = vst.msk [vmem:[#allocation2 + $0x390] sm:$0xff] %vm212, 0.0
        %328 = vst.msk [vmem:[#allocation2 + $0x398] sm:$0xff] %vm212, 0.0
        %329 = vst.msk [vmem:[#allocation2 + $0x3a0] sm:$0xff] %vm212, 0.0
        %330 = vst.msk [vmem:[#allocation2 + $0x3a8] sm:$0xff] %vm212, 0.0
        %331 = vst.msk [vmem:[#allocation2 + $0x3b0] sm:$0xff] %vm212, 0.0
        %332 = vst.msk [vmem:[#allocation2 + $0x3b8] sm:$0xff] %vm212, 0.0
        %333 = vst.msk [vmem:[#allocation2 + $0x3c0] sm:$0xff] %vm212, 0.0
        %334 = vst.msk [vmem:[#allocation2 + $0x3c8] sm:$0xff] %vm212, 0.0
        %335 = vst.msk [vmem:[#allocation2 + $0x3d0] sm:$0xff] %vm212, 0.0
        %336 = vst.msk [vmem:[#allocation2 + $0x3d8] sm:$0xff] %vm212, 0.0
        %337 = vst.msk [vmem:[#allocation2 + $0x3e0] sm:$0xff] %vm212, 0.0
        %338 = vst.msk [vmem:[#allocation2 + $0x3e8] sm:$0xff] %vm212, 0.0
        %339 = vst.msk [vmem:[#allocation2 + $0x3f0] sm:$0xff] %vm212, 0.0
        %340 = vst.msk [vmem:[#allocation2 + $0x3f8] sm:$0xff] %vm212, 0.0
        %341 = vst.msk [vmem:[#allocation3] sm:$0xff] %vm212, 0.0
        %342 = vst.msk [vmem:[#allocation3 + $0x8] sm:$0xff] %vm212, 0.0
        %343 = vst.msk [vmem:[#allocation3 + $0x10] sm:$0xff] %vm212, 0.0
        %344 = vst.msk [vmem:[#allocation3 + $0x18] sm:$0xff] %vm212, 0.0
        %vm345 = vcmask 25600
        %346 = vst.msk [vmem:[#allocation3 + $0x20] sm:$0x3] %vm345, 0.0
        %347 = vst.msk [vmem:[#allocation3 + $0x28] sm:$0xff] %vm212, 0.0
        %348 = vst.msk [vmem:[#allocation3 + $0x30] sm:$0xff] %vm212, 0.0
        %349 = vst.msk [vmem:[#allocation3 + $0x38] sm:$0xff] %vm212, 0.0
        %350 = vst.msk [vmem:[#allocation3 + $0x40] sm:$0xff] %vm212, 0.0
        %351 = vst.msk [vmem:[#allocation3 + $0x48] sm:$0x3] %vm345, 0.0
        %352 = vst.msk [vmem:[#allocation3 + $0x50] sm:$0xff] %vm212, 0.0
        %353 = vst.msk [vmem:[#allocation3 + $0x58] sm:$0xff] %vm212, 0.0
        %354 = vst.msk [vmem:[#allocation3 + $0x60] sm:$0xff] %vm212, 0.0
        %355 = vst.msk [vmem:[#allocation3 + $0x68] sm:$0xff] %vm212, 0.0
        %356 = vst.msk [vmem:[#allocation3 + $0x70] sm:$0x3] %vm345, 0.0
        %357 = vst.msk [vmem:[#allocation3 + $0x78] sm:$0xff] %vm212, 0.0
        %358 = vst.msk [vmem:[#allocation3 + $0x80] sm:$0xff] %vm212, 0.0
        %359 = vst.msk [vmem:[#allocation3 + $0x88] sm:$0xff] %vm212, 0.0
        %360 = vst.msk [vmem:[#allocation3 + $0x90] sm:$0xff] %vm212, 0.0
        %361 = vst.msk [vmem:[#allocation3 + $0x98] sm:$0x3] %vm345, 0.0
        %362 = vst.msk [vmem:[#allocation3 + $0xa0] sm:$0xff] %vm212, 0.0
        %363 = vst.msk [vmem:[#allocation3 + $0xa8] sm:$0xff] %vm212, 0.0
        %364 = vst.msk [vmem:[#allocation3 + $0xb0] sm:$0xff] %vm212, 0.0
        %365 = vst.msk [vmem:[#allocation3 + $0xb8] sm:$0xff] %vm212, 0.0
        %366 = vst.msk [vmem:[#allocation3 + $0xc0] sm:$0x3] %vm345, 0.0
        %367 = vst.msk [vmem:[#allocation3 + $0xc8] sm:$0xff] %vm212, 0.0
        %368 = vst.msk [vmem:[#allocation3 + $0xd0] sm:$0xff] %vm212, 0.0
        %369 = vst.msk [vmem:[#allocation3 + $0xd8] sm:$0xff] %vm212, 0.0
        %370 = vst.msk [vmem:[#allocation3 + $0xe0] sm:$0xff] %vm212, 0.0
        %371 = vst.msk [vmem:[#allocation3 + $0xe8] sm:$0x3] %vm345, 0.0
        %372 = vst.msk [vmem:[#allocation3 + $0xf0] sm:$0xff] %vm212, 0.0
        %373 = vst.msk [vmem:[#allocation3 + $0xf8] sm:$0xff] %vm212, 0.0
        %374 = vst.msk [vmem:[#allocation3 + $0x100] sm:$0xff] %vm212, 0.0
        %375 = vst.msk [vmem:[#allocation3 + $0x108] sm:$0xff] %vm212, 0.0
        %376 = vst.msk [vmem:[#allocation3 + $0x110] sm:$0x3] %vm345, 0.0
        %377 = vst.msk [vmem:[#allocation3 + $0x118] sm:$0xff] %vm212, 0.0
        %378 = vst.msk [vmem:[#allocation3 + $0x120] sm:$0xff] %vm212, 0.0
        %379 = vst.msk [vmem:[#allocation3 + $0x128] sm:$0xff] %vm212, 0.0
        %380 = vst.msk [vmem:[#allocation3 + $0x130] sm:$0xff] %vm212, 0.0
        %381 = vst.msk [vmem:[#allocation3 + $0x138] sm:$0x3] %vm345, 0.0
        %382 = vst.msk [vmem:[#allocation3 + $0x140] sm:$0xff] %vm212, 0.0
        %383 = vst.msk [vmem:[#allocation3 + $0x148] sm:$0xff] %vm212, 0.0
        %384 = vst.msk [vmem:[#allocation3 + $0x150] sm:$0xff] %vm212, 0.0
        %385 = vst.msk [vmem:[#allocation3 + $0x158] sm:$0xff] %vm212, 0.0
        %386 = vst.msk [vmem:[#allocation3 + $0x160] sm:$0x3] %vm345, 0.0
        %387 = vst.msk [vmem:[#allocation3 + $0x168] sm:$0xff] %vm212, 0.0
        %388 = vst.msk [vmem:[#allocation3 + $0x170] sm:$0xff] %vm212, 0.0
        %389 = vst.msk [vmem:[#allocation3 + $0x178] sm:$0xff] %vm212, 0.0
        %390 = vst.msk [vmem:[#allocation3 + $0x180] sm:$0xff] %vm212, 0.0
        %391 = vst.msk [vmem:[#allocation3 + $0x188] sm:$0x3] %vm345, 0.0
        %392 = vst.msk [vmem:[#allocation3 + $0x190] sm:$0xff] %vm212, 0.0
        %393 = vst.msk [vmem:[#allocation3 + $0x198] sm:$0xff] %vm212, 0.0
        %394 = vst.msk [vmem:[#allocation3 + $0x1a0] sm:$0xff] %vm212, 0.0
        %395 = vst.msk [vmem:[#allocation3 + $0x1a8] sm:$0xff] %vm212, 0.0
        %396 = vst.msk [vmem:[#allocation3 + $0x1b0] sm:$0x3] %vm345, 0.0
        %397 = vst.msk [vmem:[#allocation3 + $0x1b8] sm:$0xff] %vm212, 0.0
        %398 = vst.msk [vmem:[#allocation3 + $0x1c0] sm:$0xff] %vm212, 0.0
        %399 = vst.msk [vmem:[#allocation3 + $0x1c8] sm:$0xff] %vm212, 0.0
        %400 = vst.msk [vmem:[#allocation3 + $0x1d0] sm:$0xff] %vm212, 0.0
        %401 = vst.msk [vmem:[#allocation3 + $0x1d8] sm:$0x3] %vm345, 0.0
        %402 = vst.msk [vmem:[#allocation3 + $0x1e0] sm:$0xff] %vm212, 0.0
        %403 = vst.msk [vmem:[#allocation3 + $0x1e8] sm:$0xff] %vm212, 0.0
        %404 = vst.msk [vmem:[#allocation3 + $0x1f0] sm:$0xff] %vm212, 0.0
        %405 = vst.msk [vmem:[#allocation3 + $0x1f8] sm:$0xff] %vm212, 0.0
        %406 = vst.msk [vmem:[#allocation3 + $0x200] sm:$0x3] %vm345, 0.0
        %407 = vst.msk [vmem:[#allocation3 + $0x208] sm:$0xff] %vm212, 0.0
        %408 = vst.msk [vmem:[#allocation3 + $0x210] sm:$0xff] %vm212, 0.0
        %409 = vst.msk [vmem:[#allocation3 + $0x218] sm:$0xff] %vm212, 0.0
        %410 = vst.msk [vmem:[#allocation3 + $0x220] sm:$0xff] %vm212, 0.0
        %411 = vst.msk [vmem:[#allocation3 + $0x228] sm:$0x3] %vm345, 0.0
        %412 = vst.msk [vmem:[#allocation3 + $0x230] sm:$0xff] %vm212, 0.0
        %413 = vst.msk [vmem:[#allocation3 + $0x238] sm:$0xff] %vm212, 0.0
        %414 = vst.msk [vmem:[#allocation3 + $0x240] sm:$0xff] %vm212, 0.0
        %415 = vst.msk [vmem:[#allocation3 + $0x248] sm:$0xff] %vm212, 0.0
        %416 = vst.msk [vmem:[#allocation3 + $0x250] sm:$0x3] %vm345, 0.0
        %417 = vst.msk [vmem:[#allocation3 + $0x258] sm:$0xff] %vm212, 0.0
        %418 = vst.msk [vmem:[#allocation3 + $0x260] sm:$0xff] %vm212, 0.0
        %419 = vst.msk [vmem:[#allocation3 + $0x268] sm:$0xff] %vm212, 0.0
        %420 = vst.msk [vmem:[#allocation3 + $0x270] sm:$0xff] %vm212, 0.0
        %421 = vst.msk [vmem:[#allocation3 + $0x278] sm:$0x3] %vm345, 0.0
        %422 = vst.msk [vmem:[#allocation3 + $0x280] sm:$0xff] %vm212, 0.0
        %423 = vst.msk [vmem:[#allocation3 + $0x288] sm:$0xff] %vm212, 0.0
        %424 = vst.msk [vmem:[#allocation3 + $0x290] sm:$0xff] %vm212, 0.0
        %425 = vst.msk [vmem:[#allocation3 + $0x298] sm:$0xff] %vm212, 0.0
        %426 = vst.msk [vmem:[#allocation3 + $0x2a0] sm:$0x3] %vm345, 0.0
        %427 = vst.msk [vmem:[#allocation3 + $0x2a8] sm:$0xff] %vm212, 0.0
        %428 = vst.msk [vmem:[#allocation3 + $0x2b0] sm:$0xff] %vm212, 0.0
        %429 = vst.msk [vmem:[#allocation3 + $0x2b8] sm:$0xff] %vm212, 0.0
        %430 = vst.msk [vmem:[#allocation3 + $0x2c0] sm:$0xff] %vm212, 0.0
        %431 = vst.msk [vmem:[#allocation3 + $0x2c8] sm:$0x3] %vm345, 0.0
        %432 = vst.msk [vmem:[#allocation3 + $0x2d0] sm:$0xff] %vm212, 0.0
        %433 = vst.msk [vmem:[#allocation3 + $0x2d8] sm:$0xff] %vm212, 0.0
        %434 = vst.msk [vmem:[#allocation3 + $0x2e0] sm:$0xff] %vm212, 0.0
        %435 = vst.msk [vmem:[#allocation3 + $0x2e8] sm:$0xff] %vm212, 0.0
        %436 = vst.msk [vmem:[#allocation3 + $0x2f0] sm:$0x3] %vm345, 0.0
        %437 = vst.msk [vmem:[#allocation3 + $0x2f8] sm:$0xff] %vm212, 0.0
        %438 = vst.msk [vmem:[#allocation3 + $0x300] sm:$0xff] %vm212, 0.0
        %439 = vst.msk [vmem:[#allocation3 + $0x308] sm:$0xff] %vm212, 0.0
        %440 = vst.msk [vmem:[#allocation3 + $0x310] sm:$0xff] %vm212, 0.0
        %441 = vst.msk [vmem:[#allocation3 + $0x318] sm:$0x3] %vm345, 0.0
        %442 = vst.msk [vmem:[#allocation3 + $0x320] sm:$0xff] %vm212, 0.0
        %443 = vst.msk [vmem:[#allocation3 + $0x328] sm:$0xff] %vm212, 0.0
        %444 = vst.msk [vmem:[#allocation3 + $0x330] sm:$0xff] %vm212, 0.0
        %445 = vst.msk [vmem:[#allocation3 + $0x338] sm:$0xff] %vm212, 0.0
        %446 = vst.msk [vmem:[#allocation3 + $0x340] sm:$0x3] %vm345, 0.0
        %447 = vst.msk [vmem:[#allocation3 + $0x348] sm:$0xff] %vm212, 0.0
        %448 = vst.msk [vmem:[#allocation3 + $0x350] sm:$0xff] %vm212, 0.0
        %449 = vst.msk [vmem:[#allocation3 + $0x358] sm:$0xff] %vm212, 0.0
        %450 = vst.msk [vmem:[#allocation3 + $0x360] sm:$0xff] %vm212, 0.0
        %451 = vst.msk [vmem:[#allocation3 + $0x368] sm:$0x3] %vm345, 0.0
        %452 = vst.msk [vmem:[#allocation3 + $0x370] sm:$0xff] %vm212, 0.0
        %453 = vst.msk [vmem:[#allocation3 + $0x378] sm:$0xff] %vm212, 0.0
        %454 = vst.msk [vmem:[#allocation3 + $0x380] sm:$0xff] %vm212, 0.0
        %455 = vst.msk [vmem:[#allocation3 + $0x388] sm:$0xff] %vm212, 0.0
        %456 = vst.msk [vmem:[#allocation3 + $0x390] sm:$0x3] %vm345, 0.0
        %457 = vst.msk [vmem:[#allocation3 + $0x398] sm:$0xff] %vm212, 0.0
        %458 = vst.msk [vmem:[#allocation3 + $0x3a0] sm:$0xff] %vm212, 0.0
        %459 = vst.msk [vmem:[#allocation3 + $0x3a8] sm:$0xff] %vm212, 0.0
        %460 = vst.msk [vmem:[#allocation3 + $0x3b0] sm:$0xff] %vm212, 0.0
        %461 = vst.msk [vmem:[#allocation3 + $0x3b8] sm:$0x3] %vm345, 0.0
        %462 = vst.msk [vmem:[#allocation3 + $0x3c0] sm:$0xff] %vm212, 0.0
        %463 = vst.msk [vmem:[#allocation3 + $0x3c8] sm:$0xff] %vm212, 0.0
        %464 = vst.msk [vmem:[#allocation3 + $0x3d0] sm:$0xff] %vm212, 0.0
        %465 = vst.msk [vmem:[#allocation3 + $0x3d8] sm:$0xff] %vm212, 0.0
        %466 = vst.msk [vmem:[#allocation3 + $0x3e0] sm:$0x3] %vm345, 0.0
        %467 = vst.msk [vmem:[#allocation3 + $0x3e8] sm:$0xff] %vm212, 0.0
        %468 = vst.msk [vmem:[#allocation3 + $0x3f0] sm:$0xff] %vm212, 0.0
        %469 = vst.msk [vmem:[#allocation3 + $0x3f8] sm:$0xff] %vm212, 0.0
        %470 = vst.msk [vmem:[#allocation3 + $0x400] sm:$0xff] %vm212, 0.0
        %471 = vst.msk [vmem:[#allocation3 + $0x408] sm:$0x3] %vm345, 0.0
        %472 = vst.msk [vmem:[#allocation3 + $0x410] sm:$0xff] %vm212, 0.0
        %473 = vst.msk [vmem:[#allocation3 + $0x418] sm:$0xff] %vm212, 0.0
        %474 = vst.msk [vmem:[#allocation3 + $0x420] sm:$0xff] %vm212, 0.0
        %475 = vst.msk [vmem:[#allocation3 + $0x428] sm:$0xff] %vm212, 0.0
        %476 = vst.msk [vmem:[#allocation3 + $0x430] sm:$0x3] %vm345, 0.0
        %477 = vst.msk [vmem:[#allocation3 + $0x438] sm:$0xff] %vm212, 0.0
        %478 = vst.msk [vmem:[#allocation3 + $0x440] sm:$0xff] %vm212, 0.0
        %479 = vst.msk [vmem:[#allocation3 + $0x448] sm:$0xff] %vm212, 0.0
        %480 = vst.msk [vmem:[#allocation3 + $0x450] sm:$0xff] %vm212, 0.0
        %481 = vst.msk [vmem:[#allocation3 + $0x458] sm:$0x3] %vm345, 0.0
        %482 = vst.msk [vmem:[#allocation3 + $0x460] sm:$0xff] %vm212, 0.0
        %483 = vst.msk [vmem:[#allocation3 + $0x468] sm:$0xff] %vm212, 0.0
        %484 = vst.msk [vmem:[#allocation3 + $0x470] sm:$0xff] %vm212, 0.0
        %485 = vst.msk [vmem:[#allocation3 + $0x478] sm:$0xff] %vm212, 0.0
        %486 = vst.msk [vmem:[#allocation3 + $0x480] sm:$0x3] %vm345, 0.0
        %487 = vst.msk [vmem:[#allocation3 + $0x488] sm:$0xff] %vm212, 0.0
        %488 = vst.msk [vmem:[#allocation3 + $0x490] sm:$0xff] %vm212, 0.0
        %489 = vst.msk [vmem:[#allocation3 + $0x498] sm:$0xff] %vm212, 0.0
        %490 = vst.msk [vmem:[#allocation3 + $0x4a0] sm:$0xff] %vm212, 0.0
        %491 = vst.msk [vmem:[#allocation3 + $0x4a8] sm:$0x3] %vm345, 0.0
        %492 = vst.msk [vmem:[#allocation3 + $0x4b0] sm:$0xff] %vm212, 0.0
        %493 = vst.msk [vmem:[#allocation3 + $0x4b8] sm:$0xff] %vm212, 0.0
        %494 = vst.msk [vmem:[#allocation3 + $0x4c0] sm:$0xff] %vm212, 0.0
        %495 = vst.msk [vmem:[#allocation3 + $0x4c8] sm:$0xff] %vm212, 0.0
        %496 = vst.msk [vmem:[#allocation3 + $0x4d0] sm:$0x3] %vm345, 0.0
        %497 = vst.msk [vmem:[#allocation3 + $0x4d8] sm:$0xff] %vm212, 0.0
        %498 = vst.msk [vmem:[#allocation3 + $0x4e0] sm:$0xff] %vm212, 0.0
        %499 = vst.msk [vmem:[#allocation3 + $0x4e8] sm:$0xff] %vm212, 0.0
        %500 = vst.msk [vmem:[#allocation3 + $0x4f0] sm:$0xff] %vm212, 0.0
        %501 = vst.msk [vmem:[#allocation3 + $0x4f8] sm:$0x3] %vm345, 0.0
        %502 = vst.msk [vmem:[#allocation3 + $0x500] sm:$0xff] %vm212, 0.0
        %503 = vst.msk [vmem:[#allocation3 + $0x508] sm:$0xff] %vm212, 0.0
        %504 = vst.msk [vmem:[#allocation3 + $0x510] sm:$0xff] %vm212, 0.0
        %505 = vst.msk [vmem:[#allocation3 + $0x518] sm:$0xff] %vm212, 0.0
        %506 = vst.msk [vmem:[#allocation3 + $0x520] sm:$0x3] %vm345, 0.0
        %507 = vst.msk [vmem:[#allocation3 + $0x528] sm:$0xff] %vm212, 0.0
        %508 = vst.msk [vmem:[#allocation3 + $0x530] sm:$0xff] %vm212, 0.0
        %509 = vst.msk [vmem:[#allocation3 + $0x538] sm:$0xff] %vm212, 0.0
        %510 = vst.msk [vmem:[#allocation3 + $0x540] sm:$0xff] %vm212, 0.0
        %511 = vst.msk [vmem:[#allocation3 + $0x548] sm:$0x3] %vm345, 0.0
      $region36: #{spiking_tokenizer.4} parent=31 // pred_fallthru
        _
      %v512 = vld [vmem:[%s195] sm:$0xf]
      %v513 = vld [vmem:[%s195 + $0x4] sm:$0xf]
      %v514 = vld [vmem:[%s195 + $0x8] sm:$0xf]
      %v515 = vld [vmem:[%s195 + $0xc] sm:$0xf]
      %v516 = vld [vmem:[%s195 + $0x10] sm:$0xf]
      %v517 = vld [vmem:[%s195 + $0x14] sm:$0xf]
      %v518 = vld [vmem:[%s195 + $0x18] sm:$0xf]
      %v519 = vld [vmem:[%s195 + $0x1c] sm:$0xf]
      %v520 = vld [vmem:[%s195 + $0x20] sm:$0xf]
      %v521 = vld [vmem:[%s195 + $0x24] sm:$0xf]
      %v522 = vld [vmem:[%s195 + $0x28] sm:$0xf]
      %v523 = vld [vmem:[%s195 + $0x2c] sm:$0xf]
      %v524 = vld [vmem:[%s195 + $0x30] sm:$0xf]
      %v525 = vld [vmem:[%s195 + $0x34] sm:$0xf]
      %v526 = vld [vmem:[%s195 + $0x38] sm:$0xf]
      %v527 = vld [vmem:[%s195 + $0x3c] sm:$0xf]
      %v528 = vld [vmem:[%s195 + $0x40] sm:$0xf]
      %v529 = vld [vmem:[%s195 + $0x44] sm:$0xf]
      %v530 = vld [vmem:[%s195 + $0x48] sm:$0xf]
      %v531 = vld [vmem:[%s195 + $0x4c] sm:$0xf]
      %v532 = vld [vmem:[%s195 + $0x50] sm:$0xf]
      %v533 = vld [vmem:[%s195 + $0x54] sm:$0xf]
      %v534 = vld [vmem:[%s195 + $0x58] sm:$0xf]
      %v535 = vld [vmem:[%s195 + $0x5c] sm:$0xf]
      %v536 = vld [vmem:[%s195 + $0x60] sm:$0xf]
      %v537 = vld [vmem:[%s195 + $0x64] sm:$0xf]
      %v538 = vld [vmem:[%s195 + $0x68] sm:$0xf]
      %v539 = vld [vmem:[%s195 + $0x6c] sm:$0xf]
      %v540 = vld [vmem:[%s195 + $0x70] sm:$0xf]
      %v541 = vld [vmem:[%s195 + $0x74] sm:$0xf]
      %v542 = vld [vmem:[%s195 + $0x78] sm:$0xf]
      %v543 = vld [vmem:[%s195 + $0x7c] sm:$0xf]
      %v544 = vld [vmem:[%s195 + $0x80] sm:$0xf]
      %v545 = vld [vmem:[%s195 + $0x84] sm:$0xf]
      %v546 = vld [vmem:[%s195 + $0x88] sm:$0xf]
      %v547 = vld [vmem:[%s195 + $0x8c] sm:$0xf]
      %v548 = vld [vmem:[%s195 + $0x90] sm:$0xf]
      %v549 = vld [vmem:[%s195 + $0x94] sm:$0xf]
      %v550 = vld [vmem:[%s195 + $0x98] sm:$0xf]
      %v551 = vld [vmem:[%s195 + $0x9c] sm:$0xf]
      %v552 = vld [vmem:[%s195 + $0xa0] sm:$0xf]
      %v553 = vld [vmem:[%s195 + $0xa4] sm:$0xf]
      %v554 = vld [vmem:[%s195 + $0xa8] sm:$0xf]
      %v555 = vld [vmem:[%s195 + $0xac] sm:$0xf]
      %v556 = vld [vmem:[%s195 + $0xb0] sm:$0xf]
      %v557 = vld [vmem:[%s195 + $0xb4] sm:$0xf]
      %v558 = vld [vmem:[%s195 + $0xb8] sm:$0xf]
      %v559 = vld [vmem:[%s195 + $0xbc] sm:$0xf]
      %v560 = vld [vmem:[%s195 + $0xc0] sm:$0xf]
      %v561 = vld [vmem:[%s195 + $0xc4] sm:$0xf]
      %v562 = vld [vmem:[%s195 + $0xc8] sm:$0xf]
      %v563 = vld [vmem:[%s195 + $0xcc] sm:$0xf]
      %v564 = vld [vmem:[%s195 + $0xd0] sm:$0xf]
      %v565 = vld [vmem:[%s195 + $0xd4] sm:$0xf]
      %v566 = vld [vmem:[%s195 + $0xd8] sm:$0xf]
      %v567 = vld [vmem:[%s195 + $0xdc] sm:$0xf]
      %v568 = vld [vmem:[%s195 + $0xe0] sm:$0xf]
      %v569 = vld [vmem:[%s195 + $0xe4] sm:$0xf]
      %v570 = vld [vmem:[%s195 + $0xe8] sm:$0xf]
      %v571 = vld [vmem:[%s195 + $0xec] sm:$0xf]
      %v572 = vld [vmem:[%s195 + $0xf0] sm:$0xf]
      %v573 = vld [vmem:[%s195 + $0xf4] sm:$0xf]
      %v574 = vld [vmem:[%s195 + $0xf8] sm:$0xf]
      %v575 = vld [vmem:[%s195 + $0xfc] sm:$0xf]
      %v576 = vld [vmem:[%s195 + $0x100] sm:$0xf]
      %v577 = vld [vmem:[%s195 + $0x104] sm:$0xf]
      %v578 = vld [vmem:[%s195 + $0x108] sm:$0xf]
      %v579 = vld [vmem:[%s195 + $0x10c] sm:$0xf]
      %v580 = vld [vmem:[%s195 + $0x110] sm:$0xf]
      %v581 = vld [vmem:[%s195 + $0x114] sm:$0xf]
      %v582 = vld [vmem:[%s195 + $0x118] sm:$0xf]
      %v583 = vld [vmem:[%s195 + $0x11c] sm:$0xf]
      %v584 = vld [vmem:[%s195 + $0x120] sm:$0xf]
      %v585 = vld [vmem:[%s195 + $0x124] sm:$0xf]
      %v586 = vld [vmem:[%s195 + $0x128] sm:$0xf]
      %v587 = vld [vmem:[%s195 + $0x12c] sm:$0xf]
      %v588 = vld [vmem:[%s195 + $0x130] sm:$0xf]
      %v589 = vld [vmem:[%s195 + $0x134] sm:$0xf]
      %v590 = vld [vmem:[%s195 + $0x138] sm:$0xf]
      %v591 = vld [vmem:[%s195 + $0x13c] sm:$0xf]
      %v592 = vld [vmem:[%s195 + $0x140] sm:$0xf]
      %v593 = vld [vmem:[%s195 + $0x144] sm:$0xf]
      %v594 = vld [vmem:[%s195 + $0x148] sm:$0xf]
      %v595 = vld [vmem:[%s195 + $0x14c] sm:$0xf]
      %v596 = vld [vmem:[%s195 + $0x150] sm:$0xf]
      %v597 = vld [vmem:[%s195 + $0x154] sm:$0xf]
      %v598 = vld [vmem:[%s195 + $0x158] sm:$0xf]
      %v599 = vld [vmem:[%s195 + $0x15c] sm:$0xf]
      %v600 = vld [vmem:[%s195 + $0x160] sm:$0xf]
      %v601 = vld [vmem:[%s195 + $0x164] sm:$0xf]
      %v602 = vld [vmem:[%s195 + $0x168] sm:$0xf]
      %v603 = vld [vmem:[%s195 + $0x16c] sm:$0xf]
      %v604 = vld [vmem:[%s195 + $0x170] sm:$0xf]
      %v605 = vld [vmem:[%s195 + $0x174] sm:$0xf]
      %v606 = vld [vmem:[%s195 + $0x178] sm:$0xf]
      %v607 = vld [vmem:[%s195 + $0x17c] sm:$0xf]
      %v608 = vld [vmem:[%s195 + $0x180] sm:$0xf]
      %v609 = vld [vmem:[%s195 + $0x184] sm:$0xf]
      %v610 = vld [vmem:[%s195 + $0x188] sm:$0xf]
      %v611 = vld [vmem:[%s195 + $0x18c] sm:$0xf]
      %v612 = vld [vmem:[%s195 + $0x190] sm:$0xf]
      %v613 = vld [vmem:[%s195 + $0x194] sm:$0xf]
      %v614 = vld [vmem:[%s195 + $0x198] sm:$0xf]
      %v615 = vld [vmem:[%s195 + $0x19c] sm:$0xf]
      %v616 = vld [vmem:[%s195 + $0x1a0] sm:$0xf]
      %v617 = vld [vmem:[%s195 + $0x1a4] sm:$0xf]
      %v618 = vld [vmem:[%s195 + $0x1a8] sm:$0xf]
      %v619 = vld [vmem:[%s195 + $0x1ac] sm:$0xf]
      %v620 = vld [vmem:[%s195 + $0x1b0] sm:$0xf]
      %v621 = vld [vmem:[%s195 + $0x1b4] sm:$0xf]
      %v622 = vld [vmem:[%s195 + $0x1b8] sm:$0xf]
      %v623 = vld [vmem:[%s195 + $0x1bc] sm:$0xf]
      %v624 = vld [vmem:[%s195 + $0x1c0] sm:$0xf]
      %v625 = vld [vmem:[%s195 + $0x1c4] sm:$0xf]
      %v626 = vld [vmem:[%s195 + $0x1c8] sm:$0xf]
      %v627 = vld [vmem:[%s195 + $0x1cc] sm:$0xf]
      %v628 = vld [vmem:[%s195 + $0x1d0] sm:$0xf]
      %v629 = vld [vmem:[%s195 + $0x1d4] sm:$0xf]
      %v630 = vld [vmem:[%s195 + $0x1d8] sm:$0xf]
      %v631 = vld [vmem:[%s195 + $0x1dc] sm:$0xf]
      %v632 = vld [vmem:[%s195 + $0x1e0] sm:$0xf]
      %v633 = vld [vmem:[%s195 + $0x1e4] sm:$0xf]
      %v634 = vld [vmem:[%s195 + $0x1e8] sm:$0xf]
      %v635 = vld [vmem:[%s195 + $0x1ec] sm:$0xf]
      %v636 = vld [vmem:[%s195 + $0x1f0] sm:$0xf]
      %v637 = vld [vmem:[%s195 + $0x1f4] sm:$0xf]
      %v638 = vld [vmem:[%s195 + $0x1f8] sm:$0xf]
      %v639 = vld [vmem:[%s195 + $0x1fc] sm:$0xf]
      %v640 = vld [vmem:[%s1] sm:$0x7]
      %v641 = vld [vmem:[%s195 + $0x200] sm:$0xf]
      %v642 = vld [vmem:[%s195 + $0x204] sm:$0xf]
      %v643 = vld [vmem:[%s195 + $0x208] sm:$0xf]
      %v644 = vld [vmem:[%s195 + $0x20c] sm:$0xf]
      %s645 = scalar_lea.vmem %s1, 4
      %v646 = vld [vmem:[%s645] sm:$0x7]
      %v775 = vunpack.c.l.b16 %v516
      %v776 = vunpack.c.l.b16 %v517
      %v777 = vunpack.c.l.b16 %v518
      %v778 = vunpack.c.l.b16 %v519
      %v779 = vunpack.c.l.b16 %v520
      %v780 = vunpack.c.l.b16 %v521
      %v781 = vunpack.c.l.b16 %v522
      %v782 = vunpack.c.l.b16 %v523
      %v783 = vunpack.c.l.b16 %v524
      %v784 = vunpack.c.l.b16 %v525
      %v785 = vunpack.c.l.b16 %v526
      %v786 = vunpack.c.l.b16 %v527
      %v787 = vunpack.c.l.b16 %v528
      %v788 = vunpack.c.l.b16 %v529
      %v789 = vunpack.c.l.b16 %v530
      %v790 = vunpack.c.l.b16 %v531
      %v791 = vunpack.c.l.b16 %v532
      %v792 = vunpack.c.l.b16 %v533
      %v793 = vunpack.c.l.b16 %v534
      %v794 = vunpack.c.l.b16 %v535
      %v795 = vunpack.c.l.b16 %v536
      %v796 = vunpack.c.l.b16 %v537
      %v797 = vunpack.c.l.b16 %v538
      %v798 = vunpack.c.l.b16 %v539
      %v799 = vunpack.c.l.b16 %v540
      %v800 = vunpack.c.l.b16 %v541
      %v801 = vunpack.c.l.b16 %v542
      %v802 = vunpack.c.l.b16 %v543
      %v803 = vunpack.c.l.b16 %v544
      %v804 = vunpack.c.l.b16 %v545
      %v805 = vunpack.c.l.b16 %v546
      %v806 = vunpack.c.l.b16 %v547
      %v807 = vunpack.c.l.b16 %v548
      %v808 = vunpack.c.l.b16 %v549
      %v809 = vunpack.c.l.b16 %v550
      %v810 = vunpack.c.l.b16 %v551
      %v811 = vunpack.c.l.b16 %v552
      %v812 = vunpack.c.l.b16 %v553
      %v813 = vunpack.c.l.b16 %v554
      %v814 = vunpack.c.l.b16 %v555
      %v815 = vunpack.c.l.b16 %v556
      %v816 = vunpack.c.l.b16 %v557
      %v817 = vunpack.c.l.b16 %v558
      %v818 = vunpack.c.l.b16 %v559
      %v819 = vunpack.c.l.b16 %v560
      %v820 = vunpack.c.l.b16 %v561
      %v821 = vunpack.c.l.b16 %v562
      %v822 = vunpack.c.l.b16 %v563
      %v823 = vunpack.c.l.b16 %v564
      %v824 = vunpack.c.l.b16 %v565
      %v825 = vunpack.c.l.b16 %v566
      %v826 = vunpack.c.l.b16 %v567
      %v827 = vunpack.c.l.b16 %v568
      %v828 = vunpack.c.l.b16 %v569
      %v829 = vunpack.c.l.b16 %v570
      %v830 = vunpack.c.l.b16 %v571
      %v831 = vunpack.c.l.b16 %v572
      %v832 = vunpack.c.l.b16 %v573
      %v833 = vunpack.c.l.b16 %v574
      %v834 = vunpack.c.l.b16 %v575
      %v835 = vunpack.c.l.b16 %v576
      %v836 = vunpack.c.l.b16 %v577
      %v837 = vunpack.c.l.b16 %v578
      %v838 = vunpack.c.l.b16 %v579
      %v839 = vunpack.c.l.b16 %v580
      %v840 = vunpack.c.l.b16 %v581
      %v841 = vunpack.c.l.b16 %v582
      %v842 = vunpack.c.l.b16 %v583
      %v843 = vunpack.c.l.b16 %v584
      %v844 = vunpack.c.l.b16 %v585
      %v845 = vunpack.c.l.b16 %v586
      %v846 = vunpack.c.l.b16 %v587
      %v847 = vunpack.c.l.b16 %v588
      %v848 = vunpack.c.l.b16 %v589
      %v849 = vunpack.c.l.b16 %v590
      %v850 = vunpack.c.l.b16 %v591
      %v851 = vunpack.c.l.b16 %v592
      %v852 = vunpack.c.l.b16 %v593
      %v853 = vunpack.c.l.b16 %v594
      %v854 = vunpack.c.l.b16 %v595
      %v855 = vunpack.c.l.b16 %v596
      %v856 = vunpack.c.l.b16 %v597
      %v857 = vunpack.c.l.b16 %v598
      %v858 = vunpack.c.l.b16 %v599
      %v859 = vunpack.c.l.b16 %v600
      %v860 = vunpack.c.l.b16 %v601
      %v861 = vunpack.c.l.b16 %v602
      %v862 = vunpack.c.l.b16 %v603
      %v863 = vunpack.c.l.b16 %v604
      %v864 = vunpack.c.l.b16 %v605
      %v865 = vunpack.c.l.b16 %v606
      %v866 = vunpack.c.l.b16 %v607
      %v867 = vunpack.c.l.b16 %v608
      %v868 = vunpack.c.l.b16 %v609
      %v869 = vunpack.c.l.b16 %v610
      %v870 = vunpack.c.l.b16 %v611
      %v871 = vunpack.c.l.b16 %v612
      %v872 = vunpack.c.l.b16 %v613
      %v873 = vunpack.c.l.b16 %v614
      %v874 = vunpack.c.l.b16 %v615
      %v875 = vunpack.c.l.b16 %v616
      %v876 = vunpack.c.l.b16 %v617
      %v877 = vunpack.c.l.b16 %v618
      %v878 = vunpack.c.l.b16 %v619
      %v879 = vunpack.c.l.b16 %v620
      %v880 = vunpack.c.l.b16 %v621
      %v881 = vunpack.c.l.b16 %v622
      %v882 = vunpack.c.l.b16 %v623
      %v883 = vunpack.c.l.b16 %v624
      %v884 = vunpack.c.l.b16 %v625
      %v885 = vunpack.c.l.b16 %v626
      %v886 = vunpack.c.l.b16 %v627
      %v887 = vunpack.c.l.b16 %v628
      %v888 = vunpack.c.l.b16 %v629
      %v889 = vunpack.c.l.b16 %v630
      %v890 = vunpack.c.l.b16 %v631
      %v891 = vunpack.c.l.b16 %v632
      %v892 = vunpack.c.l.b16 %v633
      %v893 = vunpack.c.l.b16 %v634
      %v894 = vunpack.c.l.b16 %v635
      %v895 = vunpack.c.l.b16 %v636
      %v896 = vunpack.c.l.b16 %v637
      %v897 = vunpack.c.l.b16 %v638
      %v898 = vunpack.c.l.b16 %v639
      %v899 = vunpack.c.l.b16 %v641
      %v900 = vunpack.c.l.b16 %v642
      %v901 = vunpack.c.l.b16 %v643
      %v902 = vunpack.c.l.b16 %v644
      %v903 = vpack.c.b16 %v776, %v775
      %v904 = vpack.c.b16 %v778, %v777
      %v905 = vpack.c.b16 %v780, %v779
      %v906 = vpack.c.b16 %v782, %v781
      %v907 = vpack.c.b16 %v784, %v783
      %v908 = vpack.c.b16 %v786, %v785
      %v909 = vpack.c.b16 %v788, %v787
      %v910 = vpack.c.b16 %v790, %v789
      %v911 = vpack.c.b16 %v792, %v791
      %v912 = vpack.c.b16 %v794, %v793
      %v913 = vpack.c.b16 %v796, %v795
      %v914 = vpack.c.b16 %v798, %v797
      %v915 = vpack.c.b16 %v800, %v799
      %v916 = vpack.c.b16 %v802, %v801
      %v917 = vpack.c.b16 %v804, %v803
      %v918 = vpack.c.b16 %v806, %v805
      %v919 = vpack.c.b16 %v808, %v807
      %v920 = vpack.c.b16 %v810, %v809
      %v921 = vpack.c.b16 %v812, %v811
      %v922 = vpack.c.b16 %v814, %v813
      %v923 = vpack.c.b16 %v816, %v815
      %v924 = vpack.c.b16 %v818, %v817
      %v925 = vpack.c.b16 %v820, %v819
      %v926 = vpack.c.b16 %v822, %v821
      %v927 = vpack.c.b16 %v824, %v823
      %v928 = vpack.c.b16 %v826, %v825
      %v929 = vpack.c.b16 %v828, %v827
      %v930 = vpack.c.b16 %v830, %v829
      %v931 = vpack.c.b16 %v832, %v831
      %v932 = vpack.c.b16 %v834, %v833
      %v933 = vpack.c.b16 %v836, %v835
      %v934 = vpack.c.b16 %v838, %v837
      %v935 = vpack.c.b16 %v840, %v839
      %v936 = vpack.c.b16 %v842, %v841
      %v937 = vpack.c.b16 %v844, %v843
      %v938 = vpack.c.b16 %v846, %v845
      %v939 = vpack.c.b16 %v848, %v847
      %v940 = vpack.c.b16 %v850, %v849
      %v941 = vpack.c.b16 %v852, %v851
      %v942 = vpack.c.b16 %v854, %v853
      %v943 = vpack.c.b16 %v856, %v855
      %v944 = vpack.c.b16 %v858, %v857
      %v945 = vpack.c.b16 %v860, %v859
      %v946 = vpack.c.b16 %v862, %v861
      %v947 = vpack.c.b16 %v864, %v863
      %v948 = vpack.c.b16 %v866, %v865
      %v949 = vpack.c.b16 %v868, %v867
      %v950 = vpack.c.b16 %v870, %v869
      %v951 = vpack.c.b16 %v872, %v871
      %v952 = vpack.c.b16 %v874, %v873
      %v953 = vpack.c.b16 %v876, %v875
      %v954 = vpack.c.b16 %v878, %v877
      %v955 = vpack.c.b16 %v880, %v879
      %v956 = vpack.c.b16 %v882, %v881
      %v957 = vpack.c.b16 %v884, %v883
      %v958 = vpack.c.b16 %v886, %v885
      %v959 = vpack.c.b16 %v888, %v887
      %v960 = vpack.c.b16 %v890, %v889
      %v961 = vpack.c.b16 %v892, %v891
      %v962 = vpack.c.b16 %v894, %v893
      %v963 = vpack.c.b16 %v896, %v895
      %v964 = vpack.c.b16 %v898, %v897
      %v965 = vpack.c.b16 %v900, %v899
      %v966 = vpack.c.b16 %v902, %v901
      %vm967 = vcmask 48128
      %v969 = vsel %vm967, %v903, 0
      %v972 = vsel %vm967, %v904, 0
      %v975 = vsel %vm967, %v905, 0
      %v978 = vsel %vm967, %v906, 0
      %v981 = vsel %vm967, %v907, 0
      %v984 = vsel %vm967, %v908, 0
      %v987 = vsel %vm967, %v909, 0
      %v990 = vsel %vm967, %v910, 0
      %v993 = vsel %vm967, %v911, 0
      %v996 = vsel %vm967, %v912, 0
      %v999 = vsel %vm967, %v913, 0
      %v1002 = vsel %vm967, %v914, 0
      %v1005 = vsel %vm967, %v915, 0
      %v1008 = vsel %vm967, %v916, 0
      %v1011 = vsel %vm967, %v917, 0
      %v1014 = vsel %vm967, %v918, 0
      %v1017 = vsel %vm967, %v919, 0
      %v1020 = vsel %vm967, %v920, 0
      %v1023 = vsel %vm967, %v921, 0
      %v1026 = vsel %vm967, %v922, 0
      %v1029 = vsel %vm967, %v923, 0
      %v1032 = vsel %vm967, %v924, 0
      %v1035 = vsel %vm967, %v925, 0
      %v1038 = vsel %vm967, %v926, 0
      %v1041 = vsel %vm967, %v927, 0
      %v1044 = vsel %vm967, %v928, 0
      %v1047 = vsel %vm967, %v929, 0
      %v1050 = vsel %vm967, %v930, 0
      %v1053 = vsel %vm967, %v931, 0
      %v1056 = vsel %vm967, %v932, 0
      %v1059 = vsel %vm967, %v933, 0
      %v1062 = vsel %vm967, %v934, 0
      %v1065 = vsel %vm967, %v935, 0
      %v1068 = vsel %vm967, %v936, 0
      %v1071 = vsel %vm967, %v937, 0
      %v1074 = vsel %vm967, %v938, 0
      %v1077 = vsel %vm967, %v939, 0
      %v1080 = vsel %vm967, %v940, 0
      %v1083 = vsel %vm967, %v941, 0
      %v1086 = vsel %vm967, %v942, 0
      %v1089 = vsel %vm967, %v943, 0
      %v1092 = vsel %vm967, %v944, 0
      %v1095 = vsel %vm967, %v945, 0
      %v1098 = vsel %vm967, %v946, 0
      %v1101 = vsel %vm967, %v947, 0
      %v1104 = vsel %vm967, %v948, 0
      %v1107 = vsel %vm967, %v949, 0
      %v1110 = vsel %vm967, %v950, 0
      %v1113 = vsel %vm967, %v951, 0
      %v1116 = vsel %vm967, %v952, 0
      %v1119 = vsel %vm967, %v953, 0
      %v1122 = vsel %vm967, %v954, 0
      %v1125 = vsel %vm967, %v955, 0
      %v1128 = vsel %vm967, %v956, 0
      %v1131 = vsel %vm967, %v957, 0
      %v1134 = vsel %vm967, %v958, 0
      %v1137 = vsel %vm967, %v959, 0
      %v1140 = vsel %vm967, %v960, 0
      %v1143 = vsel %vm967, %v961, 0
      %v1146 = vsel %vm967, %v962, 0
      %v1149 = vsel %vm967, %v963, 0
      %v1152 = vsel %vm967, %v964, 0
      %v1155 = vsel %vm967, %v965, 0
      %v1158 = vsel %vm967, %v966, 0
      %vm1160 = vcmask 1042432
      %v1162 = vsel %vm1160, %v646, 0
      %1164 = vmatprep.subr.bf16.mxu0 0
      %1165 = vmatpush1.bf16.msra.mxu0 %v1162
      %1166 = vmatprep.subr.bf16.mxu0 0
      %1167 = vmatpush1.bf16.msra.mxu0 0
      %1168 = vmatprep.subr.bf16.mxu0 0
      %1169 = vmatpush1.bf16.msra.mxu0 0
      %1170 = vmatprep.subr.bf16.mxu0 0
      %1171 = vmatpush1.bf16.msra.mxu0 0
      %1172 = vmatprep.subr.bf16.mxu0 0
      %1173 = vmatpush1.bf16.msra.mxu0 0
      %1174 = vmatprep.subr.bf16.mxu0 0
      %1175 = vmatpush1.bf16.msra.mxu0 0
      %1176 = vmatprep.subr.bf16.mxu0 0
      %1177 = vmatpush1.bf16.msra.mxu0 0
      %1178 = vmatprep.subr.bf16.mxu0 0
      %1179 = vmatpush1.bf16.msra.mxu0 0
      %1180 = vmatprep.subr.bf16.mxu0 0
      %1181 = vmatpush1.bf16.msra.mxu0 0
      %1182 = vmatprep.subr.bf16.mxu0 0
      %1183 = vmatpush1.bf16.msra.mxu0 0
      %1184 = vmatprep.subr.bf16.mxu0 0
      %1185 = vmatpush1.bf16.msra.mxu0 0
      %1186 = vmatprep.subr.bf16.mxu0 0
      %1187 = vmatpush1.bf16.msra.mxu0 0
      %1188 = vmatprep.subr.bf16.mxu0 0
      %1189 = vmatpush1.bf16.msra.mxu0 0
      %1190 = vmatprep.subr.bf16.mxu0 0
      %1191 = vmatpush1.bf16.msra.mxu0 0
      %1192 = vmatprep.subr.bf16.mxu0 0
      %1193 = vmatpush1.bf16.msra.mxu0 0
      %1194 = vmatprep.subr.bf16.mxu0 0
      %1195 = vmatpush1.bf16.msra.mxu0 0
      %1196 = vmatprep.mubr.bf16.mxu0 0
      %1197 = vmatmul.mubr.bf16.gmra.mrb[0].mxu0 %v969
      %v1198 = vpop.f32.mrb[0].mxu0
      %v1199 = vadd.f32 0.0, %v1198
      %v1200 = vpop.f32.mrb[0].mxu0
      %v1201 = vpop.f32.mrb[0].mxu0
      %v1202 = vadd.f32 0.0, %v1201
      %v1203 = vpop.f32.mrb[0].mxu0
      %1204 = vmatprep.mubr.bf16.mxu0 0
      %1205 = vmatmul.mubr.bf16.gmra.mrb[0].mxu0 %v972
      %v1206 = vpop.f32.mrb[0].mxu0
      %v1207 = vadd.f32 0.0, %v1206
      %v1208 = vpop.f32.mrb[0].mxu0
      %v1209 = vpop.f32.mrb[0].mxu0
      %v1210 = vadd.f32 0.0, %v1209
      %v1211 = vpop.f32.mrb[0].mxu0
      %1212 = vmatprep.mubr.bf16.mxu0 0
      %1213 = vmatmul.mubr.bf16.gmra.mrb[0].mxu0 %v975
      %v1214 = vpop.f32.mrb[0].mxu0
      %v1215 = vadd.f32 0.0, %v1214
      %v1216 = vpop.f32.mrb[0].mxu0
      %v1217 = vpop.f32.mrb[0].mxu0
      %v1218 = vadd.f32 0.0, %v1217
      %v1219 = vpop.f32.mrb[0].mxu0
      %1220 = vmatprep.mubr.bf16.mxu0 0
      %1221 = vmatmul.mubr.bf16.gmra.mrb[0].mxu0 %v978
      %v1222 = vpop.f32.mrb[0].mxu0
      %v1223 = vadd.f32 0.0, %v1222
      %v1224 = vpop.f32.mrb[0].mxu0
      %v1225 = vpop.f32.mrb[0].mxu0
      %v1226 = vadd.f32 0.0, %v1225
      %v1227 = vpop.f32.mrb[0].mxu0
      %1228 = vmatprep.mubr.bf16.mxu0 0
      %1229 = vmatmul.mubr.bf16.gmra.mrb[0].mxu0 %v981
      %v1230 = vpop.f32.mrb[0].mxu0
      %v1231 = vadd.f32 0.0, %v1230
      %v1232 = vpop.f32.mrb[0].mxu0
      %v1233 = vpop.f32.mrb[0].mxu0
      %v1234 = vadd.f32 0.0, %v1233
      %v1235 = vpop.f32.mrb[0].mxu0
      %1236 = vmatprep.mubr.bf16.mxu0 0
      %1237 = vmatmul.mubr.bf16.gmra.mrb[0].mxu0 %v984
      %v1238 = vpop.f32.mrb[0].mxu0
      %v1239 = vadd.f32 0.0, %v1238
      %v1240 = vpop.f32.mrb[0].mxu0
      %v1241 = vpop.f32.mrb[0].mxu0
      %v1242 = vadd.f32 0.0, %v1241
      %v1243 = vpop.f32.mrb[0].mxu0
      %1244 = vmatprep.mubr.bf16.mxu0 0
      %1245 = vmatmul.mubr.bf16.gmra.mrb[0].mxu0 %v987
      %v1246 = vpop.f32.mrb[0].mxu0
      %v1247 = vadd.f32 0.0, %v1246
      %v1248 = vpop.f32.mrb[0].mxu0
      %v1249 = vpop.f32.mrb[0].mxu0
      %v1250 = vadd.f32 0.0, %v1249
      %v1251 = vpop.f32.mrb[0].mxu0
      %1252 = vmatprep.mubr.bf16.mxu0 0
      %1253 = vmatmul.mubr.bf16.gmra.mrb[0].mxu0 %v990
      %v1254 = vpop.f32.mrb[0].mxu0
      %v1255 = vadd.f32 0.0, %v1254
      %v1256 = vpop.f32.mrb[0].mxu0
      %v1257 = vpop.f32.mrb[0].mxu0
      %v1258 = vadd.f32 0.0, %v1257
      %v1259 = vpop.f32.mrb[0].mxu0
      %1260 = vmatprep.mubr.bf16.mxu0 0
      %1261 = vmatmul.mubr.bf16.gmra.mrb[0].mxu0 %v993
      %v1262 = vpop.f32.mrb[0].mxu0
      %v1263 = vadd.f32 0.0, %v1262
      %v1264 = vpop.f32.mrb[0].mxu0
      %v1265 = vpop.f32.mrb[0].mxu0
      %v1266 = vadd.f32 0.0, %v1265
      %v1267 = vpop.f32.mrb[0].mxu0
      %1268 = vmatprep.mubr.bf16.mxu0 0
      %1269 = vmatmul.mubr.bf16.gmra.mrb[0].mxu0 %v996
      %v1270 = vpop.f32.mrb[0].mxu0
      %v1271 = vadd.f32 0.0, %v1270
      %v1272 = vpop.f32.mrb[0].mxu0
      %v1273 = vpop.f32.mrb[0].mxu0
      %v1274 = vadd.f32 0.0, %v1273
      %v1275 = vpop.f32.mrb[0].mxu0
      %1276 = vmatprep.mubr.bf16.mxu0 0
      %1277 = vmatmul.mubr.bf16.gmra.mrb[0].mxu0 %v999
      %v1278 = vpop.f32.mrb[0].mxu0
      %v1279 = vadd.f32 0.0, %v1278
      %v1280 = vpop.f32.mrb[0].mxu0
      %v1281 = vpop.f32.mrb[0].mxu0
      %v1282 = vadd.f32 0.0, %v1281
      %v1283 = vpop.f32.mrb[0].mxu0
      %1284 = vmatprep.mubr.bf16.mxu0 0
      %1285 = vmatmul.mubr.bf16.gmra.mrb[0].mxu0 %v1002
      %v1286 = vpop.f32.mrb[0].mxu0
      %v1287 = vadd.f32 0.0, %v1286
      %v1288 = vpop.f32.mrb[0].mxu0
      %v1289 = vpop.f32.mrb[0].mxu0
      %v1290 = vadd.f32 0.0, %v1289
      %v1291 = vpop.f32.mrb[0].mxu0
      %1292 = vmatprep.mubr.bf16.mxu0 0
      %1293 = vmatmul.mubr.bf16.gmra.mrb[0].mxu0 %v1005
      %v1294 = vpop.f32.mrb[0].mxu0
      %v1295 = vadd.f32 0.0, %v1294
      %v1296 = vpop.f32.mrb[0].mxu0
      %v1297 = vpop.f32.mrb[0].mxu0
      %v1298 = vadd.f32 0.0, %v1297
      %v1299 = vpop.f32.mrb[0].mxu0
      %1300 = vmatprep.mubr.bf16.mxu0 0
      %1301 = vmatmul.mubr.bf16.gmra.mrb[0].mxu0 %v1008
      %v1302 = vpop.f32.mrb[0].mxu0
      %v1303 = vadd.f32 0.0, %v1302
      %v1304 = vpop.f32.mrb[0].mxu0
      %v1305 = vpop.f32.mrb[0].mxu0
      %v1306 = vadd.f32 0.0, %v1305
      %v1307 = vpop.f32.mrb[0].mxu0
      %1308 = vmatprep.mubr.bf16.mxu0 0
      %1309 = vmatmul.mubr.bf16.gmra.mrb[0].mxu0 %v1011
      %v1310 = vpop.f32.mrb[0].mxu0
      %v1311 = vadd.f32 0.0, %v1310
      %v1312 = vpop.f32.mrb[0].mxu0
      %v1313 = vpop.f32.mrb[0].mxu0
      %v1314 = vadd.f32 0.0, %v1313
      %v1315 = vpop.f32.mrb[0].mxu0
      %1316 = vmatprep.mubr.bf16.mxu0 0
      %1317 = vmatmul.mubr.bf16.gmra.mrb[0].mxu0 %v1014
      %v1318 = vpop.f32.mrb[0].mxu0
      %v1319 = vadd.f32 0.0, %v1318
      %v1320 = vpop.f32.mrb[0].mxu0
      %v1321 = vpop.f32.mrb[0].mxu0
      %v1322 = vadd.f32 0.0, %v1321
      %v1323 = vpop.f32.mrb[0].mxu0
      %1324 = vmatprep.mubr.bf16.mxu0 0
      %1325 = vmatmul.mubr.bf16.gmra.mrb[0].mxu0 %v1017
      %v1326 = vpop.f32.mrb[0].mxu0
      %v1327 = vadd.f32 0.0, %v1326
      %v1328 = vpop.f32.mrb[0].mxu0
      %v1329 = vpop.f32.mrb[0].mxu0
      %v1330 = vadd.f32 0.0, %v1329
      %v1331 = vpop.f32.mrb[0].mxu0
      %1332 = vmatprep.mubr.bf16.mxu0 0
      %1333 = vmatmul.mubr.bf16.gmra.mrb[0].mxu0 %v1020
      %v1334 = vpop.f32.mrb[0].mxu0
      %v1335 = vadd.f32 0.0, %v1334
      %v1336 = vpop.f32.mrb[0].mxu0
      %v1337 = vpop.f32.mrb[0].mxu0
      %v1338 = vadd.f32 0.0, %v1337
      %v1339 = vpop.f32.mrb[0].mxu0
      %1340 = vmatprep.mubr.bf16.mxu0 0
      %1341 = vmatmul.mubr.bf16.gmra.mrb[0].mxu0 %v1023
      %v1342 = vpop.f32.mrb[0].mxu0
      %v1343 = vadd.f32 0.0, %v1342
      %v1344 = vpop.f32.mrb[0].mxu0
      %v1345 = vpop.f32.mrb[0].mxu0
      %v1346 = vadd.f32 0.0, %v1345
      %v1347 = vpop.f32.mrb[0].mxu0
      %1348 = vmatprep.mubr.bf16.mxu0 0
      %1349 = vmatmul.mubr.bf16.gmra.mrb[0].mxu0 %v1026
      %v1350 = vpop.f32.mrb[0].mxu0
      %v1351 = vadd.f32 0.0, %v1350
      %v1352 = vpop.f32.mrb[0].mxu0
      %v1353 = vpop.f32.mrb[0].mxu0
      %v1354 = vadd.f32 0.0, %v1353
      %v1355 = vpop.f32.mrb[0].mxu0
      %1356 = vmatprep.mubr.bf16.mxu0 0
      %1357 = vmatmul.mubr.bf16.gmra.mrb[0].mxu0 %v1029
      %v1358 = vpop.f32.mrb[0].mxu0
      %v1359 = vadd.f32 0.0, %v1358
      %v1360 = vpop.f32.mrb[0].mxu0
      %v1361 = vpop.f32.mrb[0].mxu0
      %v1362 = vadd.f32 0.0, %v1361
      %v1363 = vpop.f32.mrb[0].mxu0
      %1364 = vmatprep.mubr.bf16.mxu0 0
      %1365 = vmatmul.mubr.bf16.gmra.mrb[0].mxu0 %v1032
      %v1366 = vpop.f32.mrb[0].mxu0
      %v1367 = vadd.f32 0.0, %v1366
      %v1368 = vpop.f32.mrb[0].mxu0
      %v1369 = vpop.f32.mrb[0].mxu0
      %v1370 = vadd.f32 0.0, %v1369
      %v1371 = vpop.f32.mrb[0].mxu0
      %1372 = vmatprep.mubr.bf16.mxu0 0
      %1373 = vmatmul.mubr.bf16.gmra.mrb[0].mxu0 %v1035
      %v1374 = vpop.f32.mrb[0].mxu0
      %v1375 = vadd.f32 0.0, %v1374
      %v1376 = vpop.f32.mrb[0].mxu0
      %v1377 = vpop.f32.mrb[0].mxu0
      %v1378 = vadd.f32 0.0, %v1377
      %v1379 = vpop.f32.mrb[0].mxu0
      %1380 = vmatprep.mubr.bf16.mxu0 0
      %1381 = vmatmul.mubr.bf16.gmra.mrb[0].mxu0 %v1038
      %v1382 = vpop.f32.mrb[0].mxu0
      %v1383 = vadd.f32 0.0, %v1382
      %v1384 = vpop.f32.mrb[0].mxu0
      %v1385 = vpop.f32.mrb[0].mxu0
      %v1386 = vadd.f32 0.0, %v1385
      %v1387 = vpop.f32.mrb[0].mxu0
      %1388 = vmatprep.mubr.bf16.mxu0 0
      %1389 = vmatmul.mubr.bf16.gmra.mrb[0].mxu0 %v1041
      %v1390 = vpop.f32.mrb[0].mxu0
      %v1391 = vadd.f32 0.0, %v1390
      %v1392 = vpop.f32.mrb[0].mxu0
      %v1393 = vpop.f32.mrb[0].mxu0
      %v1394 = vadd.f32 0.0, %v1393
      %v1395 = vpop.f32.mrb[0].mxu0
      %1396 = vmatprep.mubr.bf16.mxu0 0
      %1397 = vmatmul.mubr.bf16.gmra.mrb[0].mxu0 %v1044
      %v1398 = vpop.f32.mrb[0].mxu0
      %v1399 = vadd.f32 0.0, %v1398
      %v1400 = vpop.f32.mrb[0].mxu0
      %v1401 = vpop.f32.mrb[0].mxu0
      %v1402 = vadd.f32 0.0, %v1401
      %v1403 = vpop.f32.mrb[0].mxu0
      %1404 = vmatprep.mubr.bf16.mxu0 0
      %1405 = vmatmul.mubr.bf16.gmra.mrb[0].mxu0 %v1047
      %v1406 = vpop.f32.mrb[0].mxu0
      %v1407 = vadd.f32 0.0, %v1406
      %v1408 = vpop.f32.mrb[0].mxu0
      %v1409 = vpop.f32.mrb[0].mxu0
      %v1410 = vadd.f32 0.0, %v1409
      %v1411 = vpop.f32.mrb[0].mxu0
      %1412 = vmatprep.mubr.bf16.mxu0 0
      %1413 = vmatmul.mubr.bf16.gmra.mrb[0].mxu0 %v1050
      %v1414 = vpop.f32.mrb[0].mxu0
      %v1415 = vadd.f32 0.0, %v1414
      %v1416 = vpop.f32.mrb[0].mxu0
      %v1417 = vpop.f32.mrb[0].mxu0
      %v1418 = vadd.f32 0.0, %v1417
      %v1419 = vpop.f32.mrb[0].mxu0
      %1420 = vmatprep.mubr.bf16.mxu0 0
      %1421 = vmatmul.mubr.bf16.gmra.mrb[0].mxu0 %v1053
      %v1422 = vpop.f32.mrb[0].mxu0
      %v1423 = vadd.f32 0.0, %v1422
      %v1424 = vpop.f32.mrb[0].mxu0
      %v1425 = vpop.f32.mrb[0].mxu0
      %v1426 = vadd.f32 0.0, %v1425
      %v1427 = vpop.f32.mrb[0].mxu0
      %1428 = vmatprep.mubr.bf16.mxu0 0
      %1429 = vmatmul.mubr.bf16.gmra.mrb[0].mxu0 %v1056
      %v1430 = vpop.f32.mrb[0].mxu0
      %v1431 = vadd.f32 0.0, %v1430
      %v1432 = vpop.f32.mrb[0].mxu0
      %v1433 = vpop.f32.mrb[0].mxu0
      %v1434 = vadd.f32 0.0, %v1433
      %v1435 = vpop.f32.mrb[0].mxu0
      %1436 = vmatprep.mubr.bf16.mxu0 0
      %1437 = vmatmul.mubr.bf16.gmra.mrb[0].mxu0 %v1059
      %v1438 = vpop.f32.mrb[0].mxu0
      %v1439 = vadd.f32 0.0, %v1438
      %v1440 = vpop.f32.mrb[0].mxu0
      %v1441 = vpop.f32.mrb[0].mxu0
      %v1442 = vadd.f32 0.0, %v1441
      %v1443 = vpop.f32.mrb[0].mxu0
      %1444 = vmatprep.mubr.bf16.mxu0 0
      %1445 = vmatmul.mubr.bf16.gmra.mrb[0].mxu0 %v1062
      %v1446 = vpop.f32.mrb[0].mxu0
      %v1447 = vadd.f32 0.0, %v1446
      %v1448 = vpop.f32.mrb[0].mxu0
      %v1449 = vpop.f32.mrb[0].mxu0
      %v1450 = vadd.f32 0.0, %v1449
      %v1451 = vpop.f32.mrb[0].mxu0
      %1452 = vmatprep.mubr.bf16.mxu0 0
      %1453 = vmatmul.mubr.bf16.gmra.mrb[0].mxu0 %v1065
      %v1454 = vpop.f32.mrb[0].mxu0
      %v1455 = vadd.f32 0.0, %v1454
      %v1456 = vpop.f32.mrb[0].mxu0
      %v1457 = vpop.f32.mrb[0].mxu0
      %v1458 = vadd.f32 0.0, %v1457
      %v1459 = vpop.f32.mrb[0].mxu0
      %1460 = vmatprep.mubr.bf16.mxu0 0
      %1461 = vmatmul.mubr.bf16.gmra.mrb[0].mxu0 %v1068
      %v1462 = vpop.f32.mrb[0].mxu0
      %v1463 = vadd.f32 0.0, %v1462
      %v1464 = vpop.f32.mrb[0].mxu0
      %v1465 = vpop.f32.mrb[0].mxu0
      %v1466 = vadd.f32 0.0, %v1465
      %v1467 = vpop.f32.mrb[0].mxu0
      %1468 = vmatprep.mubr.bf16.mxu0 0
      %1469 = vmatmul.mubr.bf16.gmra.mrb[0].mxu0 %v1071
      %v1470 = vpop.f32.mrb[0].mxu0
      %v1471 = vadd.f32 0.0, %v1470
      %v1472 = vpop.f32.mrb[0].mxu0
      %v1473 = vpop.f32.mrb[0].mxu0
      %v1474 = vadd.f32 0.0, %v1473
      %v1475 = vpop.f32.mrb[0].mxu0
      %1476 = vmatprep.mubr.bf16.mxu0 0
      %1477 = vmatmul.mubr.bf16.gmra.mrb[0].mxu0 %v1074
      %v1478 = vpop.f32.mrb[0].mxu0
      %v1479 = vadd.f32 0.0, %v1478
      %v1480 = vpop.f32.mrb[0].mxu0
      %v1481 = vpop.f32.mrb[0].mxu0
      %v1482 = vadd.f32 0.0, %v1481
      %v1483 = vpop.f32.mrb[0].mxu0
      %1484 = vmatprep.mubr.bf16.mxu0 0
      %1485 = vmatmul.mubr.bf16.gmra.mrb[0].mxu0 %v1077
      %v1486 = vpop.f32.mrb[0].mxu0
      %v1487 = vadd.f32 0.0, %v1486
      %v1488 = vpop.f32.mrb[0].mxu0
      %v1489 = vpop.f32.mrb[0].mxu0
      %v1490 = vadd.f32 0.0, %v1489
      %v1491 = vpop.f32.mrb[0].mxu0
      %1492 = vmatprep.mubr.bf16.mxu0 0
      %1493 = vmatmul.mubr.bf16.gmra.mrb[0].mxu0 %v1080
      %v1494 = vpop.f32.mrb[0].mxu0
      %v1495 = vadd.f32 0.0, %v1494
      %v1496 = vpop.f32.mrb[0].mxu0
      %v1497 = vpop.f32.mrb[0].mxu0
      %v1498 = vadd.f32 0.0, %v1497
      %v1499 = vpop.f32.mrb[0].mxu0
      %1500 = vmatprep.mubr.bf16.mxu0 0
      %1501 = vmatmul.mubr.bf16.gmra.mrb[0].mxu0 %v1083
      %v1502 = vpop.f32.mrb[0].mxu0
      %v1503 = vadd.f32 0.0, %v1502
      %v1504 = vpop.f32.mrb[0].mxu0
      %v1505 = vpop.f32.mrb[0].mxu0
      %v1506 = vadd.f32 0.0, %v1505
      %v1507 = vpop.f32.mrb[0].mxu0
      %1508 = vmatprep.mubr.bf16.mxu0 0
      %1509 = vmatmul.mubr.bf16.gmra.mrb[0].mxu0 %v1086
      %v1510 = vpop.f32.mrb[0].mxu0
      %v1511 = vadd.f32 0.0, %v1510
      %v1512 = vpop.f32.mrb[0].mxu0
      %v1513 = vpop.f32.mrb[0].mxu0
      %v1514 = vadd.f32 0.0, %v1513
      %v1515 = vpop.f32.mrb[0].mxu0
      %1516 = vmatprep.mubr.bf16.mxu0 0
      %1517 = vmatmul.mubr.bf16.gmra.mrb[0].mxu0 %v1089
      %v1518 = vpop.f32.mrb[0].mxu0
      %v1519 = vadd.f32 0.0, %v1518
      %v1520 = vpop.f32.mrb[0].mxu0
      %v1521 = vpop.f32.mrb[0].mxu0
      %v1522 = vadd.f32 0.0, %v1521
      %v1523 = vpop.f32.mrb[0].mxu0
      %1524 = vmatprep.mubr.bf16.mxu0 0
      %1525 = vmatmul.mubr.bf16.gmra.mrb[0].mxu0 %v1092
      %v1526 = vpop.f32.mrb[0].mxu0
      %v1527 = vadd.f32 0.0, %v1526
      %v1528 = vpop.f32.mrb[0].mxu0
      %v1529 = vpop.f32.mrb[0].mxu0
      %v1530 = vadd.f32 0.0, %v1529
      %v1531 = vpop.f32.mrb[0].mxu0
      %1532 = vmatprep.mubr.bf16.mxu0 0
      %1533 = vmatmul.mubr.bf16.gmra.mrb[0].mxu0 %v1095
      %v1534 = vpop.f32.mrb[0].mxu0
      %v1535 = vadd.f32 0.0, %v1534
      %v1536 = vpop.f32.mrb[0].mxu0
      %v1537 = vpop.f32.mrb[0].mxu0
      %v1538 = vadd.f32 0.0, %v1537
      %v1539 = vpop.f32.mrb[0].mxu0
      %1540 = vmatprep.mubr.bf16.mxu0 0
      %1541 = vmatmul.mubr.bf16.gmra.mrb[0].mxu0 %v1098
      %v1542 = vpop.f32.mrb[0].mxu0
      %v1543 = vadd.f32 0.0, %v1542
      %v1544 = vpop.f32.mrb[0].mxu0
      %v1545 = vpop.f32.mrb[0].mxu0
      %v1546 = vadd.f32 0.0, %v1545
      %v1547 = vpop.f32.mrb[0].mxu0
      %1548 = vmatprep.mubr.bf16.mxu0 0
      %1549 = vmatmul.mubr.bf16.gmra.mrb[0].mxu0 %v1101
      %v1550 = vpop.f32.mrb[0].mxu0
      %v1551 = vadd.f32 0.0, %v1550
      %v1552 = vpop.f32.mrb[0].mxu0
      %v1553 = vpop.f32.mrb[0].mxu0
      %v1554 = vadd.f32 0.0, %v1553
      %v1555 = vpop.f32.mrb[0].mxu0
      %1556 = vmatprep.mubr.bf16.mxu0 0
      %1557 = vmatmul.mubr.bf16.gmra.mrb[0].mxu0 %v1104
      %v1558 = vpop.f32.mrb[0].mxu0
      %v1559 = vadd.f32 0.0, %v1558
      %v1560 = vpop.f32.mrb[0].mxu0
      %v1561 = vpop.f32.mrb[0].mxu0
      %v1562 = vadd.f32 0.0, %v1561
      %v1563 = vpop.f32.mrb[0].mxu0
      %1564 = vmatprep.mubr.bf16.mxu0 0
      %1565 = vmatmul.mubr.bf16.gmra.mrb[0].mxu0 %v1107
      %v1566 = vpop.f32.mrb[0].mxu0
      %v1567 = vadd.f32 0.0, %v1566
      %v1568 = vpop.f32.mrb[0].mxu0
      %v1569 = vpop.f32.mrb[0].mxu0
      %v1570 = vadd.f32 0.0, %v1569
      %v1571 = vpop.f32.mrb[0].mxu0
      %1572 = vmatprep.mubr.bf16.mxu0 0
      %1573 = vmatmul.mubr.bf16.gmra.mrb[0].mxu0 %v1110
      %v1574 = vpop.f32.mrb[0].mxu0
      %v1575 = vadd.f32 0.0, %v1574
      %v1576 = vpop.f32.mrb[0].mxu0
      %v1577 = vpop.f32.mrb[0].mxu0
      %v1578 = vadd.f32 0.0, %v1577
      %v1579 = vpop.f32.mrb[0].mxu0
      %1580 = vmatprep.mubr.bf16.mxu0 0
      %1581 = vmatmul.mubr.bf16.gmra.mrb[0].mxu0 %v1113
      %v1582 = vpop.f32.mrb[0].mxu0
      %v1583 = vadd.f32 0.0, %v1582
      %v1584 = vpop.f32.mrb[0].mxu0
      %v1585 = vpop.f32.mrb[0].mxu0
      %v1586 = vadd.f32 0.0, %v1585
      %v1587 = vpop.f32.mrb[0].mxu0
      %1588 = vmatprep.mubr.bf16.mxu0 0
      %1589 = vmatmul.mubr.bf16.gmra.mrb[0].mxu0 %v1116
      %v1590 = vpop.f32.mrb[0].mxu0
      %v1591 = vadd.f32 0.0, %v1590
      %v1592 = vpop.f32.mrb[0].mxu0
      %v1593 = vpop.f32.mrb[0].mxu0
      %v1594 = vadd.f32 0.0, %v1593
      %v1595 = vpop.f32.mrb[0].mxu0
      %1596 = vmatprep.mubr.bf16.mxu0 0
      %1597 = vmatmul.mubr.bf16.gmra.mrb[0].mxu0 %v1119
      %v1598 = vpop.f32.mrb[0].mxu0
      %v1599 = vadd.f32 0.0, %v1598
      %v1600 = vpop.f32.mrb[0].mxu0
      %v1601 = vpop.f32.mrb[0].mxu0
      %v1602 = vadd.f32 0.0, %v1601
      %v1603 = vpop.f32.mrb[0].mxu0
      %1604 = vmatprep.mubr.bf16.mxu0 0
      %1605 = vmatmul.mubr.bf16.gmra.mrb[0].mxu0 %v1122
      %v1606 = vpop.f32.mrb[0].mxu0
      %v1607 = vadd.f32 0.0, %v1606
      %v1608 = vpop.f32.mrb[0].mxu0
      %v1609 = vpop.f32.mrb[0].mxu0
      %v1610 = vadd.f32 0.0, %v1609
      %v1611 = vpop.f32.mrb[0].mxu0
      %1612 = vmatprep.mubr.bf16.mxu0 0
      %1613 = vmatmul.mubr.bf16.gmra.mrb[0].mxu0 %v1125
      %v1614 = vpop.f32.mrb[0].mxu0
      %v1615 = vadd.f32 0.0, %v1614
      %v1616 = vpop.f32.mrb[0].mxu0
      %v1617 = vpop.f32.mrb[0].mxu0
      %v1618 = vadd.f32 0.0, %v1617
      %v1619 = vpop.f32.mrb[0].mxu0
      %1620 = vmatprep.mubr.bf16.mxu0 0
      %1621 = vmatmul.mubr.bf16.gmra.mrb[0].mxu0 %v1128
      %v1622 = vpop.f32.mrb[0].mxu0
      %v1623 = vadd.f32 0.0, %v1622
      %v1624 = vpop.f32.mrb[0].mxu0
      %v1625 = vpop.f32.mrb[0].mxu0
      %v1626 = vadd.f32 0.0, %v1625
      %v1627 = vpop.f32.mrb[0].mxu0
      %1628 = vmatprep.mubr.bf16.mxu0 0
      %1629 = vmatmul.mubr.bf16.gmra.mrb[0].mxu0 %v1131
      %v1630 = vpop.f32.mrb[0].mxu0
      %v1631 = vadd.f32 0.0, %v1630
      %v1632 = vpop.f32.mrb[0].mxu0
      %v1633 = vpop.f32.mrb[0].mxu0
      %v1634 = vadd.f32 0.0, %v1633
      %v1635 = vpop.f32.mrb[0].mxu0
      %1636 = vmatprep.mubr.bf16.mxu0 0
      %1637 = vmatmul.mubr.bf16.gmra.mrb[0].mxu0 %v1134
      %v1638 = vpop.f32.mrb[0].mxu0
      %v1639 = vadd.f32 0.0, %v1638
      %v1640 = vpop.f32.mrb[0].mxu0
      %v1641 = vpop.f32.mrb[0].mxu0
      %v1642 = vadd.f32 0.0, %v1641
      %v1643 = vpop.f32.mrb[0].mxu0
      %1644 = vmatprep.mubr.bf16.mxu0 0
      %1645 = vmatmul.mubr.bf16.gmra.mrb[0].mxu0 %v1137
      %v1646 = vpop.f32.mrb[0].mxu0
      %v1647 = vadd.f32 0.0, %v1646
      %v1648 = vpop.f32.mrb[0].mxu0
      %v1649 = vpop.f32.mrb[0].mxu0
      %v1650 = vadd.f32 0.0, %v1649
      %v1651 = vpop.f32.mrb[0].mxu0
      %1652 = vmatprep.mubr.bf16.mxu0 0
      %1653 = vmatmul.mubr.bf16.gmra.mrb[0].mxu0 %v1140
      %v1654 = vpop.f32.mrb[0].mxu0
      %v1655 = vadd.f32 0.0, %v1654
      %v1656 = vpop.f32.mrb[0].mxu0
      %v1657 = vpop.f32.mrb[0].mxu0
      %v1658 = vadd.f32 0.0, %v1657
      %v1659 = vpop.f32.mrb[0].mxu0
      %1660 = vmatprep.mubr.bf16.mxu0 0
      %1661 = vmatmul.mubr.bf16.gmra.mrb[0].mxu0 %v1143
      %v1662 = vpop.f32.mrb[0].mxu0
      %v1663 = vadd.f32 0.0, %v1662
      %v1664 = vpop.f32.mrb[0].mxu0
      %v1665 = vpop.f32.mrb[0].mxu0
      %v1666 = vadd.f32 0.0, %v1665
      %v1667 = vpop.f32.mrb[0].mxu0
      %1668 = vmatprep.mubr.bf16.mxu0 0
      %1669 = vmatmul.mubr.bf16.gmra.mrb[0].mxu0 %v1146
      %v1670 = vpop.f32.mrb[0].mxu0
      %v1671 = vadd.f32 0.0, %v1670
      %v1672 = vpop.f32.mrb[0].mxu0
      %v1673 = vpop.f32.mrb[0].mxu0
      %v1674 = vadd.f32 0.0, %v1673
      %v1675 = vpop.f32.mrb[0].mxu0
      %1676 = vmatprep.mubr.bf16.mxu0 0
      %1677 = vmatmul.mubr.bf16.gmra.mrb[0].mxu0 %v1149
      %v1678 = vpop.f32.mrb[0].mxu0
      %v1679 = vadd.f32 0.0, %v1678
      %v1680 = vpop.f32.mrb[0].mxu0
      %v1681 = vpop.f32.mrb[0].mxu0
      %v1682 = vadd.f32 0.0, %v1681
      %v1683 = vpop.f32.mrb[0].mxu0
      %1684 = vmatprep.mubr.bf16.mxu0 0
      %1685 = vmatmul.mubr.bf16.gmra.mrb[0].mxu0 %v1152
      %v1686 = vpop.f32.mrb[0].mxu0
      %v1687 = vadd.f32 0.0, %v1686
      %v1688 = vpop.f32.mrb[0].mxu0
      %v1689 = vpop.f32.mrb[0].mxu0
      %v1690 = vadd.f32 0.0, %v1689
      %v1691 = vpop.f32.mrb[0].mxu0
      %1692 = vmatprep.mubr.bf16.mxu0 0
      %1693 = vmatmul.mubr.bf16.gmra.mrb[0].mxu0 %v1155
      %v1694 = vpop.f32.mrb[0].mxu0
      %v1695 = vadd.f32 0.0, %v1694
      %v1696 = vpop.f32.mrb[0].mxu0
      %v1697 = vpop.f32.mrb[0].mxu0
      %v1698 = vadd.f32 0.0, %v1697
      %v1699 = vpop.f32.mrb[0].mxu0
      %1700 = vmatprep.mubr.bf16.mxu0 0
      %1701 = vmatmul.mubr.bf16.gmra.mrb[0].mxu0 %v1158
      %v1702 = vpop.f32.mrb[0].mxu0
      %v1703 = vadd.f32 0.0, %v1702
      %v1704 = vpop.f32.mrb[0].mxu0
      %v1705 = vpop.f32.mrb[0].mxu0
      %v1706 = vadd.f32 0.0, %v1705
      %v1707 = vpop.f32.mrb[0].mxu0
      %1708 = vdwg.mxu0
      %v1713 = vunpack.c.l.b16 %v512
      %v1714 = vunpack.c.l.b16 %v513
      %v1715 = vunpack.c.l.b16 %v514
      %v1716 = vunpack.c.l.b16 %v515
      %v1717 = vpack.c.b16 %v1714, %v1713
      %v1718 = vpack.c.b16 %v1716, %v1715
      %v1720 = vsel %vm967, %v1717, 0
      %v1723 = vsel %vm967, %v1718, 0
      %v1726 = vsel %vm1160, %v640, 0
      %1728 = vmatprep.subr.bf16.mxu0 0
      %1729 = vmatpush1.bf16.msra.mxu0 %v1726
      %1730 = vmatprep.subr.bf16.mxu0 0
      %1731 = vmatpush1.bf16.msra.mxu0 0
      %1732 = vmatprep.subr.bf16.mxu0 0
      %1733 = vmatpush1.bf16.msra.mxu0 0
      %1734 = vmatprep.subr.bf16.mxu0 0
      %1735 = vmatpush1.bf16.msra.mxu0 0
      %1736 = vmatprep.subr.bf16.mxu0 0
      %1737 = vmatpush1.bf16.msra.mxu0 0
      %1738 = vmatprep.subr.bf16.mxu0 0
      %1739 = vmatpush1.bf16.msra.mxu0 0
      %1740 = vmatprep.subr.bf16.mxu0 0
      %1741 = vmatpush1.bf16.msra.mxu0 0
      %1742 = vmatprep.subr.bf16.mxu0 0
      %1743 = vmatpush1.bf16.msra.mxu0 0
      %1744 = vmatprep.subr.bf16.mxu0 0
      %1745 = vmatpush1.bf16.msra.mxu0 0
      %1746 = vmatprep.subr.bf16.mxu0 0
      %1747 = vmatpush1.bf16.msra.mxu0 0
      %1748 = vmatprep.subr.bf16.mxu0 0
      %1749 = vmatpush1.bf16.msra.mxu0 0
      %1750 = vmatprep.subr.bf16.mxu0 0
      %1751 = vmatpush1.bf16.msra.mxu0 0
      %1752 = vmatprep.subr.bf16.mxu0 0
      %1753 = vmatpush1.bf16.msra.mxu0 0
      %1754 = vmatprep.subr.bf16.mxu0 0
      %1755 = vmatpush1.bf16.msra.mxu0 0
      %1756 = vmatprep.subr.bf16.mxu0 0
      %1757 = vmatpush1.bf16.msra.mxu0 0
      %1758 = vmatprep.subr.bf16.mxu0 0
      %1759 = vmatpush1.bf16.msra.mxu0 0
      %1760 = vmatprep.mubr.bf16.mxu0 0
      %1761 = vmatmul.mubr.bf16.gmra.mrb[0].mxu0 %v1720
      %v1762 = vpop.f32.mrb[0].mxu0
      %v1763 = vadd.f32 %v1199, %v1762
      %v1764 = vpop.f32.mrb[0].mxu0
      %v1765 = vpop.f32.mrb[0].mxu0
      %v1766 = vadd.f32 %v1202, %v1765
      %v1767 = vpop.f32.mrb[0].mxu0
      %1768 = vmatprep.mubr.bf16.mxu0 0
      %1769 = vmatmul.mubr.bf16.gmra.mrb[0].mxu0 %v1723
      %v1770 = vpop.f32.mrb[0].mxu0
      %v1771 = vadd.f32 %v1207, %v1770
      %v1772 = vpop.f32.mrb[0].mxu0
      %v1773 = vpop.f32.mrb[0].mxu0
      %v1774 = vadd.f32 %v1210, %v1773
      %v1775 = vpop.f32.mrb[0].mxu0
      %1776 = vmatprep.mubr.bf16.mxu0 0
      %1777 = vmatmul.mubr.bf16.gmra.mrb[0].mxu0 %v969
      %v1778 = vpop.f32.mrb[0].mxu0
      %v1779 = vadd.f32 %v1215, %v1778
      %v1780 = vpop.f32.mrb[0].mxu0
      %v1781 = vpop.f32.mrb[0].mxu0
      %v1782 = vadd.f32 %v1218, %v1781
      %v1783 = vpop.f32.mrb[0].mxu0
      %1784 = vmatprep.mubr.bf16.mxu0 0
      %1785 = vmatmul.mubr.bf16.gmra.mrb[0].mxu0 %v972
      %v1786 = vpop.f32.mrb[0].mxu0
      %v1787 = vadd.f32 %v1223, %v1786
      %v1788 = vpop.f32.mrb[0].mxu0
      %v1789 = vpop.f32.mrb[0].mxu0
      %v1790 = vadd.f32 %v1226, %v1789
      %v1791 = vpop.f32.mrb[0].mxu0
      %1792 = vmatprep.mubr.bf16.mxu0 0
      %1793 = vmatmul.mubr.bf16.gmra.mrb[0].mxu0 %v975
      %v1794 = vpop.f32.mrb[0].mxu0
      %v1795 = vadd.f32 %v1231, %v1794
      %v1796 = vpop.f32.mrb[0].mxu0
      %v1797 = vpop.f32.mrb[0].mxu0
      %v1798 = vadd.f32 %v1234, %v1797
      %v1799 = vpop.f32.mrb[0].mxu0
      %1800 = vmatprep.mubr.bf16.mxu0 0
      %1801 = vmatmul.mubr.bf16.gmra.mrb[0].mxu0 %v978
      %v1802 = vpop.f32.mrb[0].mxu0
      %v1803 = vadd.f32 %v1239, %v1802
      %v1804 = vpop.f32.mrb[0].mxu0
      %v1805 = vpop.f32.mrb[0].mxu0
      %v1806 = vadd.f32 %v1242, %v1805
      %v1807 = vpop.f32.mrb[0].mxu0
      %1808 = vmatprep.mubr.bf16.mxu0 0
      %1809 = vmatmul.mubr.bf16.gmra.mrb[0].mxu0 %v981
      %v1810 = vpop.f32.mrb[0].mxu0
      %v1811 = vadd.f32 %v1247, %v1810
      %v1812 = vpop.f32.mrb[0].mxu0
      %v1813 = vpop.f32.mrb[0].mxu0
      %v1814 = vadd.f32 %v1250, %v1813
      %v1815 = vpop.f32.mrb[0].mxu0
      %1816 = vmatprep.mubr.bf16.mxu0 0
      %1817 = vmatmul.mubr.bf16.gmra.mrb[0].mxu0 %v984
      %v1818 = vpop.f32.mrb[0].mxu0
      %v1819 = vadd.f32 %v1255, %v1818
      %v1820 = vpop.f32.mrb[0].mxu0
      %v1821 = vpop.f32.mrb[0].mxu0
      %v1822 = vadd.f32 %v1258, %v1821
      %v1823 = vpop.f32.mrb[0].mxu0
      %1824 = vmatprep.mubr.bf16.mxu0 0
      %1825 = vmatmul.mubr.bf16.gmra.mrb[0].mxu0 %v987
      %v1826 = vpop.f32.mrb[0].mxu0
      %v1827 = vadd.f32 %v1263, %v1826
      %v1828 = vpop.f32.mrb[0].mxu0
      %v1829 = vpop.f32.mrb[0].mxu0
      %v1830 = vadd.f32 %v1266, %v1829
      %v1831 = vpop.f32.mrb[0].mxu0
      %1832 = vmatprep.mubr.bf16.mxu0 0
      %1833 = vmatmul.mubr.bf16.gmra.mrb[0].mxu0 %v990
      %v1834 = vpop.f32.mrb[0].mxu0
      %v1835 = vadd.f32 %v1271, %v1834
      %v1836 = vpop.f32.mrb[0].mxu0
      %v1837 = vpop.f32.mrb[0].mxu0
      %v1838 = vadd.f32 %v1274, %v1837
      %v1839 = vpop.f32.mrb[0].mxu0
      %1840 = vmatprep.mubr.bf16.mxu0 0
      %1841 = vmatmul.mubr.bf16.gmra.mrb[0].mxu0 %v993
      %v1842 = vpop.f32.mrb[0].mxu0
      %v1843 = vadd.f32 %v1279, %v1842
      %v1844 = vpop.f32.mrb[0].mxu0
      %v1845 = vpop.f32.mrb[0].mxu0
      %v1846 = vadd.f32 %v1282, %v1845
      %v1847 = vpop.f32.mrb[0].mxu0
      %1848 = vmatprep.mubr.bf16.mxu0 0
      %1849 = vmatmul.mubr.bf16.gmra.mrb[0].mxu0 %v996
      %v1850 = vpop.f32.mrb[0].mxu0
      %v1851 = vadd.f32 %v1287, %v1850
      %v1852 = vpop.f32.mrb[0].mxu0
      %v1853 = vpop.f32.mrb[0].mxu0
      %v1854 = vadd.f32 %v1290, %v1853
      %v1855 = vpop.f32.mrb[0].mxu0
      %1856 = vmatprep.mubr.bf16.mxu0 0
      %1857 = vmatmul.mubr.bf16.gmra.mrb[0].mxu0 %v999
      %v1858 = vpop.f32.mrb[0].mxu0
      %v1859 = vadd.f32 %v1295, %v1858
      %v1860 = vpop.f32.mrb[0].mxu0
      %v1861 = vpop.f32.mrb[0].mxu0
      %v1862 = vadd.f32 %v1298, %v1861
      %v1863 = vpop.f32.mrb[0].mxu0
      %1864 = vmatprep.mubr.bf16.mxu0 0
      %1865 = vmatmul.mubr.bf16.gmra.mrb[0].mxu0 %v1002
      %v1866 = vpop.f32.mrb[0].mxu0
      %v1867 = vadd.f32 %v1303, %v1866
      %v1868 = vpop.f32.mrb[0].mxu0
      %v1869 = vpop.f32.mrb[0].mxu0
      %v1870 = vadd.f32 %v1306, %v1869
      %v1871 = vpop.f32.mrb[0].mxu0
      %1872 = vmatprep.mubr.bf16.mxu0 0
      %1873 = vmatmul.mubr.bf16.gmra.mrb[0].mxu0 %v1005
      %v1874 = vpop.f32.mrb[0].mxu0
      %v1875 = vadd.f32 %v1311, %v1874
      %v1876 = vpop.f32.mrb[0].mxu0
      %v1877 = vpop.f32.mrb[0].mxu0
      %v1878 = vadd.f32 %v1314, %v1877
      %v1879 = vpop.f32.mrb[0].mxu0
      %1880 = vmatprep.mubr.bf16.mxu0 0
      %1881 = vmatmul.mubr.bf16.gmra.mrb[0].mxu0 %v1008
      %v1882 = vpop.f32.mrb[0].mxu0
      %v1883 = vadd.f32 %v1319, %v1882
      %v1884 = vpop.f32.mrb[0].mxu0
      %v1885 = vpop.f32.mrb[0].mxu0
      %v1886 = vadd.f32 %v1322, %v1885
      %v1887 = vpop.f32.mrb[0].mxu0
      %1888 = vmatprep.mubr.bf16.mxu0 0
      %1889 = vmatmul.mubr.bf16.gmra.mrb[0].mxu0 %v1011
      %v1890 = vpop.f32.mrb[0].mxu0
      %v1891 = vadd.f32 %v1327, %v1890
      %v1892 = vpop.f32.mrb[0].mxu0
      %v1893 = vpop.f32.mrb[0].mxu0
      %v1894 = vadd.f32 %v1330, %v1893
      %v1895 = vpop.f32.mrb[0].mxu0
      %1896 = vmatprep.mubr.bf16.mxu0 0
      %1897 = vmatmul.mubr.bf16.gmra.mrb[0].mxu0 %v1014
      %v1898 = vpop.f32.mrb[0].mxu0
      %v1899 = vadd.f32 %v1335, %v1898
      %v1900 = vpop.f32.mrb[0].mxu0
      %v1901 = vpop.f32.mrb[0].mxu0
      %v1902 = vadd.f32 %v1338, %v1901
      %v1903 = vpop.f32.mrb[0].mxu0
      %1904 = vmatprep.mubr.bf16.mxu0 0
      %1905 = vmatmul.mubr.bf16.gmra.mrb[0].mxu0 %v1017
      %v1906 = vpop.f32.mrb[0].mxu0
      %v1907 = vadd.f32 %v1343, %v1906
      %v1908 = vpop.f32.mrb[0].mxu0
      %v1909 = vpop.f32.mrb[0].mxu0
      %v1910 = vadd.f32 %v1346, %v1909
      %v1911 = vpop.f32.mrb[0].mxu0
      %1912 = vmatprep.mubr.bf16.mxu0 0
      %1913 = vmatmul.mubr.bf16.gmra.mrb[0].mxu0 %v1020
      %v1914 = vpop.f32.mrb[0].mxu0
      %v1915 = vadd.f32 %v1351, %v1914
      %v1916 = vpop.f32.mrb[0].mxu0
      %v1917 = vpop.f32.mrb[0].mxu0
      %v1918 = vadd.f32 %v1354, %v1917
      %v1919 = vpop.f32.mrb[0].mxu0
      %1920 = vmatprep.mubr.bf16.mxu0 0
      %1921 = vmatmul.mubr.bf16.gmra.mrb[0].mxu0 %v1023
      %v1922 = vpop.f32.mrb[0].mxu0
      %v1923 = vadd.f32 %v1359, %v1922
      %v1924 = vpop.f32.mrb[0].mxu0
      %v1925 = vpop.f32.mrb[0].mxu0
      %v1926 = vadd.f32 %v1362, %v1925
      %v1927 = vpop.f32.mrb[0].mxu0
      %1928 = vmatprep.mubr.bf16.mxu0 0
      %1929 = vmatmul.mubr.bf16.gmra.mrb[0].mxu0 %v1026
      %v1930 = vpop.f32.mrb[0].mxu0
      %v1931 = vadd.f32 %v1367, %v1930
      %v1932 = vpop.f32.mrb[0].mxu0
      %v1933 = vpop.f32.mrb[0].mxu0
      %v1934 = vadd.f32 %v1370, %v1933
      %v1935 = vpop.f32.mrb[0].mxu0
      %1936 = vmatprep.mubr.bf16.mxu0 0
      %1937 = vmatmul.mubr.bf16.gmra.mrb[0].mxu0 %v1029
      %v1938 = vpop.f32.mrb[0].mxu0
      %v1939 = vadd.f32 %v1375, %v1938
      %v1940 = vpop.f32.mrb[0].mxu0
      %v1941 = vpop.f32.mrb[0].mxu0
      %v1942 = vadd.f32 %v1378, %v1941
      %v1943 = vpop.f32.mrb[0].mxu0
      %1944 = vmatprep.mubr.bf16.mxu0 0
      %1945 = vmatmul.mubr.bf16.gmra.mrb[0].mxu0 %v1032
      %v1946 = vpop.f32.mrb[0].mxu0
      %v1947 = vadd.f32 %v1383, %v1946
      %v1948 = vpop.f32.mrb[0].mxu0
      %v1949 = vpop.f32.mrb[0].mxu0
      %v1950 = vadd.f32 %v1386, %v1949
      %v1951 = vpop.f32.mrb[0].mxu0
      %1952 = vmatprep.mubr.bf16.mxu0 0
      %1953 = vmatmul.mubr.bf16.gmra.mrb[0].mxu0 %v1035
      %v1954 = vpop.f32.mrb[0].mxu0
      %v1955 = vadd.f32 %v1391, %v1954
      %v1956 = vpop.f32.mrb[0].mxu0
      %v1957 = vpop.f32.mrb[0].mxu0
      %v1958 = vadd.f32 %v1394, %v1957
      %v1959 = vpop.f32.mrb[0].mxu0
      %1960 = vmatprep.mubr.bf16.mxu0 0
      %1961 = vmatmul.mubr.bf16.gmra.mrb[0].mxu0 %v1038
      %v1962 = vpop.f32.mrb[0].mxu0
      %v1963 = vadd.f32 %v1399, %v1962
      %v1964 = vpop.f32.mrb[0].mxu0
      %v1965 = vpop.f32.mrb[0].mxu0
      %v1966 = vadd.f32 %v1402, %v1965
      %v1967 = vpop.f32.mrb[0].mxu0
      %1968 = vmatprep.mubr.bf16.mxu0 0
      %1969 = vmatmul.mubr.bf16.gmra.mrb[0].mxu0 %v1041
      %v1970 = vpop.f32.mrb[0].mxu0
      %v1971 = vadd.f32 %v1407, %v1970
      %v1972 = vpop.f32.mrb[0].mxu0
      %v1973 = vpop.f32.mrb[0].mxu0
      %v1974 = vadd.f32 %v1410, %v1973
      %v1975 = vpop.f32.mrb[0].mxu0
      %1976 = vmatprep.mubr.bf16.mxu0 0
      %1977 = vmatmul.mubr.bf16.gmra.mrb[0].mxu0 %v1044
      %v1978 = vpop.f32.mrb[0].mxu0
      %v1979 = vadd.f32 %v1415, %v1978
      %v1980 = vpop.f32.mrb[0].mxu0
      %v1981 = vpop.f32.mrb[0].mxu0
      %v1982 = vadd.f32 %v1418, %v1981
      %v1983 = vpop.f32.mrb[0].mxu0
      %1984 = vmatprep.mubr.bf16.mxu0 0
      %1985 = vmatmul.mubr.bf16.gmra.mrb[0].mxu0 %v1047
      %v1986 = vpop.f32.mrb[0].mxu0
      %v1987 = vadd.f32 %v1423, %v1986
      %v1988 = vpop.f32.mrb[0].mxu0
      %v1989 = vpop.f32.mrb[0].mxu0
      %v1990 = vadd.f32 %v1426, %v1989
      %v1991 = vpop.f32.mrb[0].mxu0
      %1992 = vmatprep.mubr.bf16.mxu0 0
      %1993 = vmatmul.mubr.bf16.gmra.mrb[0].mxu0 %v1050
      %v1994 = vpop.f32.mrb[0].mxu0
      %v1995 = vadd.f32 %v1431, %v1994
      %v1996 = vpop.f32.mrb[0].mxu0
      %v1997 = vpop.f32.mrb[0].mxu0
      %v1998 = vadd.f32 %v1434, %v1997
      %v1999 = vpop.f32.mrb[0].mxu0
      %2000 = vmatprep.mubr.bf16.mxu0 0
      %2001 = vmatmul.mubr.bf16.gmra.mrb[0].mxu0 %v1053
      %v2002 = vpop.f32.mrb[0].mxu0
      %v2003 = vadd.f32 %v1439, %v2002
      %v2004 = vpop.f32.mrb[0].mxu0
      %v2005 = vpop.f32.mrb[0].mxu0
      %v2006 = vadd.f32 %v1442, %v2005
      %v2007 = vpop.f32.mrb[0].mxu0
      %2008 = vmatprep.mubr.bf16.mxu0 0
      %2009 = vmatmul.mubr.bf16.gmra.mrb[0].mxu0 %v1056
      %v2010 = vpop.f32.mrb[0].mxu0
      %v2011 = vadd.f32 %v1447, %v2010
      %v2012 = vpop.f32.mrb[0].mxu0
      %v2013 = vpop.f32.mrb[0].mxu0
      %v2014 = vadd.f32 %v1450, %v2013
      %v2015 = vpop.f32.mrb[0].mxu0
      %2016 = vmatprep.mubr.bf16.mxu0 0
      %2017 = vmatmul.mubr.bf16.gmra.mrb[0].mxu0 %v1059
      %v2018 = vpop.f32.mrb[0].mxu0
      %v2019 = vadd.f32 %v1455, %v2018
      %v2020 = vpop.f32.mrb[0].mxu0
      %v2021 = vpop.f32.mrb[0].mxu0
      %v2022 = vadd.f32 %v1458, %v2021
      %v2023 = vpop.f32.mrb[0].mxu0
      %2024 = vmatprep.mubr.bf16.mxu0 0
      %2025 = vmatmul.mubr.bf16.gmra.mrb[0].mxu0 %v1062
      %v2026 = vpop.f32.mrb[0].mxu0
      %v2027 = vadd.f32 %v1463, %v2026
      %v2028 = vpop.f32.mrb[0].mxu0
      %v2029 = vpop.f32.mrb[0].mxu0
      %v2030 = vadd.f32 %v1466, %v2029
      %v2031 = vpop.f32.mrb[0].mxu0
      %2032 = vmatprep.mubr.bf16.mxu0 0
      %2033 = vmatmul.mubr.bf16.gmra.mrb[0].mxu0 %v1065
      %v2034 = vpop.f32.mrb[0].mxu0
      %v2035 = vadd.f32 %v1471, %v2034
      %v2036 = vpop.f32.mrb[0].mxu0
      %v2037 = vpop.f32.mrb[0].mxu0
      %v2038 = vadd.f32 %v1474, %v2037
      %v2039 = vpop.f32.mrb[0].mxu0
      %2040 = vmatprep.mubr.bf16.mxu0 0
      %2041 = vmatmul.mubr.bf16.gmra.mrb[0].mxu0 %v1068
      %v2042 = vpop.f32.mrb[0].mxu0
      %v2043 = vadd.f32 %v1479, %v2042
      %v2044 = vpop.f32.mrb[0].mxu0
      %v2045 = vpop.f32.mrb[0].mxu0
      %v2046 = vadd.f32 %v1482, %v2045
      %v2047 = vpop.f32.mrb[0].mxu0
      %2048 = vmatprep.mubr.bf16.mxu0 0
      %2049 = vmatmul.mubr.bf16.gmra.mrb[0].mxu0 %v1071
      %v2050 = vpop.f32.mrb[0].mxu0
      %v2051 = vadd.f32 %v1487, %v2050
      %v2052 = vpop.f32.mrb[0].mxu0
      %v2053 = vpop.f32.mrb[0].mxu0
      %v2054 = vadd.f32 %v1490, %v2053
      %v2055 = vpop.f32.mrb[0].mxu0
      %2056 = vmatprep.mubr.bf16.mxu0 0
      %2057 = vmatmul.mubr.bf16.gmra.mrb[0].mxu0 %v1074
      %v2058 = vpop.f32.mrb[0].mxu0
      %v2059 = vadd.f32 %v1495, %v2058
      %v2060 = vpop.f32.mrb[0].mxu0
      %v2061 = vpop.f32.mrb[0].mxu0
      %v2062 = vadd.f32 %v1498, %v2061
      %v2063 = vpop.f32.mrb[0].mxu0
      %2064 = vmatprep.mubr.bf16.mxu0 0
      %2065 = vmatmul.mubr.bf16.gmra.mrb[0].mxu0 %v1077
      %v2066 = vpop.f32.mrb[0].mxu0
      %v2067 = vadd.f32 %v1503, %v2066
      %v2068 = vpop.f32.mrb[0].mxu0
      %v2069 = vpop.f32.mrb[0].mxu0
      %v2070 = vadd.f32 %v1506, %v2069
      %v2071 = vpop.f32.mrb[0].mxu0
      %2072 = vmatprep.mubr.bf16.mxu0 0
      %2073 = vmatmul.mubr.bf16.gmra.mrb[0].mxu0 %v1080
      %v2074 = vpop.f32.mrb[0].mxu0
      %v2075 = vadd.f32 %v1511, %v2074
      %v2076 = vpop.f32.mrb[0].mxu0
      %v2077 = vpop.f32.mrb[0].mxu0
      %v2078 = vadd.f32 %v1514, %v2077
      %v2079 = vpop.f32.mrb[0].mxu0
      %2080 = vmatprep.mubr.bf16.mxu0 0
      %2081 = vmatmul.mubr.bf16.gmra.mrb[0].mxu0 %v1083
      %v2082 = vpop.f32.mrb[0].mxu0
      %v2083 = vadd.f32 %v1519, %v2082
      %v2084 = vpop.f32.mrb[0].mxu0
      %v2085 = vpop.f32.mrb[0].mxu0
      %v2086 = vadd.f32 %v1522, %v2085
      %v2087 = vpop.f32.mrb[0].mxu0
      %2088 = vmatprep.mubr.bf16.mxu0 0
      %2089 = vmatmul.mubr.bf16.gmra.mrb[0].mxu0 %v1086
      %v2090 = vpop.f32.mrb[0].mxu0
      %v2091 = vadd.f32 %v1527, %v2090
      %v2092 = vpop.f32.mrb[0].mxu0
      %v2093 = vpop.f32.mrb[0].mxu0
      %v2094 = vadd.f32 %v1530, %v2093
      %v2095 = vpop.f32.mrb[0].mxu0
      %2096 = vmatprep.mubr.bf16.mxu0 0
      %2097 = vmatmul.mubr.bf16.gmra.mrb[0].mxu0 %v1089
      %v2098 = vpop.f32.mrb[0].mxu0
      %v2099 = vadd.f32 %v1535, %v2098
      %v2100 = vpop.f32.mrb[0].mxu0
      %v2101 = vpop.f32.mrb[0].mxu0
      %v2102 = vadd.f32 %v1538, %v2101
      %v2103 = vpop.f32.mrb[0].mxu0
      %2104 = vmatprep.mubr.bf16.mxu0 0
      %2105 = vmatmul.mubr.bf16.gmra.mrb[0].mxu0 %v1092
      %v2106 = vpop.f32.mrb[0].mxu0
      %v2107 = vadd.f32 %v1543, %v2106
      %v2108 = vpop.f32.mrb[0].mxu0
      %v2109 = vpop.f32.mrb[0].mxu0
      %v2110 = vadd.f32 %v1546, %v2109
      %v2111 = vpop.f32.mrb[0].mxu0
      %2112 = vmatprep.mubr.bf16.mxu0 0
      %2113 = vmatmul.mubr.bf16.gmra.mrb[0].mxu0 %v1095
      %v2114 = vpop.f32.mrb[0].mxu0
      %v2115 = vadd.f32 %v1551, %v2114
      %v2116 = vpop.f32.mrb[0].mxu0
      %v2117 = vpop.f32.mrb[0].mxu0
      %v2118 = vadd.f32 %v1554, %v2117
      %v2119 = vpop.f32.mrb[0].mxu0
      %2120 = vmatprep.mubr.bf16.mxu0 0
      %2121 = vmatmul.mubr.bf16.gmra.mrb[0].mxu0 %v1098
      %v2122 = vpop.f32.mrb[0].mxu0
      %v2123 = vadd.f32 %v1559, %v2122
      %v2124 = vpop.f32.mrb[0].mxu0
      %v2125 = vpop.f32.mrb[0].mxu0
      %v2126 = vadd.f32 %v1562, %v2125
      %v2127 = vpop.f32.mrb[0].mxu0
      %2128 = vmatprep.mubr.bf16.mxu0 0
      %2129 = vmatmul.mubr.bf16.gmra.mrb[0].mxu0 %v1101
      %v2130 = vpop.f32.mrb[0].mxu0
      %v2131 = vadd.f32 %v1567, %v2130
      %v2132 = vpop.f32.mrb[0].mxu0
      %v2133 = vpop.f32.mrb[0].mxu0
      %v2134 = vadd.f32 %v1570, %v2133
      %v2135 = vpop.f32.mrb[0].mxu0
      %2136 = vmatprep.mubr.bf16.mxu0 0
      %2137 = vmatmul.mubr.bf16.gmra.mrb[0].mxu0 %v1104
      %v2138 = vpop.f32.mrb[0].mxu0
      %v2139 = vadd.f32 %v1575, %v2138
      %v2140 = vpop.f32.mrb[0].mxu0
      %v2141 = vpop.f32.mrb[0].mxu0
      %v2142 = vadd.f32 %v1578, %v2141
      %v2143 = vpop.f32.mrb[0].mxu0
      %2144 = vmatprep.mubr.bf16.mxu0 0
      %2145 = vmatmul.mubr.bf16.gmra.mrb[0].mxu0 %v1107
      %v2146 = vpop.f32.mrb[0].mxu0
      %v2147 = vadd.f32 %v1583, %v2146
      %v2148 = vpop.f32.mrb[0].mxu0
      %v2149 = vpop.f32.mrb[0].mxu0
      %v2150 = vadd.f32 %v1586, %v2149
      %v2151 = vpop.f32.mrb[0].mxu0
      %2152 = vmatprep.mubr.bf16.mxu0 0
      %2153 = vmatmul.mubr.bf16.gmra.mrb[0].mxu0 %v1110
      %v2154 = vpop.f32.mrb[0].mxu0
      %v2155 = vadd.f32 %v1591, %v2154
      %v2156 = vpop.f32.mrb[0].mxu0
      %v2157 = vpop.f32.mrb[0].mxu0
      %v2158 = vadd.f32 %v1594, %v2157
      %v2159 = vpop.f32.mrb[0].mxu0
      %2160 = vmatprep.mubr.bf16.mxu0 0
      %2161 = vmatmul.mubr.bf16.gmra.mrb[0].mxu0 %v1113
      %v2162 = vpop.f32.mrb[0].mxu0
      %v2163 = vadd.f32 %v1599, %v2162
      %v2164 = vpop.f32.mrb[0].mxu0
      %v2165 = vpop.f32.mrb[0].mxu0
      %v2166 = vadd.f32 %v1602, %v2165
      %v2167 = vpop.f32.mrb[0].mxu0
      %2168 = vmatprep.mubr.bf16.mxu0 0
      %2169 = vmatmul.mubr.bf16.gmra.mrb[0].mxu0 %v1116
      %v2170 = vpop.f32.mrb[0].mxu0
      %v2171 = vadd.f32 %v1607, %v2170
      %v2172 = vpop.f32.mrb[0].mxu0
      %v2173 = vpop.f32.mrb[0].mxu0
      %v2174 = vadd.f32 %v1610, %v2173
      %v2175 = vpop.f32.mrb[0].mxu0
      %2176 = vmatprep.mubr.bf16.mxu0 0
      %2177 = vmatmul.mubr.bf16.gmra.mrb[0].mxu0 %v1119
      %v2178 = vpop.f32.mrb[0].mxu0
      %v2179 = vadd.f32 %v1615, %v2178
      %v2180 = vpop.f32.mrb[0].mxu0
      %v2181 = vpop.f32.mrb[0].mxu0
      %v2182 = vadd.f32 %v1618, %v2181
      %v2183 = vpop.f32.mrb[0].mxu0
      %2184 = vmatprep.mubr.bf16.mxu0 0
      %2185 = vmatmul.mubr.bf16.gmra.mrb[0].mxu0 %v1122
      %v2186 = vpop.f32.mrb[0].mxu0
      %v2187 = vadd.f32 %v1623, %v2186
      %v2188 = vpop.f32.mrb[0].mxu0
      %v2189 = vpop.f32.mrb[0].mxu0
      %v2190 = vadd.f32 %v1626, %v2189
      %v2191 = vpop.f32.mrb[0].mxu0
      %2192 = vmatprep.mubr.bf16.mxu0 0
      %2193 = vmatmul.mubr.bf16.gmra.mrb[0].mxu0 %v1125
      %v2194 = vpop.f32.mrb[0].mxu0
      %v2195 = vadd.f32 %v1631, %v2194
      %v2196 = vpop.f32.mrb[0].mxu0
      %v2197 = vpop.f32.mrb[0].mxu0
      %v2198 = vadd.f32 %v1634, %v2197
      %v2199 = vpop.f32.mrb[0].mxu0
      %2200 = vmatprep.mubr.bf16.mxu0 0
      %2201 = vmatmul.mubr.bf16.gmra.mrb[0].mxu0 %v1128
      %v2202 = vpop.f32.mrb[0].mxu0
      %v2203 = vadd.f32 %v1639, %v2202
      %v2204 = vpop.f32.mrb[0].mxu0
      %v2205 = vpop.f32.mrb[0].mxu0
      %v2206 = vadd.f32 %v1642, %v2205
      %v2207 = vpop.f32.mrb[0].mxu0
      %2208 = vmatprep.mubr.bf16.mxu0 0
      %2209 = vmatmul.mubr.bf16.gmra.mrb[0].mxu0 %v1131
      %v2210 = vpop.f32.mrb[0].mxu0
      %v2211 = vadd.f32 %v1647, %v2210
      %v2212 = vpop.f32.mrb[0].mxu0
      %v2213 = vpop.f32.mrb[0].mxu0
      %v2214 = vadd.f32 %v1650, %v2213
      %v2215 = vpop.f32.mrb[0].mxu0
      %2216 = vmatprep.mubr.bf16.mxu0 0
      %2217 = vmatmul.mubr.bf16.gmra.mrb[0].mxu0 %v1134
      %v2218 = vpop.f32.mrb[0].mxu0
      %v2219 = vadd.f32 %v1655, %v2218
      %v2220 = vpop.f32.mrb[0].mxu0
      %v2221 = vpop.f32.mrb[0].mxu0
      %v2222 = vadd.f32 %v1658, %v2221
      %v2223 = vpop.f32.mrb[0].mxu0
      %2224 = vmatprep.mubr.bf16.mxu0 0
      %2225 = vmatmul.mubr.bf16.gmra.mrb[0].mxu0 %v1137
      %v2226 = vpop.f32.mrb[0].mxu0
      %v2227 = vadd.f32 %v1663, %v2226
      %v2228 = vpop.f32.mrb[0].mxu0
      %v2229 = vpop.f32.mrb[0].mxu0
      %v2230 = vadd.f32 %v1666, %v2229
      %v2231 = vpop.f32.mrb[0].mxu0
      %2232 = vmatprep.mubr.bf16.mxu0 0
      %2233 = vmatmul.mubr.bf16.gmra.mrb[0].mxu0 %v1140
      %v2234 = vpop.f32.mrb[0].mxu0
      %v2235 = vadd.f32 %v1671, %v2234
      %v2236 = vpop.f32.mrb[0].mxu0
      %v2237 = vpop.f32.mrb[0].mxu0
      %v2238 = vadd.f32 %v1674, %v2237
      %v2239 = vpop.f32.mrb[0].mxu0
      %2240 = vmatprep.mubr.bf16.mxu0 0
      %2241 = vmatmul.mubr.bf16.gmra.mrb[0].mxu0 %v1143
      %v2242 = vpop.f32.mrb[0].mxu0
      %v2243 = vadd.f32 %v1679, %v2242
      %v2244 = vpop.f32.mrb[0].mxu0
      %v2245 = vpop.f32.mrb[0].mxu0
      %v2246 = vadd.f32 %v1682, %v2245
      %v2247 = vpop.f32.mrb[0].mxu0
      %2248 = vmatprep.mubr.bf16.mxu0 0
      %2249 = vmatmul.mubr.bf16.gmra.mrb[0].mxu0 %v1146
      %v2250 = vpop.f32.mrb[0].mxu0
      %v2251 = vadd.f32 %v1687, %v2250
      %v2252 = vpop.f32.mrb[0].mxu0
      %v2253 = vpop.f32.mrb[0].mxu0
      %v2254 = vadd.f32 %v1690, %v2253
      %v2255 = vpop.f32.mrb[0].mxu0
      %2256 = vmatprep.mubr.bf16.mxu0 0
      %2257 = vmatmul.mubr.bf16.gmra.mrb[0].mxu0 %v1149
      %v2258 = vpop.f32.mrb[0].mxu0
      %v2259 = vadd.f32 %v1695, %v2258
      %v2260 = vpop.f32.mrb[0].mxu0
      %v2261 = vpop.f32.mrb[0].mxu0
      %v2262 = vadd.f32 %v1698, %v2261
      %v2263 = vpop.f32.mrb[0].mxu0
      %2264 = vmatprep.mubr.bf16.mxu0 0
      %2265 = vmatmul.mubr.bf16.gmra.mrb[0].mxu0 %v1152
      %v2266 = vpop.f32.mrb[0].mxu0
      %v2267 = vadd.f32 %v1703, %v2266
      %v2268 = vpop.f32.mrb[0].mxu0
      %v2269 = vpop.f32.mrb[0].mxu0
      %v2270 = vadd.f32 %v1706, %v2269
      %v2271 = vpop.f32.mrb[0].mxu0
      %2272 = vdwg.mxu0
      %v2273 = vld [vmem:[%s195 + $0x20] sm:$0xf]
      %v2274 = vld [vmem:[%s195 + $0x24] sm:$0xf]
      %v2275 = vld [vmem:[%s195 + $0x28] sm:$0xf]
      %v2276 = vld [vmem:[%s195 + $0x2c] sm:$0xf]
      %v2277 = vld [vmem:[%s195 + $0x30] sm:$0xf]
      %v2278 = vld [vmem:[%s195 + $0x34] sm:$0xf]
      %v2279 = vld [vmem:[%s195 + $0x38] sm:$0xf]
      %v2280 = vld [vmem:[%s195 + $0x3c] sm:$0xf]
      %v2281 = vld [vmem:[%s195 + $0x40] sm:$0xf]
      %v2282 = vld [vmem:[%s195 + $0x44] sm:$0xf]
      %v2283 = vld [vmem:[%s195 + $0x48] sm:$0xf]
      %v2284 = vld [vmem:[%s195 + $0x4c] sm:$0xf]
      %v2285 = vld [vmem:[%s195 + $0x50] sm:$0xf]
      %v2286 = vld [vmem:[%s195 + $0x54] sm:$0xf]
      %v2287 = vld [vmem:[%s195 + $0x58] sm:$0xf]
      %v2288 = vld [vmem:[%s195 + $0x5c] sm:$0xf]
      %v2289 = vld [vmem:[%s195 + $0x60] sm:$0xf]
      %v2290 = vld [vmem:[%s195 + $0x64] sm:$0xf]
      %v2291 = vld [vmem:[%s195 + $0x68] sm:$0xf]
      %v2292 = vld [vmem:[%s195 + $0x6c] sm:$0xf]
      %v2293 = vld [vmem:[%s195 + $0x70] sm:$0xf]
      %v2294 = vld [vmem:[%s195 + $0x74] sm:$0xf]
      %v2295 = vld [vmem:[%s195 + $0x78] sm:$0xf]
      %v2296 = vld [vmem:[%s195 + $0x7c] sm:$0xf]
      %v2297 = vld [vmem:[%s195 + $0x80] sm:$0xf]
      %v2298 = vld [vmem:[%s195 + $0x84] sm:$0xf]
      %v2299 = vld [vmem:[%s195 + $0x88] sm:$0xf]
      %v2300 = vld [vmem:[%s195 + $0x8c] sm:$0xf]
      %v2301 = vld [vmem:[%s195 + $0x90] sm:$0xf]
      %v2302 = vld [vmem:[%s195 + $0x94] sm:$0xf]
      %v2303 = vld [vmem:[%s195 + $0x98] sm:$0xf]
      %v2304 = vld [vmem:[%s195 + $0x9c] sm:$0xf]
      %v2305 = vld [vmem:[%s195 + $0xa0] sm:$0xf]
      %v2306 = vld [vmem:[%s195 + $0xa4] sm:$0xf]
      %v2307 = vld [vmem:[%s195 + $0xa8] sm:$0xf]
      %v2308 = vld [vmem:[%s195 + $0xac] sm:$0xf]
      %v2309 = vld [vmem:[%s195 + $0xb0] sm:$0xf]
      %v2310 = vld [vmem:[%s195 + $0xb4] sm:$0xf]
      %v2311 = vld [vmem:[%s195 + $0xb8] sm:$0xf]
      %v2312 = vld [vmem:[%s195 + $0xbc] sm:$0xf]
      %v2313 = vld [vmem:[%s195 + $0xc0] sm:$0xf]
      %v2314 = vld [vmem:[%s195 + $0xc4] sm:$0xf]
      %v2315 = vld [vmem:[%s195 + $0xc8] sm:$0xf]
      %v2316 = vld [vmem:[%s195 + $0xcc] sm:$0xf]
      %v2317 = vld [vmem:[%s195 + $0xd0] sm:$0xf]
      %v2318 = vld [vmem:[%s195 + $0xd4] sm:$0xf]
      %v2319 = vld [vmem:[%s195 + $0xd8] sm:$0xf]
      %v2320 = vld [vmem:[%s195 + $0xdc] sm:$0xf]
      %v2321 = vld [vmem:[%s195 + $0xe0] sm:$0xf]
      %v2322 = vld [vmem:[%s195 + $0xe4] sm:$0xf]
      %v2323 = vld [vmem:[%s195 + $0xe8] sm:$0xf]
      %v2324 = vld [vmem:[%s195 + $0xec] sm:$0xf]
      %v2325 = vld [vmem:[%s195 + $0xf0] sm:$0xf]
      %v2326 = vld [vmem:[%s195 + $0xf4] sm:$0xf]
      %v2327 = vld [vmem:[%s195 + $0xf8] sm:$0xf]
      %v2328 = vld [vmem:[%s195 + $0xfc] sm:$0xf]
      %v2329 = vld [vmem:[%s195 + $0x100] sm:$0xf]
      %v2330 = vld [vmem:[%s195 + $0x104] sm:$0xf]
      %v2331 = vld [vmem:[%s195 + $0x108] sm:$0xf]
      %v2332 = vld [vmem:[%s195 + $0x10c] sm:$0xf]
      %v2333 = vld [vmem:[%s195 + $0x110] sm:$0xf]
      %v2334 = vld [vmem:[%s195 + $0x114] sm:$0xf]
      %v2335 = vld [vmem:[%s195 + $0x118] sm:$0xf]
      %v2336 = vld [vmem:[%s195 + $0x11c] sm:$0xf]
      %v2337 = vld [vmem:[%s195 + $0x120] sm:$0xf]
      %v2338 = vld [vmem:[%s195 + $0x124] sm:$0xf]
      %v2339 = vld [vmem:[%s195 + $0x128] sm:$0xf]
      %v2340 = vld [vmem:[%s195 + $0x12c] sm:$0xf]
      %v2341 = vld [vmem:[%s195 + $0x130] sm:$0xf]
      %v2342 = vld [vmem:[%s195 + $0x134] sm:$0xf]
      %v2343 = vld [vmem:[%s195 + $0x138] sm:$0xf]
      %v2344 = vld [vmem:[%s195 + $0x13c] sm:$0xf]
      %v2345 = vld [vmem:[%s195 + $0x140] sm:$0xf]
      %v2346 = vld [vmem:[%s195 + $0x144] sm:$0xf]
      %v2347 = vld [vmem:[%s195 + $0x148] sm:$0xf]
      %v2348 = vld [vmem:[%s195 + $0x14c] sm:$0xf]
      %v2349 = vld [vmem:[%s195 + $0x150] sm:$0xf]
      %v2350 = vld [vmem:[%s195 + $0x154] sm:$0xf]
      %v2351 = vld [vmem:[%s195 + $0x158] sm:$0xf]
      %v2352 = vld [vmem:[%s195 + $0x15c] sm:$0xf]
      %v2353 = vld [vmem:[%s195 + $0x160] sm:$0xf]
      %v2354 = vld [vmem:[%s195 + $0x164] sm:$0xf]
      %v2355 = vld [vmem:[%s195 + $0x168] sm:$0xf]
      %v2356 = vld [vmem:[%s195 + $0x16c] sm:$0xf]
      %v2357 = vld [vmem:[%s195 + $0x170] sm:$0xf]
      %v2358 = vld [vmem:[%s195 + $0x174] sm:$0xf]
      %v2359 = vld [vmem:[%s195 + $0x178] sm:$0xf]
      %v2360 = vld [vmem:[%s195 + $0x17c] sm:$0xf]
      %v2361 = vld [vmem:[%s195 + $0x180] sm:$0xf]
      %v2362 = vld [vmem:[%s195 + $0x184] sm:$0xf]
      %v2363 = vld [vmem:[%s195 + $0x188] sm:$0xf]
      %v2364 = vld [vmem:[%s195 + $0x18c] sm:$0xf]
      %v2365 = vld [vmem:[%s195 + $0x190] sm:$0xf]
      %v2366 = vld [vmem:[%s195 + $0x194] sm:$0xf]
      %v2367 = vld [vmem:[%s195 + $0x198] sm:$0xf]
      %v2368 = vld [vmem:[%s195 + $0x19c] sm:$0xf]
      %v2369 = vld [vmem:[%s195 + $0x1a0] sm:$0xf]
      %v2370 = vld [vmem:[%s195 + $0x1a4] sm:$0xf]
      %v2371 = vld [vmem:[%s195 + $0x1a8] sm:$0xf]
      %v2372 = vld [vmem:[%s195 + $0x1ac] sm:$0xf]
      %v2373 = vld [vmem:[%s195 + $0x1b0] sm:$0xf]
      %v2374 = vld [vmem:[%s195 + $0x1b4] sm:$0xf]
      %v2375 = vld [vmem:[%s195 + $0x1b8] sm:$0xf]
      %v2376 = vld [vmem:[%s195 + $0x1bc] sm:$0xf]
      %v2377 = vld [vmem:[%s195 + $0x1c0] sm:$0xf]
      %v2378 = vld [vmem:[%s195 + $0x1c4] sm:$0xf]
      %v2379 = vld [vmem:[%s195 + $0x1c8] sm:$0xf]
      %v2380 = vld [vmem:[%s195 + $0x1cc] sm:$0xf]
      %v2381 = vld [vmem:[%s195 + $0x1d0] sm:$0xf]
      %v2382 = vld [vmem:[%s195 + $0x1d4] sm:$0xf]
      %v2383 = vld [vmem:[%s195 + $0x1d8] sm:$0xf]
      %v2384 = vld [vmem:[%s195 + $0x1dc] sm:$0xf]
      %v2385 = vld [vmem:[%s195 + $0x1e0] sm:$0xf]
      %v2386 = vld [vmem:[%s195 + $0x1e4] sm:$0xf]
      %v2387 = vld [vmem:[%s195 + $0x1e8] sm:$0xf]
      %v2388 = vld [vmem:[%s195 + $0x1ec] sm:$0xf]
      %v2389 = vld [vmem:[%s195 + $0x1f0] sm:$0xf]
      %v2390 = vld [vmem:[%s195 + $0x1f4] sm:$0xf]
      %v2391 = vld [vmem:[%s195 + $0x1f8] sm:$0xf]
      %v2392 = vld [vmem:[%s195 + $0x1fc] sm:$0xf]
      %v2393 = vld [vmem:[%s195 + $0x200] sm:$0xf]
      %v2394 = vld [vmem:[%s195 + $0x204] sm:$0xf]
      %v2395 = vld [vmem:[%s195 + $0x208] sm:$0xf]
      %v2396 = vld [vmem:[%s195 + $0x20c] sm:$0xf]
      %v2397 = vld [vmem:[%s195 + $0x210] sm:$0xf]
      %v2398 = vld [vmem:[%s195 + $0x214] sm:$0xf]
      %v2399 = vld [vmem:[%s195 + $0x218] sm:$0xf]
      %v2400 = vld [vmem:[%s195 + $0x21c] sm:$0xf]
      %s2401 = scalar_lea.vmem %s1, 8
      %v2402 = vld [vmem:[%s2401] sm:$0x7]
      %v2531 = vunpack.c.l.b16 %v2273
      %v2532 = vunpack.c.l.b16 %v2274
      %v2533 = vunpack.c.l.b16 %v2275
      %v2534 = vunpack.c.l.b16 %v2276
      %v2535 = vunpack.c.l.b16 %v2277
      %v2536 = vunpack.c.l.b16 %v2278
      %v2537 = vunpack.c.l.b16 %v2279
      %v2538 = vunpack.c.l.b16 %v2280
      %v2539 = vunpack.c.l.b16 %v2281
      %v2540 = vunpack.c.l.b16 %v2282
      %v2541 = vunpack.c.l.b16 %v2283
      %v2542 = vunpack.c.l.b16 %v2284
      %v2543 = vunpack.c.l.b16 %v2285
      %v2544 = vunpack.c.l.b16 %v2286
      %v2545 = vunpack.c.l.b16 %v2287
      %v2546 = vunpack.c.l.b16 %v2288
      %v2547 = vunpack.c.l.b16 %v2289
      %v2548 = vunpack.c.l.b16 %v2290
      %v2549 = vunpack.c.l.b16 %v2291
      %v2550 = vunpack.c.l.b16 %v2292
      %v2551 = vunpack.c.l.b16 %v2293
      %v2552 = vunpack.c.l.b16 %v2294
      %v2553 = vunpack.c.l.b16 %v2295
      %v2554 = vunpack.c.l.b16 %v2296
      %v2555 = vunpack.c.l.b16 %v2297
      %v2556 = vunpack.c.l.b16 %v2298
      %v2557 = vunpack.c.l.b16 %v2299
      %v2558 = vunpack.c.l.b16 %v2300
      %v2559 = vunpack.c.l.b16 %v2301
      %v2560 = vunpack.c.l.b16 %v2302
      %v2561 = vunpack.c.l.b16 %v2303
      %v2562 = vunpack.c.l.b16 %v2304
      %v2563 = vunpack.c.l.b16 %v2305
      %v2564 = vunpack.c.l.b16 %v2306
      %v2565 = vunpack.c.l.b16 %v2307
      %v2566 = vunpack.c.l.b16 %v2308
      %v2567 = vunpack.c.l.b16 %v2309
      %v2568 = vunpack.c.l.b16 %v2310
      %v2569 = vunpack.c.l.b16 %v2311
      %v2570 = vunpack.c.l.b16 %v2312
      %v2571 = vunpack.c.l.b16 %v2313
      %v2572 = vunpack.c.l.b16 %v2314
      %v2573 = vunpack.c.l.b16 %v2315
      %v2574 = vunpack.c.l.b16 %v2316
      %v2575 = vunpack.c.l.b16 %v2317
      %v2576 = vunpack.c.l.b16 %v2318
      %v2577 = vunpack.c.l.b16 %v2319
      %v2578 = vunpack.c.l.b16 %v2320
      %v2579 = vunpack.c.l.b16 %v2321
      %v2580 = vunpack.c.l.b16 %v2322
      %v2581 = vunpack.c.l.b16 %v2323
      %v2582 = vunpack.c.l.b16 %v2324
      %v2583 = vunpack.c.l.b16 %v2325
      %v2584 = vunpack.c.l.b16 %v2326
      %v2585 = vunpack.c.l.b16 %v2327
      %v2586 = vunpack.c.l.b16 %v2328
      %v2587 = vunpack.c.l.b16 %v2329
      %v2588 = vunpack.c.l.b16 %v2330
      %v2589 = vunpack.c.l.b16 %v2331
      %v2590 = vunpack.c.l.b16 %v2332
      %v2591 = vunpack.c.l.b16 %v2333
      %v2592 = vunpack.c.l.b16 %v2334
      %v2593 = vunpack.c.l.b16 %v2335
      %v2594 = vunpack.c.l.b16 %v2336
      %v2595 = vunpack.c.l.b16 %v2337
      %v2596 = vunpack.c.l.b16 %v2338
      %v2597 = vunpack.c.l.b16 %v2339
      %v2598 = vunpack.c.l.b16 %v2340
      %v2599 = vunpack.c.l.b16 %v2341
      %v2600 = vunpack.c.l.b16 %v2342
      %v2601 = vunpack.c.l.b16 %v2343
      %v2602 = vunpack.c.l.b16 %v2344
      %v2603 = vunpack.c.l.b16 %v2345
      %v2604 = vunpack.c.l.b16 %v2346
      %v2605 = vunpack.c.l.b16 %v2347
      %v2606 = vunpack.c.l.b16 %v2348
      %v2607 = vunpack.c.l.b16 %v2349
      %v2608 = vunpack.c.l.b16 %v2350
      %v2609 = vunpack.c.l.b16 %v2351
      %v2610 = vunpack.c.l.b16 %v2352
      %v2611 = vunpack.c.l.b16 %v2353
      %v2612 = vunpack.c.l.b16 %v2354
      %v2613 = vunpack.c.l.b16 %v2355
      %v2614 = vunpack.c.l.b16 %v2356
      %v2615 = vunpack.c.l.b16 %v2357
      %v2616 = vunpack.c.l.b16 %v2358
      %v2617 = vunpack.c.l.b16 %v2359
      %v2618 = vunpack.c.l.b16 %v2360
      %v2619 = vunpack.c.l.b16 %v2361
      %v2620 = vunpack.c.l.b16 %v2362
      %v2621 = vunpack.c.l.b16 %v2363
      %v2622 = vunpack.c.l.b16 %v2364
      %v2623 = vunpack.c.l.b16 %v2365
      %v2624 = vunpack.c.l.b16 %v2366
      %v2625 = vunpack.c.l.b16 %v2367
      %v2626 = vunpack.c.l.b16 %v2368
      %v2627 = vunpack.c.l.b16 %v2369
      %v2628 = vunpack.c.l.b16 %v2370
      %v2629 = vunpack.c.l.b16 %v2371
      %v2630 = vunpack.c.l.b16 %v2372
      %v2631 = vunpack.c.l.b16 %v2373
      %v2632 = vunpack.c.l.b16 %v2374
      %v2633 = vunpack.c.l.b16 %v2375
      %v2634 = vunpack.c.l.b16 %v2376
      %v2635 = vunpack.c.l.b16 %v2377
      %v2636 = vunpack.c.l.b16 %v2378
      %v2637 = vunpack.c.l.b16 %v2379
      %v2638 = vunpack.c.l.b16 %v2380
      %v2639 = vunpack.c.l.b16 %v2381
      %v2640 = vunpack.c.l.b16 %v2382
      %v2641 = vunpack.c.l.b16 %v2383
      %v2642 = vunpack.c.l.b16 %v2384
      %v2643 = vunpack.c.l.b16 %v2385
      %v2644 = vunpack.c.l.b16 %v2386
      %v2645 = vunpack.c.l.b16 %v2387
      %v2646 = vunpack.c.l.b16 %v2388
      %v2647 = vunpack.c.l.b16 %v2389
      %v2648 = vunpack.c.l.b16 %v2390
      %v2649 = vunpack.c.l.b16 %v2391
      %v2650 = vunpack.c.l.b16 %v2392
      %v2651 = vunpack.c.l.b16 %v2393
      %v2652 = vunpack.c.l.b16 %v2394
      %v2653 = vunpack.c.l.b16 %v2395
      %v2654 = vunpack.c.l.b16 %v2396
      %v2655 = vunpack.c.l.b16 %v2397
      %v2656 = vunpack.c.l.b16 %v2398
      %v2657 = vunpack.c.l.b16 %v2399
      %v2658 = vunpack.c.l.b16 %v2400
      %v2659 = vpack.c.b16 %v2532, %v2531
      %v2660 = vpack.c.b16 %v2534, %v2533
      %v2661 = vpack.c.b16 %v2536, %v2535
      %v2662 = vpack.c.b16 %v2538, %v2537
      %v2663 = vpack.c.b16 %v2540, %v2539
      %v2664 = vpack.c.b16 %v2542, %v2541
      %v2665 = vpack.c.b16 %v2544, %v2543
      %v2666 = vpack.c.b16 %v2546, %v2545
      %v2667 = vpack.c.b16 %v2548, %v2547
      %v2668 = vpack.c.b16 %v2550, %v2549
      %v2669 = vpack.c.b16 %v2552, %v2551
      %v2670 = vpack.c.b16 %v2554, %v2553
      %v2671 = vpack.c.b16 %v2556, %v2555
      %v2672 = vpack.c.b16 %v2558, %v2557
      %v2673 = vpack.c.b16 %v2560, %v2559
      %v2674 = vpack.c.b16 %v2562, %v2561
      %v2675 = vpack.c.b16 %v2564, %v2563
      %v2676 = vpack.c.b16 %v2566, %v2565
      %v2677 = vpack.c.b16 %v2568, %v2567
      %v2678 = vpack.c.b16 %v2570, %v2569
      %v2679 = vpack.c.b16 %v2572, %v2571
      %v2680 = vpack.c.b16 %v2574, %v2573
      %v2681 = vpack.c.b16 %v2576, %v2575
      %v2682 = vpack.c.b16 %v2578, %v2577
      %v2683 = vpack.c.b16 %v2580, %v2579
      %v2684 = vpack.c.b16 %v2582, %v2581
      %v2685 = vpack.c.b16 %v2584, %v2583
      %v2686 = vpack.c.b16 %v2586, %v2585
      %v2687 = vpack.c.b16 %v2588, %v2587
      %v2688 = vpack.c.b16 %v2590, %v2589
      %v2689 = vpack.c.b16 %v2592, %v2591
      %v2690 = vpack.c.b16 %v2594, %v2593
      %v2691 = vpack.c.b16 %v2596, %v2595
      %v2692 = vpack.c.b16 %v2598, %v2597
      %v2693 = vpack.c.b16 %v2600, %v2599
      %v2694 = vpack.c.b16 %v2602, %v2601
      %v2695 = vpack.c.b16 %v2604, %v2603
      %v2696 = vpack.c.b16 %v2606, %v2605
      %v2697 = vpack.c.b16 %v2608, %v2607
      %v2698 = vpack.c.b16 %v2610, %v2609
      %v2699 = vpack.c.b16 %v2612, %v2611
      %v2700 = vpack.c.b16 %v2614, %v2613
      %v2701 = vpack.c.b16 %v2616, %v2615
      %v2702 = vpack.c.b16 %v2618, %v2617
      %v2703 = vpack.c.b16 %v2620, %v2619
      %v2704 = vpack.c.b16 %v2622, %v2621
      %v2705 = vpack.c.b16 %v2624, %v2623
      %v2706 = vpack.c.b16 %v2626, %v2625
      %v2707 = vpack.c.b16 %v2628, %v2627
      %v2708 = vpack.c.b16 %v2630, %v2629
      %v2709 = vpack.c.b16 %v2632, %v2631
      %v2710 = vpack.c.b16 %v2634, %v2633
      %v2711 = vpack.c.b16 %v2636, %v2635
      %v2712 = vpack.c.b16 %v2638, %v2637
      %v2713 = vpack.c.b16 %v2640, %v2639
      %v2714 = vpack.c.b16 %v2642, %v2641
      %v2715 = vpack.c.b16 %v2644, %v2643
      %v2716 = vpack.c.b16 %v2646, %v2645
      %v2717 = vpack.c.b16 %v2648, %v2647
      %v2718 = vpack.c.b16 %v2650, %v2649
      %v2719 = vpack.c.b16 %v2652, %v2651
      %v2720 = vpack.c.b16 %v2654, %v2653
      %v2721 = vpack.c.b16 %v2656, %v2655
      %v2722 = vpack.c.b16 %v2658, %v2657
      %v2724 = vsel %vm967, %v2659, 0
      %v2727 = vsel %vm967, %v2660, 0
      %v2730 = vsel %vm967, %v2661, 0
      %v2733 = vsel %vm967, %v2662, 0
      %v2736 = vsel %vm967, %v2663, 0
      %v2739 = vsel %vm967, %v2664, 0
      %v2742 = vsel %vm967, %v2665, 0
      %v2745 = vsel %vm967, %v2666, 0
      %v2748 = vsel %vm967, %v2667, 0
      %v2751 = vsel %vm967, %v2668, 0
      %v2754 = vsel %vm967, %v2669, 0
      %v2757 = vsel %vm967, %v2670, 0
      %v2760 = vsel %vm967, %v2671, 0
      %v2763 = vsel %vm967, %v2672, 0
      %v2766 = vsel %vm967, %v2673, 0
      %v2769 = vsel %vm967, %v2674, 0
      %v2772 = vsel %vm967, %v2675, 0
      %v2775 = vsel %vm967, %v2676, 0
      %v2778 = vsel %vm967, %v2677, 0
      %v2781 = vsel %vm967, %v2678, 0
      %v2784 = vsel %vm967, %v2679, 0
      %v2787 = vsel %vm967, %v2680, 0
      %v2790 = vsel %vm967, %v2681, 0
      %v2793 = vsel %vm967, %v2682, 0
      %v2796 = vsel %vm967, %v2683, 0
      %v2799 = vsel %vm967, %v2684, 0
      %v2802 = vsel %vm967, %v2685, 0
      %v2805 = vsel %vm967, %v2686, 0
      %v2808 = vsel %vm967, %v2687, 0
      %v2811 = vsel %vm967, %v2688, 0
      %v2814 = vsel %vm967, %v2689, 0
      %v2817 = vsel %vm967, %v2690, 0
      %v2820 = vsel %vm967, %v2691, 0
      %v2823 = vsel %vm967, %v2692, 0
      %v2826 = vsel %vm967, %v2693, 0
      %v2829 = vsel %vm967, %v2694, 0
      %v2832 = vsel %vm967, %v2695, 0
      %v2835 = vsel %vm967, %v2696, 0
      %v2838 = vsel %vm967, %v2697, 0
      %v2841 = vsel %vm967, %v2698, 0
      %v2844 = vsel %vm967, %v2699, 0
      %v2847 = vsel %vm967, %v2700, 0
      %v2850 = vsel %vm967, %v2701, 0
      %v2853 = vsel %vm967, %v2702, 0
      %v2856 = vsel %vm967, %v2703, 0
      %v2859 = vsel %vm967, %v2704, 0
      %v2862 = vsel %vm967, %v2705, 0
      %v2865 = vsel %vm967, %v2706, 0
      %v2868 = vsel %vm967, %v2707, 0
      %v2871 = vsel %vm967, %v2708, 0
      %v2874 = vsel %vm967, %v2709, 0
      %v2877 = vsel %vm967, %v2710, 0
      %v2880 = vsel %vm967, %v2711, 0
      %v2883 = vsel %vm967, %v2712, 0
      %v2886 = vsel %vm967, %v2713, 0
      %v2889 = vsel %vm967, %v2714, 0
      %v2892 = vsel %vm967, %v2715, 0
      %v2895 = vsel %vm967, %v2716, 0
      %v2898 = vsel %vm967, %v2717, 0
      %v2901 = vsel %vm967, %v2718, 0
      %v2904 = vsel %vm967, %v2719, 0
      %v2907 = vsel %vm967, %v2720, 0
      %v2910 = vsel %vm967, %v2721, 0
      %v2913 = vsel %vm967, %v2722, 0
      %v2916 = vsel %vm1160, %v2402, 0
      %2918 = vmatprep.subr.bf16.mxu0 0
      %2919 = vmatpush1.bf16.msra.mxu0 %v2916
      %2920 = vmatprep.subr.bf16.mxu0 0
      %2921 = vmatpush1.bf16.msra.mxu0 0
      %2922 = vmatprep.subr.bf16.mxu0 0
      %2923 = vmatpush1.bf16.msra.mxu0 0
      %2924 = vmatprep.subr.bf16.mxu0 0
      %2925 = vmatpush1.bf16.msra.mxu0 0
      %2926 = vmatprep.subr.bf16.mxu0 0
      %2927 = vmatpush1.bf16.msra.mxu0 0
      %2928 = vmatprep.subr.bf16.mxu0 0
      %2929 = vmatpush1.bf16.msra.mxu0 0
      %2930 = vmatprep.subr.bf16.mxu0 0
      %2931 = vmatpush1.bf16.msra.mxu0 0
      %2932 = vmatprep.subr.bf16.mxu0 0
      %2933 = vmatpush1.bf16.msra.mxu0 0
      %2934 = vmatprep.subr.bf16.mxu0 0
      %2935 = vmatpush1.bf16.msra.mxu0 0
      %2936 = vmatprep.subr.bf16.mxu0 0
      %2937 = vmatpush1.bf16.msra.mxu0 0
      %2938 = vmatprep.subr.bf16.mxu0 0
      %2939 = vmatpush1.bf16.msra.mxu0 0
      %2940 = vmatprep.subr.bf16.mxu0 0
      %2941 = vmatpush1.bf16.msra.mxu0 0
      %2942 = vmatprep.subr.bf16.mxu0 0
      %2943 = vmatpush1.bf16.msra.mxu0 0
      %2944 = vmatprep.subr.bf16.mxu0 0
      %2945 = vmatpush1.bf16.msra.mxu0 0
      %2946 = vmatprep.subr.bf16.mxu0 0
      %2947 = vmatpush1.bf16.msra.mxu0 0
      %2948 = vmatprep.subr.bf16.mxu0 0
      %2949 = vmatpush1.bf16.msra.mxu0 0
      %2950 = vmatprep.mubr.bf16.mxu0 0
      %2951 = vmatmul.mubr.bf16.gmra.mrb[0].mxu0 %v2724
      %v2952 = vpop.f32.mrb[0].mxu0
      %v2953 = vadd.f32 0.0, %v2952
      %v2954 = vpop.f32.mrb[0].mxu0
      %v2955 = vpop.f32.mrb[0].mxu0
      %v2956 = vadd.f32 0.0, %v2955
      %v2957 = vpop.f32.mrb[0].mxu0
      %2958 = vmatprep.mubr.bf16.mxu0 0
      %2959 = vmatmul.mubr.bf16.gmra.mrb[0].mxu0 %v2727
      %v2960 = vpop.f32.mrb[0].mxu0
      %v2961 = vadd.f32 0.0, %v2960
      %v2962 = vpop.f32.mrb[0].mxu0
      %v2963 = vpop.f32.mrb[0].mxu0
      %v2964 = vadd.f32 0.0, %v2963
      %v2965 = vpop.f32.mrb[0].mxu0
      %2966 = vmatprep.mubr.bf16.mxu0 0
      %2967 = vmatmul.mubr.bf16.gmra.mrb[0].mxu0 %v2730
      %v2968 = vpop.f32.mrb[0].mxu0
      %v2969 = vadd.f32 0.0, %v2968
      %v2970 = vpop.f32.mrb[0].mxu0
      %v2971 = vpop.f32.mrb[0].mxu0
      %v2972 = vadd.f32 0.0, %v2971
      %v2973 = vpop.f32.mrb[0].mxu0
      %2974 = vmatprep.mubr.bf16.mxu0 0
      %2975 = vmatmul.mubr.bf16.gmra.mrb[0].mxu0 %v2733
      %v2976 = vpop.f32.mrb[0].mxu0
      %v2977 = vadd.f32 0.0, %v2976
      %v2978 = vpop.f32.mrb[0].mxu0
      %v2979 = vpop.f32.mrb[0].mxu0
      %v2980 = vadd.f32 0.0, %v2979
      %v2981 = vpop.f32.mrb[0].mxu0
      %2982 = vmatprep.mubr.bf16.mxu0 0
      %2983 = vmatmul.mubr.bf16.gmra.mrb[0].mxu0 %v2736
      %v2984 = vpop.f32.mrb[0].mxu0
      %v2985 = vadd.f32 0.0, %v2984
      %v2986 = vpop.f32.mrb[0].mxu0
      %v2987 = vpop.f32.mrb[0].mxu0
      %v2988 = vadd.f32 0.0, %v2987
      %v2989 = vpop.f32.mrb[0].mxu0
      %2990 = vmatprep.mubr.bf16.mxu0 0
      %2991 = vmatmul.mubr.bf16.gmra.mrb[0].mxu0 %v2739
      %v2992 = vpop.f32.mrb[0].mxu0
      %v2993 = vadd.f32 0.0, %v2992
      %v2994 = vpop.f32.mrb[0].mxu0
      %v2995 = vpop.f32.mrb[0].mxu0
      %v2996 = vadd.f32 0.0, %v2995
      %v2997 = vpop.f32.mrb[0].mxu0
      %2998 = vmatprep.mubr.bf16.mxu0 0
      %2999 = vmatmul.mubr.bf16.gmra.mrb[0].mxu0 %v2742
      %v3000 = vpop.f32.mrb[0].mxu0
      %v3001 = vadd.f32 0.0, %v3000
      %v3002 = vpop.f32.mrb[0].mxu0
      %v3003 = vpop.f32.mrb[0].mxu0
      %v3004 = vadd.f32 0.0, %v3003
      %v3005 = vpop.f32.mrb[0].mxu0
      %3006 = vmatprep.mubr.bf16.mxu0 0
      %3007 = vmatmul.mubr.bf16.gmra.mrb[0].mxu0 %v2745
      %v3008 = vpop.f32.mrb[0].mxu0
      %v3009 = vadd.f32 0.0, %v3008
      %v3010 = vpop.f32.mrb[0].mxu0
      %v3011 = vpop.f32.mrb[0].mxu0
      %v3012 = vadd.f32 0.0, %v3011
      %v3013 = vpop.f32.mrb[0].mxu0
      %3014 = vmatprep.mubr.bf16.mxu0 0
      %3015 = vmatmul.mubr.bf16.gmra.mrb[0].mxu0 %v2748
      %v3016 = vpop.f32.mrb[0].mxu0
      %v3017 = vadd.f32 0.0, %v3016
      %v3018 = vpop.f32.mrb[0].mxu0
      %v3019 = vpop.f32.mrb[0].mxu0
      %v3020 = vadd.f32 0.0, %v3019
      %v3021 = vpop.f32.mrb[0].mxu0
      %3022 = vmatprep.mubr.bf16.mxu0 0
      %3023 = vmatmul.mubr.bf16.gmra.mrb[0].mxu0 %v2751
      %v3024 = vpop.f32.mrb[0].mxu0
      %v3025 = vadd.f32 0.0, %v3024
      %v3026 = vpop.f32.mrb[0].mxu0
      %v3027 = vpop.f32.mrb[0].mxu0
      %v3028 = vadd.f32 0.0, %v3027
      %v3029 = vpop.f32.mrb[0].mxu0
      %3030 = vmatprep.mubr.bf16.mxu0 0
      %3031 = vmatmul.mubr.bf16.gmra.mrb[0].mxu0 %v2754
      %v3032 = vpop.f32.mrb[0].mxu0
      %v3033 = vadd.f32 0.0, %v3032
      %v3034 = vpop.f32.mrb[0].mxu0
      %v3035 = vpop.f32.mrb[0].mxu0
      %v3036 = vadd.f32 0.0, %v3035
      %v3037 = vpop.f32.mrb[0].mxu0
      %3038 = vmatprep.mubr.bf16.mxu0 0
      %3039 = vmatmul.mubr.bf16.gmra.mrb[0].mxu0 %v2757
      %v3040 = vpop.f32.mrb[0].mxu0
      %v3041 = vadd.f32 0.0, %v3040
      %v3042 = vpop.f32.mrb[0].mxu0
      %v3043 = vpop.f32.mrb[0].mxu0
      %v3044 = vadd.f32 0.0, %v3043
      %v3045 = vpop.f32.mrb[0].mxu0
      %3046 = vmatprep.mubr.bf16.mxu0 0
      %3047 = vmatmul.mubr.bf16.gmra.mrb[0].mxu0 %v2760
      %v3048 = vpop.f32.mrb[0].mxu0
      %v3049 = vadd.f32 0.0, %v3048
      %v3050 = vpop.f32.mrb[0].mxu0
      %v3051 = vpop.f32.mrb[0].mxu0
      %v3052 = vadd.f32 0.0, %v3051
      %v3053 = vpop.f32.mrb[0].mxu0
      %3054 = vmatprep.mubr.bf16.mxu0 0
      %3055 = vmatmul.mubr.bf16.gmra.mrb[0].mxu0 %v2763
      %v3056 = vpop.f32.mrb[0].mxu0
      %v3057 = vadd.f32 0.0, %v3056
      %v3058 = vpop.f32.mrb[0].mxu0
      %v3059 = vpop.f32.mrb[0].mxu0
      %v3060 = vadd.f32 0.0, %v3059
      %v3061 = vpop.f32.mrb[0].mxu0
      %3062 = vmatprep.mubr.bf16.mxu0 0
      %3063 = vmatmul.mubr.bf16.gmra.mrb[0].mxu0 %v2766
      %v3064 = vpop.f32.mrb[0].mxu0
      %v3065 = vadd.f32 0.0, %v3064
      %v3066 = vpop.f32.mrb[0].mxu0
      %v3067 = vpop.f32.mrb[0].mxu0
      %v3068 = vadd.f32 0.0, %v3067
      %v3069 = vpop.f32.mrb[0].mxu0
      %3070 = vmatprep.mubr.bf16.mxu0 0
      %3071 = vmatmul.mubr.bf16.gmra.mrb[0].mxu0 %v2769
      %v3072 = vpop.f32.mrb[0].mxu0
      %v3073 = vadd.f32 0.0, %v3072
      %v3074 = vpop.f32.mrb[0].mxu0
      %v3075 = vpop.f32.mrb[0].mxu0
      %v3076 = vadd.f32 0.0, %v3075
      %v3077 = vpop.f32.mrb[0].mxu0
      %3078 = vmatprep.mubr.bf16.mxu0 0
      %3079 = vmatmul.mubr.bf16.gmra.mrb[0].mxu0 %v2772
      %v3080 = vpop.f32.mrb[0].mxu0
      %v3081 = vadd.f32 0.0, %v3080
      %v3082 = vpop.f32.mrb[0].mxu0
      %v3083 = vpop.f32.mrb[0].mxu0
      %v3084 = vadd.f32 0.0, %v3083
      %v3085 = vpop.f32.mrb[0].mxu0
      %3086 = vmatprep.mubr.bf16.mxu0 0
      %3087 = vmatmul.mubr.bf16.gmra.mrb[0].mxu0 %v2775
      %v3088 = vpop.f32.mrb[0].mxu0
      %v3089 = vadd.f32 0.0, %v3088
      %v3090 = vpop.f32.mrb[0].mxu0
      %v3091 = vpop.f32.mrb[0].mxu0
      %v3092 = vadd.f32 0.0, %v3091
      %v3093 = vpop.f32.mrb[0].mxu0
      %3094 = vmatprep.mubr.bf16.mxu0 0
      %3095 = vmatmul.mubr.bf16.gmra.mrb[0].mxu0 %v2778
      %v3096 = vpop.f32.mrb[0].mxu0
      %v3097 = vadd.f32 0.0, %v3096
      %v3098 = vpop.f32.mrb[0].mxu0
      %v3099 = vpop.f32.mrb[0].mxu0
      %v3100 = vadd.f32 0.0, %v3099
      %v3101 = vpop.f32.mrb[0].mxu0
      %3102 = vmatprep.mubr.bf16.mxu0 0
      %3103 = vmatmul.mubr.bf16.gmra.mrb[0].mxu0 %v2781
      %v3104 = vpop.f32.mrb[0].mxu0
      %v3105 = vadd.f32 0.0, %v3104
      %v3106 = vpop.f32.mrb[0].mxu0
      %v3107 = vpop.f32.mrb[0].mxu0
      %v3108 = vadd.f32 0.0, %v3107
      %v3109 = vpop.f32.mrb[0].mxu0
      %3110 = vmatprep.mubr.bf16.mxu0 0
      %3111 = vmatmul.mubr.bf16.gmra.mrb[0].mxu0 %v2784
      %v3112 = vpop.f32.mrb[0].mxu0
      %v3113 = vadd.f32 0.0, %v3112
      %v3114 = vpop.f32.mrb[0].mxu0
      %v3115 = vpop.f32.mrb[0].mxu0
      %v3116 = vadd.f32 0.0, %v3115
      %v3117 = vpop.f32.mrb[0].mxu0
      %3118 = vmatprep.mubr.bf16.mxu0 0
      %3119 = vmatmul.mubr.bf16.gmra.mrb[0].mxu0 %v2787
      %v3120 = vpop.f32.mrb[0].mxu0
      %v3121 = vadd.f32 0.0, %v3120
      %v3122 = vpop.f32.mrb[0].mxu0
      %v3123 = vpop.f32.mrb[0].mxu0
      %v3124 = vadd.f32 0.0, %v3123
      %v3125 = vpop.f32.mrb[0].mxu0
      %3126 = vmatprep.mubr.bf16.mxu0 0
      %3127 = vmatmul.mubr.bf16.gmra.mrb[0].mxu0 %v2790
      %v3128 = vpop.f32.mrb[0].mxu0
      %v3129 = vadd.f32 0.0, %v3128
      %v3130 = vpop.f32.mrb[0].mxu0
      %v3131 = vpop.f32.mrb[0].mxu0
      %v3132 = vadd.f32 0.0, %v3131
      %v3133 = vpop.f32.mrb[0].mxu0
      %3134 = vmatprep.mubr.bf16.mxu0 0
      %3135 = vmatmul.mubr.bf16.gmra.mrb[0].mxu0 %v2793
      %v3136 = vpop.f32.mrb[0].mxu0
      %v3137 = vadd.f32 0.0, %v3136
      %v3138 = vpop.f32.mrb[0].mxu0
      %v3139 = vpop.f32.mrb[0].mxu0
      %v3140 = vadd.f32 0.0, %v3139
      %v3141 = vpop.f32.mrb[0].mxu0
      %3142 = vmatprep.mubr.bf16.mxu0 0
      %3143 = vmatmul.mubr.bf16.gmra.mrb[0].mxu0 %v2796
      %v3144 = vpop.f32.mrb[0].mxu0
      %v3145 = vadd.f32 0.0, %v3144
      %v3146 = vpop.f32.mrb[0].mxu0
      %v3147 = vpop.f32.mrb[0].mxu0
      %v3148 = vadd.f32 0.0, %v3147
      %v3149 = vpop.f32.mrb[0].mxu0
      %3150 = vmatprep.mubr.bf16.mxu0 0
      %3151 = vmatmul.mubr.bf16.gmra.mrb[0].mxu0 %v2799
      %v3152 = vpop.f32.mrb[0].mxu0
      %v3153 = vadd.f32 0.0, %v3152
      %v3154 = vpop.f32.mrb[0].mxu0
      %v3155 = vpop.f32.mrb[0].mxu0
      %v3156 = vadd.f32 0.0, %v3155
      %v3157 = vpop.f32.mrb[0].mxu0
      %3158 = vmatprep.mubr.bf16.mxu0 0
      %3159 = vmatmul.mubr.bf16.gmra.mrb[0].mxu0 %v2802
      %v3160 = vpop.f32.mrb[0].mxu0
      %v3161 = vadd.f32 0.0, %v3160
      %v3162 = vpop.f32.mrb[0].mxu0
      %v3163 = vpop.f32.mrb[0].mxu0
      %v3164 = vadd.f32 0.0, %v3163
      %v3165 = vpop.f32.mrb[0].mxu0
      %3166 = vmatprep.mubr.bf16.mxu0 0
      %3167 = vmatmul.mubr.bf16.gmra.mrb[0].mxu0 %v2805
      %v3168 = vpop.f32.mrb[0].mxu0
      %v3169 = vadd.f32 0.0, %v3168
      %v3170 = vpop.f32.mrb[0].mxu0
      %v3171 = vpop.f32.mrb[0].mxu0
      %v3172 = vadd.f32 0.0, %v3171
      %v3173 = vpop.f32.mrb[0].mxu0
      %3174 = vmatprep.mubr.bf16.mxu0 0
      %3175 = vmatmul.mubr.bf16.gmra.mrb[0].mxu0 %v2808
      %v3176 = vpop.f32.mrb[0].mxu0
      %v3177 = vadd.f32 0.0, %v3176
      %v3178 = vpop.f32.mrb[0].mxu0
      %v3179 = vpop.f32.mrb[0].mxu0
      %v3180 = vadd.f32 0.0, %v3179
      %v3181 = vpop.f32.mrb[0].mxu0
      %3182 = vmatprep.mubr.bf16.mxu0 0
      %3183 = vmatmul.mubr.bf16.gmra.mrb[0].mxu0 %v2811
      %v3184 = vpop.f32.mrb[0].mxu0
      %v3185 = vadd.f32 0.0, %v3184
      %v3186 = vpop.f32.mrb[0].mxu0
      %v3187 = vpop.f32.mrb[0].mxu0
      %v3188 = vadd.f32 0.0, %v3187
      %v3189 = vpop.f32.mrb[0].mxu0
      %3190 = vmatprep.mubr.bf16.mxu0 0
      %3191 = vmatmul.mubr.bf16.gmra.mrb[0].mxu0 %v2814
      %v3192 = vpop.f32.mrb[0].mxu0
      %v3193 = vadd.f32 0.0, %v3192
      %v3194 = vpop.f32.mrb[0].mxu0
      %v3195 = vpop.f32.mrb[0].mxu0
      %v3196 = vadd.f32 0.0, %v3195
      %v3197 = vpop.f32.mrb[0].mxu0
      %3198 = vmatprep.mubr.bf16.mxu0 0
      %3199 = vmatmul.mubr.bf16.gmra.mrb[0].mxu0 %v2817
      %v3200 = vpop.f32.mrb[0].mxu0
      %v3201 = vadd.f32 0.0, %v3200
      %v3202 = vpop.f32.mrb[0].mxu0
      %v3203 = vpop.f32.mrb[0].mxu0
      %v3204 = vadd.f32 0.0, %v3203
      %v3205 = vpop.f32.mrb[0].mxu0
      %3206 = vmatprep.mubr.bf16.mxu0 0
      %3207 = vmatmul.mubr.bf16.gmra.mrb[0].mxu0 %v2820
      %v3208 = vpop.f32.mrb[0].mxu0
      %v3209 = vadd.f32 0.0, %v3208
      %v3210 = vpop.f32.mrb[0].mxu0
      %v3211 = vpop.f32.mrb[0].mxu0
      %v3212 = vadd.f32 0.0, %v3211
      %v3213 = vpop.f32.mrb[0].mxu0
      %3214 = vmatprep.mubr.bf16.mxu0 0
      %3215 = vmatmul.mubr.bf16.gmra.mrb[0].mxu0 %v2823
      %v3216 = vpop.f32.mrb[0].mxu0
      %v3217 = vadd.f32 0.0, %v3216
      %v3218 = vpop.f32.mrb[0].mxu0
      %v3219 = vpop.f32.mrb[0].mxu0
      %v3220 = vadd.f32 0.0, %v3219
      %v3221 = vpop.f32.mrb[0].mxu0
      %3222 = vmatprep.mubr.bf16.mxu0 0
      %3223 = vmatmul.mubr.bf16.gmra.mrb[0].mxu0 %v2826
      %v3224 = vpop.f32.mrb[0].mxu0
      %v3225 = vadd.f32 0.0, %v3224
      %v3226 = vpop.f32.mrb[0].mxu0
      %v3227 = vpop.f32.mrb[0].mxu0
      %v3228 = vadd.f32 0.0, %v3227
      %v3229 = vpop.f32.mrb[0].mxu0
      %3230 = vmatprep.mubr.bf16.mxu0 0
      %3231 = vmatmul.mubr.bf16.gmra.mrb[0].mxu0 %v2829
      %v3232 = vpop.f32.mrb[0].mxu0
      %v3233 = vadd.f32 0.0, %v3232
      %v3234 = vpop.f32.mrb[0].mxu0
      %v3235 = vpop.f32.mrb[0].mxu0
      %v3236 = vadd.f32 0.0, %v3235
      %v3237 = vpop.f32.mrb[0].mxu0
      %3238 = vmatprep.mubr.bf16.mxu0 0
      %3239 = vmatmul.mubr.bf16.gmra.mrb[0].mxu0 %v2832
      %v3240 = vpop.f32.mrb[0].mxu0
      %v3241 = vadd.f32 0.0, %v3240
      %v3242 = vpop.f32.mrb[0].mxu0
      %v3243 = vpop.f32.mrb[0].mxu0
      %v3244 = vadd.f32 0.0, %v3243
      %v3245 = vpop.f32.mrb[0].mxu0
      %3246 = vmatprep.mubr.bf16.mxu0 0
      %3247 = vmatmul.mubr.bf16.gmra.mrb[0].mxu0 %v2835
      %v3248 = vpop.f32.mrb[0].mxu0
      %v3249 = vadd.f32 0.0, %v3248
      %v3250 = vpop.f32.mrb[0].mxu0
      %v3251 = vpop.f32.mrb[0].mxu0
      %v3252 = vadd.f32 0.0, %v3251
      %v3253 = vpop.f32.mrb[0].mxu0
      %3254 = vmatprep.mubr.bf16.mxu0 0
      %3255 = vmatmul.mubr.bf16.gmra.mrb[0].mxu0 %v2838
      %v3256 = vpop.f32.mrb[0].mxu0
      %v3257 = vadd.f32 0.0, %v3256
      %v3258 = vpop.f32.mrb[0].mxu0
      %v3259 = vpop.f32.mrb[0].mxu0
      %v3260 = vadd.f32 0.0, %v3259
      %v3261 = vpop.f32.mrb[0].mxu0
      %3262 = vmatprep.mubr.bf16.mxu0 0
      %3263 = vmatmul.mubr.bf16.gmra.mrb[0].mxu0 %v2841
      %v3264 = vpop.f32.mrb[0].mxu0
      %v3265 = vadd.f32 0.0, %v3264
      %v3266 = vpop.f32.mrb[0].mxu0
      %v3267 = vpop.f32.mrb[0].mxu0
      %v3268 = vadd.f32 0.0, %v3267
      %v3269 = vpop.f32.mrb[0].mxu0
      %3270 = vmatprep.mubr.bf16.mxu0 0
      %3271 = vmatmul.mubr.bf16.gmra.mrb[0].mxu0 %v2844
      %v3272 = vpop.f32.mrb[0].mxu0
      %v3273 = vadd.f32 0.0, %v3272
      %v3274 = vpop.f32.mrb[0].mxu0
      %v3275 = vpop.f32.mrb[0].mxu0
      %v3276 = vadd.f32 0.0, %v3275
      %v3277 = vpop.f32.mrb[0].mxu0
      %3278 = vmatprep.mubr.bf16.mxu0 0
      %3279 = vmatmul.mubr.bf16.gmra.mrb[0].mxu0 %v2847
      %v3280 = vpop.f32.mrb[0].mxu0
      %v3281 = vadd.f32 0.0, %v3280
      %v3282 = vpop.f32.mrb[0].mxu0
      %v3283 = vpop.f32.mrb[0].mxu0
      %v3284 = vadd.f32 0.0, %v3283
      %v3285 = vpop.f32.mrb[0].mxu0
      %3286 = vmatprep.mubr.bf16.mxu0 0
      %3287 = vmatmul.mubr.bf16.gmra.mrb[0].mxu0 %v2850
      %v3288 = vpop.f32.mrb[0].mxu0
      %v3289 = vadd.f32 0.0, %v3288
      %v3290 = vpop.f32.mrb[0].mxu0
      %v3291 = vpop.f32.mrb[0].mxu0
      %v3292 = vadd.f32 0.0, %v3291
      %v3293 = vpop.f32.mrb[0].mxu0
      %3294 = vmatprep.mubr.bf16.mxu0 0
      %3295 = vmatmul.mubr.bf16.gmra.mrb[0].mxu0 %v2853
      %v3296 = vpop.f32.mrb[0].mxu0
      %v3297 = vadd.f32 0.0, %v3296
      %v3298 = vpop.f32.mrb[0].mxu0
      %v3299 = vpop.f32.mrb[0].mxu0
      %v3300 = vadd.f32 0.0, %v3299
      %v3301 = vpop.f32.mrb[0].mxu0
      %3302 = vmatprep.mubr.bf16.mxu0 0
      %3303 = vmatmul.mubr.bf16.gmra.mrb[0].mxu0 %v2856
      %v3304 = vpop.f32.mrb[0].mxu0
      %v3305 = vadd.f32 0.0, %v3304
      %v3306 = vpop.f32.mrb[0].mxu0
      %v3307 = vpop.f32.mrb[0].mxu0
      %v3308 = vadd.f32 0.0, %v3307
      %v3309 = vpop.f32.mrb[0].mxu0
      %3310 = vmatprep.mubr.bf16.mxu0 0
      %3311 = vmatmul.mubr.bf16.gmra.mrb[0].mxu0 %v2859
      %v3312 = vpop.f32.mrb[0].mxu0
      %v3313 = vadd.f32 0.0, %v3312
      %v3314 = vpop.f32.mrb[0].mxu0
      %v3315 = vpop.f32.mrb[0].mxu0
      %v3316 = vadd.f32 0.0, %v3315
      %v3317 = vpop.f32.mrb[0].mxu0
      %3318 = vmatprep.mubr.bf16.mxu0 0
      %3319 = vmatmul.mubr.bf16.gmra.mrb[0].mxu0 %v2862
      %v3320 = vpop.f32.mrb[0].mxu0
      %v3321 = vadd.f32 0.0, %v3320
      %v3322 = vpop.f32.mrb[0].mxu0
      %v3323 = vpop.f32.mrb[0].mxu0
      %v3324 = vadd.f32 0.0, %v3323
      %v3325 = vpop.f32.mrb[0].mxu0
      %3326 = vmatprep.mubr.bf16.mxu0 0
      %3327 = vmatmul.mubr.bf16.gmra.mrb[0].mxu0 %v2865
      %v3328 = vpop.f32.mrb[0].mxu0
      %v3329 = vadd.f32 0.0, %v3328
      %v3330 = vpop.f32.mrb[0].mxu0
      %v3331 = vpop.f32.mrb[0].mxu0
      %v3332 = vadd.f32 0.0, %v3331
      %v3333 = vpop.f32.mrb[0].mxu0
      %3334 = vmatprep.mubr.bf16.mxu0 0
      %3335 = vmatmul.mubr.bf16.gmra.mrb[0].mxu0 %v2868
      %v3336 = vpop.f32.mrb[0].mxu0
      %v3337 = vadd.f32 0.0, %v3336
      %v3338 = vpop.f32.mrb[0].mxu0
      %v3339 = vpop.f32.mrb[0].mxu0
      %v3340 = vadd.f32 0.0, %v3339
      %v3341 = vpop.f32.mrb[0].mxu0
      %3342 = vmatprep.mubr.bf16.mxu0 0
      %3343 = vmatmul.mubr.bf16.gmra.mrb[0].mxu0 %v2871
      %v3344 = vpop.f32.mrb[0].mxu0
      %v3345 = vadd.f32 0.0, %v3344
      %v3346 = vpop.f32.mrb[0].mxu0
      %v3347 = vpop.f32.mrb[0].mxu0
      %v3348 = vadd.f32 0.0, %v3347
      %v3349 = vpop.f32.mrb[0].mxu0
      %3350 = vmatprep.mubr.bf16.mxu0 0
      %3351 = vmatmul.mubr.bf16.gmra.mrb[0].mxu0 %v2874
      %v3352 = vpop.f32.mrb[0].mxu0
      %v3353 = vadd.f32 0.0, %v3352
      %v3354 = vpop.f32.mrb[0].mxu0
      %v3355 = vpop.f32.mrb[0].mxu0
      %v3356 = vadd.f32 0.0, %v3355
      %v3357 = vpop.f32.mrb[0].mxu0
      %3358 = vmatprep.mubr.bf16.mxu0 0
      %3359 = vmatmul.mubr.bf16.gmra.mrb[0].mxu0 %v2877
      %v3360 = vpop.f32.mrb[0].mxu0
      %v3361 = vadd.f32 0.0, %v3360
      %v3362 = vpop.f32.mrb[0].mxu0
      %v3363 = vpop.f32.mrb[0].mxu0
      %v3364 = vadd.f32 0.0, %v3363
      %v3365 = vpop.f32.mrb[0].mxu0
      %3366 = vmatprep.mubr.bf16.mxu0 0
      %3367 = vmatmul.mubr.bf16.gmra.mrb[0].mxu0 %v2880
      %v3368 = vpop.f32.mrb[0].mxu0
      %v3369 = vadd.f32 0.0, %v3368
      %v3370 = vpop.f32.mrb[0].mxu0
      %v3371 = vpop.f32.mrb[0].mxu0
      %v3372 = vadd.f32 0.0, %v3371
      %v3373 = vpop.f32.mrb[0].mxu0
      %3374 = vmatprep.mubr.bf16.mxu0 0
      %3375 = vmatmul.mubr.bf16.gmra.mrb[0].mxu0 %v2883
      %v3376 = vpop.f32.mrb[0].mxu0
      %v3377 = vadd.f32 0.0, %v3376
      %v3378 = vpop.f32.mrb[0].mxu0
      %v3379 = vpop.f32.mrb[0].mxu0
      %v3380 = vadd.f32 0.0, %v3379
      %v3381 = vpop.f32.mrb[0].mxu0
      %3382 = vmatprep.mubr.bf16.mxu0 0
      %3383 = vmatmul.mubr.bf16.gmra.mrb[0].mxu0 %v2886
      %v3384 = vpop.f32.mrb[0].mxu0
      %v3385 = vadd.f32 0.0, %v3384
      %v3386 = vpop.f32.mrb[0].mxu0
      %v3387 = vpop.f32.mrb[0].mxu0
      %v3388 = vadd.f32 0.0, %v3387
      %v3389 = vpop.f32.mrb[0].mxu0
      %3390 = vmatprep.mubr.bf16.mxu0 0
      %3391 = vmatmul.mubr.bf16.gmra.mrb[0].mxu0 %v2889
      %v3392 = vpop.f32.mrb[0].mxu0
      %v3393 = vadd.f32 0.0, %v3392
      %v3394 = vpop.f32.mrb[0].mxu0
      %v3395 = vpop.f32.mrb[0].mxu0
      %v3396 = vadd.f32 0.0, %v3395
      %v3397 = vpop.f32.mrb[0].mxu0
      %3398 = vmatprep.mubr.bf16.mxu0 0
      %3399 = vmatmul.mubr.bf16.gmra.mrb[0].mxu0 %v2892
      %v3400 = vpop.f32.mrb[0].mxu0
      %v3401 = vadd.f32 0.0, %v3400
      %v3402 = vpop.f32.mrb[0].mxu0
      %v3403 = vpop.f32.mrb[0].mxu0
      %v3404 = vadd.f32 0.0, %v3403
      %v3405 = vpop.f32.mrb[0].mxu0
      %3406 = vmatprep.mubr.bf16.mxu0 0
      %3407 = vmatmul.mubr.bf16.gmra.mrb[0].mxu0 %v2895
      %v3408 = vpop.f32.mrb[0].mxu0
      %v3409 = vadd.f32 0.0, %v3408
      %v3410 = vpop.f32.mrb[0].mxu0
      %v3411 = vpop.f32.mrb[0].mxu0
      %v3412 = vadd.f32 0.0, %v3411
      %v3413 = vpop.f32.mrb[0].mxu0
      %3414 = vmatprep.mubr.bf16.mxu0 0
      %3415 = vmatmul.mubr.bf16.gmra.mrb[0].mxu0 %v2898
      %v3416 = vpop.f32.mrb[0].mxu0
      %v3417 = vadd.f32 0.0, %v3416
      %v3418 = vpop.f32.mrb[0].mxu0
      %v3419 = vpop.f32.mrb[0].mxu0
      %v3420 = vadd.f32 0.0, %v3419
      %v3421 = vpop.f32.mrb[0].mxu0
      %3422 = vmatprep.mubr.bf16.mxu0 0
      %3423 = vmatmul.mubr.bf16.gmra.mrb[0].mxu0 %v2901
      %v3424 = vpop.f32.mrb[0].mxu0
      %v3425 = vadd.f32 0.0, %v3424
      %v3426 = vpop.f32.mrb[0].mxu0
      %v3427 = vpop.f32.mrb[0].mxu0
      %v3428 = vadd.f32 0.0, %v3427
      %v3429 = vpop.f32.mrb[0].mxu0
      %3430 = vmatprep.mubr.bf16.mxu0 0
      %3431 = vmatmul.mubr.bf16.gmra.mrb[0].mxu0 %v2904
      %v3432 = vpop.f32.mrb[0].mxu0
      %v3433 = vadd.f32 0.0, %v3432
      %v3434 = vpop.f32.mrb[0].mxu0
      %v3435 = vpop.f32.mrb[0].mxu0
      %v3436 = vadd.f32 0.0, %v3435
      %v3437 = vpop.f32.mrb[0].mxu0
      %3438 = vmatprep.mubr.bf16.mxu0 0
      %3439 = vmatmul.mubr.bf16.gmra.mrb[0].mxu0 %v2907
      %v3440 = vpop.f32.mrb[0].mxu0
      %v3441 = vadd.f32 0.0, %v3440
      %v3442 = vpop.f32.mrb[0].mxu0
      %v3443 = vpop.f32.mrb[0].mxu0
      %v3444 = vadd.f32 0.0, %v3443
      %v3445 = vpop.f32.mrb[0].mxu0
      %3446 = vmatprep.mubr.bf16.mxu0 0
      %3447 = vmatmul.mubr.bf16.gmra.mrb[0].mxu0 %v2910
      %v3448 = vpop.f32.mrb[0].mxu0
      %v3449 = vadd.f32 0.0, %v3448
      %v3450 = vpop.f32.mrb[0].mxu0
      %v3451 = vpop.f32.mrb[0].mxu0
      %v3452 = vadd.f32 0.0, %v3451
      %v3453 = vpop.f32.mrb[0].mxu0
      %3454 = vmatprep.mubr.bf16.mxu0 0
      %3455 = vmatmul.mubr.bf16.gmra.mrb[0].mxu0 %v2913
      %v3456 = vpop.f32.mrb[0].mxu0
      %v3457 = vadd.f32 0.0, %v3456
      %v3458 = vpop.f32.mrb[0].mxu0
      %v3459 = vpop.f32.mrb[0].mxu0
      %v3460 = vadd.f32 0.0, %v3459
      %v3461 = vpop.f32.mrb[0].mxu0
      %3462 = vdwg.mxu0
      %v3463 = vadd.f32 %v1763, %v2953
      %v3464 = vadd.f32 %v1766, %v2956
      %v3465 = vadd.f32 %v1771, %v2961
      %v3466 = vadd.f32 %v1774, %v2964
      %v3467 = vadd.f32 %v1779, %v2969
      %v3468 = vadd.f32 %v1782, %v2972
      %v3469 = vadd.f32 %v1787, %v2977
      %v3470 = vadd.f32 %v1790, %v2980
      %v3471 = vadd.f32 %v1795, %v2985
      %v3472 = vadd.f32 %v1798, %v2988
      %v3473 = vadd.f32 %v1803, %v2993
      %v3474 = vadd.f32 %v1806, %v2996
      %v3475 = vadd.f32 %v1811, %v3001
      %v3476 = vadd.f32 %v1814, %v3004
      %v3477 = vadd.f32 %v1819, %v3009
      %v3478 = vadd.f32 %v1822, %v3012
      %v3479 = vadd.f32 %v1827, %v3017
      %v3480 = vadd.f32 %v1830, %v3020
      %v3481 = vadd.f32 %v1835, %v3025
      %v3482 = vadd.f32 %v1838, %v3028
      %v3483 = vadd.f32 %v1843, %v3033
      %v3484 = vadd.f32 %v1846, %v3036
      %v3485 = vadd.f32 %v1851, %v3041
      %v3486 = vadd.f32 %v1854, %v3044
      %v3487 = vadd.f32 %v1859, %v3049
      %v3488 = vadd.f32 %v1862, %v3052
      %v3489 = vadd.f32 %v1867, %v3057
      %v3490 = vadd.f32 %v1870, %v3060
      %v3491 = vadd.f32 %v1875, %v3065
      %v3492 = vadd.f32 %v1878, %v3068
      %v3493 = vadd.f32 %v1883, %v3073
      %v3494 = vadd.f32 %v1886, %v3076
      %v3495 = vadd.f32 %v1891, %v3081
      %v3496 = vadd.f32 %v1894, %v3084
      %v3497 = vadd.f32 %v1899, %v3089
      %v3498 = vadd.f32 %v1902, %v3092
      %v3499 = vadd.f32 %v1907, %v3097
      %v3500 = vadd.f32 %v1910, %v3100
      %v3501 = vadd.f32 %v1915, %v3105
      %v3502 = vadd.f32 %v1918, %v3108
      %v3503 = vadd.f32 %v1923, %v3113
      %v3504 = vadd.f32 %v1926, %v3116
      %v3505 = vadd.f32 %v1931, %v3121
      %v3506 = vadd.f32 %v1934, %v3124
      %v3507 = vadd.f32 %v1939, %v3129
      %v3508 = vadd.f32 %v1942, %v3132
      %v3509 = vadd.f32 %v1947, %v3137
      %v3510 = vadd.f32 %v1950, %v3140
      %v3511 = vadd.f32 %v1955, %v3145
      %v3512 = vadd.f32 %v1958, %v3148
      %v3513 = vadd.f32 %v1963, %v3153
      %v3514 = vadd.f32 %v1966, %v3156
      %v3515 = vadd.f32 %v1971, %v3161
      %v3516 = vadd.f32 %v1974, %v3164
      %v3517 = vadd.f32 %v1979, %v3169
      %v3518 = vadd.f32 %v1982, %v3172
      %v3519 = vadd.f32 %v1987, %v3177
      %v3520 = vadd.f32 %v1990, %v3180
      %v3521 = vadd.f32 %v1995, %v3185
      %v3522 = vadd.f32 %v1998, %v3188
      %v3523 = vadd.f32 %v2003, %v3193
      %v3524 = vadd.f32 %v2006, %v3196
      %v3525 = vadd.f32 %v2011, %v3201
      %v3526 = vadd.f32 %v2014, %v3204
      %v3527 = vadd.f32 %v2019, %v3209
      %v3528 = vadd.f32 %v2022, %v3212
      %v3529 = vadd.f32 %v2027, %v3217
      %v3530 = vadd.f32 %v2030, %v3220
      %v3531 = vadd.f32 %v2035, %v3225
      %v3532 = vadd.f32 %v2038, %v3228
      %v3533 = vadd.f32 %v2043, %v3233
      %v3534 = vadd.f32 %v2046, %v3236
      %v3535 = vadd.f32 %v2051, %v3241
      %v3536 = vadd.f32 %v2054, %v3244
      %v3537 = vadd.f32 %v2059, %v3249
      %v3538 = vadd.f32 %v2062, %v3252
      %v3539 = vadd.f32 %v2067, %v3257
      %v3540 = vadd.f32 %v2070, %v3260
      %v3541 = vadd.f32 %v2075, %v3265
      %v3542 = vadd.f32 %v2078, %v3268
      %v3543 = vadd.f32 %v2083, %v3273
      %v3544 = vadd.f32 %v2086, %v3276
      %v3545 = vadd.f32 %v2091, %v3281
      %v3546 = vadd.f32 %v2094, %v3284
      %v3547 = vadd.f32 %v2099, %v3289
      %v3548 = vadd.f32 %v2102, %v3292
      %v3549 = vadd.f32 %v2107, %v3297
      %v3550 = vadd.f32 %v2110, %v3300
      %v3551 = vadd.f32 %v2115, %v3305
      %v3552 = vadd.f32 %v2118, %v3308
      %v3553 = vadd.f32 %v2123, %v3313
      %v3554 = vadd.f32 %v2126, %v3316
      %v3555 = vadd.f32 %v2131, %v3321
      %v3556 = vadd.f32 %v2134, %v3324
      %v3557 = vadd.f32 %v2139, %v3329
      %v3558 = vadd.f32 %v2142, %v3332
      %v3559 = vadd.f32 %v2147, %v3337
      %v3560 = vadd.f32 %v2150, %v3340
      %v3561 = vadd.f32 %v2155, %v3345
      %v3562 = vadd.f32 %v2158, %v3348
      %v3563 = vadd.f32 %v2163, %v3353
      %v3564 = vadd.f32 %v2166, %v3356
      %v3565 = vadd.f32 %v2171, %v3361
      %v3566 = vadd.f32 %v2174, %v3364
      %v3567 = vadd.f32 %v2179, %v3369
      %v3568 = vadd.f32 %v2182, %v3372
      %v3569 = vadd.f32 %v2187, %v3377
      %v3570 = vadd.f32 %v2190, %v3380
      %v3571 = vadd.f32 %v2195, %v3385
      %v3572 = vadd.f32 %v2198, %v3388
      %v3573 = vadd.f32 %v2203, %v3393
      %v3574 = vadd.f32 %v2206, %v3396
      %v3575 = vadd.f32 %v2211, %v3401
      %v3576 = vadd.f32 %v2214, %v3404
      %v3577 = vadd.f32 %v2219, %v3409
      %v3578 = vadd.f32 %v2222, %v3412
      %v3579 = vadd.f32 %v2227, %v3417
      %v3580 = vadd.f32 %v2230, %v3420
      %v3581 = vadd.f32 %v2235, %v3425
      %v3582 = vadd.f32 %v2238, %v3428
      %v3583 = vadd.f32 %v2243, %v3433
      %v3584 = vadd.f32 %v2246, %v3436
      %v3585 = vadd.f32 %v2251, %v3441
      %v3586 = vadd.f32 %v2254, %v3444
      %v3587 = vadd.f32 %v2259, %v3449
      %v3588 = vadd.f32 %v2262, %v3452
      %v3589 = vadd.f32 %v2267, %v3457
      %v3590 = vadd.f32 %v2270, %v3460
      %v3591 = vld [vmem:[%s2] sm:$0x1]
      %v3593 = vlaneseq
      %v3594 = vshrl.u32 %v3593, 7
      %v3595 = vsub.s32 0, %v3594
      %v3596 = vrot.slane %v3591, %v3595
      %v3598 = vadd.f32 %v3463, %v3596
      %v3599 = vadd.f32 %v3464, %v3596
      %v3600 = vadd.f32 %v3465, %v3596
      %v3601 = vadd.f32 %v3466, %v3596
      %v3602 = vadd.f32 %v3467, %v3596
      %v3603 = vadd.f32 %v3468, %v3596
      %v3604 = vadd.f32 %v3469, %v3596
      %v3605 = vadd.f32 %v3470, %v3596
      %v3606 = vadd.f32 %v3471, %v3596
      %v3607 = vadd.f32 %v3472, %v3596
      %v3608 = vadd.f32 %v3473, %v3596
      %v3609 = vadd.f32 %v3474, %v3596
      %v3610 = vadd.f32 %v3475, %v3596
      %v3611 = vadd.f32 %v3476, %v3596
      %v3612 = vadd.f32 %v3477, %v3596
      %v3613 = vadd.f32 %v3478, %v3596
      %v3614 = vadd.f32 %v3479, %v3596
      %v3615 = vadd.f32 %v3480, %v3596
      %v3616 = vadd.f32 %v3481, %v3596
      %v3617 = vadd.f32 %v3482, %v3596
      %v3618 = vadd.f32 %v3483, %v3596
      %v3619 = vadd.f32 %v3484, %v3596
      %v3620 = vadd.f32 %v3485, %v3596
      %v3621 = vadd.f32 %v3486, %v3596
      %v3622 = vadd.f32 %v3487, %v3596
      %v3623 = vadd.f32 %v3488, %v3596
      %v3624 = vadd.f32 %v3489, %v3596
      %v3625 = vadd.f32 %v3490, %v3596
      %v3626 = vadd.f32 %v3491, %v3596
      %v3627 = vadd.f32 %v3492, %v3596
      %v3628 = vadd.f32 %v3493, %v3596
      %v3629 = vadd.f32 %v3494, %v3596
      %v3630 = vadd.f32 %v3495, %v3596
      %v3631 = vadd.f32 %v3496, %v3596
      %v3632 = vadd.f32 %v3497, %v3596
      %v3633 = vadd.f32 %v3498, %v3596
      %v3634 = vadd.f32 %v3499, %v3596
      %v3635 = vadd.f32 %v3500, %v3596
      %v3636 = vadd.f32 %v3501, %v3596
      %v3637 = vadd.f32 %v3502, %v3596
      %v3638 = vadd.f32 %v3503, %v3596
      %v3639 = vadd.f32 %v3504, %v3596
      %v3640 = vadd.f32 %v3505, %v3596
      %v3641 = vadd.f32 %v3506, %v3596
      %v3642 = vadd.f32 %v3507, %v3596
      %v3643 = vadd.f32 %v3508, %v3596
      %v3644 = vadd.f32 %v3509, %v3596
      %v3645 = vadd.f32 %v3510, %v3596
      %v3646 = vadd.f32 %v3511, %v3596
      %v3647 = vadd.f32 %v3512, %v3596
      %v3648 = vadd.f32 %v3513, %v3596
      %v3649 = vadd.f32 %v3514, %v3596
      %v3650 = vadd.f32 %v3515, %v3596
      %v3651 = vadd.f32 %v3516, %v3596
      %v3652 = vadd.f32 %v3517, %v3596
      %v3653 = vadd.f32 %v3518, %v3596
      %v3654 = vadd.f32 %v3519, %v3596
      %v3655 = vadd.f32 %v3520, %v3596
      %v3656 = vadd.f32 %v3521, %v3596
      %v3657 = vadd.f32 %v3522, %v3596
      %v3658 = vadd.f32 %v3523, %v3596
      %v3659 = vadd.f32 %v3524, %v3596
      %v3660 = vadd.f32 %v3525, %v3596
      %v3661 = vadd.f32 %v3526, %v3596
      %v3662 = vadd.f32 %v3527, %v3596
      %v3663 = vadd.f32 %v3528, %v3596
      %v3664 = vadd.f32 %v3529, %v3596
      %v3665 = vadd.f32 %v3530, %v3596
      %v3666 = vadd.f32 %v3531, %v3596
      %v3667 = vadd.f32 %v3532, %v3596
      %v3668 = vadd.f32 %v3533, %v3596
      %v3669 = vadd.f32 %v3534, %v3596
      %v3670 = vadd.f32 %v3535, %v3596
      %v3671 = vadd.f32 %v3536, %v3596
      %v3672 = vadd.f32 %v3537, %v3596
      %v3673 = vadd.f32 %v3538, %v3596
      %v3674 = vadd.f32 %v3539, %v3596
      %v3675 = vadd.f32 %v3540, %v3596
      %v3676 = vadd.f32 %v3541, %v3596
      %v3677 = vadd.f32 %v3542, %v3596
      %v3678 = vadd.f32 %v3543, %v3596
      %v3679 = vadd.f32 %v3544, %v3596
      %v3680 = vadd.f32 %v3545, %v3596
      %v3681 = vadd.f32 %v3546, %v3596
      %v3682 = vadd.f32 %v3547, %v3596
      %v3683 = vadd.f32 %v3548, %v3596
      %v3684 = vadd.f32 %v3549, %v3596
      %v3685 = vadd.f32 %v3550, %v3596
      %v3686 = vadd.f32 %v3551, %v3596
      %v3687 = vadd.f32 %v3552, %v3596
      %v3688 = vadd.f32 %v3553, %v3596
      %v3689 = vadd.f32 %v3554, %v3596
      %v3690 = vadd.f32 %v3555, %v3596
      %v3691 = vadd.f32 %v3556, %v3596
      %v3692 = vadd.f32 %v3557, %v3596
      %v3693 = vadd.f32 %v3558, %v3596
      %v3694 = vadd.f32 %v3559, %v3596
      %v3695 = vadd.f32 %v3560, %v3596
      %v3696 = vadd.f32 %v3561, %v3596
      %v3697 = vadd.f32 %v3562, %v3596
      %v3698 = vadd.f32 %v3563, %v3596
      %v3699 = vadd.f32 %v3564, %v3596
      %v3700 = vadd.f32 %v3565, %v3596
      %v3701 = vadd.f32 %v3566, %v3596
      %v3702 = vadd.f32 %v3567, %v3596
      %v3703 = vadd.f32 %v3568, %v3596
      %v3704 = vadd.f32 %v3569, %v3596
      %v3705 = vadd.f32 %v3570, %v3596
      %v3706 = vadd.f32 %v3571, %v3596
      %v3707 = vadd.f32 %v3572, %v3596
      %v3708 = vadd.f32 %v3573, %v3596
      %v3709 = vadd.f32 %v3574, %v3596
      %v3710 = vadd.f32 %v3575, %v3596
      %v3711 = vadd.f32 %v3576, %v3596
      %v3712 = vadd.f32 %v3577, %v3596
      %v3713 = vadd.f32 %v3578, %v3596
      %v3714 = vadd.f32 %v3579, %v3596
      %v3715 = vadd.f32 %v3580, %v3596
      %v3716 = vadd.f32 %v3581, %v3596
      %v3717 = vadd.f32 %v3582, %v3596
      %v3718 = vadd.f32 %v3583, %v3596
      %v3719 = vadd.f32 %v3584, %v3596
      %v3720 = vadd.f32 %v3585, %v3596
      %v3721 = vadd.f32 %v3586, %v3596
      %v3722 = vadd.f32 %v3587, %v3596
      %v3723 = vadd.f32 %v3588, %v3596
      %v3724 = vadd.f32 %v3589, %v3596
      %v3725 = vadd.f32 %v3590, %v3596
      %v3726 = vld [vmem:[#allocation2] sm:$0xff]
      %v3727 = vld [vmem:[#allocation2 + $0x8] sm:$0xff]
      %v3728 = vld [vmem:[#allocation2 + $0x10] sm:$0xff]
      %v3729 = vld [vmem:[#allocation2 + $0x18] sm:$0xff]
      %v3730 = vld [vmem:[#allocation2 + $0x20] sm:$0xff]
      %v3731 = vld [vmem:[#allocation2 + $0x28] sm:$0xff]
      %v3732 = vld [vmem:[#allocation2 + $0x30] sm:$0xff]
      %v3733 = vld [vmem:[#allocation2 + $0x38] sm:$0xff]
      %v3734 = vld [vmem:[#allocation2 + $0x40] sm:$0xff]
      %v3735 = vld [vmem:[#allocation2 + $0x48] sm:$0xff]
      %v3736 = vld [vmem:[#allocation2 + $0x50] sm:$0xff]
      %v3737 = vld [vmem:[#allocation2 + $0x58] sm:$0xff]
      %v3738 = vld [vmem:[#allocation2 + $0x60] sm:$0xff]
      %v3739 = vld [vmem:[#allocation2 + $0x68] sm:$0xff]
      %v3740 = vld [vmem:[#allocation2 + $0x70] sm:$0xff]
      %v3741 = vld [vmem:[#allocation2 + $0x78] sm:$0xff]
      %v3742 = vld [vmem:[#allocation2 + $0x80] sm:$0xff]
      %v3743 = vld [vmem:[#allocation2 + $0x88] sm:$0xff]
      %v3744 = vld [vmem:[#allocation2 + $0x90] sm:$0xff]
      %v3745 = vld [vmem:[#allocation2 + $0x98] sm:$0xff]
      %v3746 = vld [vmem:[#allocation2 + $0xa0] sm:$0xff]
      %v3747 = vld [vmem:[#allocation2 + $0xa8] sm:$0xff]
      %v3748 = vld [vmem:[#allocation2 + $0xb0] sm:$0xff]
      %v3749 = vld [vmem:[#allocation2 + $0xb8] sm:$0xff]
      %v3750 = vld [vmem:[#allocation2 + $0xc0] sm:$0xff]
      %v3751 = vld [vmem:[#allocation2 + $0xc8] sm:$0xff]
      %v3752 = vld [vmem:[#allocation2 + $0xd0] sm:$0xff]
      %v3753 = vld [vmem:[#allocation2 + $0xd8] sm:$0xff]
      %v3754 = vld [vmem:[#allocation2 + $0xe0] sm:$0xff]
      %v3755 = vld [vmem:[#allocation2 + $0xe8] sm:$0xff]
      %v3756 = vld [vmem:[#allocation2 + $0xf0] sm:$0xff]
      %v3757 = vld [vmem:[#allocation2 + $0xf8] sm:$0xff]
      %v3758 = vld [vmem:[#allocation2 + $0x100] sm:$0xff]
      %v3759 = vld [vmem:[#allocation2 + $0x108] sm:$0xff]
      %v3760 = vld [vmem:[#allocation2 + $0x110] sm:$0xff]
      %v3761 = vld [vmem:[#allocation2 + $0x118] sm:$0xff]
      %v3762 = vld [vmem:[#allocation2 + $0x120] sm:$0xff]
      %v3763 = vld [vmem:[#allocation2 + $0x128] sm:$0xff]
      %v3764 = vld [vmem:[#allocation2 + $0x130] sm:$0xff]
      %v3765 = vld [vmem:[#allocation2 + $0x138] sm:$0xff]
      %v3766 = vld [vmem:[#allocation2 + $0x140] sm:$0xff]
      %v3767 = vld [vmem:[#allocation2 + $0x148] sm:$0xff]
      %v3768 = vld [vmem:[#allocation2 + $0x150] sm:$0xff]
      %v3769 = vld [vmem:[#allocation2 + $0x158] sm:$0xff]
      %v3770 = vld [vmem:[#allocation2 + $0x160] sm:$0xff]
      %v3771 = vld [vmem:[#allocation2 + $0x168] sm:$0xff]
      %v3772 = vld [vmem:[#allocation2 + $0x170] sm:$0xff]
      %v3773 = vld [vmem:[#allocation2 + $0x178] sm:$0xff]
      %v3774 = vld [vmem:[#allocation2 + $0x180] sm:$0xff]
      %v3775 = vld [vmem:[#allocation2 + $0x188] sm:$0xff]
      %v3776 = vld [vmem:[#allocation2 + $0x190] sm:$0xff]
      %v3777 = vld [vmem:[#allocation2 + $0x198] sm:$0xff]
      %v3778 = vld [vmem:[#allocation2 + $0x1a0] sm:$0xff]
      %v3779 = vld [vmem:[#allocation2 + $0x1a8] sm:$0xff]
      %v3780 = vld [vmem:[#allocation2 + $0x1b0] sm:$0xff]
      %v3781 = vld [vmem:[#allocation2 + $0x1b8] sm:$0xff]
      %v3782 = vld [vmem:[#allocation2 + $0x1c0] sm:$0xff]
      %v3783 = vld [vmem:[#allocation2 + $0x1c8] sm:$0xff]
      %v3784 = vld [vmem:[#allocation2 + $0x1d0] sm:$0xff]
      %v3785 = vld [vmem:[#allocation2 + $0x1d8] sm:$0xff]
      %v3786 = vld [vmem:[#allocation2 + $0x1e0] sm:$0xff]
      %v3787 = vld [vmem:[#allocation2 + $0x1e8] sm:$0xff]
      %v3788 = vld [vmem:[#allocation2 + $0x1f0] sm:$0xff]
      %v3789 = vld [vmem:[#allocation2 + $0x1f8] sm:$0xff]
      %v3790 = vld [vmem:[#allocation2 + $0x200] sm:$0xff]
      %v3791 = vld [vmem:[#allocation2 + $0x208] sm:$0xff]
      %v3792 = vld [vmem:[#allocation2 + $0x210] sm:$0xff]
      %v3793 = vld [vmem:[#allocation2 + $0x218] sm:$0xff]
      %v3794 = vld [vmem:[#allocation2 + $0x220] sm:$0xff]
      %v3795 = vld [vmem:[#allocation2 + $0x228] sm:$0xff]
      %v3796 = vld [vmem:[#allocation2 + $0x230] sm:$0xff]
      %v3797 = vld [vmem:[#allocation2 + $0x238] sm:$0xff]
      %v3798 = vld [vmem:[#allocation2 + $0x240] sm:$0xff]
      %v3799 = vld [vmem:[#allocation2 + $0x248] sm:$0xff]
      %v3800 = vld [vmem:[#allocation2 + $0x250] sm:$0xff]
      %v3801 = vld [vmem:[#allocation2 + $0x258] sm:$0xff]
      %v3802 = vld [vmem:[#allocation2 + $0x260] sm:$0xff]
      %v3803 = vld [vmem:[#allocation2 + $0x268] sm:$0xff]
      %v3804 = vld [vmem:[#allocation2 + $0x270] sm:$0xff]
      %v3805 = vld [vmem:[#allocation2 + $0x278] sm:$0xff]
      %v3806 = vld [vmem:[#allocation2 + $0x280] sm:$0xff]
      %v3807 = vld [vmem:[#allocation2 + $0x288] sm:$0xff]
      %v3808 = vld [vmem:[#allocation2 + $0x290] sm:$0xff]
      %v3809 = vld [vmem:[#allocation2 + $0x298] sm:$0xff]
      %v3810 = vld [vmem:[#allocation2 + $0x2a0] sm:$0xff]
      %v3811 = vld [vmem:[#allocation2 + $0x2a8] sm:$0xff]
      %v3812 = vld [vmem:[#allocation2 + $0x2b0] sm:$0xff]
      %v3813 = vld [vmem:[#allocation2 + $0x2b8] sm:$0xff]
      %v3814 = vld [vmem:[#allocation2 + $0x2c0] sm:$0xff]
      %v3815 = vld [vmem:[#allocation2 + $0x2c8] sm:$0xff]
      %v3816 = vld [vmem:[#allocation2 + $0x2d0] sm:$0xff]
      %v3817 = vld [vmem:[#allocation2 + $0x2d8] sm:$0xff]
      %v3818 = vld [vmem:[#allocation2 + $0x2e0] sm:$0xff]
      %v3819 = vld [vmem:[#allocation2 + $0x2e8] sm:$0xff]
      %v3820 = vld [vmem:[#allocation2 + $0x2f0] sm:$0xff]
      %v3821 = vld [vmem:[#allocation2 + $0x2f8] sm:$0xff]
      %v3822 = vld [vmem:[#allocation2 + $0x300] sm:$0xff]
      %v3823 = vld [vmem:[#allocation2 + $0x308] sm:$0xff]
      %v3824 = vld [vmem:[#allocation2 + $0x310] sm:$0xff]
      %v3825 = vld [vmem:[#allocation2 + $0x318] sm:$0xff]
      %v3826 = vld [vmem:[#allocation2 + $0x320] sm:$0xff]
      %v3827 = vld [vmem:[#allocation2 + $0x328] sm:$0xff]
      %v3828 = vld [vmem:[#allocation2 + $0x330] sm:$0xff]
      %v3829 = vld [vmem:[#allocation2 + $0x338] sm:$0xff]
      %v3830 = vld [vmem:[#allocation2 + $0x340] sm:$0xff]
      %v3831 = vld [vmem:[#allocation2 + $0x348] sm:$0xff]
      %v3832 = vld [vmem:[#allocation2 + $0x350] sm:$0xff]
      %v3833 = vld [vmem:[#allocation2 + $0x358] sm:$0xff]
      %v3834 = vld [vmem:[#allocation2 + $0x360] sm:$0xff]
      %v3835 = vld [vmem:[#allocation2 + $0x368] sm:$0xff]
      %v3836 = vld [vmem:[#allocation2 + $0x370] sm:$0xff]
      %v3837 = vld [vmem:[#allocation2 + $0x378] sm:$0xff]
      %v3838 = vld [vmem:[#allocation2 + $0x380] sm:$0xff]
      %v3839 = vld [vmem:[#allocation2 + $0x388] sm:$0xff]
      %v3840 = vld [vmem:[#allocation2 + $0x390] sm:$0xff]
      %v3841 = vld [vmem:[#allocation2 + $0x398] sm:$0xff]
      %v3842 = vld [vmem:[#allocation2 + $0x3a0] sm:$0xff]
      %v3843 = vld [vmem:[#allocation2 + $0x3a8] sm:$0xff]
      %v3844 = vld [vmem:[#allocation2 + $0x3b0] sm:$0xff]
      %v3845 = vld [vmem:[#allocation2 + $0x3b8] sm:$0xff]
      %v3846 = vld [vmem:[#allocation2 + $0x3c0] sm:$0xff]
      %v3847 = vld [vmem:[#allocation2 + $0x3c8] sm:$0xff]
      %v3848 = vld [vmem:[#allocation2 + $0x3d0] sm:$0xff]
      %v3849 = vld [vmem:[#allocation2 + $0x3d8] sm:$0xff]
      %v3850 = vld [vmem:[#allocation2 + $0x3e0] sm:$0xff]
      %v3851 = vld [vmem:[#allocation2 + $0x3e8] sm:$0xff]
      %v3852 = vld [vmem:[#allocation2 + $0x3f0] sm:$0xff]
      %v3853 = vld [vmem:[#allocation2 + $0x3f8] sm:$0xff]
      %v3854 = vsub.f32 %v3598, %v3726
      %v3855 = vsub.f32 %v3599, %v3727
      %v3856 = vsub.f32 %v3600, %v3728
      %v3857 = vsub.f32 %v3601, %v3729
      %v3858 = vsub.f32 %v3602, %v3730
      %v3859 = vsub.f32 %v3603, %v3731
      %v3860 = vsub.f32 %v3604, %v3732
      %v3861 = vsub.f32 %v3605, %v3733
      %v3862 = vsub.f32 %v3606, %v3734
      %v3863 = vsub.f32 %v3607, %v3735
      %v3864 = vsub.f32 %v3608, %v3736
      %v3865 = vsub.f32 %v3609, %v3737
      %v3866 = vsub.f32 %v3610, %v3738
      %v3867 = vsub.f32 %v3611, %v3739
      %v3868 = vsub.f32 %v3612, %v3740
      %v3869 = vsub.f32 %v3613, %v3741
      %v3870 = vsub.f32 %v3614, %v3742
      %v3871 = vsub.f32 %v3615, %v3743
      %v3872 = vsub.f32 %v3616, %v3744
      %v3873 = vsub.f32 %v3617, %v3745
      %v3874 = vsub.f32 %v3618, %v3746
      %v3875 = vsub.f32 %v3619, %v3747
      %v3876 = vsub.f32 %v3620, %v3748
      %v3877 = vsub.f32 %v3621, %v3749
      %v3878 = vsub.f32 %v3622, %v3750
      %v3879 = vsub.f32 %v3623, %v3751
      %v3880 = vsub.f32 %v3624, %v3752
      %v3881 = vsub.f32 %v3625, %v3753
      %v3882 = vsub.f32 %v3626, %v3754
      %v3883 = vsub.f32 %v3627, %v3755
      %v3884 = vsub.f32 %v3628, %v3756
      %v3885 = vsub.f32 %v3629, %v3757
      %v3886 = vsub.f32 %v3630, %v3758
      %v3887 = vsub.f32 %v3631, %v3759
      %v3888 = vsub.f32 %v3632, %v3760
      %v3889 = vsub.f32 %v3633, %v3761
      %v3890 = vsub.f32 %v3634, %v3762
      %v3891 = vsub.f32 %v3635, %v3763
      %v3892 = vsub.f32 %v3636, %v3764
      %v3893 = vsub.f32 %v3637, %v3765
      %v3894 = vsub.f32 %v3638, %v3766
      %v3895 = vsub.f32 %v3639, %v3767
      %v3896 = vsub.f32 %v3640, %v3768
      %v3897 = vsub.f32 %v3641, %v3769
      %v3898 = vsub.f32 %v3642, %v3770
      %v3899 = vsub.f32 %v3643, %v3771
      %v3900 = vsub.f32 %v3644, %v3772
      %v3901 = vsub.f32 %v3645, %v3773
      %v3902 = vsub.f32 %v3646, %v3774
      %v3903 = vsub.f32 %v3647, %v3775
      %v3904 = vsub.f32 %v3648, %v3776
      %v3905 = vsub.f32 %v3649, %v3777
      %v3906 = vsub.f32 %v3650, %v3778
      %v3907 = vsub.f32 %v3651, %v3779
      %v3908 = vsub.f32 %v3652, %v3780
      %v3909 = vsub.f32 %v3653, %v3781
      %v3910 = vsub.f32 %v3654, %v3782
      %v3911 = vsub.f32 %v3655, %v3783
      %v3912 = vsub.f32 %v3656, %v3784
      %v3913 = vsub.f32 %v3657, %v3785
      %v3914 = vsub.f32 %v3658, %v3786
      %v3915 = vsub.f32 %v3659, %v3787
      %v3916 = vsub.f32 %v3660, %v3788
      %v3917 = vsub.f32 %v3661, %v3789
      %v3918 = vsub.f32 %v3662, %v3790
      %v3919 = vsub.f32 %v3663, %v3791
      %v3920 = vsub.f32 %v3664, %v3792
      %v3921 = vsub.f32 %v3665, %v3793
      %v3922 = vsub.f32 %v3666, %v3794
      %v3923 = vsub.f32 %v3667, %v3795
      %v3924 = vsub.f32 %v3668, %v3796
      %v3925 = vsub.f32 %v3669, %v3797
      %v3926 = vsub.f32 %v3670, %v3798
      %v3927 = vsub.f32 %v3671, %v3799
      %v3928 = vsub.f32 %v3672, %v3800
      %v3929 = vsub.f32 %v3673, %v3801
      %v3930 = vsub.f32 %v3674, %v3802
      %v3931 = vsub.f32 %v3675, %v3803
      %v3932 = vsub.f32 %v3676, %v3804
      %v3933 = vsub.f32 %v3677, %v3805
      %v3934 = vsub.f32 %v3678, %v3806
      %v3935 = vsub.f32 %v3679, %v3807
      %v3936 = vsub.f32 %v3680, %v3808
      %v3937 = vsub.f32 %v3681, %v3809
      %v3938 = vsub.f32 %v3682, %v3810
      %v3939 = vsub.f32 %v3683, %v3811
      %v3940 = vsub.f32 %v3684, %v3812
      %v3941 = vsub.f32 %v3685, %v3813
      %v3942 = vsub.f32 %v3686, %v3814
      %v3943 = vsub.f32 %v3687, %v3815
      %v3944 = vsub.f32 %v3688, %v3816
      %v3945 = vsub.f32 %v3689, %v3817
      %v3946 = vsub.f32 %v3690, %v3818
      %v3947 = vsub.f32 %v3691, %v3819
      %v3948 = vsub.f32 %v3692, %v3820
      %v3949 = vsub.f32 %v3693, %v3821
      %v3950 = vsub.f32 %v3694, %v3822
      %v3951 = vsub.f32 %v3695, %v3823
      %v3952 = vsub.f32 %v3696, %v3824
      %v3953 = vsub.f32 %v3697, %v3825
      %v3954 = vsub.f32 %v3698, %v3826
      %v3955 = vsub.f32 %v3699, %v3827
      %v3956 = vsub.f32 %v3700, %v3828
      %v3957 = vsub.f32 %v3701, %v3829
      %v3958 = vsub.f32 %v3702, %v3830
      %v3959 = vsub.f32 %v3703, %v3831
      %v3960 = vsub.f32 %v3704, %v3832
      %v3961 = vsub.f32 %v3705, %v3833
      %v3962 = vsub.f32 %v3706, %v3834
      %v3963 = vsub.f32 %v3707, %v3835
      %v3964 = vsub.f32 %v3708, %v3836
      %v3965 = vsub.f32 %v3709, %v3837
      %v3966 = vsub.f32 %v3710, %v3838
      %v3967 = vsub.f32 %v3711, %v3839
      %v3968 = vsub.f32 %v3712, %v3840
      %v3969 = vsub.f32 %v3713, %v3841
      %v3970 = vsub.f32 %v3714, %v3842
      %v3971 = vsub.f32 %v3715, %v3843
      %v3972 = vsub.f32 %v3716, %v3844
      %v3973 = vsub.f32 %v3717, %v3845
      %v3974 = vsub.f32 %v3718, %v3846
      %v3975 = vsub.f32 %v3719, %v3847
      %v3976 = vsub.f32 %v3720, %v3848
      %v3977 = vsub.f32 %v3721, %v3849
      %v3978 = vsub.f32 %v3722, %v3850
      %v3979 = vsub.f32 %v3723, %v3851
      %v3980 = vsub.f32 %v3724, %v3852
      %v3981 = vsub.f32 %v3725, %v3853
      %v3982 = vmul.f32 %v3854, 0.6666667
      %v3983 = vmul.f32 %v3855, 0.6666667
      %v3984 = vmul.f32 %v3856, 0.6666667
      %v3985 = vmul.f32 %v3857, 0.6666667
      %v3986 = vmul.f32 %v3858, 0.6666667
      %v3987 = vmul.f32 %v3859, 0.6666667
      %v3988 = vmul.f32 %v3860, 0.6666667
      %v3989 = vmul.f32 %v3861, 0.6666667
      %v3990 = vmul.f32 %v3862, 0.6666667
      %v3991 = vmul.f32 %v3863, 0.6666667
      %v3992 = vmul.f32 %v3864, 0.6666667
      %v3993 = vmul.f32 %v3865, 0.6666667
      %v3994 = vmul.f32 %v3866, 0.6666667
      %v3995 = vmul.f32 %v3867, 0.6666667
      %v3996 = vmul.f32 %v3868, 0.6666667
      %v3997 = vmul.f32 %v3869, 0.6666667
      %v3998 = vmul.f32 %v3870, 0.6666667
      %v3999 = vmul.f32 %v3871, 0.6666667
      %v4000 = vmul.f32 %v3872, 0.6666667
      %v4001 = vmul.f32 %v3873, 0.6666667
      %v4002 = vmul.f32 %v3874, 0.6666667
      %v4003 = vmul.f32 %v3875, 0.6666667
      %v4004 = vmul.f32 %v3876, 0.6666667
      %v4005 = vmul.f32 %v3877, 0.6666667
      %v4006 = vmul.f32 %v3878, 0.6666667
      %v4007 = vmul.f32 %v3879, 0.6666667
      %v4008 = vmul.f32 %v3880, 0.6666667
      %v4009 = vmul.f32 %v3881, 0.6666667
      %v4010 = vmul.f32 %v3882, 0.6666667
      %v4011 = vmul.f32 %v3883, 0.6666667
      %v4012 = vmul.f32 %v3884, 0.6666667
      %v4013 = vmul.f32 %v3885, 0.6666667
      %v4014 = vmul.f32 %v3886, 0.6666667
      %v4015 = vmul.f32 %v3887, 0.6666667
      %v4016 = vmul.f32 %v3888, 0.6666667
      %v4017 = vmul.f32 %v3889, 0.6666667
      %v4018 = vmul.f32 %v3890, 0.6666667
      %v4019 = vmul.f32 %v3891, 0.6666667
      %v4020 = vmul.f32 %v3892, 0.6666667
      %v4021 = vmul.f32 %v3893, 0.6666667
      %v4022 = vmul.f32 %v3894, 0.6666667
      %v4023 = vmul.f32 %v3895, 0.6666667
      %v4024 = vmul.f32 %v3896, 0.6666667
      %v4025 = vmul.f32 %v3897, 0.6666667
      %v4026 = vmul.f32 %v3898, 0.6666667
      %v4027 = vmul.f32 %v3899, 0.6666667
      %v4028 = vmul.f32 %v3900, 0.6666667
      %v4029 = vmul.f32 %v3901, 0.6666667
      %v4030 = vmul.f32 %v3902, 0.6666667
      %v4031 = vmul.f32 %v3903, 0.6666667
      %v4032 = vmul.f32 %v3904, 0.6666667
      %v4033 = vmul.f32 %v3905, 0.6666667
      %v4034 = vmul.f32 %v3906, 0.6666667
      %v4035 = vmul.f32 %v3907, 0.6666667
      %v4036 = vmul.f32 %v3908, 0.6666667
      %v4037 = vmul.f32 %v3909, 0.6666667
      %v4038 = vmul.f32 %v3910, 0.6666667
      %v4039 = vmul.f32 %v3911, 0.6666667
      %v4040 = vmul.f32 %v3912, 0.6666667
      %v4041 = vmul.f32 %v3913, 0.6666667
      %v4042 = vmul.f32 %v3914, 0.6666667
      %v4043 = vmul.f32 %v3915, 0.6666667
      %v4044 = vmul.f32 %v3916, 0.6666667
      %v4045 = vmul.f32 %v3917, 0.6666667
      %v4046 = vmul.f32 %v3918, 0.6666667
      %v4047 = vmul.f32 %v3919, 0.6666667
      %v4048 = vmul.f32 %v3920, 0.6666667
      %v4049 = vmul.f32 %v3921, 0.6666667
      %v4050 = vmul.f32 %v3922, 0.6666667
      %v4051 = vmul.f32 %v3923, 0.6666667
      %v4052 = vmul.f32 %v3924, 0.6666667
      %v4053 = vmul.f32 %v3925, 0.6666667
      %v4054 = vmul.f32 %v3926, 0.6666667
      %v4055 = vmul.f32 %v3927, 0.6666667
      %v4056 = vmul.f32 %v3928, 0.6666667
      %v4057 = vmul.f32 %v3929, 0.6666667
      %v4058 = vmul.f32 %v3930, 0.6666667
      %v4059 = vmul.f32 %v3931, 0.6666667
      %v4060 = vmul.f32 %v3932, 0.6666667
      %v4061 = vmul.f32 %v3933, 0.6666667
      %v4062 = vmul.f32 %v3934, 0.6666667
      %v4063 = vmul.f32 %v3935, 0.6666667
      %v4064 = vmul.f32 %v3936, 0.6666667
      %v4065 = vmul.f32 %v3937, 0.6666667
      %v4066 = vmul.f32 %v3938, 0.6666667
      %v4067 = vmul.f32 %v3939, 0.6666667
      %v4068 = vmul.f32 %v3940, 0.6666667
      %v4069 = vmul.f32 %v3941, 0.6666667
      %v4070 = vmul.f32 %v3942, 0.6666667
      %v4071 = vmul.f32 %v3943, 0.6666667
      %v4072 = vmul.f32 %v3944, 0.6666667
      %v4073 = vmul.f32 %v3945, 0.6666667
      %v4074 = vmul.f32 %v3946, 0.6666667
      %v4075 = vmul.f32 %v3947, 0.6666667
      %v4076 = vmul.f32 %v3948, 0.6666667
      %v4077 = vmul.f32 %v3949, 0.6666667
      %v4078 = vmul.f32 %v3950, 0.6666667
      %v4079 = vmul.f32 %v3951, 0.6666667
      %v4080 = vmul.f32 %v3952, 0.6666667
      %v4081 = vmul.f32 %v3953, 0.6666667
      %v4082 = vmul.f32 %v3954, 0.6666667
      %v4083 = vmul.f32 %v3955, 0.6666667
      %v4084 = vmul.f32 %v3956, 0.6666667
      %v4085 = vmul.f32 %v3957, 0.6666667
      %v4086 = vmul.f32 %v3958, 0.6666667
      %v4087 = vmul.f32 %v3959, 0.6666667
      %v4088 = vmul.f32 %v3960, 0.6666667
      %v4089 = vmul.f32 %v3961, 0.6666667
      %v4090 = vmul.f32 %v3962, 0.6666667
      %v4091 = vmul.f32 %v3963, 0.6666667
      %v4092 = vmul.f32 %v3964, 0.6666667
      %v4093 = vmul.f32 %v3965, 0.6666667
      %v4094 = vmul.f32 %v3966, 0.6666667
      %v4095 = vmul.f32 %v3967, 0.6666667
      %v4096 = vmul.f32 %v3968, 0.6666667
      %v4097 = vmul.f32 %v3969, 0.6666667
      %v4098 = vmul.f32 %v3970, 0.6666667
      %v4099 = vmul.f32 %v3971, 0.6666667
      %v4100 = vmul.f32 %v3972, 0.6666667
      %v4101 = vmul.f32 %v3973, 0.6666667
      %v4102 = vmul.f32 %v3974, 0.6666667
      %v4103 = vmul.f32 %v3975, 0.6666667
      %v4104 = vmul.f32 %v3976, 0.6666667
      %v4105 = vmul.f32 %v3977, 0.6666667
      %v4106 = vmul.f32 %v3978, 0.6666667
      %v4107 = vmul.f32 %v3979, 0.6666667
      %v4108 = vmul.f32 %v3980, 0.6666667
      %v4109 = vmul.f32 %v3981, 0.6666667
      %v4110 = vadd.f32 %v3726, %v3982
      %v4111 = vadd.f32 %v3727, %v3983
      %v4112 = vadd.f32 %v3728, %v3984
      %v4113 = vadd.f32 %v3729, %v3985
      %v4114 = vadd.f32 %v3730, %v3986
      %v4115 = vadd.f32 %v3731, %v3987
      %v4116 = vadd.f32 %v3732, %v3988
      %v4117 = vadd.f32 %v3733, %v3989
      %v4118 = vadd.f32 %v3734, %v3990
      %v4119 = vadd.f32 %v3735, %v3991
      %v4120 = vadd.f32 %v3736, %v3992
      %v4121 = vadd.f32 %v3737, %v3993
      %v4122 = vadd.f32 %v3738, %v3994
      %v4123 = vadd.f32 %v3739, %v3995
      %v4124 = vadd.f32 %v3740, %v3996
      %v4125 = vadd.f32 %v3741, %v3997
      %v4126 = vadd.f32 %v3742, %v3998
      %v4127 = vadd.f32 %v3743, %v3999
      %v4128 = vadd.f32 %v3744, %v4000
      %v4129 = vadd.f32 %v3745, %v4001
      %v4130 = vadd.f32 %v3746, %v4002
      %v4131 = vadd.f32 %v3747, %v4003
      %v4132 = vadd.f32 %v3748, %v4004
      %v4133 = vadd.f32 %v3749, %v4005
      %v4134 = vadd.f32 %v3750, %v4006
      %v4135 = vadd.f32 %v3751, %v4007
      %v4136 = vadd.f32 %v3752, %v4008
      %v4137 = vadd.f32 %v3753, %v4009
      %v4138 = vadd.f32 %v3754, %v4010
      %v4139 = vadd.f32 %v3755, %v4011
      %v4140 = vadd.f32 %v3756, %v4012
      %v4141 = vadd.f32 %v3757, %v4013
      %v4142 = vadd.f32 %v3758, %v4014
      %v4143 = vadd.f32 %v3759, %v4015
      %v4144 = vadd.f32 %v3760, %v4016
      %v4145 = vadd.f32 %v3761, %v4017
      %v4146 = vadd.f32 %v3762, %v4018
      %v4147 = vadd.f32 %v3763, %v4019
      %v4148 = vadd.f32 %v3764, %v4020
      %v4149 = vadd.f32 %v3765, %v4021
      %v4150 = vadd.f32 %v3766, %v4022
      %v4151 = vadd.f32 %v3767, %v4023
      %v4152 = vadd.f32 %v3768, %v4024
      %v4153 = vadd.f32 %v3769, %v4025
      %v4154 = vadd.f32 %v3770, %v4026
      %v4155 = vadd.f32 %v3771, %v4027
      %v4156 = vadd.f32 %v3772, %v4028
      %v4157 = vadd.f32 %v3773, %v4029
      %v4158 = vadd.f32 %v3774, %v4030
      %v4159 = vadd.f32 %v3775, %v4031
      %v4160 = vadd.f32 %v3776, %v4032
      %v4161 = vadd.f32 %v3777, %v4033
      %v4162 = vadd.f32 %v3778, %v4034
      %v4163 = vadd.f32 %v3779, %v4035
      %v4164 = vadd.f32 %v3780, %v4036
      %v4165 = vadd.f32 %v3781, %v4037
      %v4166 = vadd.f32 %v3782, %v4038
      %v4167 = vadd.f32 %v3783, %v4039
      %v4168 = vadd.f32 %v3784, %v4040
      %v4169 = vadd.f32 %v3785, %v4041
      %v4170 = vadd.f32 %v3786, %v4042
      %v4171 = vadd.f32 %v3787, %v4043
      %v4172 = vadd.f32 %v3788, %v4044
      %v4173 = vadd.f32 %v3789, %v4045
      %v4174 = vadd.f32 %v3790, %v4046
      %v4175 = vadd.f32 %v3791, %v4047
      %v4176 = vadd.f32 %v3792, %v4048
      %v4177 = vadd.f32 %v3793, %v4049
      %v4178 = vadd.f32 %v3794, %v4050
      %v4179 = vadd.f32 %v3795, %v4051
      %v4180 = vadd.f32 %v3796, %v4052
      %v4181 = vadd.f32 %v3797, %v4053
      %v4182 = vadd.f32 %v3798, %v4054
      %v4183 = vadd.f32 %v3799, %v4055
      %v4184 = vadd.f32 %v3800, %v4056
      %v4185 = vadd.f32 %v3801, %v4057
      %v4186 = vadd.f32 %v3802, %v4058
      %v4187 = vadd.f32 %v3803, %v4059
      %v4188 = vadd.f32 %v3804, %v4060
      %v4189 = vadd.f32 %v3805, %v4061
      %v4190 = vadd.f32 %v3806, %v4062
      %v4191 = vadd.f32 %v3807, %v4063
      %v4192 = vadd.f32 %v3808, %v4064
      %v4193 = vadd.f32 %v3809, %v4065
      %v4194 = vadd.f32 %v3810, %v4066
      %v4195 = vadd.f32 %v3811, %v4067
      %v4196 = vadd.f32 %v3812, %v4068
      %v4197 = vadd.f32 %v3813, %v4069
      %v4198 = vadd.f32 %v3814, %v4070
      %v4199 = vadd.f32 %v3815, %v4071
      %v4200 = vadd.f32 %v3816, %v4072
      %v4201 = vadd.f32 %v3817, %v4073
      %v4202 = vadd.f32 %v3818, %v4074
      %v4203 = vadd.f32 %v3819, %v4075
      %v4204 = vadd.f32 %v3820, %v4076
      %v4205 = vadd.f32 %v3821, %v4077
      %v4206 = vadd.f32 %v3822, %v4078
      %v4207 = vadd.f32 %v3823, %v4079
      %v4208 = vadd.f32 %v3824, %v4080
      %v4209 = vadd.f32 %v3825, %v4081
      %v4210 = vadd.f32 %v3826, %v4082
      %v4211 = vadd.f32 %v3827, %v4083
      %v4212 = vadd.f32 %v3828, %v4084
      %v4213 = vadd.f32 %v3829, %v4085
      %v4214 = vadd.f32 %v3830, %v4086
      %v4215 = vadd.f32 %v3831, %v4087
      %v4216 = vadd.f32 %v3832, %v4088
      %v4217 = vadd.f32 %v3833, %v4089
      %v4218 = vadd.f32 %v3834, %v4090
      %v4219 = vadd.f32 %v3835, %v4091
      %v4220 = vadd.f32 %v3836, %v4092
      %v4221 = vadd.f32 %v3837, %v4093
      %v4222 = vadd.f32 %v3838, %v4094
      %v4223 = vadd.f32 %v3839, %v4095
      %v4224 = vadd.f32 %v3840, %v4096
      %v4225 = vadd.f32 %v3841, %v4097
      %v4226 = vadd.f32 %v3842, %v4098
      %v4227 = vadd.f32 %v3843, %v4099
      %v4228 = vadd.f32 %v3844, %v4100
      %v4229 = vadd.f32 %v3845, %v4101
      %v4230 = vadd.f32 %v3846, %v4102
      %v4231 = vadd.f32 %v3847, %v4103
      %v4232 = vadd.f32 %v3848, %v4104
      %v4233 = vadd.f32 %v3849, %v4105
      %v4234 = vadd.f32 %v3850, %v4106
      %v4235 = vadd.f32 %v3851, %v4107
      %v4236 = vadd.f32 %v3852, %v4108
      %v4237 = vadd.f32 %v3853, %v4109
      %vm4238 = vcmp.ge.f32.partialorder %v4110, 1.0
      %vm4239 = vcmp.ge.f32.partialorder %v4111, 1.0
      %vm4240 = vcmp.ge.f32.partialorder %v4112, 1.0
      %vm4241 = vcmp.ge.f32.partialorder %v4113, 1.0
      %vm4242 = vcmp.ge.f32.partialorder %v4114, 1.0
      %vm4243 = vcmp.ge.f32.partialorder %v4115, 1.0
      %vm4244 = vcmp.ge.f32.partialorder %v4116, 1.0
      %vm4245 = vcmp.ge.f32.partialorder %v4117, 1.0
      %vm4246 = vcmp.ge.f32.partialorder %v4118, 1.0
      %vm4247 = vcmp.ge.f32.partialorder %v4119, 1.0
      %vm4248 = vcmp.ge.f32.partialorder %v4120, 1.0
      %vm4249 = vcmp.ge.f32.partialorder %v4121, 1.0
      %vm4250 = vcmp.ge.f32.partialorder %v4122, 1.0
      %vm4251 = vcmp.ge.f32.partialorder %v4123, 1.0
      %vm4252 = vcmp.ge.f32.partialorder %v4124, 1.0
      %vm4253 = vcmp.ge.f32.partialorder %v4125, 1.0
      %vm4254 = vcmp.ge.f32.partialorder %v4126, 1.0
      %vm4255 = vcmp.ge.f32.partialorder %v4127, 1.0
      %vm4256 = vcmp.ge.f32.partialorder %v4128, 1.0
      %vm4257 = vcmp.ge.f32.partialorder %v4129, 1.0
      %vm4258 = vcmp.ge.f32.partialorder %v4130, 1.0
      %vm4259 = vcmp.ge.f32.partialorder %v4131, 1.0
      %vm4260 = vcmp.ge.f32.partialorder %v4132, 1.0
      %vm4261 = vcmp.ge.f32.partialorder %v4133, 1.0
      %vm4262 = vcmp.ge.f32.partialorder %v4134, 1.0
      %vm4263 = vcmp.ge.f32.partialorder %v4135, 1.0
      %vm4264 = vcmp.ge.f32.partialorder %v4136, 1.0
      %vm4265 = vcmp.ge.f32.partialorder %v4137, 1.0
      %vm4266 = vcmp.ge.f32.partialorder %v4138, 1.0
      %vm4267 = vcmp.ge.f32.partialorder %v4139, 1.0
      %vm4268 = vcmp.ge.f32.partialorder %v4140, 1.0
      %vm4269 = vcmp.ge.f32.partialorder %v4141, 1.0
      %vm4270 = vcmp.ge.f32.partialorder %v4142, 1.0
      %vm4271 = vcmp.ge.f32.partialorder %v4143, 1.0
      %vm4272 = vcmp.ge.f32.partialorder %v4144, 1.0
      %vm4273 = vcmp.ge.f32.partialorder %v4145, 1.0
      %vm4274 = vcmp.ge.f32.partialorder %v4146, 1.0
      %vm4275 = vcmp.ge.f32.partialorder %v4147, 1.0
      %vm4276 = vcmp.ge.f32.partialorder %v4148, 1.0
      %vm4277 = vcmp.ge.f32.partialorder %v4149, 1.0
      %vm4278 = vcmp.ge.f32.partialorder %v4150, 1.0
      %vm4279 = vcmp.ge.f32.partialorder %v4151, 1.0
      %vm4280 = vcmp.ge.f32.partialorder %v4152, 1.0
      %vm4281 = vcmp.ge.f32.partialorder %v4153, 1.0
      %vm4282 = vcmp.ge.f32.partialorder %v4154, 1.0
      %vm4283 = vcmp.ge.f32.partialorder %v4155, 1.0
      %vm4284 = vcmp.ge.f32.partialorder %v4156, 1.0
      %vm4285 = vcmp.ge.f32.partialorder %v4157, 1.0
      %vm4286 = vcmp.ge.f32.partialorder %v4158, 1.0
      %vm4287 = vcmp.ge.f32.partialorder %v4159, 1.0
      %vm4288 = vcmp.ge.f32.partialorder %v4160, 1.0
      %vm4289 = vcmp.ge.f32.partialorder %v4161, 1.0
      %vm4290 = vcmp.ge.f32.partialorder %v4162, 1.0
      %vm4291 = vcmp.ge.f32.partialorder %v4163, 1.0
      %vm4292 = vcmp.ge.f32.partialorder %v4164, 1.0
      %vm4293 = vcmp.ge.f32.partialorder %v4165, 1.0
      %vm4294 = vcmp.ge.f32.partialorder %v4166, 1.0
      %vm4295 = vcmp.ge.f32.partialorder %v4167, 1.0
      %vm4296 = vcmp.ge.f32.partialorder %v4168, 1.0
      %vm4297 = vcmp.ge.f32.partialorder %v4169, 1.0
      %vm4298 = vcmp.ge.f32.partialorder %v4170, 1.0
      %vm4299 = vcmp.ge.f32.partialorder %v4171, 1.0
      %vm4300 = vcmp.ge.f32.partialorder %v4172, 1.0
      %vm4301 = vcmp.ge.f32.partialorder %v4173, 1.0
      %vm4302 = vcmp.ge.f32.partialorder %v4174, 1.0
      %vm4303 = vcmp.ge.f32.partialorder %v4175, 1.0
      %vm4304 = vcmp.ge.f32.partialorder %v4176, 1.0
      %vm4305 = vcmp.ge.f32.partialorder %v4177, 1.0
      %vm4306 = vcmp.ge.f32.partialorder %v4178, 1.0
      %vm4307 = vcmp.ge.f32.partialorder %v4179, 1.0
      %vm4308 = vcmp.ge.f32.partialorder %v4180, 1.0
      %vm4309 = vcmp.ge.f32.partialorder %v4181, 1.0
      %vm4310 = vcmp.ge.f32.partialorder %v4182, 1.0
      %vm4311 = vcmp.ge.f32.partialorder %v4183, 1.0
      %vm4312 = vcmp.ge.f32.partialorder %v4184, 1.0
      %vm4313 = vcmp.ge.f32.partialorder %v4185, 1.0
      %vm4314 = vcmp.ge.f32.partialorder %v4186, 1.0
      %vm4315 = vcmp.ge.f32.partialorder %v4187, 1.0
      %vm4316 = vcmp.ge.f32.partialorder %v4188, 1.0
      %vm4317 = vcmp.ge.f32.partialorder %v4189, 1.0
      %vm4318 = vcmp.ge.f32.partialorder %v4190, 1.0
      %vm4319 = vcmp.ge.f32.partialorder %v4191, 1.0
      %vm4320 = vcmp.ge.f32.partialorder %v4192, 1.0
      %vm4321 = vcmp.ge.f32.partialorder %v4193, 1.0
      %vm4322 = vcmp.ge.f32.partialorder %v4194, 1.0
      %vm4323 = vcmp.ge.f32.partialorder %v4195, 1.0
      %vm4324 = vcmp.ge.f32.partialorder %v4196, 1.0
      %vm4325 = vcmp.ge.f32.partialorder %v4197, 1.0
      %vm4326 = vcmp.ge.f32.partialorder %v4198, 1.0
      %vm4327 = vcmp.ge.f32.partialorder %v4199, 1.0
      %vm4328 = vcmp.ge.f32.partialorder %v4200, 1.0
      %vm4329 = vcmp.ge.f32.partialorder %v4201, 1.0
      %vm4330 = vcmp.ge.f32.partialorder %v4202, 1.0
      %vm4331 = vcmp.ge.f32.partialorder %v4203, 1.0
      %vm4332 = vcmp.ge.f32.partialorder %v4204, 1.0
      %vm4333 = vcmp.ge.f32.partialorder %v4205, 1.0
      %vm4334 = vcmp.ge.f32.partialorder %v4206, 1.0
      %vm4335 = vcmp.ge.f32.partialorder %v4207, 1.0
      %vm4336 = vcmp.ge.f32.partialorder %v4208, 1.0
      %vm4337 = vcmp.ge.f32.partialorder %v4209, 1.0
      %vm4338 = vcmp.ge.f32.partialorder %v4210, 1.0
      %vm4339 = vcmp.ge.f32.partialorder %v4211, 1.0
      %vm4340 = vcmp.ge.f32.partialorder %v4212, 1.0
      %vm4341 = vcmp.ge.f32.partialorder %v4213, 1.0
      %vm4342 = vcmp.ge.f32.partialorder %v4214, 1.0
      %vm4343 = vcmp.ge.f32.partialorder %v4215, 1.0
      %vm4344 = vcmp.ge.f32.partialorder %v4216, 1.0
      %vm4345 = vcmp.ge.f32.partialorder %v4217, 1.0
      %vm4346 = vcmp.ge.f32.partialorder %v4218, 1.0
      %vm4347 = vcmp.ge.f32.partialorder %v4219, 1.0
      %vm4348 = vcmp.ge.f32.partialorder %v4220, 1.0
      %vm4349 = vcmp.ge.f32.partialorder %v4221, 1.0
      %vm4350 = vcmp.ge.f32.partialorder %v4222, 1.0
      %vm4351 = vcmp.ge.f32.partialorder %v4223, 1.0
      %vm4352 = vcmp.ge.f32.partialorder %v4224, 1.0
      %vm4353 = vcmp.ge.f32.partialorder %v4225, 1.0
      %vm4354 = vcmp.ge.f32.partialorder %v4226, 1.0
      %vm4355 = vcmp.ge.f32.partialorder %v4227, 1.0
      %vm4356 = vcmp.ge.f32.partialorder %v4228, 1.0
      %vm4357 = vcmp.ge.f32.partialorder %v4229, 1.0
      %vm4358 = vcmp.ge.f32.partialorder %v4230, 1.0
      %vm4359 = vcmp.ge.f32.partialorder %v4231, 1.0
      %vm4360 = vcmp.ge.f32.partialorder %v4232, 1.0
      %vm4361 = vcmp.ge.f32.partialorder %v4233, 1.0
      %vm4362 = vcmp.ge.f32.partialorder %v4234, 1.0
      %vm4363 = vcmp.ge.f32.partialorder %v4235, 1.0
      %vm4364 = vcmp.ge.f32.partialorder %v4236, 1.0
      %vm4365 = vcmp.ge.f32.partialorder %v4237, 1.0
      %v4366 = vsel %vm4238, 1, 0
      %v4367 = vsel %vm4239, 1, 0
      %v4368 = vsel %vm4240, 1, 0
      %v4369 = vsel %vm4241, 1, 0
      %v4370 = vsel %vm4242, 1, 0
      %v4371 = vsel %vm4243, 1, 0
      %v4372 = vsel %vm4244, 1, 0
      %v4373 = vsel %vm4245, 1, 0
      %v4374 = vsel %vm4246, 1, 0
      %v4375 = vsel %vm4247, 1, 0
      %v4376 = vsel %vm4248, 1, 0
      %v4377 = vsel %vm4249, 1, 0
      %v4378 = vsel %vm4250, 1, 0
      %v4379 = vsel %vm4251, 1, 0
      %v4380 = vsel %vm4252, 1, 0
      %v4381 = vsel %vm4253, 1, 0
      %v4382 = vsel %vm4254, 1, 0
      %v4383 = vsel %vm4255, 1, 0
      %v4384 = vsel %vm4256, 1, 0
      %v4385 = vsel %vm4257, 1, 0
      %v4386 = vsel %vm4258, 1, 0
      %v4387 = vsel %vm4259, 1, 0
      %v4388 = vsel %vm4260, 1, 0
      %v4389 = vsel %vm4261, 1, 0
      %v4390 = vsel %vm4262, 1, 0
      %v4391 = vsel %vm4263, 1, 0
      %v4392 = vsel %vm4264, 1, 0
      %v4393 = vsel %vm4265, 1, 0
      %v4394 = vsel %vm4266, 1, 0
      %v4395 = vsel %vm4267, 1, 0
      %v4396 = vsel %vm4268, 1, 0
      %v4397 = vsel %vm4269, 1, 0
      %v4398 = vsel %vm4270, 1, 0
      %v4399 = vsel %vm4271, 1, 0
      %v4400 = vsel %vm4272, 1, 0
      %v4401 = vsel %vm4273, 1, 0
      %v4402 = vsel %vm4274, 1, 0
      %v4403 = vsel %vm4275, 1, 0
      %v4404 = vsel %vm4276, 1, 0
      %v4405 = vsel %vm4277, 1, 0
      %v4406 = vsel %vm4278, 1, 0
      %v4407 = vsel %vm4279, 1, 0
      %v4408 = vsel %vm4280, 1, 0
      %v4409 = vsel %vm4281, 1, 0
      %v4410 = vsel %vm4282, 1, 0
      %v4411 = vsel %vm4283, 1, 0
      %v4412 = vsel %vm4284, 1, 0
      %v4413 = vsel %vm4285, 1, 0
      %v4414 = vsel %vm4286, 1, 0
      %v4415 = vsel %vm4287, 1, 0
      %v4416 = vsel %vm4288, 1, 0
      %v4417 = vsel %vm4289, 1, 0
      %v4418 = vsel %vm4290, 1, 0
      %v4419 = vsel %vm4291, 1, 0
      %v4420 = vsel %vm4292, 1, 0
      %v4421 = vsel %vm4293, 1, 0
      %v4422 = vsel %vm4294, 1, 0
      %v4423 = vsel %vm4295, 1, 0
      %v4424 = vsel %vm4296, 1, 0
      %v4425 = vsel %vm4297, 1, 0
      %v4426 = vsel %vm4298, 1, 0
      %v4427 = vsel %vm4299, 1, 0
      %v4428 = vsel %vm4300, 1, 0
      %v4429 = vsel %vm4301, 1, 0
      %v4430 = vsel %vm4302, 1, 0
      %v4431 = vsel %vm4303, 1, 0
      %v4432 = vsel %vm4304, 1, 0
      %v4433 = vsel %vm4305, 1, 0
      %v4434 = vsel %vm4306, 1, 0
      %v4435 = vsel %vm4307, 1, 0
      %v4436 = vsel %vm4308, 1, 0
      %v4437 = vsel %vm4309, 1, 0
      %v4438 = vsel %vm4310, 1, 0
      %v4439 = vsel %vm4311, 1, 0
      %v4440 = vsel %vm4312, 1, 0
      %v4441 = vsel %vm4313, 1, 0
      %v4442 = vsel %vm4314, 1, 0
      %v4443 = vsel %vm4315, 1, 0
      %v4444 = vsel %vm4316, 1, 0
      %v4445 = vsel %vm4317, 1, 0
      %v4446 = vsel %vm4318, 1, 0
      %v4447 = vsel %vm4319, 1, 0
      %v4448 = vsel %vm4320, 1, 0
      %v4449 = vsel %vm4321, 1, 0
      %v4450 = vsel %vm4322, 1, 0
      %v4451 = vsel %vm4323, 1, 0
      %v4452 = vsel %vm4324, 1, 0
      %v4453 = vsel %vm4325, 1, 0
      %v4454 = vsel %vm4326, 1, 0
      %v4455 = vsel %vm4327, 1, 0
      %v4456 = vsel %vm4328, 1, 0
      %v4457 = vsel %vm4329, 1, 0
      %v4458 = vsel %vm4330, 1, 0
      %v4459 = vsel %vm4331, 1, 0
      %v4460 = vsel %vm4332, 1, 0
      %v4461 = vsel %vm4333, 1, 0
      %v4462 = vsel %vm4334, 1, 0
      %v4463 = vsel %vm4335, 1, 0
      %v4464 = vsel %vm4336, 1, 0
      %v4465 = vsel %vm4337, 1, 0
      %v4466 = vsel %vm4338, 1, 0
      %v4467 = vsel %vm4339, 1, 0
      %v4468 = vsel %vm4340, 1, 0
      %v4469 = vsel %vm4341, 1, 0
      %v4470 = vsel %vm4342, 1, 0
      %v4471 = vsel %vm4343, 1, 0
      %v4472 = vsel %vm4344, 1, 0
      %v4473 = vsel %vm4345, 1, 0
      %v4474 = vsel %vm4346, 1, 0
      %v4475 = vsel %vm4347, 1, 0
      %v4476 = vsel %vm4348, 1, 0
      %v4477 = vsel %vm4349, 1, 0
      %v4478 = vsel %vm4350, 1, 0
      %v4479 = vsel %vm4351, 1, 0
      %v4480 = vsel %vm4352, 1, 0
      %v4481 = vsel %vm4353, 1, 0
      %v4482 = vsel %vm4354, 1, 0
      %v4483 = vsel %vm4355, 1, 0
      %v4484 = vsel %vm4356, 1, 0
      %v4485 = vsel %vm4357, 1, 0
      %v4486 = vsel %vm4358, 1, 0
      %v4487 = vsel %vm4359, 1, 0
      %v4488 = vsel %vm4360, 1, 0
      %v4489 = vsel %vm4361, 1, 0
      %v4490 = vsel %vm4362, 1, 0
      %v4491 = vsel %vm4363, 1, 0
      %v4492 = vsel %vm4364, 1, 0
      %v4493 = vsel %vm4365, 1, 0
      %v4494 = vcvt.s32.f32 %v4366
      %v4495 = vcvt.s32.f32 %v4367
      %v4496 = vcvt.s32.f32 %v4368
      %v4497 = vcvt.s32.f32 %v4369
      %v4498 = vcvt.s32.f32 %v4370
      %v4499 = vcvt.s32.f32 %v4371
      %v4500 = vcvt.s32.f32 %v4372
      %v4501 = vcvt.s32.f32 %v4373
      %v4502 = vcvt.s32.f32 %v4374
      %v4503 = vcvt.s32.f32 %v4375
      %v4504 = vcvt.s32.f32 %v4376
      %v4505 = vcvt.s32.f32 %v4377
      %v4506 = vcvt.s32.f32 %v4378
      %v4507 = vcvt.s32.f32 %v4379
      %v4508 = vcvt.s32.f32 %v4380
      %v4509 = vcvt.s32.f32 %v4381
      %v4510 = vcvt.s32.f32 %v4382
      %v4511 = vcvt.s32.f32 %v4383
      %v4512 = vcvt.s32.f32 %v4384
      %v4513 = vcvt.s32.f32 %v4385
      %v4514 = vcvt.s32.f32 %v4386
      %v4515 = vcvt.s32.f32 %v4387
      %v4516 = vcvt.s32.f32 %v4388
      %v4517 = vcvt.s32.f32 %v4389
      %v4518 = vcvt.s32.f32 %v4390
      %v4519 = vcvt.s32.f32 %v4391
      %v4520 = vcvt.s32.f32 %v4392
      %v4521 = vcvt.s32.f32 %v4393
      %v4522 = vcvt.s32.f32 %v4394
      %v4523 = vcvt.s32.f32 %v4395
      %v4524 = vcvt.s32.f32 %v4396
      %v4525 = vcvt.s32.f32 %v4397
      %v4526 = vcvt.s32.f32 %v4398
      %v4527 = vcvt.s32.f32 %v4399
      %v4528 = vcvt.s32.f32 %v4400
      %v4529 = vcvt.s32.f32 %v4401
      %v4530 = vcvt.s32.f32 %v4402
      %v4531 = vcvt.s32.f32 %v4403
      %v4532 = vcvt.s32.f32 %v4404
      %v4533 = vcvt.s32.f32 %v4405
      %v4534 = vcvt.s32.f32 %v4406
      %v4535 = vcvt.s32.f32 %v4407
      %v4536 = vcvt.s32.f32 %v4408
      %v4537 = vcvt.s32.f32 %v4409
      %v4538 = vcvt.s32.f32 %v4410
      %v4539 = vcvt.s32.f32 %v4411
      %v4540 = vcvt.s32.f32 %v4412
      %v4541 = vcvt.s32.f32 %v4413
      %v4542 = vcvt.s32.f32 %v4414
      %v4543 = vcvt.s32.f32 %v4415
      %v4544 = vcvt.s32.f32 %v4416
      %v4545 = vcvt.s32.f32 %v4417
      %v4546 = vcvt.s32.f32 %v4418
      %v4547 = vcvt.s32.f32 %v4419
      %v4548 = vcvt.s32.f32 %v4420
      %v4549 = vcvt.s32.f32 %v4421
      %v4550 = vcvt.s32.f32 %v4422
      %v4551 = vcvt.s32.f32 %v4423
      %v4552 = vcvt.s32.f32 %v4424
      %v4553 = vcvt.s32.f32 %v4425
      %v4554 = vcvt.s32.f32 %v4426
      %v4555 = vcvt.s32.f32 %v4427
      %v4556 = vcvt.s32.f32 %v4428
      %v4557 = vcvt.s32.f32 %v4429
      %v4558 = vcvt.s32.f32 %v4430
      %v4559 = vcvt.s32.f32 %v4431
      %v4560 = vcvt.s32.f32 %v4432
      %v4561 = vcvt.s32.f32 %v4433
      %v4562 = vcvt.s32.f32 %v4434
      %v4563 = vcvt.s32.f32 %v4435
      %v4564 = vcvt.s32.f32 %v4436
      %v4565 = vcvt.s32.f32 %v4437
      %v4566 = vcvt.s32.f32 %v4438
      %v4567 = vcvt.s32.f32 %v4439
      %v4568 = vcvt.s32.f32 %v4440
      %v4569 = vcvt.s32.f32 %v4441
      %v4570 = vcvt.s32.f32 %v4442
      %v4571 = vcvt.s32.f32 %v4443
      %v4572 = vcvt.s32.f32 %v4444
      %v4573 = vcvt.s32.f32 %v4445
      %v4574 = vcvt.s32.f32 %v4446
      %v4575 = vcvt.s32.f32 %v4447
      %v4576 = vcvt.s32.f32 %v4448
      %v4577 = vcvt.s32.f32 %v4449
      %v4578 = vcvt.s32.f32 %v4450
      %v4579 = vcvt.s32.f32 %v4451
      %v4580 = vcvt.s32.f32 %v4452
      %v4581 = vcvt.s32.f32 %v4453
      %v4582 = vcvt.s32.f32 %v4454
      %v4583 = vcvt.s32.f32 %v4455
      %v4584 = vcvt.s32.f32 %v4456
      %v4585 = vcvt.s32.f32 %v4457
      %v4586 = vcvt.s32.f32 %v4458
      %v4587 = vcvt.s32.f32 %v4459
      %v4588 = vcvt.s32.f32 %v4460
      %v4589 = vcvt.s32.f32 %v4461
      %v4590 = vcvt.s32.f32 %v4462
      %v4591 = vcvt.s32.f32 %v4463
      %v4592 = vcvt.s32.f32 %v4464
      %v4593 = vcvt.s32.f32 %v4465
      %v4594 = vcvt.s32.f32 %v4466
      %v4595 = vcvt.s32.f32 %v4467
      %v4596 = vcvt.s32.f32 %v4468
      %v4597 = vcvt.s32.f32 %v4469
      %v4598 = vcvt.s32.f32 %v4470
      %v4599 = vcvt.s32.f32 %v4471
      %v4600 = vcvt.s32.f32 %v4472
      %v4601 = vcvt.s32.f32 %v4473
      %v4602 = vcvt.s32.f32 %v4474
      %v4603 = vcvt.s32.f32 %v4475
      %v4604 = vcvt.s32.f32 %v4476
      %v4605 = vcvt.s32.f32 %v4477
      %v4606 = vcvt.s32.f32 %v4478
      %v4607 = vcvt.s32.f32 %v4479
      %v4608 = vcvt.s32.f32 %v4480
      %v4609 = vcvt.s32.f32 %v4481
      %v4610 = vcvt.s32.f32 %v4482
      %v4611 = vcvt.s32.f32 %v4483
      %v4612 = vcvt.s32.f32 %v4484
      %v4613 = vcvt.s32.f32 %v4485
      %v4614 = vcvt.s32.f32 %v4486
      %v4615 = vcvt.s32.f32 %v4487
      %v4616 = vcvt.s32.f32 %v4488
      %v4617 = vcvt.s32.f32 %v4489
      %v4618 = vcvt.s32.f32 %v4490
      %v4619 = vcvt.s32.f32 %v4491
      %v4620 = vcvt.s32.f32 %v4492
      %v4621 = vcvt.s32.f32 %v4493
      %v4622 = vsub.f32 1.0, %v4494
      %v4623 = vsub.f32 1.0, %v4495
      %v4624 = vsub.f32 1.0, %v4496
      %v4625 = vsub.f32 1.0, %v4497
      %v4626 = vsub.f32 1.0, %v4498
      %v4627 = vsub.f32 1.0, %v4499
      %v4628 = vsub.f32 1.0, %v4500
      %v4629 = vsub.f32 1.0, %v4501
      %v4630 = vsub.f32 1.0, %v4502
      %v4631 = vsub.f32 1.0, %v4503
      %v4632 = vsub.f32 1.0, %v4504
      %v4633 = vsub.f32 1.0, %v4505
      %v4634 = vsub.f32 1.0, %v4506
      %v4635 = vsub.f32 1.0, %v4507
      %v4636 = vsub.f32 1.0, %v4508
      %v4637 = vsub.f32 1.0, %v4509
      %v4638 = vsub.f32 1.0, %v4510
      %v4639 = vsub.f32 1.0, %v4511
      %v4640 = vsub.f32 1.0, %v4512
      %v4641 = vsub.f32 1.0, %v4513
      %v4642 = vsub.f32 1.0, %v4514
      %v4643 = vsub.f32 1.0, %v4515
      %v4644 = vsub.f32 1.0, %v4516
      %v4645 = vsub.f32 1.0, %v4517
      %v4646 = vsub.f32 1.0, %v4518
      %v4647 = vsub.f32 1.0, %v4519
      %v4648 = vsub.f32 1.0, %v4520
      %v4649 = vsub.f32 1.0, %v4521
      %v4650 = vsub.f32 1.0, %v4522
      %v4651 = vsub.f32 1.0, %v4523
      %v4652 = vsub.f32 1.0, %v4524
      %v4653 = vsub.f32 1.0, %v4525
      %v4654 = vsub.f32 1.0, %v4526
      %v4655 = vsub.f32 1.0, %v4527
      %v4656 = vsub.f32 1.0, %v4528
      %v4657 = vsub.f32 1.0, %v4529
      %v4658 = vsub.f32 1.0, %v4530
      %v4659 = vsub.f32 1.0, %v4531
      %v4660 = vsub.f32 1.0, %v4532
      %v4661 = vsub.f32 1.0, %v4533
      %v4662 = vsub.f32 1.0, %v4534
      %v4663 = vsub.f32 1.0, %v4535
      %v4664 = vsub.f32 1.0, %v4536
      %v4665 = vsub.f32 1.0, %v4537
      %v4666 = vsub.f32 1.0, %v4538
      %v4667 = vsub.f32 1.0, %v4539
      %v4668 = vsub.f32 1.0, %v4540
      %v4669 = vsub.f32 1.0, %v4541
      %v4670 = vsub.f32 1.0, %v4542
      %v4671 = vsub.f32 1.0, %v4543
      %v4672 = vsub.f32 1.0, %v4544
      %v4673 = vsub.f32 1.0, %v4545
      %v4674 = vsub.f32 1.0, %v4546
      %v4675 = vsub.f32 1.0, %v4547
      %v4676 = vsub.f32 1.0, %v4548
      %v4677 = vsub.f32 1.0, %v4549
      %v4678 = vsub.f32 1.0, %v4550
      %v4679 = vsub.f32 1.0, %v4551
      %v4680 = vsub.f32 1.0, %v4552
      %v4681 = vsub.f32 1.0, %v4553
      %v4682 = vsub.f32 1.0, %v4554
      %v4683 = vsub.f32 1.0, %v4555
      %v4684 = vsub.f32 1.0, %v4556
      %v4685 = vsub.f32 1.0, %v4557
      %v4686 = vsub.f32 1.0, %v4558
      %v4687 = vsub.f32 1.0, %v4559
      %v4688 = vsub.f32 1.0, %v4560
      %v4689 = vsub.f32 1.0, %v4561
      %v4690 = vsub.f32 1.0, %v4562
      %v4691 = vsub.f32 1.0, %v4563
      %v4692 = vsub.f32 1.0, %v4564
      %v4693 = vsub.f32 1.0, %v4565
      %v4694 = vsub.f32 1.0, %v4566
      %v4695 = vsub.f32 1.0, %v4567
      %v4696 = vsub.f32 1.0, %v4568
      %v4697 = vsub.f32 1.0, %v4569
      %v4698 = vsub.f32 1.0, %v4570
      %v4699 = vsub.f32 1.0, %v4571
      %v4700 = vsub.f32 1.0, %v4572
      %v4701 = vsub.f32 1.0, %v4573
      %v4702 = vsub.f32 1.0, %v4574
      %v4703 = vsub.f32 1.0, %v4575
      %v4704 = vsub.f32 1.0, %v4576
      %v4705 = vsub.f32 1.0, %v4577
      %v4706 = vsub.f32 1.0, %v4578
      %v4707 = vsub.f32 1.0, %v4579
      %v4708 = vsub.f32 1.0, %v4580
      %v4709 = vsub.f32 1.0, %v4581
      %v4710 = vsub.f32 1.0, %v4582
      %v4711 = vsub.f32 1.0, %v4583
      %v4712 = vsub.f32 1.0, %v4584
      %v4713 = vsub.f32 1.0, %v4585
      %v4714 = vsub.f32 1.0, %v4586
      %v4715 = vsub.f32 1.0, %v4587
      %v4716 = vsub.f32 1.0, %v4588
      %v4717 = vsub.f32 1.0, %v4589
      %v4718 = vsub.f32 1.0, %v4590
      %v4719 = vsub.f32 1.0, %v4591
      %v4720 = vsub.f32 1.0, %v4592
      %v4721 = vsub.f32 1.0, %v4593
      %v4722 = vsub.f32 1.0, %v4594
      %v4723 = vsub.f32 1.0, %v4595
      %v4724 = vsub.f32 1.0, %v4596
      %v4725 = vsub.f32 1.0, %v4597
      %v4726 = vsub.f32 1.0, %v4598
      %v4727 = vsub.f32 1.0, %v4599
      %v4728 = vsub.f32 1.0, %v4600
      %v4729 = vsub.f32 1.0, %v4601
      %v4730 = vsub.f32 1.0, %v4602
      %v4731 = vsub.f32 1.0, %v4603
      %v4732 = vsub.f32 1.0, %v4604
      %v4733 = vsub.f32 1.0, %v4605
      %v4734 = vsub.f32 1.0, %v4606
      %v4735 = vsub.f32 1.0, %v4607
      %v4736 = vsub.f32 1.0, %v4608
      %v4737 = vsub.f32 1.0, %v4609
      %v4738 = vsub.f32 1.0, %v4610
      %v4739 = vsub.f32 1.0, %v4611
      %v4740 = vsub.f32 1.0, %v4612
      %v4741 = vsub.f32 1.0, %v4613
      %v4742 = vsub.f32 1.0, %v4614
      %v4743 = vsub.f32 1.0, %v4615
      %v4744 = vsub.f32 1.0, %v4616
      %v4745 = vsub.f32 1.0, %v4617
      %v4746 = vsub.f32 1.0, %v4618
      %v4747 = vsub.f32 1.0, %v4619
      %v4748 = vsub.f32 1.0, %v4620
      %v4749 = vsub.f32 1.0, %v4621
      %v4750 = vmul.f32 %v4110, %v4622
      %v4751 = vmul.f32 %v4111, %v4623
      %v4752 = vmul.f32 %v4112, %v4624
      %v4753 = vmul.f32 %v4113, %v4625
      %v4754 = vmul.f32 %v4114, %v4626
      %v4755 = vmul.f32 %v4115, %v4627
      %v4756 = vmul.f32 %v4116, %v4628
      %v4757 = vmul.f32 %v4117, %v4629
      %v4758 = vmul.f32 %v4118, %v4630
      %v4759 = vmul.f32 %v4119, %v4631
      %v4760 = vmul.f32 %v4120, %v4632
      %v4761 = vmul.f32 %v4121, %v4633
      %v4762 = vmul.f32 %v4122, %v4634
      %v4763 = vmul.f32 %v4123, %v4635
      %v4764 = vmul.f32 %v4124, %v4636
      %v4765 = vmul.f32 %v4125, %v4637
      %v4766 = vmul.f32 %v4126, %v4638
      %v4767 = vmul.f32 %v4127, %v4639
      %v4768 = vmul.f32 %v4128, %v4640
      %v4769 = vmul.f32 %v4129, %v4641
      %v4770 = vmul.f32 %v4130, %v4642
      %v4771 = vmul.f32 %v4131, %v4643
      %v4772 = vmul.f32 %v4132, %v4644
      %v4773 = vmul.f32 %v4133, %v4645
      %v4774 = vmul.f32 %v4134, %v4646
      %v4775 = vmul.f32 %v4135, %v4647
      %v4776 = vmul.f32 %v4136, %v4648
      %v4777 = vmul.f32 %v4137, %v4649
      %v4778 = vmul.f32 %v4138, %v4650
      %v4779 = vmul.f32 %v4139, %v4651
      %v4780 = vmul.f32 %v4140, %v4652
      %v4781 = vmul.f32 %v4141, %v4653
      %v4782 = vmul.f32 %v4142, %v4654
      %v4783 = vmul.f32 %v4143, %v4655
      %v4784 = vmul.f32 %v4144, %v4656
      %v4785 = vmul.f32 %v4145, %v4657
      %v4786 = vmul.f32 %v4146, %v4658
      %v4787 = vmul.f32 %v4147, %v4659
      %v4788 = vmul.f32 %v4148, %v4660
      %v4789 = vmul.f32 %v4149, %v4661
      %v4790 = vmul.f32 %v4150, %v4662
      %v4791 = vmul.f32 %v4151, %v4663
      %v4792 = vmul.f32 %v4152, %v4664
      %v4793 = vmul.f32 %v4153, %v4665
      %v4794 = vmul.f32 %v4154, %v4666
      %v4795 = vmul.f32 %v4155, %v4667
      %v4796 = vmul.f32 %v4156, %v4668
      %v4797 = vmul.f32 %v4157, %v4669
      %v4798 = vmul.f32 %v4158, %v4670
      %v4799 = vmul.f32 %v4159, %v4671
      %v4800 = vmul.f32 %v4160, %v4672
      %v4801 = vmul.f32 %v4161, %v4673
      %v4802 = vmul.f32 %v4162, %v4674
      %v4803 = vmul.f32 %v4163, %v4675
      %v4804 = vmul.f32 %v4164, %v4676
      %v4805 = vmul.f32 %v4165, %v4677
      %v4806 = vmul.f32 %v4166, %v4678
      %v4807 = vmul.f32 %v4167, %v4679
      %v4808 = vmul.f32 %v4168, %v4680
      %v4809 = vmul.f32 %v4169, %v4681
      %v4810 = vmul.f32 %v4170, %v4682
      %v4811 = vmul.f32 %v4171, %v4683
      %v4812 = vmul.f32 %v4172, %v4684
      %v4813 = vmul.f32 %v4173, %v4685
      %v4814 = vmul.f32 %v4174, %v4686
      %v4815 = vmul.f32 %v4175, %v4687
      %v4816 = vmul.f32 %v4176, %v4688
      %v4817 = vmul.f32 %v4177, %v4689
      %v4818 = vmul.f32 %v4178, %v4690
      %v4819 = vmul.f32 %v4179, %v4691
      %v4820 = vmul.f32 %v4180, %v4692
      %v4821 = vmul.f32 %v4181, %v4693
      %v4822 = vmul.f32 %v4182, %v4694
      %v4823 = vmul.f32 %v4183, %v4695
      %v4824 = vmul.f32 %v4184, %v4696
      %v4825 = vmul.f32 %v4185, %v4697
      %v4826 = vmul.f32 %v4186, %v4698
      %v4827 = vmul.f32 %v4187, %v4699
      %v4828 = vmul.f32 %v4188, %v4700
      %v4829 = vmul.f32 %v4189, %v4701
      %v4830 = vmul.f32 %v4190, %v4702
      %v4831 = vmul.f32 %v4191, %v4703
      %v4832 = vmul.f32 %v4192, %v4704
      %v4833 = vmul.f32 %v4193, %v4705
      %v4834 = vmul.f32 %v4194, %v4706
      %v4835 = vmul.f32 %v4195, %v4707
      %v4836 = vmul.f32 %v4196, %v4708
      %v4837 = vmul.f32 %v4197, %v4709
      %v4838 = vmul.f32 %v4198, %v4710
      %v4839 = vmul.f32 %v4199, %v4711
      %v4840 = vmul.f32 %v4200, %v4712
      %v4841 = vmul.f32 %v4201, %v4713
      %v4842 = vmul.f32 %v4202, %v4714
      %v4843 = vmul.f32 %v4203, %v4715
      %v4844 = vmul.f32 %v4204, %v4716
      %v4845 = vmul.f32 %v4205, %v4717
      %v4846 = vmul.f32 %v4206, %v4718
      %v4847 = vmul.f32 %v4207, %v4719
      %v4848 = vmul.f32 %v4208, %v4720
      %v4849 = vmul.f32 %v4209, %v4721
      %v4850 = vmul.f32 %v4210, %v4722
      %v4851 = vmul.f32 %v4211, %v4723
      %v4852 = vmul.f32 %v4212, %v4724
      %v4853 = vmul.f32 %v4213, %v4725
      %v4854 = vmul.f32 %v4214, %v4726
      %v4855 = vmul.f32 %v4215, %v4727
      %v4856 = vmul.f32 %v4216, %v4728
      %v4857 = vmul.f32 %v4217, %v4729
      %v4858 = vmul.f32 %v4218, %v4730
      %v4859 = vmul.f32 %v4219, %v4731
      %v4860 = vmul.f32 %v4220, %v4732
      %v4861 = vmul.f32 %v4221, %v4733
      %v4862 = vmul.f32 %v4222, %v4734
      %v4863 = vmul.f32 %v4223, %v4735
      %v4864 = vmul.f32 %v4224, %v4736
      %v4865 = vmul.f32 %v4225, %v4737
      %v4866 = vmul.f32 %v4226, %v4738
      %v4867 = vmul.f32 %v4227, %v4739
      %v4868 = vmul.f32 %v4228, %v4740
      %v4869 = vmul.f32 %v4229, %v4741
      %v4870 = vmul.f32 %v4230, %v4742
      %v4871 = vmul.f32 %v4231, %v4743
      %v4872 = vmul.f32 %v4232, %v4744
      %v4873 = vmul.f32 %v4233, %v4745
      %v4874 = vmul.f32 %v4234, %v4746
      %v4875 = vmul.f32 %v4235, %v4747
      %v4876 = vmul.f32 %v4236, %v4748
      %v4877 = vmul.f32 %v4237, %v4749
      %vm4878 = vcmask 31744
      %4879 = vst.msk [vmem:[#allocation2] sm:$0xff] %vm4878, %v4750
      %4880 = vst.msk [vmem:[#allocation2 + $0x8] sm:$0xff] %vm4878, %v4751
      %4881 = vst.msk [vmem:[#allocation2 + $0x10] sm:$0xff] %vm4878, %v4752
      %4882 = vst.msk [vmem:[#allocation2 + $0x18] sm:$0xff] %vm4878, %v4753
      %4883 = vst.msk [vmem:[#allocation2 + $0x20] sm:$0xff] %vm4878, %v4754
      %4884 = vst.msk [vmem:[#allocation2 + $0x28] sm:$0xff] %vm4878, %v4755
      %4885 = vst.msk [vmem:[#allocation2 + $0x30] sm:$0xff] %vm4878, %v4756
      %4886 = vst.msk [vmem:[#allocation2 + $0x38] sm:$0xff] %vm4878, %v4757
      %4887 = vst.msk [vmem:[#allocation2 + $0x40] sm:$0xff] %vm4878, %v4758
      %4888 = vst.msk [vmem:[#allocation2 + $0x48] sm:$0xff] %vm4878, %v4759
      %4889 = vst.msk [vmem:[#allocation2 + $0x50] sm:$0xff] %vm4878, %v4760
      %4890 = vst.msk [vmem:[#allocation2 + $0x58] sm:$0xff] %vm4878, %v4761
      %4891 = vst.msk [vmem:[#allocation2 + $0x60] sm:$0xff] %vm4878, %v4762
      %4892 = vst.msk [vmem:[#allocation2 + $0x68] sm:$0xff] %vm4878, %v4763
      %4893 = vst.msk [vmem:[#allocation2 + $0x70] sm:$0xff] %vm4878, %v4764
      %4894 = vst.msk [vmem:[#allocation2 + $0x78] sm:$0xff] %vm4878, %v4765
      %4895 = vst.msk [vmem:[#allocation2 + $0x80] sm:$0xff] %vm4878, %v4766
      %4896 = vst.msk [vmem:[#allocation2 + $0x88] sm:$0xff] %vm4878, %v4767
      %4897 = vst.msk [vmem:[#allocation2 + $0x90] sm:$0xff] %vm4878, %v4768
      %4898 = vst.msk [vmem:[#allocation2 + $0x98] sm:$0xff] %vm4878, %v4769
      %4899 = vst.msk [vmem:[#allocation2 + $0xa0] sm:$0xff] %vm4878, %v4770
      %4900 = vst.msk [vmem:[#allocation2 + $0xa8] sm:$0xff] %vm4878, %v4771
      %4901 = vst.msk [vmem:[#allocation2 + $0xb0] sm:$0xff] %vm4878, %v4772
      %4902 = vst.msk [vmem:[#allocation2 + $0xb8] sm:$0xff] %vm4878, %v4773
      %4903 = vst.msk [vmem:[#allocation2 + $0xc0] sm:$0xff] %vm4878, %v4774
      %4904 = vst.msk [vmem:[#allocation2 + $0xc8] sm:$0xff] %vm4878, %v4775
      %4905 = vst.msk [vmem:[#allocation2 + $0xd0] sm:$0xff] %vm4878, %v4776
      %4906 = vst.msk [vmem:[#allocation2 + $0xd8] sm:$0xff] %vm4878, %v4777
      %4907 = vst.msk [vmem:[#allocation2 + $0xe0] sm:$0xff] %vm4878, %v4778
      %4908 = vst.msk [vmem:[#allocation2 + $0xe8] sm:$0xff] %vm4878, %v4779
      %4909 = vst.msk [vmem:[#allocation2 + $0xf0] sm:$0xff] %vm4878, %v4780
      %4910 = vst.msk [vmem:[#allocation2 + $0xf8] sm:$0xff] %vm4878, %v4781
      %4911 = vst.msk [vmem:[#allocation2 + $0x100] sm:$0xff] %vm4878, %v4782
      %4912 = vst.msk [vmem:[#allocation2 + $0x108] sm:$0xff] %vm4878, %v4783
      %4913 = vst.msk [vmem:[#allocation2 + $0x110] sm:$0xff] %vm4878, %v4784
      %4914 = vst.msk [vmem:[#allocation2 + $0x118] sm:$0xff] %vm4878, %v4785
      %4915 = vst.msk [vmem:[#allocation2 + $0x120] sm:$0xff] %vm4878, %v4786
      %4916 = vst.msk [vmem:[#allocation2 + $0x128] sm:$0xff] %vm4878, %v4787
      %4917 = vst.msk [vmem:[#allocation2 + $0x130] sm:$0xff] %vm4878, %v4788
      %4918 = vst.msk [vmem:[#allocation2 + $0x138] sm:$0xff] %vm4878, %v4789
      %4919 = vst.msk [vmem:[#allocation2 + $0x140] sm:$0xff] %vm4878, %v4790
      %4920 = vst.msk [vmem:[#allocation2 + $0x148] sm:$0xff] %vm4878, %v4791
      %4921 = vst.msk [vmem:[#allocation2 + $0x150] sm:$0xff] %vm4878, %v4792
      %4922 = vst.msk [vmem:[#allocation2 + $0x158] sm:$0xff] %vm4878, %v4793
      %4923 = vst.msk [vmem:[#allocation2 + $0x160] sm:$0xff] %vm4878, %v4794
      %4924 = vst.msk [vmem:[#allocation2 + $0x168] sm:$0xff] %vm4878, %v4795
      %4925 = vst.msk [vmem:[#allocation2 + $0x170] sm:$0xff] %vm4878, %v4796
      %4926 = vst.msk [vmem:[#allocation2 + $0x178] sm:$0xff] %vm4878, %v4797
      %4927 = vst.msk [vmem:[#allocation2 + $0x180] sm:$0xff] %vm4878, %v4798
      %4928 = vst.msk [vmem:[#allocation2 + $0x188] sm:$0xff] %vm4878, %v4799
      %4929 = vst.msk [vmem:[#allocation2 + $0x190] sm:$0xff] %vm4878, %v4800
      %4930 = vst.msk [vmem:[#allocation2 + $0x198] sm:$0xff] %vm4878, %v4801
      %4931 = vst.msk [vmem:[#allocation2 + $0x1a0] sm:$0xff] %vm4878, %v4802
      %4932 = vst.msk [vmem:[#allocation2 + $0x1a8] sm:$0xff] %vm4878, %v4803
      %4933 = vst.msk [vmem:[#allocation2 + $0x1b0] sm:$0xff] %vm4878, %v4804
      %4934 = vst.msk [vmem:[#allocation2 + $0x1b8] sm:$0xff] %vm4878, %v4805
      %4935 = vst.msk [vmem:[#allocation2 + $0x1c0] sm:$0xff] %vm4878, %v4806
      %4936 = vst.msk [vmem:[#allocation2 + $0x1c8] sm:$0xff] %vm4878, %v4807
      %4937 = vst.msk [vmem:[#allocation2 + $0x1d0] sm:$0xff] %vm4878, %v4808
      %4938 = vst.msk [vmem:[#allocation2 + $0x1d8] sm:$0xff] %vm4878, %v4809
      %4939 = vst.msk [vmem:[#allocation2 + $0x1e0] sm:$0xff] %vm4878, %v4810
      %4940 = vst.msk [vmem:[#allocation2 + $0x1e8] sm:$0xff] %vm4878, %v4811
      %4941 = vst.msk [vmem:[#allocation2 + $0x1f0] sm:$0xff] %vm4878, %v4812
      %4942 = vst.msk [vmem:[#allocation2 + $0x1f8] sm:$0xff] %vm4878, %v4813
      %4943 = vst.msk [vmem:[#allocation2 + $0x200] sm:$0xff] %vm4878, %v4814
      %4944 = vst.msk [vmem:[#allocation2 + $0x208] sm:$0xff] %vm4878, %v4815
      %4945 = vst.msk [vmem:[#allocation2 + $0x210] sm:$0xff] %vm4878, %v4816
      %4946 = vst.msk [vmem:[#allocation2 + $0x218] sm:$0xff] %vm4878, %v4817
      %4947 = vst.msk [vmem:[#allocation2 + $0x220] sm:$0xff] %vm4878, %v4818
      %4948 = vst.msk [vmem:[#allocation2 + $0x228] sm:$0xff] %vm4878, %v4819
      %4949 = vst.msk [vmem:[#allocation2 + $0x230] sm:$0xff] %vm4878, %v4820
      %4950 = vst.msk [vmem:[#allocation2 + $0x238] sm:$0xff] %vm4878, %v4821
      %4951 = vst.msk [vmem:[#allocation2 + $0x240] sm:$0xff] %vm4878, %v4822
      %4952 = vst.msk [vmem:[#allocation2 + $0x248] sm:$0xff] %vm4878, %v4823
      %4953 = vst.msk [vmem:[#allocation2 + $0x250] sm:$0xff] %vm4878, %v4824
      %4954 = vst.msk [vmem:[#allocation2 + $0x258] sm:$0xff] %vm4878, %v4825
      %4955 = vst.msk [vmem:[#allocation2 + $0x260] sm:$0xff] %vm4878, %v4826
      %4956 = vst.msk [vmem:[#allocation2 + $0x268] sm:$0xff] %vm4878, %v4827
      %4957 = vst.msk [vmem:[#allocation2 + $0x270] sm:$0xff] %vm4878, %v4828
      %4958 = vst.msk [vmem:[#allocation2 + $0x278] sm:$0xff] %vm4878, %v4829
      %4959 = vst.msk [vmem:[#allocation2 + $0x280] sm:$0xff] %vm4878, %v4830
      %4960 = vst.msk [vmem:[#allocation2 + $0x288] sm:$0xff] %vm4878, %v4831
      %4961 = vst.msk [vmem:[#allocation2 + $0x290] sm:$0xff] %vm4878, %v4832
      %4962 = vst.msk [vmem:[#allocation2 + $0x298] sm:$0xff] %vm4878, %v4833
      %4963 = vst.msk [vmem:[#allocation2 + $0x2a0] sm:$0xff] %vm4878, %v4834
      %4964 = vst.msk [vmem:[#allocation2 + $0x2a8] sm:$0xff] %vm4878, %v4835
      %4965 = vst.msk [vmem:[#allocation2 + $0x2b0] sm:$0xff] %vm4878, %v4836
      %4966 = vst.msk [vmem:[#allocation2 + $0x2b8] sm:$0xff] %vm4878, %v4837
      %4967 = vst.msk [vmem:[#allocation2 + $0x2c0] sm:$0xff] %vm4878, %v4838
      %4968 = vst.msk [vmem:[#allocation2 + $0x2c8] sm:$0xff] %vm4878, %v4839
      %4969 = vst.msk [vmem:[#allocation2 + $0x2d0] sm:$0xff] %vm4878, %v4840
      %4970 = vst.msk [vmem:[#allocation2 + $0x2d8] sm:$0xff] %vm4878, %v4841
      %4971 = vst.msk [vmem:[#allocation2 + $0x2e0] sm:$0xff] %vm4878, %v4842
      %4972 = vst.msk [vmem:[#allocation2 + $0x2e8] sm:$0xff] %vm4878, %v4843
      %4973 = vst.msk [vmem:[#allocation2 + $0x2f0] sm:$0xff] %vm4878, %v4844
      %4974 = vst.msk [vmem:[#allocation2 + $0x2f8] sm:$0xff] %vm4878, %v4845
      %4975 = vst.msk [vmem:[#allocation2 + $0x300] sm:$0xff] %vm4878, %v4846
      %4976 = vst.msk [vmem:[#allocation2 + $0x308] sm:$0xff] %vm4878, %v4847
      %4977 = vst.msk [vmem:[#allocation2 + $0x310] sm:$0xff] %vm4878, %v4848
      %4978 = vst.msk [vmem:[#allocation2 + $0x318] sm:$0xff] %vm4878, %v4849
      %4979 = vst.msk [vmem:[#allocation2 + $0x320] sm:$0xff] %vm4878, %v4850
      %4980 = vst.msk [vmem:[#allocation2 + $0x328] sm:$0xff] %vm4878, %v4851
      %4981 = vst.msk [vmem:[#allocation2 + $0x330] sm:$0xff] %vm4878, %v4852
      %4982 = vst.msk [vmem:[#allocation2 + $0x338] sm:$0xff] %vm4878, %v4853
      %4983 = vst.msk [vmem:[#allocation2 + $0x340] sm:$0xff] %vm4878, %v4854
      %4984 = vst.msk [vmem:[#allocation2 + $0x348] sm:$0xff] %vm4878, %v4855
      %4985 = vst.msk [vmem:[#allocation2 + $0x350] sm:$0xff] %vm4878, %v4856
      %4986 = vst.msk [vmem:[#allocation2 + $0x358] sm:$0xff] %vm4878, %v4857
      %4987 = vst.msk [vmem:[#allocation2 + $0x360] sm:$0xff] %vm4878, %v4858
      %4988 = vst.msk [vmem:[#allocation2 + $0x368] sm:$0xff] %vm4878, %v4859
      %4989 = vst.msk [vmem:[#allocation2 + $0x370] sm:$0xff] %vm4878, %v4860
      %4990 = vst.msk [vmem:[#allocation2 + $0x378] sm:$0xff] %vm4878, %v4861
      %4991 = vst.msk [vmem:[#allocation2 + $0x380] sm:$0xff] %vm4878, %v4862
      %4992 = vst.msk [vmem:[#allocation2 + $0x388] sm:$0xff] %vm4878, %v4863
      %4993 = vst.msk [vmem:[#allocation2 + $0x390] sm:$0xff] %vm4878, %v4864
      %4994 = vst.msk [vmem:[#allocation2 + $0x398] sm:$0xff] %vm4878, %v4865
      %4995 = vst.msk [vmem:[#allocation2 + $0x3a0] sm:$0xff] %vm4878, %v4866
      %4996 = vst.msk [vmem:[#allocation2 + $0x3a8] sm:$0xff] %vm4878, %v4867
      %4997 = vst.msk [vmem:[#allocation2 + $0x3b0] sm:$0xff] %vm4878, %v4868
      %4998 = vst.msk [vmem:[#allocation2 + $0x3b8] sm:$0xff] %vm4878, %v4869
      %4999 = vst.msk [vmem:[#allocation2 + $0x3c0] sm:$0xff] %vm4878, %v4870
      %5000 = vst.msk [vmem:[#allocation2 + $0x3c8] sm:$0xff] %vm4878, %v4871
      %5001 = vst.msk [vmem:[#allocation2 + $0x3d0] sm:$0xff] %vm4878, %v4872
      %5002 = vst.msk [vmem:[#allocation2 + $0x3d8] sm:$0xff] %vm4878, %v4873
      %5003 = vst.msk [vmem:[#allocation2 + $0x3e0] sm:$0xff] %vm4878, %v4874
      %5004 = vst.msk [vmem:[#allocation2 + $0x3e8] sm:$0xff] %vm4878, %v4875
      %5005 = vst.msk [vmem:[#allocation2 + $0x3f0] sm:$0xff] %vm4878, %v4876
      %5006 = vst.msk [vmem:[#allocation2 + $0x3f8] sm:$0xff] %vm4878, %v4877
      %s5007 = scalar_lea.vmem [#allocation3], 40
      %5008 = vst.msk [vmem:[%s5007 + $0x1] sm:$0xff] %vm4878, %v4494
      %5009 = vst.msk [vmem:[%s5007 + $0x9] sm:$0xff] %vm4878, %v4495
      %5010 = vst.msk [vmem:[%s5007 + $0x11] sm:$0xff] %vm4878, %v4496
      %5011 = vst.msk [vmem:[%s5007 + $0x19] sm:$0xff] %vm4878, %v4497
      %5012 = vst.msk [vmem:[%s5007 + $0x29] sm:$0xff] %vm4878, %v4498
      %5013 = vst.msk [vmem:[%s5007 + $0x31] sm:$0xff] %vm4878, %v4499
      %5014 = vst.msk [vmem:[%s5007 + $0x39] sm:$0xff] %vm4878, %v4500
      %5015 = vst.msk [vmem:[%s5007 + $0x41] sm:$0xff] %vm4878, %v4501
      %5016 = vst.msk [vmem:[%s5007 + $0x51] sm:$0xff] %vm4878, %v4502
      %5017 = vst.msk [vmem:[%s5007 + $0x59] sm:$0xff] %vm4878, %v4503
      %5018 = vst.msk [vmem:[%s5007 + $0x61] sm:$0xff] %vm4878, %v4504
      %5019 = vst.msk [vmem:[%s5007 + $0x69] sm:$0xff] %vm4878, %v4505
      %5020 = vst.msk [vmem:[%s5007 + $0x79] sm:$0xff] %vm4878, %v4506
      %5021 = vst.msk [vmem:[%s5007 + $0x81] sm:$0xff] %vm4878, %v4507
      %5022 = vst.msk [vmem:[%s5007 + $0x89] sm:$0xff] %vm4878, %v4508
      %5023 = vst.msk [vmem:[%s5007 + $0x91] sm:$0xff] %vm4878, %v4509
      %5024 = vst.msk [vmem:[%s5007 + $0xa1] sm:$0xff] %vm4878, %v4510
      %5025 = vst.msk [vmem:[%s5007 + $0xa9] sm:$0xff] %vm4878, %v4511
      %5026 = vst.msk [vmem:[%s5007 + $0xb1] sm:$0xff] %vm4878, %v4512
      %5027 = vst.msk [vmem:[%s5007 + $0xb9] sm:$0xff] %vm4878, %v4513
      %5028 = vst.msk [vmem:[%s5007 + $0xc9] sm:$0xff] %vm4878, %v4514
      %5029 = vst.msk [vmem:[%s5007 + $0xd1] sm:$0xff] %vm4878, %v4515
      %5030 = vst.msk [vmem:[%s5007 + $0xd9] sm:$0xff] %vm4878, %v4516
      %5031 = vst.msk [vmem:[%s5007 + $0xe1] sm:$0xff] %vm4878, %v4517
      %5032 = vst.msk [vmem:[%s5007 + $0xf1] sm:$0xff] %vm4878, %v4518
      %5033 = vst.msk [vmem:[%s5007 + $0xf9] sm:$0xff] %vm4878, %v4519
      %5034 = vst.msk [vmem:[%s5007 + $0x101] sm:$0xff] %vm4878, %v4520
      %5035 = vst.msk [vmem:[%s5007 + $0x109] sm:$0xff] %vm4878, %v4521
      %5036 = vst.msk [vmem:[%s5007 + $0x119] sm:$0xff] %vm4878, %v4522
      %5037 = vst.msk [vmem:[%s5007 + $0x121] sm:$0xff] %vm4878, %v4523
      %5038 = vst.msk [vmem:[%s5007 + $0x129] sm:$0xff] %vm4878, %v4524
      %5039 = vst.msk [vmem:[%s5007 + $0x131] sm:$0xff] %vm4878, %v4525
      %5040 = vst.msk [vmem:[%s5007 + $0x141] sm:$0xff] %vm4878, %v4526
      %5041 = vst.msk [vmem:[%s5007 + $0x149] sm:$0xff] %vm4878, %v4527
      %5042 = vst.msk [vmem:[%s5007 + $0x151] sm:$0xff] %vm4878, %v4528
      %5043 = vst.msk [vmem:[%s5007 + $0x159] sm:$0xff] %vm4878, %v4529
      %5044 = vst.msk [vmem:[%s5007 + $0x169] sm:$0xff] %vm4878, %v4530
      %5045 = vst.msk [vmem:[%s5007 + $0x171] sm:$0xff] %vm4878, %v4531
      %5046 = vst.msk [vmem:[%s5007 + $0x179] sm:$0xff] %vm4878, %v4532
      %5047 = vst.msk [vmem:[%s5007 + $0x181] sm:$0xff] %vm4878, %v4533
      %5048 = vst.msk [vmem:[%s5007 + $0x191] sm:$0xff] %vm4878, %v4534
      %5049 = vst.msk [vmem:[%s5007 + $0x199] sm:$0xff] %vm4878, %v4535
      %5050 = vst.msk [vmem:[%s5007 + $0x1a1] sm:$0xff] %vm4878, %v4536
      %5051 = vst.msk [vmem:[%s5007 + $0x1a9] sm:$0xff] %vm4878, %v4537
      %5052 = vst.msk [vmem:[%s5007 + $0x1b9] sm:$0xff] %vm4878, %v4538
      %5053 = vst.msk [vmem:[%s5007 + $0x1c1] sm:$0xff] %vm4878, %v4539
      %5054 = vst.msk [vmem:[%s5007 + $0x1c9] sm:$0xff] %vm4878, %v4540
      %5055 = vst.msk [vmem:[%s5007 + $0x1d1] sm:$0xff] %vm4878, %v4541
      %5056 = vst.msk [vmem:[%s5007 + $0x1e1] sm:$0xff] %vm4878, %v4542
      %5057 = vst.msk [vmem:[%s5007 + $0x1e9] sm:$0xff] %vm4878, %v4543
      %5058 = vst.msk [vmem:[%s5007 + $0x1f1] sm:$0xff] %vm4878, %v4544
      %5059 = vst.msk [vmem:[%s5007 + $0x1f9] sm:$0xff] %vm4878, %v4545
      %5060 = vst.msk [vmem:[%s5007 + $0x209] sm:$0xff] %vm4878, %v4546
      %5061 = vst.msk [vmem:[%s5007 + $0x211] sm:$0xff] %vm4878, %v4547
      %5062 = vst.msk [vmem:[%s5007 + $0x219] sm:$0xff] %vm4878, %v4548
      %5063 = vst.msk [vmem:[%s5007 + $0x221] sm:$0xff] %vm4878, %v4549
      %5064 = vst.msk [vmem:[%s5007 + $0x231] sm:$0xff] %vm4878, %v4550
      %5065 = vst.msk [vmem:[%s5007 + $0x239] sm:$0xff] %vm4878, %v4551
      %5066 = vst.msk [vmem:[%s5007 + $0x241] sm:$0xff] %vm4878, %v4552
      %5067 = vst.msk [vmem:[%s5007 + $0x249] sm:$0xff] %vm4878, %v4553
      %5068 = vst.msk [vmem:[%s5007 + $0x259] sm:$0xff] %vm4878, %v4554
      %5069 = vst.msk [vmem:[%s5007 + $0x261] sm:$0xff] %vm4878, %v4555
      %5070 = vst.msk [vmem:[%s5007 + $0x269] sm:$0xff] %vm4878, %v4556
      %5071 = vst.msk [vmem:[%s5007 + $0x271] sm:$0xff] %vm4878, %v4557
      %5072 = vst.msk [vmem:[%s5007 + $0x281] sm:$0xff] %vm4878, %v4558
      %5073 = vst.msk [vmem:[%s5007 + $0x289] sm:$0xff] %vm4878, %v4559
      %5074 = vst.msk [vmem:[%s5007 + $0x291] sm:$0xff] %vm4878, %v4560
      %5075 = vst.msk [vmem:[%s5007 + $0x299] sm:$0xff] %vm4878, %v4561
      %5076 = vst.msk [vmem:[%s5007 + $0x2a9] sm:$0xff] %vm4878, %v4562
      %5077 = vst.msk [vmem:[%s5007 + $0x2b1] sm:$0xff] %vm4878, %v4563
      %5078 = vst.msk [vmem:[%s5007 + $0x2b9] sm:$0xff] %vm4878, %v4564
      %5079 = vst.msk [vmem:[%s5007 + $0x2c1] sm:$0xff] %vm4878, %v4565
      %5080 = vst.msk [vmem:[%s5007 + $0x2d1] sm:$0xff] %vm4878, %v4566
      %5081 = vst.msk [vmem:[%s5007 + $0x2d9] sm:$0xff] %vm4878, %v4567
      %5082 = vst.msk [vmem:[%s5007 + $0x2e1] sm:$0xff] %vm4878, %v4568
      %5083 = vst.msk [vmem:[%s5007 + $0x2e9] sm:$0xff] %vm4878, %v4569
      %5084 = vst.msk [vmem:[%s5007 + $0x2f9] sm:$0xff] %vm4878, %v4570
      %5085 = vst.msk [vmem:[%s5007 + $0x301] sm:$0xff] %vm4878, %v4571
      %5086 = vst.msk [vmem:[%s5007 + $0x309] sm:$0xff] %vm4878, %v4572
      %5087 = vst.msk [vmem:[%s5007 + $0x311] sm:$0xff] %vm4878, %v4573
      %5088 = vst.msk [vmem:[%s5007 + $0x321] sm:$0xff] %vm4878, %v4574
      %5089 = vst.msk [vmem:[%s5007 + $0x329] sm:$0xff] %vm4878, %v4575
      %5090 = vst.msk [vmem:[%s5007 + $0x331] sm:$0xff] %vm4878, %v4576
      %5091 = vst.msk [vmem:[%s5007 + $0x339] sm:$0xff] %vm4878, %v4577
      %5092 = vst.msk [vmem:[%s5007 + $0x349] sm:$0xff] %vm4878, %v4578
      %5093 = vst.msk [vmem:[%s5007 + $0x351] sm:$0xff] %vm4878, %v4579
      %5094 = vst.msk [vmem:[%s5007 + $0x359] sm:$0xff] %vm4878, %v4580
      %5095 = vst.msk [vmem:[%s5007 + $0x361] sm:$0xff] %vm4878, %v4581
      %5096 = vst.msk [vmem:[%s5007 + $0x371] sm:$0xff] %vm4878, %v4582
      %5097 = vst.msk [vmem:[%s5007 + $0x379] sm:$0xff] %vm4878, %v4583
      %5098 = vst.msk [vmem:[%s5007 + $0x381] sm:$0xff] %vm4878, %v4584
      %5099 = vst.msk [vmem:[%s5007 + $0x389] sm:$0xff] %vm4878, %v4585
      %5100 = vst.msk [vmem:[%s5007 + $0x399] sm:$0xff] %vm4878, %v4586
      %5101 = vst.msk [vmem:[%s5007 + $0x3a1] sm:$0xff] %vm4878, %v4587
      %5102 = vst.msk [vmem:[%s5007 + $0x3a9] sm:$0xff] %vm4878, %v4588
      %5103 = vst.msk [vmem:[%s5007 + $0x3b1] sm:$0xff] %vm4878, %v4589
      %5104 = vst.msk [vmem:[%s5007 + $0x3c1] sm:$0xff] %vm4878, %v4590
      %5105 = vst.msk [vmem:[%s5007 + $0x3c9] sm:$0xff] %vm4878, %v4591
      %5106 = vst.msk [vmem:[%s5007 + $0x3d1] sm:$0xff] %vm4878, %v4592
      %5107 = vst.msk [vmem:[%s5007 + $0x3d9] sm:$0xff] %vm4878, %v4593
      %5108 = vst.msk [vmem:[%s5007 + $0x3e9] sm:$0xff] %vm4878, %v4594
      %5109 = vst.msk [vmem:[%s5007 + $0x3f1] sm:$0xff] %vm4878, %v4595
      %5110 = vst.msk [vmem:[%s5007 + $0x3f9] sm:$0xff] %vm4878, %v4596
      %5111 = vst.msk [vmem:[%s5007 + $0x401] sm:$0xff] %vm4878, %v4597
      %5112 = vst.msk [vmem:[%s5007 + $0x411] sm:$0xff] %vm4878, %v4598
      %5113 = vst.msk [vmem:[%s5007 + $0x419] sm:$0xff] %vm4878, %v4599
      %5114 = vst.msk [vmem:[%s5007 + $0x421] sm:$0xff] %vm4878, %v4600
      %5115 = vst.msk [vmem:[%s5007 + $0x429] sm:$0xff] %vm4878, %v4601
      %5116 = vst.msk [vmem:[%s5007 + $0x439] sm:$0xff] %vm4878, %v4602
      %5117 = vst.msk [vmem:[%s5007 + $0x441] sm:$0xff] %vm4878, %v4603
      %5118 = vst.msk [vmem:[%s5007 + $0x449] sm:$0xff] %vm4878, %v4604
      %5119 = vst.msk [vmem:[%s5007 + $0x451] sm:$0xff] %vm4878, %v4605
      %5120 = vst.msk [vmem:[%s5007 + $0x461] sm:$0xff] %vm4878, %v4606
      %5121 = vst.msk [vmem:[%s5007 + $0x469] sm:$0xff] %vm4878, %v4607
      %5122 = vst.msk [vmem:[%s5007 + $0x471] sm:$0xff] %vm4878, %v4608
      %5123 = vst.msk [vmem:[%s5007 + $0x479] sm:$0xff] %vm4878, %v4609
      %5124 = vst.msk [vmem:[%s5007 + $0x489] sm:$0xff] %vm4878, %v4610
      %5125 = vst.msk [vmem:[%s5007 + $0x491] sm:$0xff] %vm4878, %v4611
      %5126 = vst.msk [vmem:[%s5007 + $0x499] sm:$0xff] %vm4878, %v4612
      %5127 = vst.msk [vmem:[%s5007 + $0x4a1] sm:$0xff] %vm4878, %v4613
      %5128 = vst.msk [vmem:[%s5007 + $0x4b1] sm:$0xff] %vm4878, %v4614
      %5129 = vst.msk [vmem:[%s5007 + $0x4b9] sm:$0xff] %vm4878, %v4615
      %5130 = vst.msk [vmem:[%s5007 + $0x4c1] sm:$0xff] %vm4878, %v4616
      %5131 = vst.msk [vmem:[%s5007 + $0x4c9] sm:$0xff] %vm4878, %v4617
      %5132 = vst.msk [vmem:[%s5007 + $0x4d9] sm:$0xff] %vm4878, %v4618
      %5133 = vst.msk [vmem:[%s5007 + $0x4e1] sm:$0xff] %vm4878, %v4619
      %5134 = vst.msk [vmem:[%s5007 + $0x4e9] sm:$0xff] %vm4878, %v4620
      %5135 = vst.msk [vmem:[%s5007 + $0x4f1] sm:$0xff] %vm4878, %v4621
      %v5136 = vld [vmem:[#allocation3] sm:$0xff]
      %v5137 = vld [vmem:[#allocation3 + $0x8] sm:$0xff]
      %v5138 = vld [vmem:[#allocation3 + $0x10] sm:$0xff]
      %v5139 = vld [vmem:[#allocation3 + $0x18] sm:$0xff]
      %v5140 = vld [vmem:[#allocation3 + $0x20] sm:$0x3]
      %v5141 = vld [vmem:[#allocation3 + $0x50] sm:$0xff]
      %v5142 = vld [vmem:[#allocation3 + $0x58] sm:$0xff]
      %v5143 = vld [vmem:[#allocation3 + $0x60] sm:$0xff]
      %v5144 = vld [vmem:[#allocation3 + $0x68] sm:$0xff]
      %v5145 = vld [vmem:[#allocation3 + $0x70] sm:$0x3]
      %v5146 = vld [vmem:[#allocation3 + $0xa0] sm:$0xff]
      %v5147 = vld [vmem:[#allocation3 + $0xa8] sm:$0xff]
      %v5148 = vld [vmem:[#allocation3 + $0xb0] sm:$0xff]
      %v5149 = vld [vmem:[#allocation3 + $0xb8] sm:$0xff]
      %v5150 = vld [vmem:[#allocation3 + $0xc0] sm:$0x3]
      %v5151 = vld [vmem:[#allocation3 + $0xf0] sm:$0xff]
      %v5152 = vld [vmem:[#allocation3 + $0xf8] sm:$0xff]
      %v5153 = vld [vmem:[#allocation3 + $0x100] sm:$0xff]
      %v5154 = vld [vmem:[#allocation3 + $0x108] sm:$0xff]
      %v5155 = vld [vmem:[#allocation3 + $0x110] sm:$0x3]
      %v5156 = vld [vmem:[#allocation3 + $0x140] sm:$0xff]
      %v5157 = vld [vmem:[#allocation3 + $0x148] sm:$0xff]
      %v5158 = vld [vmem:[#allocation3 + $0x150] sm:$0xff]
      %v5159 = vld [vmem:[#allocation3 + $0x158] sm:$0xff]
      %v5160 = vld [vmem:[#allocation3 + $0x160] sm:$0x3]
      %v5161 = vld [vmem:[#allocation3 + $0x190] sm:$0xff]
      %v5162 = vld [vmem:[#allocation3 + $0x198] sm:$0xff]
      %v5163 = vld [vmem:[#allocation3 + $0x1a0] sm:$0xff]
      %v5164 = vld [vmem:[#allocation3 + $0x1a8] sm:$0xff]
      %v5165 = vld [vmem:[#allocation3 + $0x1b0] sm:$0x3]
      %v5166 = vld [vmem:[#allocation3 + $0x1e0] sm:$0xff]
      %v5167 = vld [vmem:[#allocation3 + $0x1e8] sm:$0xff]
      %v5168 = vld [vmem:[#allocation3 + $0x1f0] sm:$0xff]
      %v5169 = vld [vmem:[#allocation3 + $0x1f8] sm:$0xff]
      %v5170 = vld [vmem:[#allocation3 + $0x200] sm:$0x3]
      %v5171 = vld [vmem:[#allocation3 + $0x230] sm:$0xff]
      %v5172 = vld [vmem:[#allocation3 + $0x238] sm:$0xff]
      %v5173 = vld [vmem:[#allocation3 + $0x240] sm:$0xff]
      %v5174 = vld [vmem:[#allocation3 + $0x248] sm:$0xff]
      %v5175 = vld [vmem:[#allocation3 + $0x250] sm:$0x3]
      %v5176 = vld [vmem:[#allocation3 + $0x280] sm:$0xff]
      %v5177 = vld [vmem:[#allocation3 + $0x288] sm:$0xff]
      %v5178 = vld [vmem:[#allocation3 + $0x290] sm:$0xff]
      %v5179 = vld [vmem:[#allocation3 + $0x298] sm:$0xff]
      %v5180 = vld [vmem:[#allocation3 + $0x2a0] sm:$0x3]
      %v5181 = vld [vmem:[#allocation3 + $0x2d0] sm:$0xff]
      %v5182 = vld [vmem:[#allocation3 + $0x2d8] sm:$0xff]
      %v5183 = vld [vmem:[#allocation3 + $0x2e0] sm:$0xff]
      %v5184 = vld [vmem:[#allocation3 + $0x2e8] sm:$0xff]
      %v5185 = vld [vmem:[#allocation3 + $0x2f0] sm:$0x3]
      %v5186 = vld [vmem:[#allocation3 + $0x320] sm:$0xff]
      %v5187 = vld [vmem:[#allocation3 + $0x328] sm:$0xff]
      %v5188 = vld [vmem:[#allocation3 + $0x330] sm:$0xff]
      %v5189 = vld [vmem:[#allocation3 + $0x338] sm:$0xff]
      %v5190 = vld [vmem:[#allocation3 + $0x340] sm:$0x3]
      %v5191 = vld [vmem:[#allocation3 + $0x370] sm:$0xff]
      %v5192 = vld [vmem:[#allocation3 + $0x378] sm:$0xff]
      %v5193 = vld [vmem:[#allocation3 + $0x380] sm:$0xff]
      %v5194 = vld [vmem:[#allocation3 + $0x388] sm:$0xff]
      %v5195 = vld [vmem:[#allocation3 + $0x390] sm:$0x3]
      %v5196 = vld [vmem:[#allocation3 + $0x3c0] sm:$0xff]
      %v5197 = vld [vmem:[#allocation3 + $0x3c8] sm:$0xff]
      %v5198 = vld [vmem:[#allocation3 + $0x3d0] sm:$0xff]
      %v5199 = vld [vmem:[#allocation3 + $0x3d8] sm:$0xff]
      %v5200 = vld [vmem:[#allocation3 + $0x3e0] sm:$0x3]
      %v5201 = vld [vmem:[#allocation3 + $0x410] sm:$0xff]
      %v5202 = vld [vmem:[#allocation3 + $0x418] sm:$0xff]
      %v5203 = vld [vmem:[#allocation3 + $0x420] sm:$0xff]
      %v5204 = vld [vmem:[#allocation3 + $0x428] sm:$0xff]
      %v5205 = vld [vmem:[#allocation3 + $0x430] sm:$0x3]
      %v5206 = vld [vmem:[#allocation3 + $0x460] sm:$0xff]
      %v5207 = vld [vmem:[#allocation3 + $0x468] sm:$0xff]
      %v5208 = vld [vmem:[#allocation3 + $0x470] sm:$0xff]
      %v5209 = vld [vmem:[#allocation3 + $0x478] sm:$0xff]
      %v5210 = vld [vmem:[#allocation3 + $0x480] sm:$0x3]
      %v5211 = vld [vmem:[#allocation3 + $0x4b0] sm:$0xff]
      %v5212 = vld [vmem:[#allocation3 + $0x4b8] sm:$0xff]
      %v5213 = vld [vmem:[#allocation3 + $0x4c0] sm:$0xff]
      %v5214 = vld [vmem:[#allocation3 + $0x4c8] sm:$0xff]
      %v5215 = vld [vmem:[#allocation3 + $0x4d0] sm:$0x3]
      %v5216 = vld [vmem:[%s5007] sm:$0xff]
      %v5217 = vld [vmem:[%s5007 + $0x8] sm:$0xff]
      %v5218 = vld [vmem:[%s5007 + $0x10] sm:$0xff]
      %v5219 = vld [vmem:[%s5007 + $0x18] sm:$0xff]
      %v5220 = vld [vmem:[%s5007 + $0x20] sm:$0x3]
      %v5221 = vld [vmem:[%s5007 + $0x50] sm:$0xff]
      %v5222 = vld [vmem:[%s5007 + $0x58] sm:$0xff]
      %v5223 = vld [vmem:[%s5007 + $0x60] sm:$0xff]
      %v5224 = vld [vmem:[%s5007 + $0x68] sm:$0xff]
      %v5225 = vld [vmem:[%s5007 + $0x70] sm:$0x3]
      %v5226 = vld [vmem:[%s5007 + $0xa0] sm:$0xff]
      %v5227 = vld [vmem:[%s5007 + $0xa8] sm:$0xff]
      %v5228 = vld [vmem:[%s5007 + $0xb0] sm:$0xff]
      %v5229 = vld [vmem:[%s5007 + $0xb8] sm:$0xff]
      %v5230 = vld [vmem:[%s5007 + $0xc0] sm:$0x3]
      %v5231 = vld [vmem:[%s5007 + $0xf0] sm:$0xff]
      %v5232 = vld [vmem:[%s5007 + $0xf8] sm:$0xff]
      %v5233 = vld [vmem:[%s5007 + $0x100] sm:$0xff]
      %v5234 = vld [vmem:[%s5007 + $0x108] sm:$0xff]
      %v5235 = vld [vmem:[%s5007 + $0x110] sm:$0x3]
      %v5236 = vld [vmem:[%s5007 + $0x140] sm:$0xff]
      %v5237 = vld [vmem:[%s5007 + $0x148] sm:$0xff]
      %v5238 = vld [vmem:[%s5007 + $0x150] sm:$0xff]
      %v5239 = vld [vmem:[%s5007 + $0x158] sm:$0xff]
      %v5240 = vld [vmem:[%s5007 + $0x160] sm:$0x3]
      %v5241 = vld [vmem:[%s5007 + $0x190] sm:$0xff]
      %v5242 = vld [vmem:[%s5007 + $0x198] sm:$0xff]
      %v5243 = vld [vmem:[%s5007 + $0x1a0] sm:$0xff]
      %v5244 = vld [vmem:[%s5007 + $0x1a8] sm:$0xff]
      %v5245 = vld [vmem:[%s5007 + $0x1b0] sm:$0x3]
      %v5246 = vld [vmem:[%s5007 + $0x1e0] sm:$0xff]
      %v5247 = vld [vmem:[%s5007 + $0x1e8] sm:$0xff]
      %v5248 = vld [vmem:[%s5007 + $0x1f0] sm:$0xff]
      %v5249 = vld [vmem:[%s5007 + $0x1f8] sm:$0xff]
      %v5250 = vld [vmem:[%s5007 + $0x200] sm:$0x3]
      %v5251 = vld [vmem:[%s5007 + $0x230] sm:$0xff]
      %v5252 = vld [vmem:[%s5007 + $0x238] sm:$0xff]
      %v5253 = vld [vmem:[%s5007 + $0x240] sm:$0xff]
      %v5254 = vld [vmem:[%s5007 + $0x248] sm:$0xff]
      %v5255 = vld [vmem:[%s5007 + $0x250] sm:$0x3]
      %v5256 = vld [vmem:[%s5007 + $0x280] sm:$0xff]
      %v5257 = vld [vmem:[%s5007 + $0x288] sm:$0xff]
      %v5258 = vld [vmem:[%s5007 + $0x290] sm:$0xff]
      %v5259 = vld [vmem:[%s5007 + $0x298] sm:$0xff]
      %v5260 = vld [vmem:[%s5007 + $0x2a0] sm:$0x3]
      %v5261 = vld [vmem:[%s5007 + $0x2d0] sm:$0xff]
      %v5262 = vld [vmem:[%s5007 + $0x2d8] sm:$0xff]
      %v5263 = vld [vmem:[%s5007 + $0x2e0] sm:$0xff]
      %v5264 = vld [vmem:[%s5007 + $0x2e8] sm:$0xff]
      %v5265 = vld [vmem:[%s5007 + $0x2f0] sm:$0x3]
      %v5266 = vld [vmem:[%s5007 + $0x320] sm:$0xff]
      %v5267 = vld [vmem:[%s5007 + $0x328] sm:$0xff]
      %v5268 = vld [vmem:[%s5007 + $0x330] sm:$0xff]
      %v5269 = vld [vmem:[%s5007 + $0x338] sm:$0xff]
      %v5270 = vld [vmem:[%s5007 + $0x340] sm:$0x3]
      %v5271 = vld [vmem:[%s5007 + $0x370] sm:$0xff]
      %v5272 = vld [vmem:[%s5007 + $0x378] sm:$0xff]
      %v5273 = vld [vmem:[%s5007 + $0x380] sm:$0xff]
      %v5274 = vld [vmem:[%s5007 + $0x388] sm:$0xff]
      %v5275 = vld [vmem:[%s5007 + $0x390] sm:$0x3]
      %v5276 = vld [vmem:[%s5007 + $0x3c0] sm:$0xff]
      %v5277 = vld [vmem:[%s5007 + $0x3c8] sm:$0xff]
      %v5278 = vld [vmem:[%s5007 + $0x3d0] sm:$0xff]
      %v5279 = vld [vmem:[%s5007 + $0x3d8] sm:$0xff]
      %v5280 = vld [vmem:[%s5007 + $0x3e0] sm:$0x3]
      %v5281 = vld [vmem:[%s5007 + $0x410] sm:$0xff]
      %v5282 = vld [vmem:[%s5007 + $0x418] sm:$0xff]
      %v5283 = vld [vmem:[%s5007 + $0x420] sm:$0xff]
      %v5284 = vld [vmem:[%s5007 + $0x428] sm:$0xff]
      %v5285 = vld [vmem:[%s5007 + $0x430] sm:$0x3]
      %v5286 = vld [vmem:[%s5007 + $0x460] sm:$0xff]
      %v5287 = vld [vmem:[%s5007 + $0x468] sm:$0xff]
      %v5288 = vld [vmem:[%s5007 + $0x470] sm:$0xff]
      %v5289 = vld [vmem:[%s5007 + $0x478] sm:$0xff]
      %v5290 = vld [vmem:[%s5007 + $0x480] sm:$0x3]
      %v5291 = vld [vmem:[%s5007 + $0x4b0] sm:$0xff]
      %v5292 = vld [vmem:[%s5007 + $0x4b8] sm:$0xff]
      %v5293 = vld [vmem:[%s5007 + $0x4c0] sm:$0xff]
      %v5294 = vld [vmem:[%s5007 + $0x4c8] sm:$0xff]
      %v5295 = vld [vmem:[%s5007 + $0x4d0] sm:$0x3]
      %v5296 = vmax.f32 %v5136, %v5216
      %v5297 = vmax.f32 %v5137, %v5217
      %v5298 = vmax.f32 %v5138, %v5218
      %v5299 = vmax.f32 %v5139, %v5219
      %v5300 = vmax.f32 %v5140, %v5220
      %v5301 = vmax.f32 %v5141, %v5221
      %v5302 = vmax.f32 %v5142, %v5222
      %v5303 = vmax.f32 %v5143, %v5223
      %v5304 = vmax.f32 %v5144, %v5224
      %v5305 = vmax.f32 %v5145, %v5225
      %v5306 = vmax.f32 %v5146, %v5226
      %v5307 = vmax.f32 %v5147, %v5227
      %v5308 = vmax.f32 %v5148, %v5228
      %v5309 = vmax.f32 %v5149, %v5229
      %v5310 = vmax.f32 %v5150, %v5230
      %v5311 = vmax.f32 %v5151, %v5231
      %v5312 = vmax.f32 %v5152, %v5232
      %v5313 = vmax.f32 %v5153, %v5233
      %v5314 = vmax.f32 %v5154, %v5234
      %v5315 = vmax.f32 %v5155, %v5235
      %v5316 = vmax.f32 %v5156, %v5236
      %v5317 = vmax.f32 %v5157, %v5237
      %v5318 = vmax.f32 %v5158, %v5238
      %v5319 = vmax.f32 %v5159, %v5239
      %v5320 = vmax.f32 %v5160, %v5240
      %v5321 = vmax.f32 %v5161, %v5241
      %v5322 = vmax.f32 %v5162, %v5242
      %v5323 = vmax.f32 %v5163, %v5243
      %v5324 = vmax.f32 %v5164, %v5244
      %v5325 = vmax.f32 %v5165, %v5245
      %v5326 = vmax.f32 %v5166, %v5246
      %v5327 = vmax.f32 %v5167, %v5247
      %v5328 = vmax.f32 %v5168, %v5248
      %v5329 = vmax.f32 %v5169, %v5249
      %v5330 = vmax.f32 %v5170, %v5250
      %v5331 = vmax.f32 %v5171, %v5251
      %v5332 = vmax.f32 %v5172, %v5252
      %v5333 = vmax.f32 %v5173, %v5253
      %v5334 = vmax.f32 %v5174, %v5254
      %v5335 = vmax.f32 %v5175, %v5255
      %v5336 = vmax.f32 %v5176, %v5256
      %v5337 = vmax.f32 %v5177, %v5257
      %v5338 = vmax.f32 %v5178, %v5258
      %v5339 = vmax.f32 %v5179, %v5259
      %v5340 = vmax.f32 %v5180, %v5260
      %v5341 = vmax.f32 %v5181, %v5261
      %v5342 = vmax.f32 %v5182, %v5262
      %v5343 = vmax.f32 %v5183, %v5263
      %v5344 = vmax.f32 %v5184, %v5264
      %v5345 = vmax.f32 %v5185, %v5265
      %v5346 = vmax.f32 %v5186, %v5266
      %v5347 = vmax.f32 %v5187, %v5267
      %v5348 = vmax.f32 %v5188, %v5268
      %v5349 = vmax.f32 %v5189, %v5269
      %v5350 = vmax.f32 %v5190, %v5270
      %v5351 = vmax.f32 %v5191, %v5271
      %v5352 = vmax.f32 %v5192, %v5272
      %v5353 = vmax.f32 %v5193, %v5273
      %v5354 = vmax.f32 %v5194, %v5274
      %v5355 = vmax.f32 %v5195, %v5275
      %v5356 = vmax.f32 %v5196, %v5276
      %v5357 = vmax.f32 %v5197, %v5277
      %v5358 = vmax.f32 %v5198, %v5278
      %v5359 = vmax.f32 %v5199, %v5279
      %v5360 = vmax.f32 %v5200, %v5280
      %v5361 = vmax.f32 %v5201, %v5281
      %v5362 = vmax.f32 %v5202, %v5282
      %v5363 = vmax.f32 %v5203, %v5283
      %v5364 = vmax.f32 %v5204, %v5284
      %v5365 = vmax.f32 %v5205, %v5285
      %v5366 = vmax.f32 %v5206, %v5286
      %v5367 = vmax.f32 %v5207, %v5287
      %v5368 = vmax.f32 %v5208, %v5288
      %v5369 = vmax.f32 %v5209, %v5289
      %v5370 = vmax.f32 %v5210, %v5290
      %v5371 = vmax.f32 %v5211, %v5291
      %v5372 = vmax.f32 %v5212, %v5292
      %v5373 = vmax.f32 %v5213, %v5293
      %v5374 = vmax.f32 %v5214, %v5294
      %v5375 = vmax.f32 %v5215, %v5295
      %s5376 = scalar_lea.vmem [#allocation3], 80
      %v5377 = vld [vmem:[%s5376] sm:$0xff]
      %v5378 = vld [vmem:[%s5376 + $0x8] sm:$0xff]
      %v5379 = vld [vmem:[%s5376 + $0x10] sm:$0xff]
      %v5380 = vld [vmem:[%s5376 + $0x18] sm:$0xff]
      %v5381 = vld [vmem:[%s5376 + $0x20] sm:$0x3]
      %v5382 = vld [vmem:[%s5376 + $0x50] sm:$0xff]
      %v5383 = vld [vmem:[%s5376 + $0x58] sm:$0xff]
      %v5384 = vld [vmem:[%s5376 + $0x60] sm:$0xff]
      %v5385 = vld [vmem:[%s5376 + $0x68] sm:$0xff]
      %v5386 = vld [vmem:[%s5376 + $0x70] sm:$0x3]
      %v5387 = vld [vmem:[%s5376 + $0xa0] sm:$0xff]
      %v5388 = vld [vmem:[%s5376 + $0xa8] sm:$0xff]
      %v5389 = vld [vmem:[%s5376 + $0xb0] sm:$0xff]
      %v5390 = vld [vmem:[%s5376 + $0xb8] sm:$0xff]
      %v5391 = vld [vmem:[%s5376 + $0xc0] sm:$0x3]
      %v5392 = vld [vmem:[%s5376 + $0xf0] sm:$0xff]
      %v5393 = vld [vmem:[%s5376 + $0xf8] sm:$0xff]
      %v5394 = vld [vmem:[%s5376 + $0x100] sm:$0xff]
      %v5395 = vld [vmem:[%s5376 + $0x108] sm:$0xff]
      %v5396 = vld [vmem:[%s5376 + $0x110] sm:$0x3]
      %v5397 = vld [vmem:[%s5376 + $0x140] sm:$0xff]
      %v5398 = vld [vmem:[%s5376 + $0x148] sm:$0xff]
      %v5399 = vld [vmem:[%s5376 + $0x150] sm:$0xff]
      %v5400 = vld [vmem:[%s5376 + $0x158] sm:$0xff]
      %v5401 = vld [vmem:[%s5376 + $0x160] sm:$0x3]
      %v5402 = vld [vmem:[%s5376 + $0x190] sm:$0xff]
      %v5403 = vld [vmem:[%s5376 + $0x198] sm:$0xff]
      %v5404 = vld [vmem:[%s5376 + $0x1a0] sm:$0xff]
      %v5405 = vld [vmem:[%s5376 + $0x1a8] sm:$0xff]
      %v5406 = vld [vmem:[%s5376 + $0x1b0] sm:$0x3]
      %v5407 = vld [vmem:[%s5376 + $0x1e0] sm:$0xff]
      %v5408 = vld [vmem:[%s5376 + $0x1e8] sm:$0xff]
      %v5409 = vld [vmem:[%s5376 + $0x1f0] sm:$0xff]
      %v5410 = vld [vmem:[%s5376 + $0x1f8] sm:$0xff]
      %v5411 = vld [vmem:[%s5376 + $0x200] sm:$0x3]
      %v5412 = vld [vmem:[%s5376 + $0x230] sm:$0xff]
      %v5413 = vld [vmem:[%s5376 + $0x238] sm:$0xff]
      %v5414 = vld [vmem:[%s5376 + $0x240] sm:$0xff]
      %v5415 = vld [vmem:[%s5376 + $0x248] sm:$0xff]
      %v5416 = vld [vmem:[%s5376 + $0x250] sm:$0x3]
      %v5417 = vld [vmem:[%s5376 + $0x280] sm:$0xff]
      %v5418 = vld [vmem:[%s5376 + $0x288] sm:$0xff]
      %v5419 = vld [vmem:[%s5376 + $0x290] sm:$0xff]
      %v5420 = vld [vmem:[%s5376 + $0x298] sm:$0xff]
      %v5421 = vld [vmem:[%s5376 + $0x2a0] sm:$0x3]
      %v5422 = vld [vmem:[%s5376 + $0x2d0] sm:$0xff]
      %v5423 = vld [vmem:[%s5376 + $0x2d8] sm:$0xff]
      %v5424 = vld [vmem:[%s5376 + $0x2e0] sm:$0xff]
      %v5425 = vld [vmem:[%s5376 + $0x2e8] sm:$0xff]
      %v5426 = vld [vmem:[%s5376 + $0x2f0] sm:$0x3]
      %v5427 = vld [vmem:[%s5376 + $0x320] sm:$0xff]
      %v5428 = vld [vmem:[%s5376 + $0x328] sm:$0xff]
      %v5429 = vld [vmem:[%s5376 + $0x330] sm:$0xff]
      %v5430 = vld [vmem:[%s5376 + $0x338] sm:$0xff]
      %v5431 = vld [vmem:[%s5376 + $0x340] sm:$0x3]
      %v5432 = vld [vmem:[%s5376 + $0x370] sm:$0xff]
      %v5433 = vld [vmem:[%s5376 + $0x378] sm:$0xff]
      %v5434 = vld [vmem:[%s5376 + $0x380] sm:$0xff]
      %v5435 = vld [vmem:[%s5376 + $0x388] sm:$0xff]
      %v5436 = vld [vmem:[%s5376 + $0x390] sm:$0x3]
      %v5437 = vld [vmem:[%s5376 + $0x3c0] sm:$0xff]
      %v5438 = vld [vmem:[%s5376 + $0x3c8] sm:$0xff]
      %v5439 = vld [vmem:[%s5376 + $0x3d0] sm:$0xff]
      %v5440 = vld [vmem:[%s5376 + $0x3d8] sm:$0xff]
      %v5441 = vld [vmem:[%s5376 + $0x3e0] sm:$0x3]
      %v5442 = vld [vmem:[%s5376 + $0x410] sm:$0xff]
      %v5443 = vld [vmem:[%s5376 + $0x418] sm:$0xff]
      %v5444 = vld [vmem:[%s5376 + $0x420] sm:$0xff]
      %v5445 = vld [vmem:[%s5376 + $0x428] sm:$0xff]
      %v5446 = vld [vmem:[%s5376 + $0x430] sm:$0x3]
      %v5447 = vld [vmem:[%s5376 + $0x460] sm:$0xff]
      %v5448 = vld [vmem:[%s5376 + $0x468] sm:$0xff]
      %v5449 = vld [vmem:[%s5376 + $0x470] sm:$0xff]
      %v5450 = vld [vmem:[%s5376 + $0x478] sm:$0xff]
      %v5451 = vld [vmem:[%s5376 + $0x480] sm:$0x3]
      %v5452 = vld [vmem:[%s5376 + $0x4b0] sm:$0xff]
      %v5453 = vld [vmem:[%s5376 + $0x4b8] sm:$0xff]
      %v5454 = vld [vmem:[%s5376 + $0x4c0] sm:$0xff]
      %v5455 = vld [vmem:[%s5376 + $0x4c8] sm:$0xff]
      %v5456 = vld [vmem:[%s5376 + $0x4d0] sm:$0x3]
      %v5457 = vmax.f32 %v5296, %v5377
      %v5458 = vmax.f32 %v5297, %v5378
      %v5459 = vmax.f32 %v5298, %v5379
      %v5460 = vmax.f32 %v5299, %v5380
      %v5461 = vmax.f32 %v5300, %v5381
      %v5462 = vmax.f32 %v5301, %v5382
      %v5463 = vmax.f32 %v5302, %v5383
      %v5464 = vmax.f32 %v5303, %v5384
      %v5465 = vmax.f32 %v5304, %v5385
      %v5466 = vmax.f32 %v5305, %v5386
      %v5467 = vmax.f32 %v5306, %v5387
      %v5468 = vmax.f32 %v5307, %v5388
      %v5469 = vmax.f32 %v5308, %v5389
      %v5470 = vmax.f32 %v5309, %v5390
      %v5471 = vmax.f32 %v5310, %v5391
      %v5472 = vmax.f32 %v5311, %v5392
      %v5473 = vmax.f32 %v5312, %v5393
      %v5474 = vmax.f32 %v5313, %v5394
      %v5475 = vmax.f32 %v5314, %v5395
      %v5476 = vmax.f32 %v5315, %v5396
      %v5477 = vmax.f32 %v5316, %v5397
      %v5478 = vmax.f32 %v5317, %v5398
      %v5479 = vmax.f32 %v5318, %v5399
      %v5480 = vmax.f32 %v5319, %v5400
      %v5481 = vmax.f32 %v5320, %v5401
      %v5482 = vmax.f32 %v5321, %v5402
      %v5483 = vmax.f32 %v5322, %v5403
      %v5484 = vmax.f32 %v5323, %v5404
      %v5485 = vmax.f32 %v5324, %v5405
      %v5486 = vmax.f32 %v5325, %v5406
      %v5487 = vmax.f32 %v5326, %v5407
      %v5488 = vmax.f32 %v5327, %v5408
      %v5489 = vmax.f32 %v5328, %v5409
      %v5490 = vmax.f32 %v5329, %v5410
      %v5491 = vmax.f32 %v5330, %v5411
      %v5492 = vmax.f32 %v5331, %v5412
      %v5493 = vmax.f32 %v5332, %v5413
      %v5494 = vmax.f32 %v5333, %v5414
      %v5495 = vmax.f32 %v5334, %v5415
      %v5496 = vmax.f32 %v5335, %v5416
      %v5497 = vmax.f32 %v5336, %v5417
      %v5498 = vmax.f32 %v5337, %v5418
      %v5499 = vmax.f32 %v5338, %v5419
      %v5500 = vmax.f32 %v5339, %v5420
      %v5501 = vmax.f32 %v5340, %v5421
      %v5502 = vmax.f32 %v5341, %v5422
      %v5503 = vmax.f32 %v5342, %v5423
      %v5504 = vmax.f32 %v5343, %v5424
      %v5505 = vmax.f32 %v5344, %v5425
      %v5506 = vmax.f32 %v5345, %v5426
      %v5507 = vmax.f32 %v5346, %v5427
      %v5508 = vmax.f32 %v5347, %v5428
      %v5509 = vmax.f32 %v5348, %v5429
      %v5510 = vmax.f32 %v5349, %v5430
      %v5511 = vmax.f32 %v5350, %v5431
      %v5512 = vmax.f32 %v5351, %v5432
      %v5513 = vmax.f32 %v5352, %v5433
      %v5514 = vmax.f32 %v5353, %v5434
      %v5515 = vmax.f32 %v5354, %v5435
      %v5516 = vmax.f32 %v5355, %v5436
      %v5517 = vmax.f32 %v5356, %v5437
      %v5518 = vmax.f32 %v5357, %v5438
      %v5519 = vmax.f32 %v5358, %v5439
      %v5520 = vmax.f32 %v5359, %v5440
      %v5521 = vmax.f32 %v5360, %v5441
      %v5522 = vmax.f32 %v5361, %v5442
      %v5523 = vmax.f32 %v5362, %v5443
      %v5524 = vmax.f32 %v5363, %v5444
      %v5525 = vmax.f32 %v5364, %v5445
      %v5526 = vmax.f32 %v5365, %v5446
      %v5527 = vmax.f32 %v5366, %v5447
      %v5528 = vmax.f32 %v5367, %v5448
      %v5529 = vmax.f32 %v5368, %v5449
      %v5530 = vmax.f32 %v5369, %v5450
      %v5531 = vmax.f32 %v5370, %v5451
      %v5532 = vmax.f32 %v5371, %v5452
      %v5533 = vmax.f32 %v5372, %v5453
      %v5534 = vmax.f32 %v5373, %v5454
      %v5535 = vmax.f32 %v5374, %v5455
      %v5536 = vmax.f32 %v5375, %v5456
      %5537 = vst.msk [vmem:[#allocation4] sm:$0xff] %vm4878, %v5457
      %5538 = vst.msk [vmem:[#allocation4 + $0x8] sm:$0xff] %vm4878, %v5458
      %5539 = vst.msk [vmem:[#allocation4 + $0x10] sm:$0xff] %vm4878, %v5459
      %5540 = vst.msk [vmem:[#allocation4 + $0x18] sm:$0xff] %vm4878, %v5460
      %vm5541 = vcmask 25600
      %5542 = vst.msk [vmem:[#allocation4 + $0x20] sm:$0x3] %vm5541, %v5461
      %5543 = vst.msk [vmem:[#allocation4 + $0x28] sm:$0xff] %vm4878, %v5462
      %5544 = vst.msk [vmem:[#allocation4 + $0x30] sm:$0xff] %vm4878, %v5463
      %5545 = vst.msk [vmem:[#allocation4 + $0x38] sm:$0xff] %vm4878, %v5464
      %5546 = vst.msk [vmem:[#allocation4 + $0x40] sm:$0xff] %vm4878, %v5465
      %5547 = vst.msk [vmem:[#allocation4 + $0x48] sm:$0x3] %vm5541, %v5466
      %5548 = vst.msk [vmem:[#allocation4 + $0x50] sm:$0xff] %vm4878, %v5467
      %5549 = vst.msk [vmem:[#allocation4 + $0x58] sm:$0xff] %vm4878, %v5468
      %5550 = vst.msk [vmem:[#allocation4 + $0x60] sm:$0xff] %vm4878, %v5469
      %5551 = vst.msk [vmem:[#allocation4 + $0x68] sm:$0xff] %vm4878, %v5470
      %5552 = vst.msk [vmem:[#allocation4 + $0x70] sm:$0x3] %vm5541, %v5471
      %5553 = vst.msk [vmem:[#allocation4 + $0x78] sm:$0xff] %vm4878, %v5472
      %5554 = vst.msk [vmem:[#allocation4 + $0x80] sm:$0xff] %vm4878, %v5473
      %5555 = vst.msk [vmem:[#allocation4 + $0x88] sm:$0xff] %vm4878, %v5474
      %5556 = vst.msk [vmem:[#allocation4 + $0x90] sm:$0xff] %vm4878, %v5475
      %5557 = vst.msk [vmem:[#allocation4 + $0x98] sm:$0x3] %vm5541, %v5476
      %5558 = vst.msk [vmem:[#allocation4 + $0xa0] sm:$0xff] %vm4878, %v5477
      %5559 = vst.msk [vmem:[#allocation4 + $0xa8] sm:$0xff] %vm4878, %v5478
      %5560 = vst.msk [vmem:[#allocation4 + $0xb0] sm:$0xff] %vm4878, %v5479
      %5561 = vst.msk [vmem:[#allocation4 + $0xb8] sm:$0xff] %vm4878, %v5480
      %5562 = vst.msk [vmem:[#allocation4 + $0xc0] sm:$0x3] %vm5541, %v5481
      %5563 = vst.msk [vmem:[#allocation4 + $0xc8] sm:$0xff] %vm4878, %v5482
      %5564 = vst.msk [vmem:[#allocation4 + $0xd0] sm:$0xff] %vm4878, %v5483
      %5565 = vst.msk [vmem:[#allocation4 + $0xd8] sm:$0xff] %vm4878, %v5484
      %5566 = vst.msk [vmem:[#allocation4 + $0xe0] sm:$0xff] %vm4878, %v5485
      %5567 = vst.msk [vmem:[#allocation4 + $0xe8] sm:$0x3] %vm5541, %v5486
      %5568 = vst.msk [vmem:[#allocation4 + $0xf0] sm:$0xff] %vm4878, %v5487
      %5569 = vst.msk [vmem:[#allocation4 + $0xf8] sm:$0xff] %vm4878, %v5488
      %5570 = vst.msk [vmem:[#allocation4 + $0x100] sm:$0xff] %vm4878, %v5489
      %5571 = vst.msk [vmem:[#allocation4 + $0x108] sm:$0xff] %vm4878, %v5490
      %5572 = vst.msk [vmem:[#allocation4 + $0x110] sm:$0x3] %vm5541, %v5491
      %5573 = vst.msk [vmem:[#allocation4 + $0x118] sm:$0xff] %vm4878, %v5492
      %5574 = vst.msk [vmem:[#allocation4 + $0x120] sm:$0xff] %vm4878, %v5493
      %5575 = vst.msk [vmem:[#allocation4 + $0x128] sm:$0xff] %vm4878, %v5494
      %5576 = vst.msk [vmem:[#allocation4 + $0x130] sm:$0xff] %vm4878, %v5495
      %5577 = vst.msk [vmem:[#allocation4 + $0x138] sm:$0x3] %vm5541, %v5496
      %5578 = vst.msk [vmem:[#allocation4 + $0x140] sm:$0xff] %vm4878, %v5497
      %5579 = vst.msk [vmem:[#allocation4 + $0x148] sm:$0xff] %vm4878, %v5498
      %5580 = vst.msk [vmem:[#allocation4 + $0x150] sm:$0xff] %vm4878, %v5499
      %5581 = vst.msk [vmem:[#allocation4 + $0x158] sm:$0xff] %vm4878, %v5500
      %5582 = vst.msk [vmem:[#allocation4 + $0x160] sm:$0x3] %vm5541, %v5501
      %5583 = vst.msk [vmem:[#allocation4 + $0x168] sm:$0xff] %vm4878, %v5502
      %5584 = vst.msk [vmem:[#allocation4 + $0x170] sm:$0xff] %vm4878, %v5503
      %5585 = vst.msk [vmem:[#allocation4 + $0x178] sm:$0xff] %vm4878, %v5504
      %5586 = vst.msk [vmem:[#allocation4 + $0x180] sm:$0xff] %vm4878, %v5505
      %5587 = vst.msk [vmem:[#allocation4 + $0x188] sm:$0x3] %vm5541, %v5506
      %5588 = vst.msk [vmem:[#allocation4 + $0x190] sm:$0xff] %vm4878, %v5507
      %5589 = vst.msk [vmem:[#allocation4 + $0x198] sm:$0xff] %vm4878, %v5508
      %5590 = vst.msk [vmem:[#allocation4 + $0x1a0] sm:$0xff] %vm4878, %v5509
      %5591 = vst.msk [vmem:[#allocation4 + $0x1a8] sm:$0xff] %vm4878, %v5510
      %5592 = vst.msk [vmem:[#allocation4 + $0x1b0] sm:$0x3] %vm5541, %v5511
      %5593 = vst.msk [vmem:[#allocation4 + $0x1b8] sm:$0xff] %vm4878, %v5512
      %5594 = vst.msk [vmem:[#allocation4 + $0x1c0] sm:$0xff] %vm4878, %v5513
      %5595 = vst.msk [vmem:[#allocation4 + $0x1c8] sm:$0xff] %vm4878, %v5514
      %5596 = vst.msk [vmem:[#allocation4 + $0x1d0] sm:$0xff] %vm4878, %v5515
      %5597 = vst.msk [vmem:[#allocation4 + $0x1d8] sm:$0x3] %vm5541, %v5516
      %5598 = vst.msk [vmem:[#allocation4 + $0x1e0] sm:$0xff] %vm4878, %v5517
      %5599 = vst.msk [vmem:[#allocation4 + $0x1e8] sm:$0xff] %vm4878, %v5518
      %5600 = vst.msk [vmem:[#allocation4 + $0x1f0] sm:$0xff] %vm4878, %v5519
      %5601 = vst.msk [vmem:[#allocation4 + $0x1f8] sm:$0xff] %vm4878, %v5520
      %5602 = vst.msk [vmem:[#allocation4 + $0x200] sm:$0x3] %vm5541, %v5521
      %5603 = vst.msk [vmem:[#allocation4 + $0x208] sm:$0xff] %vm4878, %v5522
      %5604 = vst.msk [vmem:[#allocation4 + $0x210] sm:$0xff] %vm4878, %v5523
      %5605 = vst.msk [vmem:[#allocation4 + $0x218] sm:$0xff] %vm4878, %v5524
      %5606 = vst.msk [vmem:[#allocation4 + $0x220] sm:$0xff] %vm4878, %v5525
      %5607 = vst.msk [vmem:[#allocation4 + $0x228] sm:$0x3] %vm5541, %v5526
      %5608 = vst.msk [vmem:[#allocation4 + $0x230] sm:$0xff] %vm4878, %v5527
      %5609 = vst.msk [vmem:[#allocation4 + $0x238] sm:$0xff] %vm4878, %v5528
      %5610 = vst.msk [vmem:[#allocation4 + $0x240] sm:$0xff] %vm4878, %v5529
      %5611 = vst.msk [vmem:[#allocation4 + $0x248] sm:$0xff] %vm4878, %v5530
      %5612 = vst.msk [vmem:[#allocation4 + $0x250] sm:$0x3] %vm5541, %v5531
      %5613 = vst.msk [vmem:[#allocation4 + $0x258] sm:$0xff] %vm4878, %v5532
      %5614 = vst.msk [vmem:[#allocation4 + $0x260] sm:$0xff] %vm4878, %v5533
      %5615 = vst.msk [vmem:[#allocation4 + $0x268] sm:$0xff] %vm4878, %v5534
      %5616 = vst.msk [vmem:[#allocation4 + $0x270] sm:$0xff] %vm4878, %v5535
      %5617 = vst.msk [vmem:[#allocation4 + $0x278] sm:$0x3] %vm5541, %v5536
      %v5618 = vld [vmem:[#allocation4] sm:$0xff]
      %v5619 = vld [vmem:[#allocation4 + $0x8] sm:$0xff]
      %v5620 = vld [vmem:[#allocation4 + $0x10] sm:$0xff]
      %v5621 = vld [vmem:[#allocation4 + $0x18] sm:$0xff]
      %v5622 = vld [vmem:[#allocation4 + $0x28] sm:$0xff]
      %v5623 = vld [vmem:[#allocation4 + $0x30] sm:$0xff]
      %v5624 = vld [vmem:[#allocation4 + $0x38] sm:$0xff]
      %v5625 = vld [vmem:[#allocation4 + $0x40] sm:$0xff]
      %v5626 = vld [vmem:[#allocation4 + $0x50] sm:$0xff]
      %v5627 = vld [vmem:[#allocation4 + $0x58] sm:$0xff]
      %v5628 = vld [vmem:[#allocation4 + $0x60] sm:$0xff]
      %v5629 = vld [vmem:[#allocation4 + $0x68] sm:$0xff]
      %v5630 = vld [vmem:[#allocation4 + $0x78] sm:$0xff]
      %v5631 = vld [vmem:[#allocation4 + $0x80] sm:$0xff]
      %v5632 = vld [vmem:[#allocation4 + $0x88] sm:$0xff]
      %v5633 = vld [vmem:[#allocation4 + $0x90] sm:$0xff]
      %v5634 = vld [vmem:[#allocation4 + $0xa0] sm:$0xff]
      %v5635 = vld [vmem:[#allocation4 + $0xa8] sm:$0xff]
      %v5636 = vld [vmem:[#allocation4 + $0xb0] sm:$0xff]
      %v5637 = vld [vmem:[#allocation4 + $0xb8] sm:$0xff]
      %v5638 = vld [vmem:[#allocation4 + $0xc8] sm:$0xff]
      %v5639 = vld [vmem:[#allocation4 + $0xd0] sm:$0xff]
      %v5640 = vld [vmem:[#allocation4 + $0xd8] sm:$0xff]
      %v5641 = vld [vmem:[#allocation4 + $0xe0] sm:$0xff]
      %v5642 = vld [vmem:[#allocation4 + $0xf0] sm:$0xff]
      %v5643 = vld [vmem:[#allocation4 + $0xf8] sm:$0xff]
      %v5644 = vld [vmem:[#allocation4 + $0x100] sm:$0xff]
      %v5645 = vld [vmem:[#allocation4 + $0x108] sm:$0xff]
      %v5646 = vld [vmem:[#allocation4 + $0x118] sm:$0xff]
      %v5647 = vld [vmem:[#allocation4 + $0x120] sm:$0xff]
      %v5648 = vld [vmem:[#allocation4 + $0x128] sm:$0xff]
      %v5649 = vld [vmem:[#allocation4 + $0x130] sm:$0xff]
      %v5650 = vld [vmem:[#allocation4 + $0x140] sm:$0xff]
      %v5651 = vld [vmem:[#allocation4 + $0x148] sm:$0xff]
      %v5652 = vld [vmem:[#allocation4 + $0x150] sm:$0xff]
      %v5653 = vld [vmem:[#allocation4 + $0x158] sm:$0xff]
      %v5654 = vld [vmem:[#allocation4 + $0x168] sm:$0xff]
      %v5655 = vld [vmem:[#allocation4 + $0x170] sm:$0xff]
      %v5656 = vld [vmem:[#allocation4 + $0x178] sm:$0xff]
      %v5657 = vld [vmem:[#allocation4 + $0x180] sm:$0xff]
      %v5658 = vld [vmem:[#allocation4 + $0x190] sm:$0xff]
      %v5659 = vld [vmem:[#allocation4 + $0x198] sm:$0xff]
      %v5660 = vld [vmem:[#allocation4 + $0x1a0] sm:$0xff]
      %v5661 = vld [vmem:[#allocation4 + $0x1a8] sm:$0xff]
      %v5662 = vld [vmem:[#allocation4 + $0x1b8] sm:$0xff]
      %v5663 = vld [vmem:[#allocation4 + $0x1c0] sm:$0xff]
      %v5664 = vld [vmem:[#allocation4 + $0x1c8] sm:$0xff]
      %v5665 = vld [vmem:[#allocation4 + $0x1d0] sm:$0xff]
      %v5666 = vld [vmem:[#allocation4 + $0x1e0] sm:$0xff]
      %v5667 = vld [vmem:[#allocation4 + $0x1e8] sm:$0xff]
      %v5668 = vld [vmem:[#allocation4 + $0x1f0] sm:$0xff]
      %v5669 = vld [vmem:[#allocation4 + $0x1f8] sm:$0xff]
      %v5670 = vld [vmem:[#allocation4 + $0x208] sm:$0xff]
      %v5671 = vld [vmem:[#allocation4 + $0x210] sm:$0xff]
      %v5672 = vld [vmem:[#allocation4 + $0x218] sm:$0xff]
      %v5673 = vld [vmem:[#allocation4 + $0x220] sm:$0xff]
      %v5674 = vld [vmem:[#allocation4 + $0x230] sm:$0xff]
      %v5675 = vld [vmem:[#allocation4 + $0x238] sm:$0xff]
      %v5676 = vld [vmem:[#allocation4 + $0x240] sm:$0xff]
      %v5677 = vld [vmem:[#allocation4 + $0x248] sm:$0xff]
      %v5678 = vld [vmem:[#allocation4 + $0x258] sm:$0xff]
      %v5679 = vld [vmem:[#allocation4 + $0x260] sm:$0xff]
      %v5680 = vld [vmem:[#allocation4 + $0x268] sm:$0xff]
      %v5681 = vld [vmem:[#allocation4 + $0x270] sm:$0xff]
      %v5682 = vld [vmem:[#allocation4 + $0x1] sm:$0xff]
      %v5683 = vld [vmem:[#allocation4 + $0x9] sm:$0xff]
      %v5684 = vld [vmem:[#allocation4 + $0x11] sm:$0xff]
      %v5685 = vld [vmem:[#allocation4 + $0x19] sm:$0xff]
      %v5686 = vld [vmem:[#allocation4 + $0x29] sm:$0xff]
      %v5687 = vld [vmem:[#allocation4 + $0x31] sm:$0xff]
      %v5688 = vld [vmem:[#allocation4 + $0x39] sm:$0xff]
      %v5689 = vld [vmem:[#allocation4 + $0x41] sm:$0xff]
      %v5690 = vld [vmem:[#allocation4 + $0x51] sm:$0xff]
      %v5691 = vld [vmem:[#allocation4 + $0x59] sm:$0xff]
      %v5692 = vld [vmem:[#allocation4 + $0x61] sm:$0xff]
      %v5693 = vld [vmem:[#allocation4 + $0x69] sm:$0xff]
      %v5694 = vld [vmem:[#allocation4 + $0x79] sm:$0xff]
      %v5695 = vld [vmem:[#allocation4 + $0x81] sm:$0xff]
      %v5696 = vld [vmem:[#allocation4 + $0x89] sm:$0xff]
      %v5697 = vld [vmem:[#allocation4 + $0x91] sm:$0xff]
      %v5698 = vld [vmem:[#allocation4 + $0xa1] sm:$0xff]
      %v5699 = vld [vmem:[#allocation4 + $0xa9] sm:$0xff]
      %v5700 = vld [vmem:[#allocation4 + $0xb1] sm:$0xff]
      %v5701 = vld [vmem:[#allocation4 + $0xb9] sm:$0xff]
      %v5702 = vld [vmem:[#allocation4 + $0xc9] sm:$0xff]
      %v5703 = vld [vmem:[#allocation4 + $0xd1] sm:$0xff]
      %v5704 = vld [vmem:[#allocation4 + $0xd9] sm:$0xff]
      %v5705 = vld [vmem:[#allocation4 + $0xe1] sm:$0xff]
      %v5706 = vld [vmem:[#allocation4 + $0xf1] sm:$0xff]
      %v5707 = vld [vmem:[#allocation4 + $0xf9] sm:$0xff]
      %v5708 = vld [vmem:[#allocation4 + $0x101] sm:$0xff]
      %v5709 = vld [vmem:[#allocation4 + $0x109] sm:$0xff]
      %v5710 = vld [vmem:[#allocation4 + $0x119] sm:$0xff]
      %v5711 = vld [vmem:[#allocation4 + $0x121] sm:$0xff]
      %v5712 = vld [vmem:[#allocation4 + $0x129] sm:$0xff]
      %v5713 = vld [vmem:[#allocation4 + $0x131] sm:$0xff]
      %v5714 = vld [vmem:[#allocation4 + $0x141] sm:$0xff]
      %v5715 = vld [vmem:[#allocation4 + $0x149] sm:$0xff]
      %v5716 = vld [vmem:[#allocation4 + $0x151] sm:$0xff]
      %v5717 = vld [vmem:[#allocation4 + $0x159] sm:$0xff]
      %v5718 = vld [vmem:[#allocation4 + $0x169] sm:$0xff]
      %v5719 = vld [vmem:[#allocation4 + $0x171] sm:$0xff]
      %v5720 = vld [vmem:[#allocation4 + $0x179] sm:$0xff]
      %v5721 = vld [vmem:[#allocation4 + $0x181] sm:$0xff]
      %v5722 = vld [vmem:[#allocation4 + $0x191] sm:$0xff]
      %v5723 = vld [vmem:[#allocation4 + $0x199] sm:$0xff]
      %v5724 = vld [vmem:[#allocation4 + $0x1a1] sm:$0xff]
      %v5725 = vld [vmem:[#allocation4 + $0x1a9] sm:$0xff]
      %v5726 = vld [vmem:[#allocation4 + $0x1b9] sm:$0xff]
      %v5727 = vld [vmem:[#allocation4 + $0x1c1] sm:$0xff]
      %v5728 = vld [vmem:[#allocation4 + $0x1c9] sm:$0xff]
      %v5729 = vld [vmem:[#allocation4 + $0x1d1] sm:$0xff]
      %v5730 = vld [vmem:[#allocation4 + $0x1e1] sm:$0xff]
      %v5731 = vld [vmem:[#allocation4 + $0x1e9] sm:$0xff]
      %v5732 = vld [vmem:[#allocation4 + $0x1f1] sm:$0xff]
      %v5733 = vld [vmem:[#allocation4 + $0x1f9] sm:$0xff]
      %v5734 = vld [vmem:[#allocation4 + $0x209] sm:$0xff]
      %v5735 = vld [vmem:[#allocation4 + $0x211] sm:$0xff]
      %v5736 = vld [vmem:[#allocation4 + $0x219] sm:$0xff]
      %v5737 = vld [vmem:[#allocation4 + $0x221] sm:$0xff]
      %v5738 = vld [vmem:[#allocation4 + $0x231] sm:$0xff]
      %v5739 = vld [vmem:[#allocation4 + $0x239] sm:$0xff]
      %v5740 = vld [vmem:[#allocation4 + $0x241] sm:$0xff]
      %v5741 = vld [vmem:[#allocation4 + $0x249] sm:$0xff]
      %v5742 = vld [vmem:[#allocation4 + $0x259] sm:$0xff]
      %v5743 = vld [vmem:[#allocation4 + $0x261] sm:$0xff]
      %v5744 = vld [vmem:[#allocation4 + $0x269] sm:$0xff]
      %v5745 = vld [vmem:[#allocation4 + $0x271] sm:$0xff]
      %v5746 = vmax.f32 %v5618, %v5682
      %v5747 = vmax.f32 %v5619, %v5683
      %v5748 = vmax.f32 %v5620, %v5684
      %v5749 = vmax.f32 %v5621, %v5685
      %v5750 = vmax.f32 %v5622, %v5686
      %v5751 = vmax.f32 %v5623, %v5687
      %v5752 = vmax.f32 %v5624, %v5688
      %v5753 = vmax.f32 %v5625, %v5689
      %v5754 = vmax.f32 %v5626, %v5690
      %v5755 = vmax.f32 %v5627, %v5691
      %v5756 = vmax.f32 %v5628, %v5692
      %v5757 = vmax.f32 %v5629, %v5693
      %v5758 = vmax.f32 %v5630, %v5694
      %v5759 = vmax.f32 %v5631, %v5695
      %v5760 = vmax.f32 %v5632, %v5696
      %v5761 = vmax.f32 %v5633, %v5697
      %v5762 = vmax.f32 %v5634, %v5698
      %v5763 = vmax.f32 %v5635, %v5699
      %v5764 = vmax.f32 %v5636, %v5700
      %v5765 = vmax.f32 %v5637, %v5701
      %v5766 = vmax.f32 %v5638, %v5702
      %v5767 = vmax.f32 %v5639, %v5703
      %v5768 = vmax.f32 %v5640, %v5704
      %v5769 = vmax.f32 %v5641, %v5705
      %v5770 = vmax.f32 %v5642, %v5706
      %v5771 = vmax.f32 %v5643, %v5707
      %v5772 = vmax.f32 %v5644, %v5708
      %v5773 = vmax.f32 %v5645, %v5709
      %v5774 = vmax.f32 %v5646, %v5710
      %v5775 = vmax.f32 %v5647, %v5711
      %v5776 = vmax.f32 %v5648, %v5712
      %v5777 = vmax.f32 %v5649, %v5713
      %v5778 = vmax.f32 %v5650, %v5714
      %v5779 = vmax.f32 %v5651, %v5715
      %v5780 = vmax.f32 %v5652, %v5716
      %v5781 = vmax.f32 %v5653, %v5717
      %v5782 = vmax.f32 %v5654, %v5718
      %v5783 = vmax.f32 %v5655, %v5719
      %v5784 = vmax.f32 %v5656, %v5720
      %v5785 = vmax.f32 %v5657, %v5721
      %v5786 = vmax.f32 %v5658, %v5722
      %v5787 = vmax.f32 %v5659, %v5723
      %v5788 = vmax.f32 %v5660, %v5724
      %v5789 = vmax.f32 %v5661, %v5725
      %v5790 = vmax.f32 %v5662, %v5726
      %v5791 = vmax.f32 %v5663, %v5727
      %v5792 = vmax.f32 %v5664, %v5728
      %v5793 = vmax.f32 %v5665, %v5729
      %v5794 = vmax.f32 %v5666, %v5730
      %v5795 = vmax.f32 %v5667, %v5731
      %v5796 = vmax.f32 %v5668, %v5732
      %v5797 = vmax.f32 %v5669, %v5733
      %v5798 = vmax.f32 %v5670, %v5734
      %v5799 = vmax.f32 %v5671, %v5735
      %v5800 = vmax.f32 %v5672, %v5736
      %v5801 = vmax.f32 %v5673, %v5737
      %v5802 = vmax.f32 %v5674, %v5738
      %v5803 = vmax.f32 %v5675, %v5739
      %v5804 = vmax.f32 %v5676, %v5740
      %v5805 = vmax.f32 %v5677, %v5741
      %v5806 = vmax.f32 %v5678, %v5742
      %v5807 = vmax.f32 %v5679, %v5743
      %v5808 = vmax.f32 %v5680, %v5744
      %v5809 = vmax.f32 %v5681, %v5745
      %v5810 = vld [vmem:[#allocation4 + $0x2] sm:$0xff]
      %v5811 = vld [vmem:[#allocation4 + $0xa] sm:$0xff]
      %v5812 = vld [vmem:[#allocation4 + $0x12] sm:$0xff]
      %v5813 = vld [vmem:[#allocation4 + $0x1a] sm:$0xff]
      %v5814 = vld [vmem:[#allocation4 + $0x2a] sm:$0xff]
      %v5815 = vld [vmem:[#allocation4 + $0x32] sm:$0xff]
      %v5816 = vld [vmem:[#allocation4 + $0x3a] sm:$0xff]
      %v5817 = vld [vmem:[#allocation4 + $0x42] sm:$0xff]
      %v5818 = vld [vmem:[#allocation4 + $0x52] sm:$0xff]
      %v5819 = vld [vmem:[#allocation4 + $0x5a] sm:$0xff]
      %v5820 = vld [vmem:[#allocation4 + $0x62] sm:$0xff]
      %v5821 = vld [vmem:[#allocation4 + $0x6a] sm:$0xff]
      %v5822 = vld [vmem:[#allocation4 + $0x7a] sm:$0xff]
      %v5823 = vld [vmem:[#allocation4 + $0x82] sm:$0xff]
      %v5824 = vld [vmem:[#allocation4 + $0x8a] sm:$0xff]
      %v5825 = vld [vmem:[#allocation4 + $0x92] sm:$0xff]
      %v5826 = vld [vmem:[#allocation4 + $0xa2] sm:$0xff]
      %v5827 = vld [vmem:[#allocation4 + $0xaa] sm:$0xff]
      %v5828 = vld [vmem:[#allocation4 + $0xb2] sm:$0xff]
      %v5829 = vld [vmem:[#allocation4 + $0xba] sm:$0xff]
      %v5830 = vld [vmem:[#allocation4 + $0xca] sm:$0xff]
      %v5831 = vld [vmem:[#allocation4 + $0xd2] sm:$0xff]
      %v5832 = vld [vmem:[#allocation4 + $0xda] sm:$0xff]
      %v5833 = vld [vmem:[#allocation4 + $0xe2] sm:$0xff]
      %v5834 = vld [vmem:[#allocation4 + $0xf2] sm:$0xff]
      %v5835 = vld [vmem:[#allocation4 + $0xfa] sm:$0xff]
      %v5836 = vld [vmem:[#allocation4 + $0x102] sm:$0xff]
      %v5837 = vld [vmem:[#allocation4 + $0x10a] sm:$0xff]
      %v5838 = vld [vmem:[#allocation4 + $0x11a] sm:$0xff]
      %v5839 = vld [vmem:[#allocation4 + $0x122] sm:$0xff]
      %v5840 = vld [vmem:[#allocation4 + $0x12a] sm:$0xff]
      %v5841 = vld [vmem:[#allocation4 + $0x132] sm:$0xff]
      %v5842 = vld [vmem:[#allocation4 + $0x142] sm:$0xff]
      %v5843 = vld [vmem:[#allocation4 + $0x14a] sm:$0xff]
      %v5844 = vld [vmem:[#allocation4 + $0x152] sm:$0xff]
      %v5845 = vld [vmem:[#allocation4 + $0x15a] sm:$0xff]
      %v5846 = vld [vmem:[#allocation4 + $0x16a] sm:$0xff]
      %v5847 = vld [vmem:[#allocation4 + $0x172] sm:$0xff]
      %v5848 = vld [vmem:[#allocation4 + $0x17a] sm:$0xff]
      %v5849 = vld [vmem:[#allocation4 + $0x182] sm:$0xff]
      %v5850 = vld [vmem:[#allocation4 + $0x192] sm:$0xff]
      %v5851 = vld [vmem:[#allocation4 + $0x19a] sm:$0xff]
      %v5852 = vld [vmem:[#allocation4 + $0x1a2] sm:$0xff]
      %v5853 = vld [vmem:[#allocation4 + $0x1aa] sm:$0xff]
      %v5854 = vld [vmem:[#allocation4 + $0x1ba] sm:$0xff]
      %v5855 = vld [vmem:[#allocation4 + $0x1c2] sm:$0xff]
      %v5856 = vld [vmem:[#allocation4 + $0x1ca] sm:$0xff]
      %v5857 = vld [vmem:[#allocation4 + $0x1d2] sm:$0xff]
      %v5858 = vld [vmem:[#allocation4 + $0x1e2] sm:$0xff]
      %v5859 = vld [vmem:[#allocation4 + $0x1ea] sm:$0xff]
      %v5860 = vld [vmem:[#allocation4 + $0x1f2] sm:$0xff]
      %v5861 = vld [vmem:[#allocation4 + $0x1fa] sm:$0xff]
      %v5862 = vld [vmem:[#allocation4 + $0x20a] sm:$0xff]
      %v5863 = vld [vmem:[#allocation4 + $0x212] sm:$0xff]
      %v5864 = vld [vmem:[#allocation4 + $0x21a] sm:$0xff]
      %v5865 = vld [vmem:[#allocation4 + $0x222] sm:$0xff]
      %v5866 = vld [vmem:[#allocation4 + $0x232] sm:$0xff]
      %v5867 = vld [vmem:[#allocation4 + $0x23a] sm:$0xff]
      %v5868 = vld [vmem:[#allocation4 + $0x242] sm:$0xff]
      %v5869 = vld [vmem:[#allocation4 + $0x24a] sm:$0xff]
      %v5870 = vld [vmem:[#allocation4 + $0x25a] sm:$0xff]
      %v5871 = vld [vmem:[#allocation4 + $0x262] sm:$0xff]
      %v5872 = vld [vmem:[#allocation4 + $0x26a] sm:$0xff]
      %v5873 = vld [vmem:[#allocation4 + $0x272] sm:$0xff]
      %v5874 = vmax.f32 %v5746, %v5810
      %v5875 = vmax.f32 %v5747, %v5811
      %v5876 = vmax.f32 %v5748, %v5812
      %v5877 = vmax.f32 %v5749, %v5813
      %v5878 = vmax.f32 %v5750, %v5814
      %v5879 = vmax.f32 %v5751, %v5815
      %v5880 = vmax.f32 %v5752, %v5816
      %v5881 = vmax.f32 %v5753, %v5817
      %v5882 = vmax.f32 %v5754, %v5818
      %v5883 = vmax.f32 %v5755, %v5819
      %v5884 = vmax.f32 %v5756, %v5820
      %v5885 = vmax.f32 %v5757, %v5821
      %v5886 = vmax.f32 %v5758, %v5822
      %v5887 = vmax.f32 %v5759, %v5823
      %v5888 = vmax.f32 %v5760, %v5824
      %v5889 = vmax.f32 %v5761, %v5825
      %v5890 = vmax.f32 %v5762, %v5826
      %v5891 = vmax.f32 %v5763, %v5827
      %v5892 = vmax.f32 %v5764, %v5828
      %v5893 = vmax.f32 %v5765, %v5829
      %v5894 = vmax.f32 %v5766, %v5830
      %v5895 = vmax.f32 %v5767, %v5831
      %v5896 = vmax.f32 %v5768, %v5832
      %v5897 = vmax.f32 %v5769, %v5833
      %v5898 = vmax.f32 %v5770, %v5834
      %v5899 = vmax.f32 %v5771, %v5835
      %v5900 = vmax.f32 %v5772, %v5836
      %v5901 = vmax.f32 %v5773, %v5837
      %v5902 = vmax.f32 %v5774, %v5838
      %v5903 = vmax.f32 %v5775, %v5839
      %v5904 = vmax.f32 %v5776, %v5840
      %v5905 = vmax.f32 %v5777, %v5841
      %v5906 = vmax.f32 %v5778, %v5842
      %v5907 = vmax.f32 %v5779, %v5843
      %v5908 = vmax.f32 %v5780, %v5844
      %v5909 = vmax.f32 %v5781, %v5845
      %v5910 = vmax.f32 %v5782, %v5846
      %v5911 = vmax.f32 %v5783, %v5847
      %v5912 = vmax.f32 %v5784, %v5848
      %v5913 = vmax.f32 %v5785, %v5849
      %v5914 = vmax.f32 %v5786, %v5850
      %v5915 = vmax.f32 %v5787, %v5851
      %v5916 = vmax.f32 %v5788, %v5852
      %v5917 = vmax.f32 %v5789, %v5853
      %v5918 = vmax.f32 %v5790, %v5854
      %v5919 = vmax.f32 %v5791, %v5855
      %v5920 = vmax.f32 %v5792, %v5856
      %v5921 = vmax.f32 %v5793, %v5857
      %v5922 = vmax.f32 %v5794, %v5858
      %v5923 = vmax.f32 %v5795, %v5859
      %v5924 = vmax.f32 %v5796, %v5860
      %v5925 = vmax.f32 %v5797, %v5861
      %v5926 = vmax.f32 %v5798, %v5862
      %v5927 = vmax.f32 %v5799, %v5863
      %v5928 = vmax.f32 %v5800, %v5864
      %v5929 = vmax.f32 %v5801, %v5865
      %v5930 = vmax.f32 %v5802, %v5866
      %v5931 = vmax.f32 %v5803, %v5867
      %v5932 = vmax.f32 %v5804, %v5868
      %v5933 = vmax.f32 %v5805, %v5869
      %v5934 = vmax.f32 %v5806, %v5870
      %v5935 = vmax.f32 %v5807, %v5871
      %v5936 = vmax.f32 %v5808, %v5872
      %v5937 = vmax.f32 %v5809, %v5873
      %v5938 = vpack.c.bf16 %v5875, %v5874
      %v5939 = vpack.c.bf16 %v5877, %v5876
      %v5940 = vpack.c.bf16 %v5879, %v5878
      %v5941 = vpack.c.bf16 %v5881, %v5880
      %v5942 = vpack.c.bf16 %v5883, %v5882
      %v5943 = vpack.c.bf16 %v5885, %v5884
      %v5944 = vpack.c.bf16 %v5887, %v5886
      %v5945 = vpack.c.bf16 %v5889, %v5888
      %v5946 = vpack.c.bf16 %v5891, %v5890
      %v5947 = vpack.c.bf16 %v5893, %v5892
      %v5948 = vpack.c.bf16 %v5895, %v5894
      %v5949 = vpack.c.bf16 %v5897, %v5896
      %v5950 = vpack.c.bf16 %v5899, %v5898
      %v5951 = vpack.c.bf16 %v5901, %v5900
      %v5952 = vpack.c.bf16 %v5903, %v5902
      %v5953 = vpack.c.bf16 %v5905, %v5904
      %v5954 = vpack.c.bf16 %v5907, %v5906
      %v5955 = vpack.c.bf16 %v5909, %v5908
      %v5956 = vpack.c.bf16 %v5911, %v5910
      %v5957 = vpack.c.bf16 %v5913, %v5912
      %v5958 = vpack.c.bf16 %v5915, %v5914
      %v5959 = vpack.c.bf16 %v5917, %v5916
      %v5960 = vpack.c.bf16 %v5919, %v5918
      %v5961 = vpack.c.bf16 %v5921, %v5920
      %v5962 = vpack.c.bf16 %v5923, %v5922
      %v5963 = vpack.c.bf16 %v5925, %v5924
      %v5964 = vpack.c.bf16 %v5927, %v5926
      %v5965 = vpack.c.bf16 %v5929, %v5928
      %v5966 = vpack.c.bf16 %v5931, %v5930
      %v5967 = vpack.c.bf16 %v5933, %v5932
      %v5968 = vpack.c.bf16 %v5935, %v5934
      %v5969 = vpack.c.bf16 %v5937, %v5936
      %v6002 = vunpack.c.l.b16 %v5938
      %v6003 = vunpack.c.h.b16 %v5938
      %v6004 = vunpack.c.l.b16 %v5939
      %v6005 = vunpack.c.h.b16 %v5939
      %v6006 = vunpack.c.l.b16 %v5940
      %v6007 = vunpack.c.h.b16 %v5940
      %v6008 = vunpack.c.l.b16 %v5941
      %v6009 = vunpack.c.h.b16 %v5941
      %v6010 = vunpack.c.l.b16 %v5942
      %v6011 = vunpack.c.h.b16 %v5942
      %v6012 = vunpack.c.l.b16 %v5943
      %v6013 = vunpack.c.h.b16 %v5943
      %v6014 = vunpack.c.l.b16 %v5944
      %v6015 = vunpack.c.h.b16 %v5944
      %v6016 = vunpack.c.l.b16 %v5945
      %v6017 = vunpack.c.h.b16 %v5945
      %v6018 = vunpack.c.l.b16 %v5946
      %v6019 = vunpack.c.h.b16 %v5946
      %v6020 = vunpack.c.l.b16 %v5947
      %v6021 = vunpack.c.h.b16 %v5947
      %v6022 = vunpack.c.l.b16 %v5948
      %v6023 = vunpack.c.h.b16 %v5948
      %v6024 = vunpack.c.l.b16 %v5949
      %v6025 = vunpack.c.h.b16 %v5949
      %v6026 = vunpack.c.l.b16 %v5950
      %v6027 = vunpack.c.h.b16 %v5950
      %v6028 = vunpack.c.l.b16 %v5951
      %v6029 = vunpack.c.h.b16 %v5951
      %v6030 = vunpack.c.l.b16 %v5952
      %v6031 = vunpack.c.h.b16 %v5952
      %v6032 = vunpack.c.l.b16 %v5953
      %v6033 = vunpack.c.h.b16 %v5953
      %v6034 = vunpack.c.l.b16 %v5954
      %v6035 = vunpack.c.h.b16 %v5954
      %v6036 = vunpack.c.l.b16 %v5955
      %v6037 = vunpack.c.h.b16 %v5955
      %v6038 = vunpack.c.l.b16 %v5956
      %v6039 = vunpack.c.h.b16 %v5956
      %v6040 = vunpack.c.l.b16 %v5957
      %v6041 = vunpack.c.h.b16 %v5957
      %v6042 = vunpack.c.l.b16 %v5958
      %v6043 = vunpack.c.h.b16 %v5958
      %v6044 = vunpack.c.l.b16 %v5959
      %v6045 = vunpack.c.h.b16 %v5959
      %v6046 = vunpack.c.l.b16 %v5960
      %v6047 = vunpack.c.h.b16 %v5960
      %v6048 = vunpack.c.l.b16 %v5961
      %v6049 = vunpack.c.h.b16 %v5961
      %v6050 = vunpack.c.l.b16 %v5962
      %v6051 = vunpack.c.h.b16 %v5962
      %v6052 = vunpack.c.l.b16 %v5963
      %v6053 = vunpack.c.h.b16 %v5963
      %v6054 = vunpack.c.l.b16 %v5964
      %v6055 = vunpack.c.h.b16 %v5964
      %v6056 = vunpack.c.l.b16 %v5965
      %v6057 = vunpack.c.h.b16 %v5965
      %v6058 = vunpack.c.l.b16 %v5966
      %v6059 = vunpack.c.h.b16 %v5966
      %v6060 = vunpack.c.l.b16 %v5967
      %v6061 = vunpack.c.h.b16 %v5967
      %v6062 = vunpack.c.l.b16 %v5968
      %v6063 = vunpack.c.h.b16 %v5968
      %v6064 = vunpack.c.l.b16 %v5969
      %v6065 = vunpack.c.h.b16 %v5969
      %v6066 = vpack.c.b16 %v6002, %v6002
      %v6067 = vpack.c.b16 %v6003, %v6003
      %v6068 = vpack.c.b16 %v6004, %v6004
      %v6069 = vpack.c.b16 %v6005, %v6005
      %v6070 = vpack.c.b16 %v6006, %v6006
      %v6071 = vpack.c.b16 %v6007, %v6007
      %v6072 = vpack.c.b16 %v6008, %v6008
      %v6073 = vpack.c.b16 %v6009, %v6009
      %v6074 = vpack.c.b16 %v6010, %v6010
      %v6075 = vpack.c.b16 %v6011, %v6011
      %v6076 = vpack.c.b16 %v6012, %v6012
      %v6077 = vpack.c.b16 %v6013, %v6013
      %v6078 = vpack.c.b16 %v6014, %v6014
      %v6079 = vpack.c.b16 %v6015, %v6015
      %v6080 = vpack.c.b16 %v6016, %v6016
      %v6081 = vpack.c.b16 %v6017, %v6017
      %v6082 = vpack.c.b16 %v6018, %v6018
      %v6083 = vpack.c.b16 %v6019, %v6019
      %v6084 = vpack.c.b16 %v6020, %v6020
      %v6085 = vpack.c.b16 %v6021, %v6021
      %v6086 = vpack.c.b16 %v6022, %v6022
      %v6087 = vpack.c.b16 %v6023, %v6023
      %v6088 = vpack.c.b16 %v6024, %v6024
      %v6089 = vpack.c.b16 %v6025, %v6025
      %v6090 = vpack.c.b16 %v6026, %v6026
      %v6091 = vpack.c.b16 %v6027, %v6027
      %v6092 = vpack.c.b16 %v6028, %v6028
      %v6093 = vpack.c.b16 %v6029, %v6029
      %v6094 = vpack.c.b16 %v6030, %v6030
      %v6095 = vpack.c.b16 %v6031, %v6031
      %v6096 = vpack.c.b16 %v6032, %v6032
      %v6097 = vpack.c.b16 %v6033, %v6033
      %v6098 = vpack.c.b16 %v6034, %v6034
      %v6099 = vpack.c.b16 %v6035, %v6035
      %v6100 = vpack.c.b16 %v6036, %v6036
      %v6101 = vpack.c.b16 %v6037, %v6037
      %v6102 = vpack.c.b16 %v6038, %v6038
      %v6103 = vpack.c.b16 %v6039, %v6039
      %v6104 = vpack.c.b16 %v6040, %v6040
      %v6105 = vpack.c.b16 %v6041, %v6041
      %v6106 = vpack.c.b16 %v6042, %v6042
      %v6107 = vpack.c.b16 %v6043, %v6043
      %v6108 = vpack.c.b16 %v6044, %v6044
      %v6109 = vpack.c.b16 %v6045, %v6045
      %v6110 = vpack.c.b16 %v6046, %v6046
      %v6111 = vpack.c.b16 %v6047, %v6047
      %v6112 = vpack.c.b16 %v6048, %v6048
      %v6113 = vpack.c.b16 %v6049, %v6049
      %v6114 = vpack.c.b16 %v6050, %v6050
      %v6115 = vpack.c.b16 %v6051, %v6051
      %v6116 = vpack.c.b16 %v6052, %v6052
      %v6117 = vpack.c.b16 %v6053, %v6053
      %v6118 = vpack.c.b16 %v6054, %v6054
      %v6119 = vpack.c.b16 %v6055, %v6055
      %v6120 = vpack.c.b16 %v6056, %v6056
      %v6121 = vpack.c.b16 %v6057, %v6057
      %v6122 = vpack.c.b16 %v6058, %v6058
      %v6123 = vpack.c.b16 %v6059, %v6059
      %v6124 = vpack.c.b16 %v6060, %v6060
      %v6125 = vpack.c.b16 %v6061, %v6061
      %v6126 = vpack.c.b16 %v6062, %v6062
      %v6127 = vpack.c.b16 %v6063, %v6063
      %v6128 = vpack.c.b16 %v6064, %v6064
      %v6129 = vpack.c.b16 %v6065, %v6065
      %vm6194 = vcmask 27648
      %6195 = vst.msk [vmem:[%s204] sm:$0xf] %vm6194, %v6066
      %6196 = vst.msk [vmem:[%s204 + $0x4] sm:$0xf] %vm6194, %v6067
      %6197 = vst.msk [vmem:[%s204 + $0x8] sm:$0xf] %vm6194, %v6068
      %6198 = vst.msk [vmem:[%s204 + $0xc] sm:$0xf] %vm6194, %v6069
      %6199 = vst.msk [vmem:[%s204 + $0x10] sm:$0xf] %vm6194, %v6070
      %6200 = vst.msk [vmem:[%s204 + $0x14] sm:$0xf] %vm6194, %v6071
      %6201 = vst.msk [vmem:[%s204 + $0x18] sm:$0xf] %vm6194, %v6072
      %6202 = vst.msk [vmem:[%s204 + $0x1c] sm:$0xf] %vm6194, %v6073
      %6203 = vst.msk [vmem:[%s204 + $0x20] sm:$0xf] %vm6194, %v6074
      %6204 = vst.msk [vmem:[%s204 + $0x24] sm:$0xf] %vm6194, %v6075
      %6205 = vst.msk [vmem:[%s204 + $0x28] sm:$0xf] %vm6194, %v6076
      %6206 = vst.msk [vmem:[%s204 + $0x2c] sm:$0xf] %vm6194, %v6077
      %6207 = vst.msk [vmem:[%s204 + $0x30] sm:$0xf] %vm6194, %v6078
      %6208 = vst.msk [vmem:[%s204 + $0x34] sm:$0xf] %vm6194, %v6079
      %6209 = vst.msk [vmem:[%s204 + $0x38] sm:$0xf] %vm6194, %v6080
      %6210 = vst.msk [vmem:[%s204 + $0x3c] sm:$0xf] %vm6194, %v6081
      %6211 = vst.msk [vmem:[%s204 + $0x40] sm:$0xf] %vm6194, %v6082
      %6212 = vst.msk [vmem:[%s204 + $0x44] sm:$0xf] %vm6194, %v6083
      %6213 = vst.msk [vmem:[%s204 + $0x48] sm:$0xf] %vm6194, %v6084
      %6214 = vst.msk [vmem:[%s204 + $0x4c] sm:$0xf] %vm6194, %v6085
      %6215 = vst.msk [vmem:[%s204 + $0x50] sm:$0xf] %vm6194, %v6086
      %6216 = vst.msk [vmem:[%s204 + $0x54] sm:$0xf] %vm6194, %v6087
      %6217 = vst.msk [vmem:[%s204 + $0x58] sm:$0xf] %vm6194, %v6088
      %6218 = vst.msk [vmem:[%s204 + $0x5c] sm:$0xf] %vm6194, %v6089
      %6219 = vst.msk [vmem:[%s204 + $0x60] sm:$0xf] %vm6194, %v6090
      %6220 = vst.msk [vmem:[%s204 + $0x64] sm:$0xf] %vm6194, %v6091
      %6221 = vst.msk [vmem:[%s204 + $0x68] sm:$0xf] %vm6194, %v6092
      %6222 = vst.msk [vmem:[%s204 + $0x6c] sm:$0xf] %vm6194, %v6093
      %6223 = vst.msk [vmem:[%s204 + $0x70] sm:$0xf] %vm6194, %v6094
      %6224 = vst.msk [vmem:[%s204 + $0x74] sm:$0xf] %vm6194, %v6095
      %6225 = vst.msk [vmem:[%s204 + $0x78] sm:$0xf] %vm6194, %v6096
      %6226 = vst.msk [vmem:[%s204 + $0x7c] sm:$0xf] %vm6194, %v6097
      %6227 = vst.msk [vmem:[%s204 + $0x80] sm:$0xf] %vm6194, %v6098
      %6228 = vst.msk [vmem:[%s204 + $0x84] sm:$0xf] %vm6194, %v6099
      %6229 = vst.msk [vmem:[%s204 + $0x88] sm:$0xf] %vm6194, %v6100
      %6230 = vst.msk [vmem:[%s204 + $0x8c] sm:$0xf] %vm6194, %v6101
      %6231 = vst.msk [vmem:[%s204 + $0x90] sm:$0xf] %vm6194, %v6102
      %6232 = vst.msk [vmem:[%s204 + $0x94] sm:$0xf] %vm6194, %v6103
      %6233 = vst.msk [vmem:[%s204 + $0x98] sm:$0xf] %vm6194, %v6104
      %6234 = vst.msk [vmem:[%s204 + $0x9c] sm:$0xf] %vm6194, %v6105
      %6235 = vst.msk [vmem:[%s204 + $0xa0] sm:$0xf] %vm6194, %v6106
      %6236 = vst.msk [vmem:[%s204 + $0xa4] sm:$0xf] %vm6194, %v6107
      %6237 = vst.msk [vmem:[%s204 + $0xa8] sm:$0xf] %vm6194, %v6108
      %6238 = vst.msk [vmem:[%s204 + $0xac] sm:$0xf] %vm6194, %v6109
      %6239 = vst.msk [vmem:[%s204 + $0xb0] sm:$0xf] %vm6194, %v6110
      %6240 = vst.msk [vmem:[%s204 + $0xb4] sm:$0xf] %vm6194, %v6111
      %6241 = vst.msk [vmem:[%s204 + $0xb8] sm:$0xf] %vm6194, %v6112
      %6242 = vst.msk [vmem:[%s204 + $0xbc] sm:$0xf] %vm6194, %v6113
      %6243 = vst.msk [vmem:[%s204 + $0xc0] sm:$0xf] %vm6194, %v6114
      %6244 = vst.msk [vmem:[%s204 + $0xc4] sm:$0xf] %vm6194, %v6115
      %6245 = vst.msk [vmem:[%s204 + $0xc8] sm:$0xf] %vm6194, %v6116
      %6246 = vst.msk [vmem:[%s204 + $0xcc] sm:$0xf] %vm6194, %v6117
      %6247 = vst.msk [vmem:[%s204 + $0xd0] sm:$0xf] %vm6194, %v6118
      %6248 = vst.msk [vmem:[%s204 + $0xd4] sm:$0xf] %vm6194, %v6119
      %6249 = vst.msk [vmem:[%s204 + $0xd8] sm:$0xf] %vm6194, %v6120
      %6250 = vst.msk [vmem:[%s204 + $0xdc] sm:$0xf] %vm6194, %v6121
      %6251 = vst.msk [vmem:[%s204 + $0xe0] sm:$0xf] %vm6194, %v6122
      %6252 = vst.msk [vmem:[%s204 + $0xe4] sm:$0xf] %vm6194, %v6123
      %6253 = vst.msk [vmem:[%s204 + $0xe8] sm:$0xf] %vm6194, %v6124
      %6254 = vst.msk [vmem:[%s204 + $0xec] sm:$0xf] %vm6194, %v6125
      %6255 = vst.msk [vmem:[%s204 + $0xf0] sm:$0xf] %vm6194, %v6126
      %6256 = vst.msk [vmem:[%s204 + $0xf4] sm:$0xf] %vm6194, %v6127
      %6257 = vst.msk [vmem:[%s204 + $0xf8] sm:$0xf] %vm6194, %v6128
      %6258 = vst.msk [vmem:[%s204 + $0xfc] sm:$0xf] %vm6194, %v6129
      %s6259 = smul.u32 %s19, 2
      %s6260 = sadd.s32 %s6259, %s18
      %p6261 = scmp.lt.s32.totalorder %s6260, 3
      %s6262 = scalar_select %p6261, %s6260, 3
      %s6263 = smul.addr %s6262, 64
      %s6264 = smul.addr %s6263, 4
      %s6265 = scalar_lea.vmem %s3, %s6264
      // Predicated region
      $region37: #{spiking_tokenizer.4} parent=31 // pred_check
        %p6266 = pneg %p120
      $region38: #{spiking_tokenizer.4} parent=31 // pred_check_branch
        %6268 = sbr.rel (%p6266) target = $region40
      $region39: #{spiking_tokenizer.4} parent=31 // pred_region
        %s6269 = smul.u32 %s19, 2
        %s6270 = sadd.s32 %s6269, %s18
      $region40: #{spiking_tokenizer.4} parent=31 // pred_fallthru
        _
    $region32: #{spiking_tokenizer.4} parent=5 // pred_fallthru
      _
    %p6271 = scmp.le.s32.totalorder 2, %s9
    // Predicated region
    $region41: #{spiking_tokenizer.4} parent=5 // pred_check
      %p6272 = pneg %p6271
    $region42: #{spiking_tokenizer.4} parent=5 // pred_check_branch
      %6274 = sbr.rel (%p6272) target = $region44
    $region43: #{spiking_tokenizer.4} parent=5 // pred_region
      %s6275 = ssub.s32 %s9, 2
      // Predicated region
      $region45: #{spiking_tokenizer.4} parent=43 // pred_check
        %p6276 = pneg %p126
      $region46: #{spiking_tokenizer.4} parent=43 // pred_check_branch
        %6278 = sbr.rel (%p6276) target = $region48
      $region47: #{spiking_tokenizer.4} parent=43 // pred_region
        %s6279 = smul.u32 %s21, 2
        %s6280 = sadd.s32 %s6279, %s20
        %p6281 = scmp.lt.s32.totalorder %s6280, 3
        %s6282 = scalar_select %p6281, %s6280, 3
        %s6283 = smul.addr %s6282, 64
        %s6284 = smul.addr %s6283, 4
        %s6285 = scalar_lea.vmem %s3, %s6284
      $region48: #{spiking_tokenizer.4} parent=43 // pred_fallthru
        _
    $region44: #{spiking_tokenizer.4} parent=5 // pred_fallthru
      _
  $region6: #{spiking_tokenizer.4} parent=0 // loop_footer
    %s13 = sadd.s32 1, %s9
  $region7: #{spiking_tokenizer.4} parent=0 // loop_footer_branch
    %8 = sbr.rel target = $region3
  $region8: #{spiking_tokenizer.4} parent=0 // loop_exit
    _

// kernel: spiking_tokenizer.7
$region0: #{spiking_tokenizer.7}
  #allocation0 [shape = 'u32[]', space=smem, size = 0x4, offset = 0x4, fixed_abs, tag = 'smem constant byte address 0x4 - core index']
  #allocation1 [shape = 'u32[144,128]{1,0:T(1,128)}', space=vmem, size = 0x12000, scoped, tag = 'internal scratch']
  %s0 = inlined_call_operand.vmem [shape: bf16[4,24,48], index: 0, kind: input, shape index: {}]
  %s1 = inlined_call_operand.vmem [shape: bf16[3,48,32], index: 1, kind: input, shape index: {}]
  %s2 = inlined_call_operand.vmem [shape: f32[1,32], index: 2, kind: input, shape index: {}]
  %s3 = inlined_call_operand.hbm [shape: f32[4,16,32], index: 3, kind: output, shape index: {}]
  %s4 = sld [smem:[#allocation0]]
  $region45: #{spiking_tokenizer.7} parent=0
    _
  %s6 = ssub.s32 1, %s4
  %s7 = scalar_select 0, %s6, %s4
  $region1: #{spiking_tokenizer.7} parent=0
    #allocation2 [shape = 'u8[16384]{0}', space=vmem, size = 0x4000, scoped, tag = 'output window, operand 0']
    #allocation3 [shape = 's32[2]{0}', space=sflag, size = 0x8, scoped, tag = 'scoped memory for spiking_tokenizer.7']
    %8 = vsyncpa [#allocation3], 0
    %s9 = scalar_lea.sflag [#allocation3], 1
    %10 = vsyncpa %s9, 0
    loop: start=0, step=1, limit=6
    $region2: #{spiking_tokenizer.7} parent=1 // loop_pre_header
      _
    $region3: #{spiking_tokenizer.7} parent=1 // loop_header
      %s12 = sphi 0, %s16
      %p13 = scmp.ge.s32.totalorder %s12, 6
      %s22 = sphi 0, %s24
      %s25 = sphi 0, %s22
      %s26 = sphi 0, %s25
      %s42 = sphi 0, %s26
      %s46 = sphi 0, %s46
      %s48 = sphi 0, %s46
      %s49 = sphi 0, %s48
      %s63 = sphi 0, %s49
      %s67 = sphi 0, %s67
      %s69 = sphi 0, %s67
      %s70 = sphi 0, %s69
      %s84 = sphi 0, %s70
      %s90 = sphi 0, %s92
      %s93 = sphi 0, %s90
      %s94 = sphi 0, %s93
      %s110 = sphi 0, %s94
    $region4: #{spiking_tokenizer.7} parent=1 // loop_header_branch
      %15 = sbr.rel (%p13) target = $region8
    $region5: #{spiking_tokenizer.7} parent=1 // loop_body
      %s17 = ssub.s32 %s12, 1
      %s18 = ssub.s32 %s12, 2
      %s19 = sadd.s32 %s12, 1
      %s20 = ssub.s32 %s12, %s19
      %p21 = scmp.eq.s32.totalorder %s20, 0
      %s23 = sadd.s32 %s22, 1
      %s24 = scalar_select %p21, %s22, %s23
      %p27 = pneg %p21
      %p28 = scmp.eq.s32.totalorder %s12, 3
      %p29 = por %p27, %p28
      %p30 = scmp.ne.s32.totalorder %s22, %s25
      %p31 = scmp.eq.s32.totalorder %s12, 0
      %p32 = por %p30, %p31
      %p33 = scmp.ne.s32.totalorder %s22, %s25
      %p34 = scmp.eq.s32.totalorder %s17, 3
      %p35 = por %p33, %p34
      %p36 = scmp.ne.s32.totalorder %s25, %s26
      %p37 = scmp.eq.s32.totalorder %s17, 0
      %p38 = por %p36, %p37
      %p39 = scmp.ne.s32.totalorder %s25, %s26
      %p40 = scmp.eq.s32.totalorder %s18, 3
      %p41 = por %p39, %p40
      %p43 = scmp.ne.s32.totalorder %s26, %s42
      %p44 = scmp.eq.s32.totalorder %s18, 0
      %p45 = por %p43, %p44
      %s47 = sadd.s32 %s46, 1
      %p50 = scmp.eq.s32.totalorder %s12, 3
      %p51 = scmp.ne.s32.totalorder %s46, %s48
      %p52 = scmp.eq.s32.totalorder %s12, 0
      %p53 = por %p51, %p52
      %p54 = scmp.ne.s32.totalorder %s46, %s48
      %p55 = scmp.eq.s32.totalorder %s17, 3
      %p56 = por %p54, %p55
      %p57 = scmp.ne.s32.totalorder %s48, %s49
      %p58 = scmp.eq.s32.totalorder %s17, 0
      %p59 = por %p57, %p58
      %p60 = scmp.ne.s32.totalorder %s48, %s49
      %p61 = scmp.eq.s32.totalorder %s18, 3
      %p62 = por %p60, %p61
      %p64 = scmp.ne.s32.totalorder %s49, %s63
      %p65 = scmp.eq.s32.totalorder %s18, 0
      %p66 = por %p64, %p65
      %s68 = sadd.s32 %s67, 1
      %p71 = scmp.eq.s32.totalorder %s12, 3
      %p72 = scmp.ne.s32.totalorder %s67, %s69
      %p73 = scmp.eq.s32.totalorder %s12, 0
      %p74 = por %p72, %p73
      %p75 = scmp.ne.s32.totalorder %s67, %s69
      %p76 = scmp.eq.s32.totalorder %s17, 3
      %p77 = por %p75, %p76
      %p78 = scmp.ne.s32.totalorder %s69, %s70
      %p79 = scmp.eq.s32.totalorder %s17, 0
      %p80 = por %p78, %p79
      %p81 = scmp.ne.s32.totalorder %s69, %s70
      %p82 = scmp.eq.s32.totalorder %s18, 3
      %p83 = por %p81, %p82
      %p85 = scmp.ne.s32.totalorder %s70, %s84
      %p86 = scmp.eq.s32.totalorder %s18, 0
      %p87 = por %p85, %p86
      %s88 = ssub.s32 %s12, %s19
      %p89 = scmp.eq.s32.totalorder %s88, 0
      %s91 = sadd.s32 %s90, 1
      %s92 = scalar_select %p89, %s90, %s91
      %p95 = pneg %p89
      %p96 = scmp.eq.s32.totalorder %s12, 3
      %p97 = por %p95, %p96
      %p98 = scmp.ne.s32.totalorder %s90, %s93
      %p99 = scmp.eq.s32.totalorder %s12, 0
      %p100 = por %p98, %p99
      %p101 = scmp.ne.s32.totalorder %s90, %s93
      %p102 = scmp.eq.s32.totalorder %s17, 3
      %p103 = por %p101, %p102
      %p104 = scmp.ne.s32.totalorder %s93, %s94
      %p105 = scmp.eq.s32.totalorder %s17, 0
      %p106 = por %p104, %p105
      %p107 = scmp.ne.s32.totalorder %s93, %s94
      %p108 = scmp.eq.s32.totalorder %s18, 3
      %p109 = por %p107, %p108
      %p111 = scmp.ne.s32.totalorder %s94, %s110
      %p112 = scmp.eq.s32.totalorder %s18, 0
      %p113 = por %p111, %p112
      %p114 = scmp.le.s32.totalorder 1, %s12
      %p115 = scmp.lt.s32.totalorder %s12, 5
      %p116 = pnand %p114, %p115
      %p117 = pneg %p116
      // Predicated region
      $region9: #{spiking_tokenizer.7} parent=5 // pred_check
        _
      $region10: #{spiking_tokenizer.7} parent=5 // pred_check_branch
        %119 = sbr.rel (%p116) target = $region12
      $region11: #{spiking_tokenizer.7} parent=5 // pred_region
        %s120 = ssub.s32 %s12, 1
        // Predicated region
        $region13: #{spiking_tokenizer.7} parent=11 // pred_check
          %p121 = pneg %p59
        $region14: #{spiking_tokenizer.7} parent=11 // pred_check_branch
          %123 = sbr.rel (%p121) target = $region16
        $region15: #{spiking_tokenizer.7} parent=11 // pred_region
          _
        $region16: #{spiking_tokenizer.7} parent=11 // pred_fallthru
          _
        // Predicated region
        $region17: #{spiking_tokenizer.7} parent=11 // pred_check
          %p124 = pneg %p80
        $region18: #{spiking_tokenizer.7} parent=11 // pred_check_branch
          %126 = sbr.rel (%p124) target = $region20
        $region19: #{spiking_tokenizer.7} parent=11 // pred_region
          _
        $region20: #{spiking_tokenizer.7} parent=11 // pred_fallthru
          _
      $region12: #{spiking_tokenizer.7} parent=5 // pred_fallthru
        _
      %p127 = scmp.lt.s32.totalorder %s12, 4
      // Predicated region
      $region21: #{spiking_tokenizer.7} parent=5 // pred_check
        %p128 = pneg %p127
      $region22: #{spiking_tokenizer.7} parent=5 // pred_check_branch
        %130 = sbr.rel (%p128) target = $region24
      $region23: #{spiking_tokenizer.7} parent=5 // pred_region
        // Predicated region
        $region25: #{spiking_tokenizer.7} parent=23 // pred_check
          %p131 = pneg %p32
        $region26: #{spiking_tokenizer.7} parent=23 // pred_check_branch
          %133 = sbr.rel (%p131) target = $region28
        $region27: #{spiking_tokenizer.7} parent=23 // pred_region
          %p134 = scmp.lt.s32.totalorder %s12, 3
          %s135 = scalar_select %p134, %s12, 3
          %s136 = smul.addr %s135, 3
          %s137 = smul.addr %s136, 4
          %s138 = scalar_lea.vmem %s0, %s137
        $region28: #{spiking_tokenizer.7} parent=23 // pred_fallthru
          _
      $region24: #{spiking_tokenizer.7} parent=5 // pred_fallthru
        _
      %p139 = scmp.le.s32.totalorder 1, %s12
      %p140 = scmp.lt.s32.totalorder %s12, 5
      %p141 = pnand %p139, %p140
      %p142 = pneg %p141
      // Predicated region
      $region29: #{spiking_tokenizer.7} parent=5 // pred_check
        _
      $region30: #{spiking_tokenizer.7} parent=5 // pred_check_branch
        %144 = sbr.rel (%p141) target = $region32
      $region31: #{spiking_tokenizer.7} parent=5 // pred_region
        %s145 = ssub.s32 %s12, 1
        %p146 = scmp.lt.s32.totalorder %s17, 3
        %s147 = scalar_select %p146, %s17, 3
        %s148 = smul.addr %s147, 3
        %s149 = smul.addr %s148, 4
        %s150 = scalar_lea.vmem %s0, %s149
        %p151 = pneg %p38
        %p152 = pneg %p35
        %p153 = pneg %p59
        %p154 = pneg %p56
        %p155 = pneg %p80
        %p156 = pneg %p77
        %p157 = pneg %p106
        %p158 = pneg %p103
        %s159 = sand.u32 %s93, 1
        %s160 = scalar_lea.sflag [#allocation3], %s159
        %s161 = sand.u32 %s93, 1
        %s162 = smul.addr %s161, 16
        %s163 = scalar_lea.vmem [#allocation2], %s162
        %p164 = scmp.lt.s32.totalorder %s17, 3
        %s165 = scalar_select %p164, %s17, 3
        %s166 = smul.addr %s165, 3
        %s167 = smul.addr %s166, 4
        %s168 = scalar_lea.vmem %s0, %s167
        %v170 = vld [vmem:[%s168] sm:$0xf]
        %v171 = vld [vmem:[%s168 + $0x4] sm:$0xf]
        %v172 = vld [vmem:[%s1] sm:$0xf]
        %v173 = vld [vmem:[%s1 + $0x4] sm:$0xf]
        %v174 = vld [vmem:[%s1 + $0x8] sm:$0xf]
        %v175 = vld [vmem:[%s1 + $0xc] sm:$0xf]
        %v176 = vld [vmem:[%s1 + $0x10] sm:$0xf]
        %v177 = vld [vmem:[%s1 + $0x14] sm:$0xf]
        %v178 = vld [vmem:[%s168] sm:$0xc]
        %v179 = vld [vmem:[%s168 + $0x8] sm:$0x3]
        %s180 = scalar_lea.vmem %s1, 24
        %v181 = vld [vmem:[%s180] sm:$0xf]
        %v182 = vld [vmem:[%s180 + $0x4] sm:$0xf]
        %v183 = vld [vmem:[%s180 + $0x8] sm:$0xf]
        %v184 = vld [vmem:[%s180 + $0xc] sm:$0xf]
        %v185 = vld [vmem:[%s180 + $0x10] sm:$0xf]
        %v186 = vld [vmem:[%s180 + $0x14] sm:$0xf]
        %v190 = vunpack.c.l.b16 %v178
        %v191 = vunpack.c.l.b16 %v171
        %v192 = vunpack.c.l.b16 %v179
        %v193 = vpack.c.b16 %v191, %v190
        %v194 = vpack.c.b16 %v192, %v192
        %vm195 = vcmask 1045504
        %v196 = vrot.slane %v193, 2
        %v197 = vrot.slane %v194, 2
        %v198 = vsel %vm195, %v196, %v197
        %v205 = vunpack.c.l.b16 %v181
        %v206 = vunpack.c.l.b16 %v182
        %v207 = vunpack.c.l.b16 %v183
        %v208 = vunpack.c.l.b16 %v184
        %v209 = vunpack.c.l.b16 %v185
        %v210 = vunpack.c.l.b16 %v186
        %v211 = vpack.c.b16 %v206, %v205
        %v212 = vpack.c.b16 %v208, %v207
        %v213 = vpack.c.b16 %v210, %v209
        %vm217 = vcmask 392192
        %v219 = vsel %vm217, %v198, 0
        %221 = vmatprep.subr.bf16.mxu0 0
        %222 = vmatpush1.bf16.msra.mxu0 %v211
        %223 = vmatprep.subr.bf16.mxu0 0
        %224 = vmatpush1.bf16.msra.mxu0 %v212
        %225 = vmatprep.subr.bf16.mxu0 0
        %226 = vmatpush1.bf16.msra.mxu0 %v213
        %227 = vmatprep.subr.bf16.mxu0 0
        %228 = vmatpush1.bf16.msra.mxu0 0
        %229 = vmatprep.subr.bf16.mxu0 0
        %230 = vmatpush1.bf16.msra.mxu0 0
        %231 = vmatprep.subr.bf16.mxu0 0
        %232 = vmatpush1.bf16.msra.mxu0 0
        %233 = vmatprep.subr.bf16.mxu0 0
        %234 = vmatpush1.bf16.msra.mxu0 0
        %235 = vmatprep.subr.bf16.mxu0 0
        %236 = vmatpush1.bf16.msra.mxu0 0
        %237 = vmatprep.subr.bf16.mxu0 0
        %238 = vmatpush1.bf16.msra.mxu0 0
        %239 = vmatprep.subr.bf16.mxu0 0
        %240 = vmatpush1.bf16.msra.mxu0 0
        %241 = vmatprep.subr.bf16.mxu0 0
        %242 = vmatpush1.bf16.msra.mxu0 0
        %243 = vmatprep.subr.bf16.mxu0 0
        %244 = vmatpush1.bf16.msra.mxu0 0
        %245 = vmatprep.subr.bf16.mxu0 0
        %246 = vmatpush1.bf16.msra.mxu0 0
        %247 = vmatprep.subr.bf16.mxu0 0
        %248 = vmatpush1.bf16.msra.mxu0 0
        %249 = vmatprep.subr.bf16.mxu0 0
        %250 = vmatpush1.bf16.msra.mxu0 0
        %251 = vmatprep.subr.bf16.mxu0 0
        %252 = vmatpush1.bf16.msra.mxu0 0
        %253 = vmatprep.mubr.bf16.mxu0 0
        %254 = vmatmul.mubr.bf16.gmra.mrb[0].mxu0 %v219
        %v255 = vpop.f32.mrb[0].mxu0
        %v256 = vadd.f32 0.0, %v255
        %v257 = vpop.f32.mrb[0].mxu0
        %v258 = vpop.f32.mrb[0].mxu0
        %v259 = vadd.f32 0.0, %v258
        %v260 = vpop.f32.mrb[0].mxu0
        %261 = vdwg.mxu0
        %v263 = vunpack.c.l.b16 %v170
        %v264 = vpack.c.b16 %v191, %v263
        %v271 = vunpack.c.l.b16 %v172
        %v272 = vunpack.c.l.b16 %v173
        %v273 = vunpack.c.l.b16 %v174
        %v274 = vunpack.c.l.b16 %v175
        %v275 = vunpack.c.l.b16 %v176
        %v276 = vunpack.c.l.b16 %v177
        %v277 = vpack.c.b16 %v272, %v271
        %v278 = vpack.c.b16 %v274, %v273
        %v279 = vpack.c.b16 %v276, %v275
        %v284 = vsel %vm217, %v264, 0
        %286 = vmatprep.subr.bf16.mxu0 0
        %287 = vmatpush1.bf16.msra.mxu0 %v277
        %288 = vmatprep.subr.bf16.mxu0 0
        %289 = vmatpush1.bf16.msra.mxu0 %v278
        %290 = vmatprep.subr.bf16.mxu0 0
        %291 = vmatpush1.bf16.msra.mxu0 %v279
        %292 = vmatprep.subr.bf16.mxu0 0
        %293 = vmatpush1.bf16.msra.mxu0 0
        %294 = vmatprep.subr.bf16.mxu0 0
        %295 = vmatpush1.bf16.msra.mxu0 0
        %296 = vmatprep.subr.bf16.mxu0 0
        %297 = vmatpush1.bf16.msra.mxu0 0
        %298 = vmatprep.subr.bf16.mxu0 0
        %299 = vmatpush1.bf16.msra.mxu0 0
        %300 = vmatprep.subr.bf16.mxu0 0
        %301 = vmatpush1.bf16.msra.mxu0 0
        %302 = vmatprep.subr.bf16.mxu0 0
        %303 = vmatpush1.bf16.msra.mxu0 0
        %304 = vmatprep.subr.bf16.mxu0 0
        %305 = vmatpush1.bf16.msra.mxu0 0
        %306 = vmatprep.subr.bf16.mxu0 0
        %307 = vmatpush1.bf16.msra.mxu0 0
        %308 = vmatprep.subr.bf16.mxu0 0
        %309 = vmatpush1.bf16.msra.mxu0 0
        %310 = vmatprep.subr.bf16.mxu0 0
        %311 = vmatpush1.bf16.msra.mxu0 0
        %312 = vmatprep.subr.bf16.mxu0 0
        %313 = vmatpush1.bf16.msra.mxu0 0
        %314 = vmatprep.subr.bf16.mxu0 0
        %315 = vmatpush1.bf16.msra.mxu0 0
        %316 = vmatprep.subr.bf16.mxu0 0
        %317 = vmatpush1.bf16.msra.mxu0 0
        %318 = vmatprep.mubr.bf16.mxu0 0
        %319 = vmatmul.mubr.bf16.gmra.mrb[0].mxu0 %v284
        %v320 = vpop.f32.mrb[0].mxu0
        %v321 = vadd.f32 %v256, %v320
        %v322 = vpop.f32.mrb[0].mxu0
        %v323 = vpop.f32.mrb[0].mxu0
        %v324 = vadd.f32 %v259, %v323
        %v325 = vpop.f32.mrb[0].mxu0
        %326 = vdwg.mxu0
        %v327 = vld [vmem:[%s168 + $0x8] sm:$0xf]
        %s328 = scalar_lea.vmem %s1, 48
        %v329 = vld [vmem:[%s328] sm:$0xf]
        %v330 = vld [vmem:[%s328 + $0x4] sm:$0xf]
        %v331 = vld [vmem:[%s328 + $0x8] sm:$0xf]
        %v332 = vld [vmem:[%s328 + $0xc] sm:$0xf]
        %v333 = vld [vmem:[%s328 + $0x10] sm:$0xf]
        %v334 = vld [vmem:[%s328 + $0x14] sm:$0xf]
        %v336 = vunpack.c.l.b16 %v327
        %v337 = vpack.c.b16 %v336, %v191
        %v344 = vunpack.c.l.b16 %v329
        %v345 = vunpack.c.l.b16 %v330
        %v346 = vunpack.c.l.b16 %v331
        %v347 = vunpack.c.l.b16 %v332
        %v348 = vunpack.c.l.b16 %v333
        %v349 = vunpack.c.l.b16 %v334
        %v350 = vpack.c.b16 %v345, %v344
        %v351 = vpack.c.b16 %v347, %v346
        %v352 = vpack.c.b16 %v349, %v348
        %v357 = vsel %vm217, %v337, 0
        %359 = vmatprep.subr.bf16.mxu0 0
        %360 = vmatpush1.bf16.msra.mxu0 %v350
        %361 = vmatprep.subr.bf16.mxu0 0
        %362 = vmatpush1.bf16.msra.mxu0 %v351
        %363 = vmatprep.subr.bf16.mxu0 0
        %364 = vmatpush1.bf16.msra.mxu0 %v352
        %365 = vmatprep.subr.bf16.mxu0 0
        %366 = vmatpush1.bf16.msra.mxu0 0
        %367 = vmatprep.subr.bf16.mxu0 0
        %368 = vmatpush1.bf16.msra.mxu0 0
        %369 = vmatprep.subr.bf16.mxu0 0
        %370 = vmatpush1.bf16.msra.mxu0 0
        %371 = vmatprep.subr.bf16.mxu0 0
        %372 = vmatpush1.bf16.msra.mxu0 0
        %373 = vmatprep.subr.bf16.mxu0 0
        %374 = vmatpush1.bf16.msra.mxu0 0
        %375 = vmatprep.subr.bf16.mxu0 0
        %376 = vmatpush1.bf16.msra.mxu0 0
        %377 = vmatprep.subr.bf16.mxu0 0
        %378 = vmatpush1.bf16.msra.mxu0 0
        %379 = vmatprep.subr.bf16.mxu0 0
        %380 = vmatpush1.bf16.msra.mxu0 0
        %381 = vmatprep.subr.bf16.mxu0 0
        %382 = vmatpush1.bf16.msra.mxu0 0
        %383 = vmatprep.subr.bf16.mxu0 0
        %384 = vmatpush1.bf16.msra.mxu0 0
        %385 = vmatprep.subr.bf16.mxu0 0
        %386 = vmatpush1.bf16.msra.mxu0 0
        %387 = vmatprep.subr.bf16.mxu0 0
        %388 = vmatpush1.bf16.msra.mxu0 0
        %389 = vmatprep.subr.bf16.mxu0 0
        %390 = vmatpush1.bf16.msra.mxu0 0
        %391 = vmatprep.mubr.bf16.mxu0 0
        %392 = vmatmul.mubr.bf16.gmra.mrb[0].mxu0 %v357
        %v393 = vpop.f32.mrb[0].mxu0
        %v394 = vadd.f32 0.0, %v393
        %v395 = vpop.f32.mrb[0].mxu0
        %v396 = vpop.f32.mrb[0].mxu0
        %v397 = vadd.f32 0.0, %v396
        %v398 = vpop.f32.mrb[0].mxu0
        %399 = vdwg.mxu0
        %v400 = vadd.f32 %v321, %v394
        %v401 = vadd.f32 %v324, %v397
        %v402 = vld [vmem:[%s2] sm:$0x1]
        %v404 = vlaneseq
        %v405 = vshrl.u32 %v404, 7
        %v406 = vsub.s32 0, %v405
        %v407 = vrot.slane %v402, %v406
        %v409 = vadd.f32 %v400, %v407
        %v410 = vadd.f32 %v401, %v407
        %vm411 = vcmask 261120
        %412 = vst.msk [vmem:[%s163] sm:$0xff] %vm411, %v409
        %413 = vst.msk [vmem:[%s163 + $0x8] sm:$0xff] %vm411, %v410
        %s414 = sand.u32 %s93, 1
        %s415 = scalar_lea.sflag [#allocation3], %s414
        %s416 = sand.u32 %s93, 1
        %s417 = smul.addr %s416, 16
        %s418 = scalar_lea.vmem [#allocation2], %s417
        // Predicated region
        $region33: #{spiking_tokenizer.7} parent=31 // pred_check
          %p419 = pneg %p103
        $region34: #{spiking_tokenizer.7} parent=31 // pred_check_branch
          %421 = sbr.rel (%p419) target = $region36
        $region35: #{spiking_tokenizer.7} parent=31 // pred_region
          %s423 = ssub.s32 256, 256
          %424 = vsyncadd %s415, %s423
          %s425 = smul.addr %s17, 2
          %s426 = smul.addr %s425, 128
          %s427 = scalar_lea.hbm %s3, %s426
          %s428 = sshll.u32 %s418, 4
          %s429 = int_to_ptr.vmem [resolvable:$true] %s428
          %434 = dma.vmem_to_hbm [thread:$0]  %s429, 256, %s427, %s415, 128, 128, 8
        $region36: #{spiking_tokenizer.7} parent=31 // pred_fallthru
          _
      $region32: #{spiking_tokenizer.7} parent=5 // pred_fallthru
        _
      %p435 = scmp.le.s32.totalorder 2, %s12
      // Predicated region
      $region37: #{spiking_tokenizer.7} parent=5 // pred_check
        %p436 = pneg %p435
      $region38: #{spiking_tokenizer.7} parent=5 // pred_check_branch
        %438 = sbr.rel (%p436) target = $region40
      $region39: #{spiking_tokenizer.7} parent=5 // pred_region
        %s439 = ssub.s32 %s12, 2
        // Predicated region
        $region41: #{spiking_tokenizer.7} parent=39 // pred_check
          %p440 = pneg %p109
        $region42: #{spiking_tokenizer.7} parent=39 // pred_check_branch
          %442 = sbr.rel (%p440) target = $region44
        $region43: #{spiking_tokenizer.7} parent=39 // pred_region
          %s443 = sand.u32 %s94, 1
          %s444 = scalar_lea.sflag [#allocation3], %s443
          %s445 = sand.u32 %s94, 1
          %s446 = smul.addr %s445, 16
          %s447 = scalar_lea.vmem [#allocation2], %s446
          %448 = dma.done %s444, 256
        $region44: #{spiking_tokenizer.7} parent=39 // pred_fallthru
          _
      $region40: #{spiking_tokenizer.7} parent=5 // pred_fallthru
        _
    $region6: #{spiking_tokenizer.7} parent=1 // loop_footer
      %s16 = sadd.s32 1, %s12
    $region7: #{spiking_tokenizer.7} parent=1 // loop_footer_branch
      %11 = sbr.rel target = $region3
    $region8: #{spiking_tokenizer.7} parent=1 // loop_exit
      _
    %449 = vsyncpa [#allocation3], 1
    %s450 = scalar_lea.sflag [#allocation3], 1
    %451 = vsyncpa %s450, 1

</llo_original>
